<compile_context>
chip_gen: v7x
topology: tpu7x:2x2x1
jax: 0.10.0
libtpu: 0.0.40
codegen_flags: <defaults>
</compile_context>

<pallas_src>
import jax
import jax.numpy as jnp
from jax.experimental import pallas as pl
from jax.experimental.pallas import tpu as pltpu

# ----------------------------- config --------------------------------------
K = 4            # conv bank kernel sizes 1..K
IN_CH = 16       # in_channels
CH = 32          # channels (highway size, GRU hidden size)
PROJ = (64, 16)  # proj_channels (PROJ[-1] != CH -> highway_mismatch = True)
NH = 2           # num_highways
B = 2            # batch
L = 20           # sequence length

PREC = jax.lax.Precision.HIGHEST  # for the pure-JAX reference only


# ----------------------------- the fused kernel -----------------------------
def _cbhg_kernel(x_ref, wbank_ref, sbank_ref, tbank_ref,
                 wp1_ref, sp1_ref, tp1_ref,
                 wp2_ref, sp2_ref, tp2_ref,
                 wpre_ref, whw_ref, bhw_ref,
                 wih_ref, bih_ref, whh_ref, bhh_ref,
                 out_ref):
    f32 = jnp.float32
    batch, seq = out_ref.shape[0], out_ref.shape[1]
    n = batch * seq                       # time-major rows: r = t*batch + b
    ch = wpre_ref.shape[-1]               # highway / GRU hidden size
    riota = jax.lax.broadcasted_iota(jnp.int32, (n, 1), 0)

    def shift_rows(v, off):
        """result[r] = v[r + off*batch], zeros outside the slab.  Time-major
        rows make a whole-slab shift identical to per-sequence zero padding."""
        s = off * batch
        if s == 0:
            return v
        rolled = pltpu.roll(v, (-s) % n, 0)      # rolled[r] = v[(r+s) mod n]
        if s < 0:
            return jnp.where(riota >= -s, rolled, 0.0)
        return jnp.where(riota < n - s, rolled, 0.0)

    def im2col_dot(v, offsets, w_ref, s_ref, t_ref, relu):
        """conv as ONE dot: lane-concat the shifted copies, matmul against the
        (taps*Cin, Cout) weight, relu, then folded eval-mode BatchNorm."""
        vi = jnp.concatenate([shift_rows(v, o) for o in offsets], axis=-1)
        z = jnp.dot(vi, w_ref[...], preferred_element_type=f32)
        if relu:
            z = jnp.maximum(z, 0.0)
        return z * s_ref[...] + t_ref[...]

    x = x_ref[...]                                         # (L*B, IN_CH)

    # conv bank, all kernel sizes 1..K fused (offsets -2..+1) -> (L*B, K*CH)
    y = im2col_dot(x, (-2, -1, 0, 1), wbank_ref, sbank_ref, tbank_ref, True)
    # MaxPool1d(kernel=2, stride=1, pad=1)[:seq]  ==  max(y[t], y[t-1])
    prev = jnp.where(riota >= batch, pltpu.roll(y, batch, 0), y)
    y = jnp.maximum(y, prev)
    # projection convs (kernel 3)
    y = im2col_dot(y, (-1, 0, 1), wp1_ref, sp1_ref, tp1_ref, True)
    y = im2col_dot(y, (-1, 0, 1), wp2_ref, sp2_ref, tp2_ref, False)
    h = y + x                                              # residual

    # pre_highway (no bias) + highway layers ([W1 | W2] fused per layer)
    h = jnp.dot(h, wpre_ref[...], preferred_element_type=f32)   # (L*B, CH)
    for i in range(whw_ref.shape[0]):
        hz = jnp.dot(h, whw_ref[i], preferred_element_type=f32) + bhw_ref[i]
        g = jax.nn.sigmoid(hz[:, ch:])
        h = g * jnp.maximum(hz[:, :ch], 0.0) + (1.0 - g) * h

    # GRU input projection, both directions fused: lanes [fwd r,z,n | bwd r,z,n]
    gi = jnp.dot(h, wih_ref[...], preferred_element_type=f32) + bih_ref[...]
    gi_f, gi_b = gi[:, :3 * ch], gi[:, 3 * ch:]

    # Interleaved bidirectional GRU recurrence: one block-diagonal dot/step.
    whh = whh_ref[...]                  # (2*CH, 6*CH), same value every step
    bhh = bhh_ref[...]
    hs = jnp.zeros((batch, 2 * ch), f32)                   # [h_fwd | h_bwd]
    for s in range(seq):                                   # fully unrolled
        tf, tb = s, seq - 1 - s                            # static indices
        gs = jnp.concatenate([gi_f[tf * batch:(tf + 1) * batch, :],
                              gi_b[tb * batch:(tb + 1) * batch, :]], axis=-1)
        gh = jnp.dot(hs, whh, preferred_element_type=f32) + bhh
        a = jax.nn.sigmoid(gs + gh)                        # r/z gates
        r = jnp.concatenate([a[:, 0:ch], a[:, 3 * ch:4 * ch]], axis=-1)
        z = jnp.concatenate([a[:, ch:2 * ch], a[:, 4 * ch:5 * ch]], axis=-1)
        gin = jnp.concatenate([gs[:, 2 * ch:3 * ch], gs[:, 5 * ch:]], axis=-1)
        ghn = jnp.concatenate([gh[:, 2 * ch:3 * ch], gh[:, 5 * ch:]], axis=-1)
        cand = jnp.tanh(gin + r * ghn)
        hs = (1.0 - z) * cand + z * hs
        # store straight into the final (B, L, 2*CH) layout
        out_ref[:, tf, 0:ch] = hs[:, 0:ch].astype(out_ref.dtype)
        out_ref[:, tb, ch:2 * ch] = hs[:, ch:].astype(out_ref.dtype)


def cbhg_forward(x_ncl, fp):
    """x_ncl: (B, IN_CH, L) PyTorch layout  ->  (B, L, 2*CH).  One pallas_call,
    no grid (single invocation, whole-array VMEM blocks)."""
    b, cin, seq = x_ncl.shape
    assert cin == IN_CH and PROJ[-1] == IN_CH  # residual add requirement
    # channels-last, time-major slab (row = t*B + b)
    x_tm = jnp.transpose(x_ncl, (2, 0, 1)).reshape(seq * b, cin)
    return pl.pallas_call(
        _cbhg_kernel,
        out_shape=jax.ShapeDtypeStruct((b, seq, 2 * CH), jnp.float32),
    )(x_tm,
      fp["bank_w"], fp["bank_scale"], fp["bank_shift"],
      fp["proj1_w"], fp["proj1_scale"], fp["proj1_shift"],
      fp["proj2_w"], fp["proj2_scale"], fp["proj2_shift"],
      fp["pre_w"], fp["hw_w"], fp["hw_b"],
      fp["gru_wih"], fp["gru_bih"], fp["gru_whh"], fp["gru_bhh"])


# ----------------------------- params ---------------------------------------
def make_params(key):
    keys = iter(jax.random.split(key, 64))

    def nrm(shape, scale=0.1):
        return (scale * jax.random.normal(next(keys), shape)).astype(jnp.float32)

    def bn(c):
        gamma = 1.0 + 0.1 * jax.random.normal(next(keys), (1, c))
        beta = 0.05 * jax.random.normal(next(keys), (1, c))
        mean = 0.05 * jax.random.normal(next(keys), (1, c))
        var = jax.random.uniform(next(keys), (1, c), minval=0.5, maxval=1.5)
        scale = gamma * jax.lax.rsqrt(var + 1e-5)
        shift = beta - mean * scale
        return scale.astype(jnp.float32), shift.astype(jnp.float32)

    p = {}
    for k in range(1, K + 1):
        p[f"bank_w_{k}"] = nrm((k, IN_CH, CH))               # (tap, Cin, Cout)
        p[f"bank_scale_{k}"], p[f"bank_shift_{k}"] = bn(CH)
    p["proj1_w"] = nrm((3, K * CH, PROJ[0]))
    p["proj1_scale"], p["proj1_shift"] = bn(PROJ[0])
    p["proj2_w"] = nrm((3, PROJ[0], PROJ[1]))
    p["proj2_scale"], p["proj2_shift"] = bn(PROJ[1])
    p["pre_highway_w"] = nrm((PROJ[1], CH))                  # Linear, no bias
    for i in range(NH):
        p[f"hw_w1_{i}"] = nrm((CH, CH))
        p[f"hw_b1_{i}"] = jnp.zeros((1, CH), jnp.float32)    # W1.bias.fill_(0.)
        p[f"hw_w2_{i}"] = nrm((CH, CH))
        p[f"hw_b2_{i}"] = nrm((1, CH))
    for d in ("f", "b"):                                     # fwd / reverse GRU
        p[f"wih_{d}"] = nrm((CH, 3 * CH))                    # gate order r, z, n
        p[f"whh_{d}"] = nrm((CH, 3 * CH))
        p[f"bih_{d}"] = nrm((1, 3 * CH))
        p[f"bhh_{d}"] = nrm((1, 3 * CH))
    return p


def fuse_params(p):
    """One-time host-side fusion of module parameters into kernel-ready form."""
    assert PROJ[-1] == IN_CH, "residual add requires proj_channels[-1] == in_channels"
    f = {}
    # Conv bank -> single im2col weight; row block m <-> time offset (m - 2).
    wall = jnp.zeros((4, IN_CH, K * CH), jnp.float32)
    scales, shifts = [], []
    for k in range(1, K + 1):
        w = p[f"bank_w_{k}"]                                 # (k, IN_CH, CH)
        col = (k - 1) * CH
        pad = k // 2
        for j in range(k):
            m = j - pad + 2
            wall = wall.at[m, :, col:col + CH].set(w[j])
        scales.append(p[f"bank_scale_{k}"])
        shifts.append(p[f"bank_shift_{k}"])
    f["bank_w"] = wall.reshape(4 * IN_CH, K * CH)            # (64, 128)
    f["bank_scale"] = jnp.concatenate(scales, axis=-1)
    f["bank_shift"] = jnp.concatenate(shifts, axis=-1)
    f["proj1_w"] = p["proj1_w"].reshape(3 * K * CH, PROJ[0])     # (384, 64)
    f["proj1_scale"], f["proj1_shift"] = p["proj1_scale"], p["proj1_shift"]
    f["proj2_w"] = p["proj2_w"].reshape(3 * PROJ[0], PROJ[1])    # (192, 16)
    f["proj2_scale"], f["proj2_shift"] = p["proj2_scale"], p["proj2_shift"]
    f["pre_w"] = p["pre_highway_w"]
    f["hw_w"] = jnp.stack([jnp.concatenate([p[f"hw_w1_{i}"], p[f"hw_w2_{i}"]],
                                           axis=-1) for i in range(NH)])
    f["hw_b"] = jnp.stack([jnp.concatenate([p[f"hw_b1_{i}"], p[f"hw_b2_{i}"]],
                                           axis=-1) for i in range(NH)])
    # GRU, both directions fused; gi lanes = [fwd r,z,n | bwd r,z,n].
    f["gru_wih"] = jnp.concatenate([p["wih_f"], p["wih_b"]], axis=-1)  # (32,192)
    f["gru_bih"] = jnp.concatenate([p["bih_f"], p["bih_b"]], axis=-1)  # (1,192)
    whh_bd = jnp.zeros((2 * CH, 6 * CH), jnp.float32)        # block-diagonal
    whh_bd = whh_bd.at[:CH, :3 * CH].set(p["whh_f"])
    whh_bd = whh_bd.at[CH:, 3 * CH:].set(p["whh_b"])
    f["gru_whh"] = whh_bd
    f["gru_bhh"] = jnp.concatenate([p["bhh_f"], p["bhh_b"]], axis=-1)  # (1,192)
    return f


# ----------------------- pure-JAX reference (for checking) ------------------
def cbhg_reference(x_ncl, p):
    b, _, seq = x_ncl.shape
    x = jnp.transpose(x_ncl, (0, 2, 1))                      # (B, L, Cin)

    def conv_bn(v, w, scale, shift, relu):                   # w: (taps,Cin,Cout)
        taps = w.shape[0]
        pad = taps // 2
        vp = jnp.pad(v, ((0, 0), (pad, pad), (0, 0)))
        acc = sum(jnp.einsum("blc,co->blo", vp[:, j:j + seq, :], w[j],
                             precision=PREC) for j in range(taps))
        if relu:
            acc = jnp.maximum(acc, 0.0)
        return acc * scale + shift

    residual = x
    bank = [conv_bn(x, p[f"bank_w_{k}"], p[f"bank_scale_{k}"],
                    p[f"bank_shift_{k}"], True) for k in range(1, K + 1)]
    y = jnp.concatenate(bank, axis=-1)
    prev = jnp.concatenate([y[:, :1, :], y[:, :-1, :]], axis=1)
    y = jnp.maximum(y, prev)                                 # maxpool(2,1,1)[:L]
    y = conv_bn(y, p["proj1_w"], p["proj1_scale"], p["proj1_shift"], True)
    y = conv_bn(y, p["proj2_w"], p["proj2_scale"], p["proj2_shift"], False)
    h = y + residual
    h = jnp.dot(h, p["pre_highway_w"], precision=PREC)
    for i in range(NH):
        x1 = jnp.dot(h, p[f"hw_w1_{i}"], precision=PREC) + p[f"hw_b1_{i}"]
        x2 = jnp.dot(h, p[f"hw_w2_{i}"], precision=PREC) + p[f"hw_b2_{i}"]
        g = jax.nn.sigmoid(x2)
        h = g * jnp.maximum(x1, 0.0) + (1.0 - g) * h

    def gru_dir(wih, whh, bih, bhh, reverse):
        state = jnp.zeros((b, CH), jnp.float32)
        outs = [None] * seq
        order = range(seq - 1, -1, -1) if reverse else range(seq)
        for t in order:
            gi = jnp.dot(h[:, t, :], wih, precision=PREC) + bih
            gh = jnp.dot(state, whh, precision=PREC) + bhh
            r = jax.nn.sigmoid(gi[:, :CH] + gh[:, :CH])
            z = jax.nn.sigmoid(gi[:, CH:2 * CH] + gh[:, CH:2 * CH])
            c = jnp.tanh(gi[:, 2 * CH:] + r * gh[:, 2 * CH:])
            state = (1.0 - z) * c + z * state
            outs[t] = state
        return jnp.stack(outs, axis=1)                       # (B, L, CH)

    of = gru_dir(p["wih_f"], p["whh_f"], p["bih_f"], p["bhh_f"], False)
    ob = gru_dir(p["wih_b"], p["whh_b"], p["bih_b"], p["bhh_b"], True)
    return jnp.concatenate([of, ob], axis=-1)                # (B, L, 2*CH)


# ----------------------------- main ------------------------------------------
if __name__ == "__main__":
    key = jax.random.PRNGKey(0)
    pkey, xkey = jax.random.split(key)
    raw = make_params(pkey)
    fused = fuse_params(raw)

    # PyTorch input layout (B, in_channels, L).
    x_ncl = jax.random.normal(xkey, (B, IN_CH, L), dtype=jnp.float32)

    out = jax.jit(cbhg_forward)(x_ncl, fused)
    out = jax.block_until_ready(out)
    assert out.shape == (B, L, 2 * CH), out.shape
    assert bool(jnp.all(jnp.isfinite(out)))

    ref = jax.block_until_ready(jax.jit(cbhg_reference)(x_ncl, raw))
    assert bool(jnp.allclose(out, ref, rtol=2e-2, atol=2e-2)), \
        float(jnp.max(jnp.abs(out - ref)))
    print("KERNEL_OK")
</pallas_src>

<mosaic_0001>
module attributes {stable_mosaic.version = 11 : i64} {
  func.func @_cbhg_kernel(%arg0: memref<40x16xf32, #tpu.memory_space<vmem>>, %arg1: memref<64x128xf32, #tpu.memory_space<vmem>>, %arg2: memref<1x128xf32, #tpu.memory_space<vmem>>, %arg3: memref<1x128xf32, #tpu.memory_space<vmem>>, %arg4: memref<384x64xf32, #tpu.memory_space<vmem>>, %arg5: memref<1x64xf32, #tpu.memory_space<vmem>>, %arg6: memref<1x64xf32, #tpu.memory_space<vmem>>, %arg7: memref<192x16xf32, #tpu.memory_space<vmem>>, %arg8: memref<1x16xf32, #tpu.memory_space<vmem>>, %arg9: memref<1x16xf32, #tpu.memory_space<vmem>>, %arg10: memref<16x32xf32, #tpu.memory_space<vmem>>, %arg11: memref<2x32x64xf32, #tpu.memory_space<vmem>>, %arg12: memref<2x1x64xf32, #tpu.memory_space<vmem>>, %arg13: memref<32x192xf32, #tpu.memory_space<vmem>>, %arg14: memref<1x192xf32, #tpu.memory_space<vmem>>, %arg15: memref<64x192xf32, #tpu.memory_space<vmem>>, %arg16: memref<1x192xf32, #tpu.memory_space<vmem>>, %arg17: memref<2x20x64xf32, #tpu.memory_space<vmem>>) attributes {dimension_semantics = [], scalar_prefetch = 0 : i64, scratch_operands = 0 : i64, tpu.core_type = #tpu.core_type<tc>} {
    %0 = tpu.iota {dimensions = array<i32: 0>} : vector<40x1xi32>
    %c0 = arith.constant 0 : index
    %c0_0 = arith.constant 0 : index
    %1 = vector.load %arg0[%c0, %c0_0] : memref<40x16xf32, #tpu.memory_space<vmem>>, vector<40x16xf32>
    %c4_i32 = arith.constant 4 : i32
    %2 = tpu.dynamic_rotate %1 by %c4_i32 dim 0 : vector<40x16xf32>, i32 -> vector<40x16xf32>
    %c4_i32_1 = arith.constant 4 : i32
    %3 = vector.broadcast %c4_i32_1 : i32 to vector<40x1xi32>
    %4 = arith.cmpi sge, %0, %3 : vector<40x1xi32>
    %cst = arith.constant 0.000000e+00 : f32
    %5 = vector.shape_cast %4 : vector<40x1xi1> to vector<40x1xi1>
    %6 = vector.broadcast %5 : vector<40x1xi1> to vector<40x16xi1>
    %7 = vector.broadcast %cst : f32 to vector<40x16xf32>
    %8 = arith.select %6, %2, %7 : vector<40x16xi1>, vector<40x16xf32>
    %c2_i32 = arith.constant 2 : i32
    %9 = tpu.dynamic_rotate %1 by %c2_i32 dim 0 : vector<40x16xf32>, i32 -> vector<40x16xf32>
    %c2_i32_2 = arith.constant 2 : i32
    %10 = vector.broadcast %c2_i32_2 : i32 to vector<40x1xi32>
    %11 = arith.cmpi sge, %0, %10 : vector<40x1xi32>
    %cst_3 = arith.constant 0.000000e+00 : f32
    %12 = vector.shape_cast %11 : vector<40x1xi1> to vector<40x1xi1>
    %13 = vector.broadcast %12 : vector<40x1xi1> to vector<40x16xi1>
    %14 = vector.broadcast %cst_3 : f32 to vector<40x16xf32>
    %15 = arith.select %13, %9, %14 : vector<40x16xi1>, vector<40x16xf32>
    %c38_i32 = arith.constant 38 : i32
    %16 = tpu.dynamic_rotate %1 by %c38_i32 dim 0 : vector<40x16xf32>, i32 -> vector<40x16xf32>
    %c38_i32_4 = arith.constant 38 : i32
    %17 = vector.broadcast %c38_i32_4 : i32 to vector<40x1xi32>
    %18 = arith.cmpi slt, %0, %17 : vector<40x1xi32>
    %cst_5 = arith.constant 0.000000e+00 : f32
    %19 = vector.shape_cast %18 : vector<40x1xi1> to vector<40x1xi1>
    %20 = vector.broadcast %19 : vector<40x1xi1> to vector<40x16xi1>
    %21 = vector.broadcast %cst_5 : f32 to vector<40x16xf32>
    %22 = arith.select %20, %16, %21 : vector<40x16xi1>, vector<40x16xf32>
    %23 = tpu.concatenate %8, %15, %1, %22 in 1 : vector<40x16xf32>, vector<40x16xf32>, vector<40x16xf32>, vector<40x16xf32> -> vector<40x64xf32>
    %c0_6 = arith.constant 0 : index
    %c0_7 = arith.constant 0 : index
    %24 = vector.load %arg1[%c0_6, %c0_7] : memref<64x128xf32, #tpu.memory_space<vmem>>, vector<64x128xf32>
    %cst_8 = arith.constant dense<0.000000e+00> : vector<40x128xf32>
    %25 = tpu.matmul %23, %24, %cst_8 {dimension_numbers = #tpu.dot_dimension_numbers<[1], [0], [0], [1], [0, 0, 1, 1], [], []>} : vector<40x64xf32>, vector<64x128xf32>, vector<40x128xf32> -> vector<40x128xf32>
    %cst_9 = arith.constant 0.000000e+00 : f32
    %26 = vector.broadcast %cst_9 : f32 to vector<40x128xf32>
    %27 = arith.maximumf %25, %26 : vector<40x128xf32>
    %c0_10 = arith.constant 0 : index
    %c0_11 = arith.constant 0 : index
    %28 = vector.load %arg2[%c0_10, %c0_11] : memref<1x128xf32, #tpu.memory_space<vmem>>, vector<1x128xf32>
    %29 = vector.broadcast %28 : vector<1x128xf32> to vector<40x128xf32>
    %30 = arith.mulf %27, %29 : vector<40x128xf32>
    %c0_12 = arith.constant 0 : index
    %c0_13 = arith.constant 0 : index
    %31 = vector.load %arg3[%c0_12, %c0_13] : memref<1x128xf32, #tpu.memory_space<vmem>>, vector<1x128xf32>
    %32 = vector.broadcast %31 : vector<1x128xf32> to vector<40x128xf32>
    %33 = arith.addf %30, %32 : vector<40x128xf32>
    %c2_i32_14 = arith.constant 2 : i32
    %34 = vector.broadcast %c2_i32_14 : i32 to vector<40x1xi32>
    %35 = arith.cmpi sge, %0, %34 : vector<40x1xi32>
    %c2_i32_15 = arith.constant 2 : i32
    %36 = tpu.dynamic_rotate %33 by %c2_i32_15 dim 0 : vector<40x128xf32>, i32 -> vector<40x128xf32>
    %37 = vector.shape_cast %35 : vector<40x1xi1> to vector<40x1xi1>
    %38 = vector.broadcast %37 : vector<40x1xi1> to vector<40x128xi1>
    %39 = arith.select %38, %36, %33 : vector<40x128xi1>, vector<40x128xf32>
    %40 = arith.maximumf %33, %39 : vector<40x128xf32>
    %c2_i32_16 = arith.constant 2 : i32
    %41 = tpu.dynamic_rotate %40 by %c2_i32_16 dim 0 : vector<40x128xf32>, i32 -> vector<40x128xf32>
    %c2_i32_17 = arith.constant 2 : i32
    %42 = vector.broadcast %c2_i32_17 : i32 to vector<40x1xi32>
    %43 = arith.cmpi sge, %0, %42 : vector<40x1xi32>
    %cst_18 = arith.constant 0.000000e+00 : f32
    %44 = vector.shape_cast %43 : vector<40x1xi1> to vector<40x1xi1>
    %45 = vector.broadcast %44 : vector<40x1xi1> to vector<40x128xi1>
    %46 = vector.broadcast %cst_18 : f32 to vector<40x128xf32>
    %47 = arith.select %45, %41, %46 : vector<40x128xi1>, vector<40x128xf32>
    %c38_i32_19 = arith.constant 38 : i32
    %48 = tpu.dynamic_rotate %40 by %c38_i32_19 dim 0 : vector<40x128xf32>, i32 -> vector<40x128xf32>
    %c38_i32_20 = arith.constant 38 : i32
    %49 = vector.broadcast %c38_i32_20 : i32 to vector<40x1xi32>
    %50 = arith.cmpi slt, %0, %49 : vector<40x1xi32>
    %cst_21 = arith.constant 0.000000e+00 : f32
    %51 = vector.shape_cast %50 : vector<40x1xi1> to vector<40x1xi1>
    %52 = vector.broadcast %51 : vector<40x1xi1> to vector<40x128xi1>
    %53 = vector.broadcast %cst_21 : f32 to vector<40x128xf32>
    %54 = arith.select %52, %48, %53 : vector<40x128xi1>, vector<40x128xf32>
    %55 = tpu.concatenate %47, %40, %54 in 1 : vector<40x128xf32>, vector<40x128xf32>, vector<40x128xf32> -> vector<40x384xf32>
    %c0_22 = arith.constant 0 : index
    %c0_23 = arith.constant 0 : index
    %56 = vector.load %arg4[%c0_22, %c0_23] : memref<384x64xf32, #tpu.memory_space<vmem>>, vector<384x64xf32>
    %cst_24 = arith.constant dense<0.000000e+00> : vector<40x64xf32>
    %57 = tpu.matmul %55, %56, %cst_24 {dimension_numbers = #tpu.dot_dimension_numbers<[1], [0], [0], [1], [0, 0, 1, 1], [], []>} : vector<40x384xf32>, vector<384x64xf32>, vector<40x64xf32> -> vector<40x64xf32>
    %cst_25 = arith.constant 0.000000e+00 : f32
    %58 = vector.broadcast %cst_25 : f32 to vector<40x64xf32>
    %59 = arith.maximumf %57, %58 : vector<40x64xf32>
    %c0_26 = arith.constant 0 : index
    %c0_27 = arith.constant 0 : index
    %60 = vector.load %arg5[%c0_26, %c0_27] : memref<1x64xf32, #tpu.memory_space<vmem>>, vector<1x64xf32>
    %61 = vector.broadcast %60 : vector<1x64xf32> to vector<40x64xf32>
    %62 = arith.mulf %59, %61 : vector<40x64xf32>
    %c0_28 = arith.constant 0 : index
    %c0_29 = arith.constant 0 : index
    %63 = vector.load %arg6[%c0_28, %c0_29] : memref<1x64xf32, #tpu.memory_space<vmem>>, vector<1x64xf32>
    %64 = vector.broadcast %63 : vector<1x64xf32> to vector<40x64xf32>
    %65 = arith.addf %62, %64 : vector<40x64xf32>
    %c2_i32_30 = arith.constant 2 : i32
    %66 = tpu.dynamic_rotate %65 by %c2_i32_30 dim 0 : vector<40x64xf32>, i32 -> vector<40x64xf32>
    %c2_i32_31 = arith.constant 2 : i32
    %67 = vector.broadcast %c2_i32_31 : i32 to vector<40x1xi32>
    %68 = arith.cmpi sge, %0, %67 : vector<40x1xi32>
    %cst_32 = arith.constant 0.000000e+00 : f32
    %69 = vector.shape_cast %68 : vector<40x1xi1> to vector<40x1xi1>
    %70 = vector.broadcast %69 : vector<40x1xi1> to vector<40x64xi1>
    %71 = vector.broadcast %cst_32 : f32 to vector<40x64xf32>
    %72 = arith.select %70, %66, %71 : vector<40x64xi1>, vector<40x64xf32>
    %c38_i32_33 = arith.constant 38 : i32
    %73 = tpu.dynamic_rotate %65 by %c38_i32_33 dim 0 : vector<40x64xf32>, i32 -> vector<40x64xf32>
    %c38_i32_34 = arith.constant 38 : i32
    %74 = vector.broadcast %c38_i32_34 : i32 to vector<40x1xi32>
    %75 = arith.cmpi slt, %0, %74 : vector<40x1xi32>
    %cst_35 = arith.constant 0.000000e+00 : f32
    %76 = vector.shape_cast %75 : vector<40x1xi1> to vector<40x1xi1>
    %77 = vector.broadcast %76 : vector<40x1xi1> to vector<40x64xi1>
    %78 = vector.broadcast %cst_35 : f32 to vector<40x64xf32>
    %79 = arith.select %77, %73, %78 : vector<40x64xi1>, vector<40x64xf32>
    %80 = tpu.concatenate %72, %65, %79 in 1 : vector<40x64xf32>, vector<40x64xf32>, vector<40x64xf32> -> vector<40x192xf32>
    %c0_36 = arith.constant 0 : index
    %c0_37 = arith.constant 0 : index
    %81 = vector.load %arg7[%c0_36, %c0_37] : memref<192x16xf32, #tpu.memory_space<vmem>>, vector<192x16xf32>
    %cst_38 = arith.constant dense<0.000000e+00> : vector<40x16xf32>
    %82 = tpu.matmul %80, %81, %cst_38 {dimension_numbers = #tpu.dot_dimension_numbers<[1], [0], [0], [1], [0, 0, 1, 1], [], []>} : vector<40x192xf32>, vector<192x16xf32>, vector<40x16xf32> -> vector<40x16xf32>
    %c0_39 = arith.constant 0 : index
    %c0_40 = arith.constant 0 : index
    %83 = vector.load %arg8[%c0_39, %c0_40] : memref<1x16xf32, #tpu.memory_space<vmem>>, vector<1x16xf32>
    %84 = vector.broadcast %83 : vector<1x16xf32> to vector<40x16xf32>
    %85 = arith.mulf %82, %84 : vector<40x16xf32>
    %c0_41 = arith.constant 0 : index
    %c0_42 = arith.constant 0 : index
    %86 = vector.load %arg9[%c0_41, %c0_42] : memref<1x16xf32, #tpu.memory_space<vmem>>, vector<1x16xf32>
    %87 = vector.broadcast %86 : vector<1x16xf32> to vector<40x16xf32>
    %88 = arith.addf %85, %87 : vector<40x16xf32>
    %89 = arith.addf %88, %1 : vector<40x16xf32>
    %c0_43 = arith.constant 0 : index
    %c0_44 = arith.constant 0 : index
    %90 = vector.load %arg10[%c0_43, %c0_44] : memref<16x32xf32, #tpu.memory_space<vmem>>, vector<16x32xf32>
    %cst_45 = arith.constant dense<0.000000e+00> : vector<40x32xf32>
    %91 = tpu.matmul %89, %90, %cst_45 {dimension_numbers = #tpu.dot_dimension_numbers<[1], [0], [0], [1], [0, 0, 1, 1], [], []>} : vector<40x16xf32>, vector<16x32xf32>, vector<40x32xf32> -> vector<40x32xf32>
    %c0_46 = arith.constant 0 : index
    %c0_47 = arith.constant 0 : index
    %c0_48 = arith.constant 0 : index
    %92 = vector.load %arg11[%c0_46, %c0_47, %c0_48] : memref<2x32x64xf32, #tpu.memory_space<vmem>>, vector<1x32x64xf32>
    %93 = vector.shape_cast %92 : vector<1x32x64xf32> to vector<32x64xf32>
    %cst_49 = arith.constant dense<0.000000e+00> : vector<40x64xf32>
    %94 = tpu.matmul %91, %93, %cst_49 {dimension_numbers = #tpu.dot_dimension_numbers<[1], [0], [0], [1], [0, 0, 1, 1], [], []>} : vector<40x32xf32>, vector<32x64xf32>, vector<40x64xf32> -> vector<40x64xf32>
    %c0_50 = arith.constant 0 : index
    %c0_51 = arith.constant 0 : index
    %c0_52 = arith.constant 0 : index
    %95 = vector.load %arg12[%c0_50, %c0_51, %c0_52] : memref<2x1x64xf32, #tpu.memory_space<vmem>>, vector<1x1x64xf32>
    %96 = vector.shape_cast %95 : vector<1x1x64xf32> to vector<1x64xf32>
    %97 = vector.broadcast %96 : vector<1x64xf32> to vector<40x64xf32>
    %98 = arith.addf %94, %97 : vector<40x64xf32>
    %99 = vector.extract_strided_slice %98 {offsets = [0, 32], sizes = [40, 32], strides = [1, 1]} : vector<40x64xf32> to vector<40x32xf32>
    %100 = arith.negf %99 : vector<40x32xf32>
    %101 = math.exp %100 : vector<40x32xf32>
    %cst_53 = arith.constant 1.000000e+00 : f32
    %102 = vector.broadcast %cst_53 : f32 to vector<40x32xf32>
    %103 = arith.addf %102, %101 : vector<40x32xf32>
    %104 = arith.divf %102, %103 : vector<40x32xf32>
    %105 = vector.extract_strided_slice %98 {offsets = [0, 0], sizes = [40, 32], strides = [1, 1]} : vector<40x64xf32> to vector<40x32xf32>
    %cst_54 = arith.constant 0.000000e+00 : f32
    %106 = vector.broadcast %cst_54 : f32 to vector<40x32xf32>
    %107 = arith.maximumf %105, %106 : vector<40x32xf32>
    %108 = arith.mulf %104, %107 : vector<40x32xf32>
    %cst_55 = arith.constant 1.000000e+00 : f32
    %109 = vector.broadcast %cst_55 : f32 to vector<40x32xf32>
    %110 = arith.subf %109, %104 : vector<40x32xf32>
    %111 = arith.mulf %110, %91 : vector<40x32xf32>
    %112 = arith.addf %108, %111 : vector<40x32xf32>
    %c1 = arith.constant 1 : index
    %c0_56 = arith.constant 0 : index
    %c0_57 = arith.constant 0 : index
    %113 = vector.load %arg11[%c1, %c0_56, %c0_57] : memref<2x32x64xf32, #tpu.memory_space<vmem>>, vector<1x32x64xf32>
    %114 = vector.shape_cast %113 : vector<1x32x64xf32> to vector<32x64xf32>
    %cst_58 = arith.constant dense<0.000000e+00> : vector<40x64xf32>
    %115 = tpu.matmul %112, %114, %cst_58 {dimension_numbers = #tpu.dot_dimension_numbers<[1], [0], [0], [1], [0, 0, 1, 1], [], []>} : vector<40x32xf32>, vector<32x64xf32>, vector<40x64xf32> -> vector<40x64xf32>
    %c1_59 = arith.constant 1 : index
    %c0_60 = arith.constant 0 : index
    %c0_61 = arith.constant 0 : index
    %116 = vector.load %arg12[%c1_59, %c0_60, %c0_61] : memref<2x1x64xf32, #tpu.memory_space<vmem>>, vector<1x1x64xf32>
    %117 = vector.shape_cast %116 : vector<1x1x64xf32> to vector<1x64xf32>
    %118 = vector.broadcast %117 : vector<1x64xf32> to vector<40x64xf32>
    %119 = arith.addf %115, %118 : vector<40x64xf32>
    %120 = vector.extract_strided_slice %119 {offsets = [0, 32], sizes = [40, 32], strides = [1, 1]} : vector<40x64xf32> to vector<40x32xf32>
    %121 = arith.negf %120 : vector<40x32xf32>
    %122 = math.exp %121 : vector<40x32xf32>
    %cst_62 = arith.constant 1.000000e+00 : f32
    %123 = vector.broadcast %cst_62 : f32 to vector<40x32xf32>
    %124 = arith.addf %123, %122 : vector<40x32xf32>
    %125 = arith.divf %123, %124 : vector<40x32xf32>
    %126 = vector.extract_strided_slice %119 {offsets = [0, 0], sizes = [40, 32], strides = [1, 1]} : vector<40x64xf32> to vector<40x32xf32>
    %cst_63 = arith.constant 0.000000e+00 : f32
    %127 = vector.broadcast %cst_63 : f32 to vector<40x32xf32>
    %128 = arith.maximumf %126, %127 : vector<40x32xf32>
    %129 = arith.mulf %125, %128 : vector<40x32xf32>
    %cst_64 = arith.constant 1.000000e+00 : f32
    %130 = vector.broadcast %cst_64 : f32 to vector<40x32xf32>
    %131 = arith.subf %130, %125 : vector<40x32xf32>
    %132 = arith.mulf %131, %112 : vector<40x32xf32>
    %133 = arith.addf %129, %132 : vector<40x32xf32>
    %c0_65 = arith.constant 0 : index
    %c0_66 = arith.constant 0 : index
    %134 = vector.load %arg13[%c0_65, %c0_66] : memref<32x192xf32, #tpu.memory_space<vmem>>, vector<32x192xf32>
    %cst_67 = arith.constant dense<0.000000e+00> : vector<40x192xf32>
    %135 = tpu.matmul %133, %134, %cst_67 {dimension_numbers = #tpu.dot_dimension_numbers<[1], [0], [0], [1], [0, 0, 1, 1], [], []>} : vector<40x32xf32>, vector<32x192xf32>, vector<40x192xf32> -> vector<40x192xf32>
    %c0_68 = arith.constant 0 : index
    %c0_69 = arith.constant 0 : index
    %136 = vector.load %arg14[%c0_68, %c0_69] : memref<1x192xf32, #tpu.memory_space<vmem>>, vector<1x192xf32>
    %137 = vector.broadcast %136 : vector<1x192xf32> to vector<40x192xf32>
    %138 = arith.addf %135, %137 : vector<40x192xf32>
    %139 = vector.extract_strided_slice %138 {offsets = [0, 0], sizes = [40, 96], strides = [1, 1]} : vector<40x192xf32> to vector<40x96xf32>
    %140 = vector.extract_strided_slice %138 {offsets = [0, 96], sizes = [40, 96], strides = [1, 1]} : vector<40x192xf32> to vector<40x96xf32>
    %c0_70 = arith.constant 0 : index
    %c0_71 = arith.constant 0 : index
    %141 = vector.load %arg15[%c0_70, %c0_71] : memref<64x192xf32, #tpu.memory_space<vmem>>, vector<64x192xf32>
    %c0_72 = arith.constant 0 : index
    %c0_73 = arith.constant 0 : index
    %142 = vector.load %arg16[%c0_72, %c0_73] : memref<1x192xf32, #tpu.memory_space<vmem>>, vector<1x192xf32>
    %cst_74 = arith.constant 0.000000e+00 : f32
    %143 = vector.broadcast %cst_74 : f32 to vector<2x64xf32>
    %144 = vector.extract_strided_slice %139 {offsets = [0, 0], sizes = [2, 96], strides = [1, 1]} : vector<40x96xf32> to vector<2x96xf32>
    %145 = vector.extract_strided_slice %140 {offsets = [38, 0], sizes = [2, 96], strides = [1, 1]} : vector<40x96xf32> to vector<2x96xf32>
    %146 = tpu.concatenate %144, %145 in 1 : vector<2x96xf32>, vector<2x96xf32> -> vector<2x192xf32>
    %cst_75 = arith.constant dense<0.000000e+00> : vector<2x192xf32>
    %147 = tpu.matmul %143, %141, %cst_75 {dimension_numbers = #tpu.dot_dimension_numbers<[1], [0], [0], [1], [0, 0, 1, 1], [], []>} : vector<2x64xf32>, vector<64x192xf32>, vector<2x192xf32> -> vector<2x192xf32>
    %148 = vector.broadcast %142 : vector<1x192xf32> to vector<2x192xf32>
    %149 = arith.addf %147, %148 : vector<2x192xf32>
    %150 = arith.addf %146, %149 : vector<2x192xf32>
    %151 = arith.negf %150 : vector<2x192xf32>
    %152 = math.exp %151 : vector<2x192xf32>
    %cst_76 = arith.constant 1.000000e+00 : f32
    %153 = vector.broadcast %cst_76 : f32 to vector<2x192xf32>
    %154 = arith.addf %153, %152 : vector<2x192xf32>
    %155 = arith.divf %153, %154 : vector<2x192xf32>
    %156 = vector.extract_strided_slice %155 {offsets = [0, 0], sizes = [2, 32], strides = [1, 1]} : vector<2x192xf32> to vector<2x32xf32>
    %157 = vector.extract_strided_slice %155 {offsets = [0, 96], sizes = [2, 32], strides = [1, 1]} : vector<2x192xf32> to vector<2x32xf32>
    %158 = tpu.concatenate %156, %157 in 1 : vector<2x32xf32>, vector<2x32xf32> -> vector<2x64xf32>
    %159 = vector.extract_strided_slice %155 {offsets = [0, 32], sizes = [2, 32], strides = [1, 1]} : vector<2x192xf32> to vector<2x32xf32>
    %160 = vector.extract_strided_slice %155 {offsets = [0, 128], sizes = [2, 32], strides = [1, 1]} : vector<2x192xf32> to vector<2x32xf32>
    %161 = tpu.concatenate %159, %160 in 1 : vector<2x32xf32>, vector<2x32xf32> -> vector<2x64xf32>
    %162 = vector.extract_strided_slice %146 {offsets = [0, 64], sizes = [2, 32], strides = [1, 1]} : vector<2x192xf32> to vector<2x32xf32>
    %163 = vector.extract_strided_slice %146 {offsets = [0, 160], sizes = [2, 32], strides = [1, 1]} : vector<2x192xf32> to vector<2x32xf32>
    %164 = tpu.concatenate %162, %163 in 1 : vector<2x32xf32>, vector<2x32xf32> -> vector<2x64xf32>
    %165 = vector.extract_strided_slice %149 {offsets = [0, 64], sizes = [2, 32], strides = [1, 1]} : vector<2x192xf32> to vector<2x32xf32>
    %166 = vector.extract_strided_slice %149 {offsets = [0, 160], sizes = [2, 32], strides = [1, 1]} : vector<2x192xf32> to vector<2x32xf32>
    %167 = tpu.concatenate %165, %166 in 1 : vector<2x32xf32>, vector<2x32xf32> -> vector<2x64xf32>
    %168 = arith.mulf %158, %167 : vector<2x64xf32>
    %169 = arith.addf %164, %168 : vector<2x64xf32>
    %170 = math.tanh %169 : vector<2x64xf32>
    %cst_77 = arith.constant 1.000000e+00 : f32
    %171 = vector.broadcast %cst_77 : f32 to vector<2x64xf32>
    %172 = arith.subf %171, %161 : vector<2x64xf32>
    %173 = arith.mulf %172, %170 : vector<2x64xf32>
    %174 = arith.mulf %161, %143 : vector<2x64xf32>
    %175 = arith.addf %173, %174 : vector<2x64xf32>
    %176 = vector.extract_strided_slice %175 {offsets = [0, 0], sizes = [2, 32], strides = [1, 1]} : vector<2x64xf32> to vector<2x32xf32>
    %c0_78 = arith.constant 0 : index
    %c0_79 = arith.constant 0 : index
    %c0_80 = arith.constant 0 : index
    %177 = vector.load %arg17[%c0_78, %c0_79, %c0_80] : memref<2x20x64xf32, #tpu.memory_space<vmem>>, vector<2x1x32xf32>
    %178 = vector.shape_cast %177 : vector<2x1x32xf32> to vector<2x32xf32>
    %179 = vector.shape_cast %176 : vector<2x32xf32> to vector<2x1x32xf32>
    tpu.vector_store %arg17[%c0_78, %c0_79, %c0_80], %179 {strides = array<i32>} : memref<2x20x64xf32, #tpu.memory_space<vmem>>, vector<2x1x32xf32>,
    %180 = vector.extract_strided_slice %175 {offsets = [0, 32], sizes = [2, 32], strides = [1, 1]} : vector<2x64xf32> to vector<2x32xf32>
    %c0_81 = arith.constant 0 : index
    %c19 = arith.constant 19 : index
    %c32 = arith.constant 32 : index
    %181 = vector.load %arg17[%c0_81, %c19, %c32] : memref<2x20x64xf32, #tpu.memory_space<vmem>>, vector<2x1x32xf32>
    %182 = vector.shape_cast %181 : vector<2x1x32xf32> to vector<2x32xf32>
    %183 = vector.shape_cast %180 : vector<2x32xf32> to vector<2x1x32xf32>
    tpu.vector_store %arg17[%c0_81, %c19, %c32], %183 {strides = array<i32>} : memref<2x20x64xf32, #tpu.memory_space<vmem>>, vector<2x1x32xf32>,
    %184 = vector.extract_strided_slice %139 {offsets = [2, 0], sizes = [2, 96], strides = [1, 1]} : vector<40x96xf32> to vector<2x96xf32>
    %185 = vector.extract_strided_slice %140 {offsets = [36, 0], sizes = [2, 96], strides = [1, 1]} : vector<40x96xf32> to vector<2x96xf32>
    %186 = tpu.concatenate %184, %185 in 1 : vector<2x96xf32>, vector<2x96xf32> -> vector<2x192xf32>
    %cst_82 = arith.constant dense<0.000000e+00> : vector<2x192xf32>
    %187 = tpu.matmul %175, %141, %cst_82 {dimension_numbers = #tpu.dot_dimension_numbers<[1], [0], [0], [1], [0, 0, 1, 1], [], []>} : vector<2x64xf32>, vector<64x192xf32>, vector<2x192xf32> -> vector<2x192xf32>
    %188 = vector.broadcast %142 : vector<1x192xf32> to vector<2x192xf32>
    %189 = arith.addf %187, %188 : vector<2x192xf32>
    %190 = arith.addf %186, %189 : vector<2x192xf32>
    %191 = arith.negf %190 : vector<2x192xf32>
    %192 = math.exp %191 : vector<2x192xf32>
    %cst_83 = arith.constant 1.000000e+00 : f32
    %193 = vector.broadcast %cst_83 : f32 to vector<2x192xf32>
    %194 = arith.addf %193, %192 : vector<2x192xf32>
    %195 = arith.divf %193, %194 : vector<2x192xf32>
    %196 = vector.extract_strided_slice %195 {offsets = [0, 0], sizes = [2, 32], strides = [1, 1]} : vector<2x192xf32> to vector<2x32xf32>
    %197 = vector.extract_strided_slice %195 {offsets = [0, 96], sizes = [2, 32], strides = [1, 1]} : vector<2x192xf32> to vector<2x32xf32>
    %198 = tpu.concatenate %196, %197 in 1 : vector<2x32xf32>, vector<2x32xf32> -> vector<2x64xf32>
    %199 = vector.extract_strided_slice %195 {offsets = [0, 32], sizes = [2, 32], strides = [1, 1]} : vector<2x192xf32> to vector<2x32xf32>
    %200 = vector.extract_strided_slice %195 {offsets = [0, 128], sizes = [2, 32], strides = [1, 1]} : vector<2x192xf32> to vector<2x32xf32>
    %201 = tpu.concatenate %199, %200 in 1 : vector<2x32xf32>, vector<2x32xf32> -> vector<2x64xf32>
    %202 = vector.extract_strided_slice %186 {offsets = [0, 64], sizes = [2, 32], strides = [1, 1]} : vector<2x192xf32> to vector<2x32xf32>
    %203 = vector.extract_strided_slice %186 {offsets = [0, 160], sizes = [2, 32], strides = [1, 1]} : vector<2x192xf32> to vector<2x32xf32>
    %204 = tpu.concatenate %202, %203 in 1 : vector<2x32xf32>, vector<2x32xf32> -> vector<2x64xf32>
    %205 = vector.extract_strided_slice %189 {offsets = [0, 64], sizes = [2, 32], strides = [1, 1]} : vector<2x192xf32> to vector<2x32xf32>
    %206 = vector.extract_strided_slice %189 {offsets = [0, 160], sizes = [2, 32], strides = [1, 1]} : vector<2x192xf32> to vector<2x32xf32>
    %207 = tpu.concatenate %205, %206 in 1 : vector<2x32xf32>, vector<2x32xf32> -> vector<2x64xf32>
    %208 = arith.mulf %198, %207 : vector<2x64xf32>
    %209 = arith.addf %204, %208 : vector<2x64xf32>
    %210 = math.tanh %209 : vector<2x64xf32>
    %cst_84 = arith.constant 1.000000e+00 : f32
    %211 = vector.broadcast %cst_84 : f32 to vector<2x64xf32>
    %212 = arith.subf %211, %201 : vector<2x64xf32>
    %213 = arith.mulf %212, %210 : vector<2x64xf32>
    %214 = arith.mulf %201, %175 : vector<2x64xf32>
    %215 = arith.addf %213, %214 : vector<2x64xf32>
    %216 = vector.extract_strided_slice %215 {offsets = [0, 0], sizes = [2, 32], strides = [1, 1]} : vector<2x64xf32> to vector<2x32xf32>
    %c0_85 = arith.constant 0 : index
    %c1_86 = arith.constant 1 : index
    %c0_87 = arith.constant 0 : index
    %217 = vector.load %arg17[%c0_85, %c1_86, %c0_87] : memref<2x20x64xf32, #tpu.memory_space<vmem>>, vector<2x1x32xf32>
    %218 = vector.shape_cast %217 : vector<2x1x32xf32> to vector<2x32xf32>
    %219 = vector.shape_cast %216 : vector<2x32xf32> to vector<2x1x32xf32>
    tpu.vector_store %arg17[%c0_85, %c1_86, %c0_87], %219 {strides = array<i32>} : memref<2x20x64xf32, #tpu.memory_space<vmem>>, vector<2x1x32xf32>,
    %220 = vector.extract_strided_slice %215 {offsets = [0, 32], sizes = [2, 32], strides = [1, 1]} : vector<2x64xf32> to vector<2x32xf32>
    %c0_88 = arith.constant 0 : index
    %c18 = arith.constant 18 : index
    %c32_89 = arith.constant 32 : index
    %221 = vector.load %arg17[%c0_88, %c18, %c32_89] : memref<2x20x64xf32, #tpu.memory_space<vmem>>, vector<2x1x32xf32>
    %222 = vector.shape_cast %221 : vector<2x1x32xf32> to vector<2x32xf32>
    %223 = vector.shape_cast %220 : vector<2x32xf32> to vector<2x1x32xf32>
    tpu.vector_store %arg17[%c0_88, %c18, %c32_89], %223 {strides = array<i32>} : memref<2x20x64xf32, #tpu.memory_space<vmem>>, vector<2x1x32xf32>,
    %224 = vector.extract_strided_slice %139 {offsets = [4, 0], sizes = [2, 96], strides = [1, 1]} : vector<40x96xf32> to vector<2x96xf32>
    %225 = vector.extract_strided_slice %140 {offsets = [34, 0], sizes = [2, 96], strides = [1, 1]} : vector<40x96xf32> to vector<2x96xf32>
    %226 = tpu.concatenate %224, %225 in 1 : vector<2x96xf32>, vector<2x96xf32> -> vector<2x192xf32>
    %cst_90 = arith.constant dense<0.000000e+00> : vector<2x192xf32>
    %227 = tpu.matmul %215, %141, %cst_90 {dimension_numbers = #tpu.dot_dimension_numbers<[1], [0], [0], [1], [0, 0, 1, 1], [], []>} : vector<2x64xf32>, vector<64x192xf32>, vector<2x192xf32> -> vector<2x192xf32>
    %228 = vector.broadcast %142 : vector<1x192xf32> to vector<2x192xf32>
    %229 = arith.addf %227, %228 : vector<2x192xf32>
    %230 = arith.addf %226, %229 : vector<2x192xf32>
    %231 = arith.negf %230 : vector<2x192xf32>
    %232 = math.exp %231 : vector<2x192xf32>
    %cst_91 = arith.constant 1.000000e+00 : f32
    %233 = vector.broadcast %cst_91 : f32 to vector<2x192xf32>
    %234 = arith.addf %233, %232 : vector<2x192xf32>
    %235 = arith.divf %233, %234 : vector<2x192xf32>
    %236 = vector.extract_strided_slice %235 {offsets = [0, 0], sizes = [2, 32], strides = [1, 1]} : vector<2x192xf32> to vector<2x32xf32>
    %237 = vector.extract_strided_slice %235 {offsets = [0, 96], sizes = [2, 32], strides = [1, 1]} : vector<2x192xf32> to vector<2x32xf32>
    %238 = tpu.concatenate %236, %237 in 1 : vector<2x32xf32>, vector<2x32xf32> -> vector<2x64xf32>
    %239 = vector.extract_strided_slice %235 {offsets = [0, 32], sizes = [2, 32], strides = [1, 1]} : vector<2x192xf32> to vector<2x32xf32>
    %240 = vector.extract_strided_slice %235 {offsets = [0, 128], sizes = [2, 32], strides = [1, 1]} : vector<2x192xf32> to vector<2x32xf32>
    %241 = tpu.concatenate %239, %240 in 1 : vector<2x32xf32>, vector<2x32xf32> -> vector<2x64xf32>
    %242 = vector.extract_strided_slice %226 {offsets = [0, 64], sizes = [2, 32], strides = [1, 1]} : vector<2x192xf32> to vector<2x32xf32>
    %243 = vector.extract_strided_slice %226 {offsets = [0, 160], sizes = [2, 32], strides = [1, 1]} : vector<2x192xf32> to vector<2x32xf32>
    %244 = tpu.concatenate %242, %243 in 1 : vector<2x32xf32>, vector<2x32xf32> -> vector<2x64xf32>
    %245 = vector.extract_strided_slice %229 {offsets = [0, 64], sizes = [2, 32], strides = [1, 1]} : vector<2x192xf32> to vector<2x32xf32>
    %246 = vector.extract_strided_slice %229 {offsets = [0, 160], sizes = [2, 32], strides = [1, 1]} : vector<2x192xf32> to vector<2x32xf32>
    %247 = tpu.concatenate %245, %246 in 1 : vector<2x32xf32>, vector<2x32xf32> -> vector<2x64xf32>
    %248 = arith.mulf %238, %247 : vector<2x64xf32>
    %249 = arith.addf %244, %248 : vector<2x64xf32>
    %250 = math.tanh %249 : vector<2x64xf32>
    %cst_92 = arith.constant 1.000000e+00 : f32
    %251 = vector.broadcast %cst_92 : f32 to vector<2x64xf32>
    %252 = arith.subf %251, %241 : vector<2x64xf32>
    %253 = arith.mulf %252, %250 : vector<2x64xf32>
    %254 = arith.mulf %241, %215 : vector<2x64xf32>
    %255 = arith.addf %253, %254 : vector<2x64xf32>
    %256 = vector.extract_strided_slice %255 {offsets = [0, 0], sizes = [2, 32], strides = [1, 1]} : vector<2x64xf32> to vector<2x32xf32>
    %c0_93 = arith.constant 0 : index
    %c2 = arith.constant 2 : index
    %c0_94 = arith.constant 0 : index
    %257 = vector.load %arg17[%c0_93, %c2, %c0_94] : memref<2x20x64xf32, #tpu.memory_space<vmem>>, vector<2x1x32xf32>
    %258 = vector.shape_cast %257 : vector<2x1x32xf32> to vector<2x32xf32>
    %259 = vector.shape_cast %256 : vector<2x32xf32> to vector<2x1x32xf32>
    tpu.vector_store %arg17[%c0_93, %c2, %c0_94], %259 {strides = array<i32>} : memref<2x20x64xf32, #tpu.memory_space<vmem>>, vector<2x1x32xf32>,
    %260 = vector.extract_strided_slice %255 {offsets = [0, 32], sizes = [2, 32], strides = [1, 1]} : vector<2x64xf32> to vector<2x32xf32>
    %c0_95 = arith.constant 0 : index
    %c17 = arith.constant 17 : index
    %c32_96 = arith.constant 32 : index
    %261 = vector.load %arg17[%c0_95, %c17, %c32_96] : memref<2x20x64xf32, #tpu.memory_space<vmem>>, vector<2x1x32xf32>
    %262 = vector.shape_cast %261 : vector<2x1x32xf32> to vector<2x32xf32>
    %263 = vector.shape_cast %260 : vector<2x32xf32> to vector<2x1x32xf32>
    tpu.vector_store %arg17[%c0_95, %c17, %c32_96], %263 {strides = array<i32>} : memref<2x20x64xf32, #tpu.memory_space<vmem>>, vector<2x1x32xf32>,
    %264 = vector.extract_strided_slice %139 {offsets = [6, 0], sizes = [2, 96], strides = [1, 1]} : vector<40x96xf32> to vector<2x96xf32>
    %265 = vector.extract_strided_slice %140 {offsets = [32, 0], sizes = [2, 96], strides = [1, 1]} : vector<40x96xf32> to vector<2x96xf32>
    %266 = tpu.concatenate %264, %265 in 1 : vector<2x96xf32>, vector<2x96xf32> -> vector<2x192xf32>
    %cst_97 = arith.constant dense<0.000000e+00> : vector<2x192xf32>
    %267 = tpu.matmul %255, %141, %cst_97 {dimension_numbers = #tpu.dot_dimension_numbers<[1], [0], [0], [1], [0, 0, 1, 1], [], []>} : vector<2x64xf32>, vector<64x192xf32>, vector<2x192xf32> -> vector<2x192xf32>
    %268 = vector.broadcast %142 : vector<1x192xf32> to vector<2x192xf32>
    %269 = arith.addf %267, %268 : vector<2x192xf32>
    %270 = arith.addf %266, %269 : vector<2x192xf32>
    %271 = arith.negf %270 : vector<2x192xf32>
    %272 = math.exp %271 : vector<2x192xf32>
    %cst_98 = arith.constant 1.000000e+00 : f32
    %273 = vector.broadcast %cst_98 : f32 to vector<2x192xf32>
    %274 = arith.addf %273, %272 : vector<2x192xf32>
    %275 = arith.divf %273, %274 : vector<2x192xf32>
    %276 = vector.extract_strided_slice %275 {offsets = [0, 0], sizes = [2, 32], strides = [1, 1]} : vector<2x192xf32> to vector<2x32xf32>
    %277 = vector.extract_strided_slice %275 {offsets = [0, 96], sizes = [2, 32], strides = [1, 1]} : vector<2x192xf32> to vector<2x32xf32>
    %278 = tpu.concatenate %276, %277 in 1 : vector<2x32xf32>, vector<2x32xf32> -> vector<2x64xf32>
    %279 = vector.extract_strided_slice %275 {offsets = [0, 32], sizes = [2, 32], strides = [1, 1]} : vector<2x192xf32> to vector<2x32xf32>
    %280 = vector.extract_strided_slice %275 {offsets = [0, 128], sizes = [2, 32], strides = [1, 1]} : vector<2x192xf32> to vector<2x32xf32>
    %281 = tpu.concatenate %279, %280 in 1 : vector<2x32xf32>, vector<2x32xf32> -> vector<2x64xf32>
    %282 = vector.extract_strided_slice %266 {offsets = [0, 64], sizes = [2, 32], strides = [1, 1]} : vector<2x192xf32> to vector<2x32xf32>
    %283 = vector.extract_strided_slice %266 {offsets = [0, 160], sizes = [2, 32], strides = [1, 1]} : vector<2x192xf32> to vector<2x32xf32>
    %284 = tpu.concatenate %282, %283 in 1 : vector<2x32xf32>, vector<2x32xf32> -> vector<2x64xf32>
    %285 = vector.extract_strided_slice %269 {offsets = [0, 64], sizes = [2, 32], strides = [1, 1]} : vector<2x192xf32> to vector<2x32xf32>
    %286 = vector.extract_strided_slice %269 {offsets = [0, 160], sizes = [2, 32], strides = [1, 1]} : vector<2x192xf32> to vector<2x32xf32>
    %287 = tpu.concatenate %285, %286 in 1 : vector<2x32xf32>, vector<2x32xf32> -> vector<2x64xf32>
    %288 = arith.mulf %278, %287 : vector<2x64xf32>
    %289 = arith.addf %284, %288 : vector<2x64xf32>
    %290 = math.tanh %289 : vector<2x64xf32>
    %cst_99 = arith.constant 1.000000e+00 : f32
    %291 = vector.broadcast %cst_99 : f32 to vector<2x64xf32>
    %292 = arith.subf %291, %281 : vector<2x64xf32>
    %293 = arith.mulf %292, %290 : vector<2x64xf32>
    %294 = arith.mulf %281, %255 : vector<2x64xf32>
    %295 = arith.addf %293, %294 : vector<2x64xf32>
    %296 = vector.extract_strided_slice %295 {offsets = [0, 0], sizes = [2, 32], strides = [1, 1]} : vector<2x64xf32> to vector<2x32xf32>
    %c0_100 = arith.constant 0 : index
    %c3 = arith.constant 3 : index
    %c0_101 = arith.constant 0 : index
    %297 = vector.load %arg17[%c0_100, %c3, %c0_101] : memref<2x20x64xf32, #tpu.memory_space<vmem>>, vector<2x1x32xf32>
    %298 = vector.shape_cast %297 : vector<2x1x32xf32> to vector<2x32xf32>
    %299 = vector.shape_cast %296 : vector<2x32xf32> to vector<2x1x32xf32>
    tpu.vector_store %arg17[%c0_100, %c3, %c0_101], %299 {strides = array<i32>} : memref<2x20x64xf32, #tpu.memory_space<vmem>>, vector<2x1x32xf32>,
    %300 = vector.extract_strided_slice %295 {offsets = [0, 32], sizes = [2, 32], strides = [1, 1]} : vector<2x64xf32> to vector<2x32xf32>
    %c0_102 = arith.constant 0 : index
    %c16 = arith.constant 16 : index
    %c32_103 = arith.constant 32 : index
    %301 = vector.load %arg17[%c0_102, %c16, %c32_103] : memref<2x20x64xf32, #tpu.memory_space<vmem>>, vector<2x1x32xf32>
    %302 = vector.shape_cast %301 : vector<2x1x32xf32> to vector<2x32xf32>
    %303 = vector.shape_cast %300 : vector<2x32xf32> to vector<2x1x32xf32>
    tpu.vector_store %arg17[%c0_102, %c16, %c32_103], %303 {strides = array<i32>} : memref<2x20x64xf32, #tpu.memory_space<vmem>>, vector<2x1x32xf32>,
    %304 = vector.extract_strided_slice %139 {offsets = [8, 0], sizes = [2, 96], strides = [1, 1]} : vector<40x96xf32> to vector<2x96xf32>
    %305 = vector.extract_strided_slice %140 {offsets = [30, 0], sizes = [2, 96], strides = [1, 1]} : vector<40x96xf32> to vector<2x96xf32>
    %306 = tpu.concatenate %304, %305 in 1 : vector<2x96xf32>, vector<2x96xf32> -> vector<2x192xf32>
    %cst_104 = arith.constant dense<0.000000e+00> : vector<2x192xf32>
    %307 = tpu.matmul %295, %141, %cst_104 {dimension_numbers = #tpu.dot_dimension_numbers<[1], [0], [0], [1], [0, 0, 1, 1], [], []>} : vector<2x64xf32>, vector<64x192xf32>, vector<2x192xf32> -> vector<2x192xf32>
    %308 = vector.broadcast %142 : vector<1x192xf32> to vector<2x192xf32>
    %309 = arith.addf %307, %308 : vector<2x192xf32>
    %310 = arith.addf %306, %309 : vector<2x192xf32>
    %311 = arith.negf %310 : vector<2x192xf32>
    %312 = math.exp %311 : vector<2x192xf32>
    %cst_105 = arith.constant 1.000000e+00 : f32
    %313 = vector.broadcast %cst_105 : f32 to vector<2x192xf32>
    %314 = arith.addf %313, %312 : vector<2x192xf32>
    %315 = arith.divf %313, %314 : vector<2x192xf32>
    %316 = vector.extract_strided_slice %315 {offsets = [0, 0], sizes = [2, 32], strides = [1, 1]} : vector<2x192xf32> to vector<2x32xf32>
    %317 = vector.extract_strided_slice %315 {offsets = [0, 96], sizes = [2, 32], strides = [1, 1]} : vector<2x192xf32> to vector<2x32xf32>
    %318 = tpu.concatenate %316, %317 in 1 : vector<2x32xf32>, vector<2x32xf32> -> vector<2x64xf32>
    %319 = vector.extract_strided_slice %315 {offsets = [0, 32], sizes = [2, 32], strides = [1, 1]} : vector<2x192xf32> to vector<2x32xf32>
    %320 = vector.extract_strided_slice %315 {offsets = [0, 128], sizes = [2, 32], strides = [1, 1]} : vector<2x192xf32> to vector<2x32xf32>
    %321 = tpu.concatenate %319, %320 in 1 : vector<2x32xf32>, vector<2x32xf32> -> vector<2x64xf32>
    %322 = vector.extract_strided_slice %306 {offsets = [0, 64], sizes = [2, 32], strides = [1, 1]} : vector<2x192xf32> to vector<2x32xf32>
    %323 = vector.extract_strided_slice %306 {offsets = [0, 160], sizes = [2, 32], strides = [1, 1]} : vector<2x192xf32> to vector<2x32xf32>
    %324 = tpu.concatenate %322, %323 in 1 : vector<2x32xf32>, vector<2x32xf32> -> vector<2x64xf32>
    %325 = vector.extract_strided_slice %309 {offsets = [0, 64], sizes = [2, 32], strides = [1, 1]} : vector<2x192xf32> to vector<2x32xf32>
    %326 = vector.extract_strided_slice %309 {offsets = [0, 160], sizes = [2, 32], strides = [1, 1]} : vector<2x192xf32> to vector<2x32xf32>
    %327 = tpu.concatenate %325, %326 in 1 : vector<2x32xf32>, vector<2x32xf32> -> vector<2x64xf32>
    %328 = arith.mulf %318, %327 : vector<2x64xf32>
    %329 = arith.addf %324, %328 : vector<2x64xf32>
    %330 = math.tanh %329 : vector<2x64xf32>
    %cst_106 = arith.constant 1.000000e+00 : f32
    %331 = vector.broadcast %cst_106 : f32 to vector<2x64xf32>
    %332 = arith.subf %331, %321 : vector<2x64xf32>
    %333 = arith.mulf %332, %330 : vector<2x64xf32>
    %334 = arith.mulf %321, %295 : vector<2x64xf32>
    %335 = arith.addf %333, %334 : vector<2x64xf32>
    %336 = vector.extract_strided_slice %335 {offsets = [0, 0], sizes = [2, 32], strides = [1, 1]} : vector<2x64xf32> to vector<2x32xf32>
    %c0_107 = arith.constant 0 : index
    %c4 = arith.constant 4 : index
    %c0_108 = arith.constant 0 : index
    %337 = vector.load %arg17[%c0_107, %c4, %c0_108] : memref<2x20x64xf32, #tpu.memory_space<vmem>>, vector<2x1x32xf32>
    %338 = vector.shape_cast %337 : vector<2x1x32xf32> to vector<2x32xf32>
    %339 = vector.shape_cast %336 : vector<2x32xf32> to vector<2x1x32xf32>
    tpu.vector_store %arg17[%c0_107, %c4, %c0_108], %339 {strides = array<i32>} : memref<2x20x64xf32, #tpu.memory_space<vmem>>, vector<2x1x32xf32>,
    %340 = vector.extract_strided_slice %335 {offsets = [0, 32], sizes = [2, 32], strides = [1, 1]} : vector<2x64xf32> to vector<2x32xf32>
    %c0_109 = arith.constant 0 : index
    %c15 = arith.constant 15 : index
    %c32_110 = arith.constant 32 : index
    %341 = vector.load %arg17[%c0_109, %c15, %c32_110] : memref<2x20x64xf32, #tpu.memory_space<vmem>>, vector<2x1x32xf32>
    %342 = vector.shape_cast %341 : vector<2x1x32xf32> to vector<2x32xf32>
    %343 = vector.shape_cast %340 : vector<2x32xf32> to vector<2x1x32xf32>
    tpu.vector_store %arg17[%c0_109, %c15, %c32_110], %343 {strides = array<i32>} : memref<2x20x64xf32, #tpu.memory_space<vmem>>, vector<2x1x32xf32>,
    %344 = vector.extract_strided_slice %139 {offsets = [10, 0], sizes = [2, 96], strides = [1, 1]} : vector<40x96xf32> to vector<2x96xf32>
    %345 = vector.extract_strided_slice %140 {offsets = [28, 0], sizes = [2, 96], strides = [1, 1]} : vector<40x96xf32> to vector<2x96xf32>
    %346 = tpu.concatenate %344, %345 in 1 : vector<2x96xf32>, vector<2x96xf32> -> vector<2x192xf32>
    %cst_111 = arith.constant dense<0.000000e+00> : vector<2x192xf32>
    %347 = tpu.matmul %335, %141, %cst_111 {dimension_numbers = #tpu.dot_dimension_numbers<[1], [0], [0], [1], [0, 0, 1, 1], [], []>} : vector<2x64xf32>, vector<64x192xf32>, vector<2x192xf32> -> vector<2x192xf32>
    %348 = vector.broadcast %142 : vector<1x192xf32> to vector<2x192xf32>
    %349 = arith.addf %347, %348 : vector<2x192xf32>
    %350 = arith.addf %346, %349 : vector<2x192xf32>
    %351 = arith.negf %350 : vector<2x192xf32>
    %352 = math.exp %351 : vector<2x192xf32>
    %cst_112 = arith.constant 1.000000e+00 : f32
    %353 = vector.broadcast %cst_112 : f32 to vector<2x192xf32>
    %354 = arith.addf %353, %352 : vector<2x192xf32>
    %355 = arith.divf %353, %354 : vector<2x192xf32>
    %356 = vector.extract_strided_slice %355 {offsets = [0, 0], sizes = [2, 32], strides = [1, 1]} : vector<2x192xf32> to vector<2x32xf32>
    %357 = vector.extract_strided_slice %355 {offsets = [0, 96], sizes = [2, 32], strides = [1, 1]} : vector<2x192xf32> to vector<2x32xf32>
    %358 = tpu.concatenate %356, %357 in 1 : vector<2x32xf32>, vector<2x32xf32> -> vector<2x64xf32>
    %359 = vector.extract_strided_slice %355 {offsets = [0, 32], sizes = [2, 32], strides = [1, 1]} : vector<2x192xf32> to vector<2x32xf32>
    %360 = vector.extract_strided_slice %355 {offsets = [0, 128], sizes = [2, 32], strides = [1, 1]} : vector<2x192xf32> to vector<2x32xf32>
    %361 = tpu.concatenate %359, %360 in 1 : vector<2x32xf32>, vector<2x32xf32> -> vector<2x64xf32>
    %362 = vector.extract_strided_slice %346 {offsets = [0, 64], sizes = [2, 32], strides = [1, 1]} : vector<2x192xf32> to vector<2x32xf32>
    %363 = vector.extract_strided_slice %346 {offsets = [0, 160], sizes = [2, 32], strides = [1, 1]} : vector<2x192xf32> to vector<2x32xf32>
    %364 = tpu.concatenate %362, %363 in 1 : vector<2x32xf32>, vector<2x32xf32> -> vector<2x64xf32>
    %365 = vector.extract_strided_slice %349 {offsets = [0, 64], sizes = [2, 32], strides = [1, 1]} : vector<2x192xf32> to vector<2x32xf32>
    %366 = vector.extract_strided_slice %349 {offsets = [0, 160], sizes = [2, 32], strides = [1, 1]} : vector<2x192xf32> to vector<2x32xf32>
    %367 = tpu.concatenate %365, %366 in 1 : vector<2x32xf32>, vector<2x32xf32> -> vector<2x64xf32>
    %368 = arith.mulf %358, %367 : vector<2x64xf32>
    %369 = arith.addf %364, %368 : vector<2x64xf32>
    %370 = math.tanh %369 : vector<2x64xf32>
    %cst_113 = arith.constant 1.000000e+00 : f32
    %371 = vector.broadcast %cst_113 : f32 to vector<2x64xf32>
    %372 = arith.subf %371, %361 : vector<2x64xf32>
    %373 = arith.mulf %372, %370 : vector<2x64xf32>
    %374 = arith.mulf %361, %335 : vector<2x64xf32>
    %375 = arith.addf %373, %374 : vector<2x64xf32>
    %376 = vector.extract_strided_slice %375 {offsets = [0, 0], sizes = [2, 32], strides = [1, 1]} : vector<2x64xf32> to vector<2x32xf32>
    %c0_114 = arith.constant 0 : index
    %c5 = arith.constant 5 : index
    %c0_115 = arith.constant 0 : index
    %377 = vector.load %arg17[%c0_114, %c5, %c0_115] : memref<2x20x64xf32, #tpu.memory_space<vmem>>, vector<2x1x32xf32>
    %378 = vector.shape_cast %377 : vector<2x1x32xf32> to vector<2x32xf32>
    %379 = vector.shape_cast %376 : vector<2x32xf32> to vector<2x1x32xf32>
    tpu.vector_store %arg17[%c0_114, %c5, %c0_115], %379 {strides = array<i32>} : memref<2x20x64xf32, #tpu.memory_space<vmem>>, vector<2x1x32xf32>,
    %380 = vector.extract_strided_slice %375 {offsets = [0, 32], sizes = [2, 32], strides = [1, 1]} : vector<2x64xf32> to vector<2x32xf32>
    %c0_116 = arith.constant 0 : index
    %c14 = arith.constant 14 : index
    %c32_117 = arith.constant 32 : index
    %381 = vector.load %arg17[%c0_116, %c14, %c32_117] : memref<2x20x64xf32, #tpu.memory_space<vmem>>, vector<2x1x32xf32>
    %382 = vector.shape_cast %381 : vector<2x1x32xf32> to vector<2x32xf32>
    %383 = vector.shape_cast %380 : vector<2x32xf32> to vector<2x1x32xf32>
    tpu.vector_store %arg17[%c0_116, %c14, %c32_117], %383 {strides = array<i32>} : memref<2x20x64xf32, #tpu.memory_space<vmem>>, vector<2x1x32xf32>,
    %384 = vector.extract_strided_slice %139 {offsets = [12, 0], sizes = [2, 96], strides = [1, 1]} : vector<40x96xf32> to vector<2x96xf32>
    %385 = vector.extract_strided_slice %140 {offsets = [26, 0], sizes = [2, 96], strides = [1, 1]} : vector<40x96xf32> to vector<2x96xf32>
    %386 = tpu.concatenate %384, %385 in 1 : vector<2x96xf32>, vector<2x96xf32> -> vector<2x192xf32>
    %cst_118 = arith.constant dense<0.000000e+00> : vector<2x192xf32>
    %387 = tpu.matmul %375, %141, %cst_118 {dimension_numbers = #tpu.dot_dimension_numbers<[1], [0], [0], [1], [0, 0, 1, 1], [], []>} : vector<2x64xf32>, vector<64x192xf32>, vector<2x192xf32> -> vector<2x192xf32>
    %388 = vector.broadcast %142 : vector<1x192xf32> to vector<2x192xf32>
    %389 = arith.addf %387, %388 : vector<2x192xf32>
    %390 = arith.addf %386, %389 : vector<2x192xf32>
    %391 = arith.negf %390 : vector<2x192xf32>
    %392 = math.exp %391 : vector<2x192xf32>
    %cst_119 = arith.constant 1.000000e+00 : f32
    %393 = vector.broadcast %cst_119 : f32 to vector<2x192xf32>
    %394 = arith.addf %393, %392 : vector<2x192xf32>
    %395 = arith.divf %393, %394 : vector<2x192xf32>
    %396 = vector.extract_strided_slice %395 {offsets = [0, 0], sizes = [2, 32], strides = [1, 1]} : vector<2x192xf32> to vector<2x32xf32>
    %397 = vector.extract_strided_slice %395 {offsets = [0, 96], sizes = [2, 32], strides = [1, 1]} : vector<2x192xf32> to vector<2x32xf32>
    %398 = tpu.concatenate %396, %397 in 1 : vector<2x32xf32>, vector<2x32xf32> -> vector<2x64xf32>
    %399 = vector.extract_strided_slice %395 {offsets = [0, 32], sizes = [2, 32], strides = [1, 1]} : vector<2x192xf32> to vector<2x32xf32>
    %400 = vector.extract_strided_slice %395 {offsets = [0, 128], sizes = [2, 32], strides = [1, 1]} : vector<2x192xf32> to vector<2x32xf32>
    %401 = tpu.concatenate %399, %400 in 1 : vector<2x32xf32>, vector<2x32xf32> -> vector<2x64xf32>
    %402 = vector.extract_strided_slice %386 {offsets = [0, 64], sizes = [2, 32], strides = [1, 1]} : vector<2x192xf32> to vector<2x32xf32>
    %403 = vector.extract_strided_slice %386 {offsets = [0, 160], sizes = [2, 32], strides = [1, 1]} : vector<2x192xf32> to vector<2x32xf32>
    %404 = tpu.concatenate %402, %403 in 1 : vector<2x32xf32>, vector<2x32xf32> -> vector<2x64xf32>
    %405 = vector.extract_strided_slice %389 {offsets = [0, 64], sizes = [2, 32], strides = [1, 1]} : vector<2x192xf32> to vector<2x32xf32>
    %406 = vector.extract_strided_slice %389 {offsets = [0, 160], sizes = [2, 32], strides = [1, 1]} : vector<2x192xf32> to vector<2x32xf32>
    %407 = tpu.concatenate %405, %406 in 1 : vector<2x32xf32>, vector<2x32xf32> -> vector<2x64xf32>
    %408 = arith.mulf %398, %407 : vector<2x64xf32>
    %409 = arith.addf %404, %408 : vector<2x64xf32>
    %410 = math.tanh %409 : vector<2x64xf32>
    %cst_120 = arith.constant 1.000000e+00 : f32
    %411 = vector.broadcast %cst_120 : f32 to vector<2x64xf32>
    %412 = arith.subf %411, %401 : vector<2x64xf32>
    %413 = arith.mulf %412, %410 : vector<2x64xf32>
    %414 = arith.mulf %401, %375 : vector<2x64xf32>
    %415 = arith.addf %413, %414 : vector<2x64xf32>
    %416 = vector.extract_strided_slice %415 {offsets = [0, 0], sizes = [2, 32], strides = [1, 1]} : vector<2x64xf32> to vector<2x32xf32>
    %c0_121 = arith.constant 0 : index
    %c6 = arith.constant 6 : index
    %c0_122 = arith.constant 0 : index
    %417 = vector.load %arg17[%c0_121, %c6, %c0_122] : memref<2x20x64xf32, #tpu.memory_space<vmem>>, vector<2x1x32xf32>
    %418 = vector.shape_cast %417 : vector<2x1x32xf32> to vector<2x32xf32>
    %419 = vector.shape_cast %416 : vector<2x32xf32> to vector<2x1x32xf32>
    tpu.vector_store %arg17[%c0_121, %c6, %c0_122], %419 {strides = array<i32>} : memref<2x20x64xf32, #tpu.memory_space<vmem>>, vector<2x1x32xf32>,
    %420 = vector.extract_strided_slice %415 {offsets = [0, 32], sizes = [2, 32], strides = [1, 1]} : vector<2x64xf32> to vector<2x32xf32>
    %c0_123 = arith.constant 0 : index
    %c13 = arith.constant 13 : index
    %c32_124 = arith.constant 32 : index
    %421 = vector.load %arg17[%c0_123, %c13, %c32_124] : memref<2x20x64xf32, #tpu.memory_space<vmem>>, vector<2x1x32xf32>
    %422 = vector.shape_cast %421 : vector<2x1x32xf32> to vector<2x32xf32>
    %423 = vector.shape_cast %420 : vector<2x32xf32> to vector<2x1x32xf32>
    tpu.vector_store %arg17[%c0_123, %c13, %c32_124], %423 {strides = array<i32>} : memref<2x20x64xf32, #tpu.memory_space<vmem>>, vector<2x1x32xf32>,
    %424 = vector.extract_strided_slice %139 {offsets = [14, 0], sizes = [2, 96], strides = [1, 1]} : vector<40x96xf32> to vector<2x96xf32>
    %425 = vector.extract_strided_slice %140 {offsets = [24, 0], sizes = [2, 96], strides = [1, 1]} : vector<40x96xf32> to vector<2x96xf32>
    %426 = tpu.concatenate %424, %425 in 1 : vector<2x96xf32>, vector<2x96xf32> -> vector<2x192xf32>
    %cst_125 = arith.constant dense<0.000000e+00> : vector<2x192xf32>
    %427 = tpu.matmul %415, %141, %cst_125 {dimension_numbers = #tpu.dot_dimension_numbers<[1], [0], [0], [1], [0, 0, 1, 1], [], []>} : vector<2x64xf32>, vector<64x192xf32>, vector<2x192xf32> -> vector<2x192xf32>
    %428 = vector.broadcast %142 : vector<1x192xf32> to vector<2x192xf32>
    %429 = arith.addf %427, %428 : vector<2x192xf32>
    %430 = arith.addf %426, %429 : vector<2x192xf32>
    %431 = arith.negf %430 : vector<2x192xf32>
    %432 = math.exp %431 : vector<2x192xf32>
    %cst_126 = arith.constant 1.000000e+00 : f32
    %433 = vector.broadcast %cst_126 : f32 to vector<2x192xf32>
    %434 = arith.addf %433, %432 : vector<2x192xf32>
    %435 = arith.divf %433, %434 : vector<2x192xf32>
    %436 = vector.extract_strided_slice %435 {offsets = [0, 0], sizes = [2, 32], strides = [1, 1]} : vector<2x192xf32> to vector<2x32xf32>
    %437 = vector.extract_strided_slice %435 {offsets = [0, 96], sizes = [2, 32], strides = [1, 1]} : vector<2x192xf32> to vector<2x32xf32>
    %438 = tpu.concatenate %436, %437 in 1 : vector<2x32xf32>, vector<2x32xf32> -> vector<2x64xf32>
    %439 = vector.extract_strided_slice %435 {offsets = [0, 32], sizes = [2, 32], strides = [1, 1]} : vector<2x192xf32> to vector<2x32xf32>
    %440 = vector.extract_strided_slice %435 {offsets = [0, 128], sizes = [2, 32], strides = [1, 1]} : vector<2x192xf32> to vector<2x32xf32>
    %441 = tpu.concatenate %439, %440 in 1 : vector<2x32xf32>, vector<2x32xf32> -> vector<2x64xf32>
    %442 = vector.extract_strided_slice %426 {offsets = [0, 64], sizes = [2, 32], strides = [1, 1]} : vector<2x192xf32> to vector<2x32xf32>
    %443 = vector.extract_strided_slice %426 {offsets = [0, 160], sizes = [2, 32], strides = [1, 1]} : vector<2x192xf32> to vector<2x32xf32>
    %444 = tpu.concatenate %442, %443 in 1 : vector<2x32xf32>, vector<2x32xf32> -> vector<2x64xf32>
    %445 = vector.extract_strided_slice %429 {offsets = [0, 64], sizes = [2, 32], strides = [1, 1]} : vector<2x192xf32> to vector<2x32xf32>
    %446 = vector.extract_strided_slice %429 {offsets = [0, 160], sizes = [2, 32], strides = [1, 1]} : vector<2x192xf32> to vector<2x32xf32>
    %447 = tpu.concatenate %445, %446 in 1 : vector<2x32xf32>, vector<2x32xf32> -> vector<2x64xf32>
    %448 = arith.mulf %438, %447 : vector<2x64xf32>
    %449 = arith.addf %444, %448 : vector<2x64xf32>
    %450 = math.tanh %449 : vector<2x64xf32>
    %cst_127 = arith.constant 1.000000e+00 : f32
    %451 = vector.broadcast %cst_127 : f32 to vector<2x64xf32>
    %452 = arith.subf %451, %441 : vector<2x64xf32>
    %453 = arith.mulf %452, %450 : vector<2x64xf32>
    %454 = arith.mulf %441, %415 : vector<2x64xf32>
    %455 = arith.addf %453, %454 : vector<2x64xf32>
    %456 = vector.extract_strided_slice %455 {offsets = [0, 0], sizes = [2, 32], strides = [1, 1]} : vector<2x64xf32> to vector<2x32xf32>
    %c0_128 = arith.constant 0 : index
    %c7 = arith.constant 7 : index
    %c0_129 = arith.constant 0 : index
    %457 = vector.load %arg17[%c0_128, %c7, %c0_129] : memref<2x20x64xf32, #tpu.memory_space<vmem>>, vector<2x1x32xf32>
    %458 = vector.shape_cast %457 : vector<2x1x32xf32> to vector<2x32xf32>
    %459 = vector.shape_cast %456 : vector<2x32xf32> to vector<2x1x32xf32>
    tpu.vector_store %arg17[%c0_128, %c7, %c0_129], %459 {strides = array<i32>} : memref<2x20x64xf32, #tpu.memory_space<vmem>>, vector<2x1x32xf32>,
    %460 = vector.extract_strided_slice %455 {offsets = [0, 32], sizes = [2, 32], strides = [1, 1]} : vector<2x64xf32> to vector<2x32xf32>
    %c0_130 = arith.constant 0 : index
    %c12 = arith.constant 12 : index
    %c32_131 = arith.constant 32 : index
    %461 = vector.load %arg17[%c0_130, %c12, %c32_131] : memref<2x20x64xf32, #tpu.memory_space<vmem>>, vector<2x1x32xf32>
    %462 = vector.shape_cast %461 : vector<2x1x32xf32> to vector<2x32xf32>
    %463 = vector.shape_cast %460 : vector<2x32xf32> to vector<2x1x32xf32>
    tpu.vector_store %arg17[%c0_130, %c12, %c32_131], %463 {strides = array<i32>} : memref<2x20x64xf32, #tpu.memory_space<vmem>>, vector<2x1x32xf32>,
    %464 = vector.extract_strided_slice %139 {offsets = [16, 0], sizes = [2, 96], strides = [1, 1]} : vector<40x96xf32> to vector<2x96xf32>
    %465 = vector.extract_strided_slice %140 {offsets = [22, 0], sizes = [2, 96], strides = [1, 1]} : vector<40x96xf32> to vector<2x96xf32>
    %466 = tpu.concatenate %464, %465 in 1 : vector<2x96xf32>, vector<2x96xf32> -> vector<2x192xf32>
    %cst_132 = arith.constant dense<0.000000e+00> : vector<2x192xf32>
    %467 = tpu.matmul %455, %141, %cst_132 {dimension_numbers = #tpu.dot_dimension_numbers<[1], [0], [0], [1], [0, 0, 1, 1], [], []>} : vector<2x64xf32>, vector<64x192xf32>, vector<2x192xf32> -> vector<2x192xf32>
    %468 = vector.broadcast %142 : vector<1x192xf32> to vector<2x192xf32>
    %469 = arith.addf %467, %468 : vector<2x192xf32>
    %470 = arith.addf %466, %469 : vector<2x192xf32>
    %471 = arith.negf %470 : vector<2x192xf32>
    %472 = math.exp %471 : vector<2x192xf32>
    %cst_133 = arith.constant 1.000000e+00 : f32
    %473 = vector.broadcast %cst_133 : f32 to vector<2x192xf32>
    %474 = arith.addf %473, %472 : vector<2x192xf32>
    %475 = arith.divf %473, %474 : vector<2x192xf32>
    %476 = vector.extract_strided_slice %475 {offsets = [0, 0], sizes = [2, 32], strides = [1, 1]} : vector<2x192xf32> to vector<2x32xf32>
    %477 = vector.extract_strided_slice %475 {offsets = [0, 96], sizes = [2, 32], strides = [1, 1]} : vector<2x192xf32> to vector<2x32xf32>
    %478 = tpu.concatenate %476, %477 in 1 : vector<2x32xf32>, vector<2x32xf32> -> vector<2x64xf32>
    %479 = vector.extract_strided_slice %475 {offsets = [0, 32], sizes = [2, 32], strides = [1, 1]} : vector<2x192xf32> to vector<2x32xf32>
    %480 = vector.extract_strided_slice %475 {offsets = [0, 128], sizes = [2, 32], strides = [1, 1]} : vector<2x192xf32> to vector<2x32xf32>
    %481 = tpu.concatenate %479, %480 in 1 : vector<2x32xf32>, vector<2x32xf32> -> vector<2x64xf32>
    %482 = vector.extract_strided_slice %466 {offsets = [0, 64], sizes = [2, 32], strides = [1, 1]} : vector<2x192xf32> to vector<2x32xf32>
    %483 = vector.extract_strided_slice %466 {offsets = [0, 160], sizes = [2, 32], strides = [1, 1]} : vector<2x192xf32> to vector<2x32xf32>
    %484 = tpu.concatenate %482, %483 in 1 : vector<2x32xf32>, vector<2x32xf32> -> vector<2x64xf32>
    %485 = vector.extract_strided_slice %469 {offsets = [0, 64], sizes = [2, 32], strides = [1, 1]} : vector<2x192xf32> to vector<2x32xf32>
    %486 = vector.extract_strided_slice %469 {offsets = [0, 160], sizes = [2, 32], strides = [1, 1]} : vector<2x192xf32> to vector<2x32xf32>
    %487 = tpu.concatenate %485, %486 in 1 : vector<2x32xf32>, vector<2x32xf32> -> vector<2x64xf32>
    %488 = arith.mulf %478, %487 : vector<2x64xf32>
    %489 = arith.addf %484, %488 : vector<2x64xf32>
    %490 = math.tanh %489 : vector<2x64xf32>
    %cst_134 = arith.constant 1.000000e+00 : f32
    %491 = vector.broadcast %cst_134 : f32 to vector<2x64xf32>
    %492 = arith.subf %491, %481 : vector<2x64xf32>
    %493 = arith.mulf %492, %490 : vector<2x64xf32>
    %494 = arith.mulf %481, %455 : vector<2x64xf32>
    %495 = arith.addf %493, %494 : vector<2x64xf32>
    %496 = vector.extract_strided_slice %495 {offsets = [0, 0], sizes = [2, 32], strides = [1, 1]} : vector<2x64xf32> to vector<2x32xf32>
    %c0_135 = arith.constant 0 : index
    %c8 = arith.constant 8 : index
    %c0_136 = arith.constant 0 : index
    %497 = vector.load %arg17[%c0_135, %c8, %c0_136] : memref<2x20x64xf32, #tpu.memory_space<vmem>>, vector<2x1x32xf32>
    %498 = vector.shape_cast %497 : vector<2x1x32xf32> to vector<2x32xf32>
    %499 = vector.shape_cast %496 : vector<2x32xf32> to vector<2x1x32xf32>
    tpu.vector_store %arg17[%c0_135, %c8, %c0_136], %499 {strides = array<i32>} : memref<2x20x64xf32, #tpu.memory_space<vmem>>, vector<2x1x32xf32>,
    %500 = vector.extract_strided_slice %495 {offsets = [0, 32], sizes = [2, 32], strides = [1, 1]} : vector<2x64xf32> to vector<2x32xf32>
    %c0_137 = arith.constant 0 : index
    %c11 = arith.constant 11 : index
    %c32_138 = arith.constant 32 : index
    %501 = vector.load %arg17[%c0_137, %c11, %c32_138] : memref<2x20x64xf32, #tpu.memory_space<vmem>>, vector<2x1x32xf32>
    %502 = vector.shape_cast %501 : vector<2x1x32xf32> to vector<2x32xf32>
    %503 = vector.shape_cast %500 : vector<2x32xf32> to vector<2x1x32xf32>
    tpu.vector_store %arg17[%c0_137, %c11, %c32_138], %503 {strides = array<i32>} : memref<2x20x64xf32, #tpu.memory_space<vmem>>, vector<2x1x32xf32>,
    %504 = vector.extract_strided_slice %139 {offsets = [18, 0], sizes = [2, 96], strides = [1, 1]} : vector<40x96xf32> to vector<2x96xf32>
    %505 = vector.extract_strided_slice %140 {offsets = [20, 0], sizes = [2, 96], strides = [1, 1]} : vector<40x96xf32> to vector<2x96xf32>
    %506 = tpu.concatenate %504, %505 in 1 : vector<2x96xf32>, vector<2x96xf32> -> vector<2x192xf32>
    %cst_139 = arith.constant dense<0.000000e+00> : vector<2x192xf32>
    %507 = tpu.matmul %495, %141, %cst_139 {dimension_numbers = #tpu.dot_dimension_numbers<[1], [0], [0], [1], [0, 0, 1, 1], [], []>} : vector<2x64xf32>, vector<64x192xf32>, vector<2x192xf32> -> vector<2x192xf32>
    %508 = vector.broadcast %142 : vector<1x192xf32> to vector<2x192xf32>
    %509 = arith.addf %507, %508 : vector<2x192xf32>
    %510 = arith.addf %506, %509 : vector<2x192xf32>
    %511 = arith.negf %510 : vector<2x192xf32>
    %512 = math.exp %511 : vector<2x192xf32>
    %cst_140 = arith.constant 1.000000e+00 : f32
    %513 = vector.broadcast %cst_140 : f32 to vector<2x192xf32>
    %514 = arith.addf %513, %512 : vector<2x192xf32>
    %515 = arith.divf %513, %514 : vector<2x192xf32>
    %516 = vector.extract_strided_slice %515 {offsets = [0, 0], sizes = [2, 32], strides = [1, 1]} : vector<2x192xf32> to vector<2x32xf32>
    %517 = vector.extract_strided_slice %515 {offsets = [0, 96], sizes = [2, 32], strides = [1, 1]} : vector<2x192xf32> to vector<2x32xf32>
    %518 = tpu.concatenate %516, %517 in 1 : vector<2x32xf32>, vector<2x32xf32> -> vector<2x64xf32>
    %519 = vector.extract_strided_slice %515 {offsets = [0, 32], sizes = [2, 32], strides = [1, 1]} : vector<2x192xf32> to vector<2x32xf32>
    %520 = vector.extract_strided_slice %515 {offsets = [0, 128], sizes = [2, 32], strides = [1, 1]} : vector<2x192xf32> to vector<2x32xf32>
    %521 = tpu.concatenate %519, %520 in 1 : vector<2x32xf32>, vector<2x32xf32> -> vector<2x64xf32>
    %522 = vector.extract_strided_slice %506 {offsets = [0, 64], sizes = [2, 32], strides = [1, 1]} : vector<2x192xf32> to vector<2x32xf32>
    %523 = vector.extract_strided_slice %506 {offsets = [0, 160], sizes = [2, 32], strides = [1, 1]} : vector<2x192xf32> to vector<2x32xf32>
    %524 = tpu.concatenate %522, %523 in 1 : vector<2x32xf32>, vector<2x32xf32> -> vector<2x64xf32>
    %525 = vector.extract_strided_slice %509 {offsets = [0, 64], sizes = [2, 32], strides = [1, 1]} : vector<2x192xf32> to vector<2x32xf32>
    %526 = vector.extract_strided_slice %509 {offsets = [0, 160], sizes = [2, 32], strides = [1, 1]} : vector<2x192xf32> to vector<2x32xf32>
    %527 = tpu.concatenate %525, %526 in 1 : vector<2x32xf32>, vector<2x32xf32> -> vector<2x64xf32>
    %528 = arith.mulf %518, %527 : vector<2x64xf32>
    %529 = arith.addf %524, %528 : vector<2x64xf32>
    %530 = math.tanh %529 : vector<2x64xf32>
    %cst_141 = arith.constant 1.000000e+00 : f32
    %531 = vector.broadcast %cst_141 : f32 to vector<2x64xf32>
    %532 = arith.subf %531, %521 : vector<2x64xf32>
    %533 = arith.mulf %532, %530 : vector<2x64xf32>
    %534 = arith.mulf %521, %495 : vector<2x64xf32>
    %535 = arith.addf %533, %534 : vector<2x64xf32>
    %536 = vector.extract_strided_slice %535 {offsets = [0, 0], sizes = [2, 32], strides = [1, 1]} : vector<2x64xf32> to vector<2x32xf32>
    %c0_142 = arith.constant 0 : index
    %c9 = arith.constant 9 : index
    %c0_143 = arith.constant 0 : index
    %537 = vector.load %arg17[%c0_142, %c9, %c0_143] : memref<2x20x64xf32, #tpu.memory_space<vmem>>, vector<2x1x32xf32>
    %538 = vector.shape_cast %537 : vector<2x1x32xf32> to vector<2x32xf32>
    %539 = vector.shape_cast %536 : vector<2x32xf32> to vector<2x1x32xf32>
    tpu.vector_store %arg17[%c0_142, %c9, %c0_143], %539 {strides = array<i32>} : memref<2x20x64xf32, #tpu.memory_space<vmem>>, vector<2x1x32xf32>,
    %540 = vector.extract_strided_slice %535 {offsets = [0, 32], sizes = [2, 32], strides = [1, 1]} : vector<2x64xf32> to vector<2x32xf32>
    %c0_144 = arith.constant 0 : index
    %c10 = arith.constant 10 : index
    %c32_145 = arith.constant 32 : index
    %541 = vector.load %arg17[%c0_144, %c10, %c32_145] : memref<2x20x64xf32, #tpu.memory_space<vmem>>, vector<2x1x32xf32>
    %542 = vector.shape_cast %541 : vector<2x1x32xf32> to vector<2x32xf32>
    %543 = vector.shape_cast %540 : vector<2x32xf32> to vector<2x1x32xf32>
    tpu.vector_store %arg17[%c0_144, %c10, %c32_145], %543 {strides = array<i32>} : memref<2x20x64xf32, #tpu.memory_space<vmem>>, vector<2x1x32xf32>,
    %544 = vector.extract_strided_slice %139 {offsets = [20, 0], sizes = [2, 96], strides = [1, 1]} : vector<40x96xf32> to vector<2x96xf32>
    %545 = vector.extract_strided_slice %140 {offsets = [18, 0], sizes = [2, 96], strides = [1, 1]} : vector<40x96xf32> to vector<2x96xf32>
    %546 = tpu.concatenate %544, %545 in 1 : vector<2x96xf32>, vector<2x96xf32> -> vector<2x192xf32>
    %cst_146 = arith.constant dense<0.000000e+00> : vector<2x192xf32>
    %547 = tpu.matmul %535, %141, %cst_146 {dimension_numbers = #tpu.dot_dimension_numbers<[1], [0], [0], [1], [0, 0, 1, 1], [], []>} : vector<2x64xf32>, vector<64x192xf32>, vector<2x192xf32> -> vector<2x192xf32>
    %548 = vector.broadcast %142 : vector<1x192xf32> to vector<2x192xf32>
    %549 = arith.addf %547, %548 : vector<2x192xf32>
    %550 = arith.addf %546, %549 : vector<2x192xf32>
    %551 = arith.negf %550 : vector<2x192xf32>
    %552 = math.exp %551 : vector<2x192xf32>
    %cst_147 = arith.constant 1.000000e+00 : f32
    %553 = vector.broadcast %cst_147 : f32 to vector<2x192xf32>
    %554 = arith.addf %553, %552 : vector<2x192xf32>
    %555 = arith.divf %553, %554 : vector<2x192xf32>
    %556 = vector.extract_strided_slice %555 {offsets = [0, 0], sizes = [2, 32], strides = [1, 1]} : vector<2x192xf32> to vector<2x32xf32>
    %557 = vector.extract_strided_slice %555 {offsets = [0, 96], sizes = [2, 32], strides = [1, 1]} : vector<2x192xf32> to vector<2x32xf32>
    %558 = tpu.concatenate %556, %557 in 1 : vector<2x32xf32>, vector<2x32xf32> -> vector<2x64xf32>
    %559 = vector.extract_strided_slice %555 {offsets = [0, 32], sizes = [2, 32], strides = [1, 1]} : vector<2x192xf32> to vector<2x32xf32>
    %560 = vector.extract_strided_slice %555 {offsets = [0, 128], sizes = [2, 32], strides = [1, 1]} : vector<2x192xf32> to vector<2x32xf32>
    %561 = tpu.concatenate %559, %560 in 1 : vector<2x32xf32>, vector<2x32xf32> -> vector<2x64xf32>
    %562 = vector.extract_strided_slice %546 {offsets = [0, 64], sizes = [2, 32], strides = [1, 1]} : vector<2x192xf32> to vector<2x32xf32>
    %563 = vector.extract_strided_slice %546 {offsets = [0, 160], sizes = [2, 32], strides = [1, 1]} : vector<2x192xf32> to vector<2x32xf32>
    %564 = tpu.concatenate %562, %563 in 1 : vector<2x32xf32>, vector<2x32xf32> -> vector<2x64xf32>
    %565 = vector.extract_strided_slice %549 {offsets = [0, 64], sizes = [2, 32], strides = [1, 1]} : vector<2x192xf32> to vector<2x32xf32>
    %566 = vector.extract_strided_slice %549 {offsets = [0, 160], sizes = [2, 32], strides = [1, 1]} : vector<2x192xf32> to vector<2x32xf32>
    %567 = tpu.concatenate %565, %566 in 1 : vector<2x32xf32>, vector<2x32xf32> -> vector<2x64xf32>
    %568 = arith.mulf %558, %567 : vector<2x64xf32>
    %569 = arith.addf %564, %568 : vector<2x64xf32>
    %570 = math.tanh %569 : vector<2x64xf32>
    %cst_148 = arith.constant 1.000000e+00 : f32
    %571 = vector.broadcast %cst_148 : f32 to vector<2x64xf32>
    %572 = arith.subf %571, %561 : vector<2x64xf32>
    %573 = arith.mulf %572, %570 : vector<2x64xf32>
    %574 = arith.mulf %561, %535 : vector<2x64xf32>
    %575 = arith.addf %573, %574 : vector<2x64xf32>
    %576 = vector.extract_strided_slice %575 {offsets = [0, 0], sizes = [2, 32], strides = [1, 1]} : vector<2x64xf32> to vector<2x32xf32>
    %c0_149 = arith.constant 0 : index
    %c10_150 = arith.constant 10 : index
    %c0_151 = arith.constant 0 : index
    %577 = vector.load %arg17[%c0_149, %c10_150, %c0_151] : memref<2x20x64xf32, #tpu.memory_space<vmem>>, vector<2x1x32xf32>
    %578 = vector.shape_cast %577 : vector<2x1x32xf32> to vector<2x32xf32>
    %579 = vector.shape_cast %576 : vector<2x32xf32> to vector<2x1x32xf32>
    tpu.vector_store %arg17[%c0_149, %c10_150, %c0_151], %579 {strides = array<i32>} : memref<2x20x64xf32, #tpu.memory_space<vmem>>, vector<2x1x32xf32>,
    %580 = vector.extract_strided_slice %575 {offsets = [0, 32], sizes = [2, 32], strides = [1, 1]} : vector<2x64xf32> to vector<2x32xf32>
    %c0_152 = arith.constant 0 : index
    %c9_153 = arith.constant 9 : index
    %c32_154 = arith.constant 32 : index
    %581 = vector.load %arg17[%c0_152, %c9_153, %c32_154] : memref<2x20x64xf32, #tpu.memory_space<vmem>>, vector<2x1x32xf32>
    %582 = vector.shape_cast %581 : vector<2x1x32xf32> to vector<2x32xf32>
    %583 = vector.shape_cast %580 : vector<2x32xf32> to vector<2x1x32xf32>
    tpu.vector_store %arg17[%c0_152, %c9_153, %c32_154], %583 {strides = array<i32>} : memref<2x20x64xf32, #tpu.memory_space<vmem>>, vector<2x1x32xf32>,
    %584 = vector.extract_strided_slice %139 {offsets = [22, 0], sizes = [2, 96], strides = [1, 1]} : vector<40x96xf32> to vector<2x96xf32>
    %585 = vector.extract_strided_slice %140 {offsets = [16, 0], sizes = [2, 96], strides = [1, 1]} : vector<40x96xf32> to vector<2x96xf32>
    %586 = tpu.concatenate %584, %585 in 1 : vector<2x96xf32>, vector<2x96xf32> -> vector<2x192xf32>
    %cst_155 = arith.constant dense<0.000000e+00> : vector<2x192xf32>
    %587 = tpu.matmul %575, %141, %cst_155 {dimension_numbers = #tpu.dot_dimension_numbers<[1], [0], [0], [1], [0, 0, 1, 1], [], []>} : vector<2x64xf32>, vector<64x192xf32>, vector<2x192xf32> -> vector<2x192xf32>
    %588 = vector.broadcast %142 : vector<1x192xf32> to vector<2x192xf32>
    %589 = arith.addf %587, %588 : vector<2x192xf32>
    %590 = arith.addf %586, %589 : vector<2x192xf32>
    %591 = arith.negf %590 : vector<2x192xf32>
    %592 = math.exp %591 : vector<2x192xf32>
    %cst_156 = arith.constant 1.000000e+00 : f32
    %593 = vector.broadcast %cst_156 : f32 to vector<2x192xf32>
    %594 = arith.addf %593, %592 : vector<2x192xf32>
    %595 = arith.divf %593, %594 : vector<2x192xf32>
    %596 = vector.extract_strided_slice %595 {offsets = [0, 0], sizes = [2, 32], strides = [1, 1]} : vector<2x192xf32> to vector<2x32xf32>
    %597 = vector.extract_strided_slice %595 {offsets = [0, 96], sizes = [2, 32], strides = [1, 1]} : vector<2x192xf32> to vector<2x32xf32>
    %598 = tpu.concatenate %596, %597 in 1 : vector<2x32xf32>, vector<2x32xf32> -> vector<2x64xf32>
    %599 = vector.extract_strided_slice %595 {offsets = [0, 32], sizes = [2, 32], strides = [1, 1]} : vector<2x192xf32> to vector<2x32xf32>
    %600 = vector.extract_strided_slice %595 {offsets = [0, 128], sizes = [2, 32], strides = [1, 1]} : vector<2x192xf32> to vector<2x32xf32>
    %601 = tpu.concatenate %599, %600 in 1 : vector<2x32xf32>, vector<2x32xf32> -> vector<2x64xf32>
    %602 = vector.extract_strided_slice %586 {offsets = [0, 64], sizes = [2, 32], strides = [1, 1]} : vector<2x192xf32> to vector<2x32xf32>
    %603 = vector.extract_strided_slice %586 {offsets = [0, 160], sizes = [2, 32], strides = [1, 1]} : vector<2x192xf32> to vector<2x32xf32>
    %604 = tpu.concatenate %602, %603 in 1 : vector<2x32xf32>, vector<2x32xf32> -> vector<2x64xf32>
    %605 = vector.extract_strided_slice %589 {offsets = [0, 64], sizes = [2, 32], strides = [1, 1]} : vector<2x192xf32> to vector<2x32xf32>
    %606 = vector.extract_strided_slice %589 {offsets = [0, 160], sizes = [2, 32], strides = [1, 1]} : vector<2x192xf32> to vector<2x32xf32>
    %607 = tpu.concatenate %605, %606 in 1 : vector<2x32xf32>, vector<2x32xf32> -> vector<2x64xf32>
    %608 = arith.mulf %598, %607 : vector<2x64xf32>
    %609 = arith.addf %604, %608 : vector<2x64xf32>
    %610 = math.tanh %609 : vector<2x64xf32>
    %cst_157 = arith.constant 1.000000e+00 : f32
    %611 = vector.broadcast %cst_157 : f32 to vector<2x64xf32>
    %612 = arith.subf %611, %601 : vector<2x64xf32>
    %613 = arith.mulf %612, %610 : vector<2x64xf32>
    %614 = arith.mulf %601, %575 : vector<2x64xf32>
    %615 = arith.addf %613, %614 : vector<2x64xf32>
    %616 = vector.extract_strided_slice %615 {offsets = [0, 0], sizes = [2, 32], strides = [1, 1]} : vector<2x64xf32> to vector<2x32xf32>
    %c0_158 = arith.constant 0 : index
    %c11_159 = arith.constant 11 : index
    %c0_160 = arith.constant 0 : index
    %617 = vector.load %arg17[%c0_158, %c11_159, %c0_160] : memref<2x20x64xf32, #tpu.memory_space<vmem>>, vector<2x1x32xf32>
    %618 = vector.shape_cast %617 : vector<2x1x32xf32> to vector<2x32xf32>
    %619 = vector.shape_cast %616 : vector<2x32xf32> to vector<2x1x32xf32>
    tpu.vector_store %arg17[%c0_158, %c11_159, %c0_160], %619 {strides = array<i32>} : memref<2x20x64xf32, #tpu.memory_space<vmem>>, vector<2x1x32xf32>,
    %620 = vector.extract_strided_slice %615 {offsets = [0, 32], sizes = [2, 32], strides = [1, 1]} : vector<2x64xf32> to vector<2x32xf32>
    %c0_161 = arith.constant 0 : index
    %c8_162 = arith.constant 8 : index
    %c32_163 = arith.constant 32 : index
    %621 = vector.load %arg17[%c0_161, %c8_162, %c32_163] : memref<2x20x64xf32, #tpu.memory_space<vmem>>, vector<2x1x32xf32>
    %622 = vector.shape_cast %621 : vector<2x1x32xf32> to vector<2x32xf32>
    %623 = vector.shape_cast %620 : vector<2x32xf32> to vector<2x1x32xf32>
    tpu.vector_store %arg17[%c0_161, %c8_162, %c32_163], %623 {strides = array<i32>} : memref<2x20x64xf32, #tpu.memory_space<vmem>>, vector<2x1x32xf32>,
    %624 = vector.extract_strided_slice %139 {offsets = [24, 0], sizes = [2, 96], strides = [1, 1]} : vector<40x96xf32> to vector<2x96xf32>
    %625 = vector.extract_strided_slice %140 {offsets = [14, 0], sizes = [2, 96], strides = [1, 1]} : vector<40x96xf32> to vector<2x96xf32>
    %626 = tpu.concatenate %624, %625 in 1 : vector<2x96xf32>, vector<2x96xf32> -> vector<2x192xf32>
    %cst_164 = arith.constant dense<0.000000e+00> : vector<2x192xf32>
    %627 = tpu.matmul %615, %141, %cst_164 {dimension_numbers = #tpu.dot_dimension_numbers<[1], [0], [0], [1], [0, 0, 1, 1], [], []>} : vector<2x64xf32>, vector<64x192xf32>, vector<2x192xf32> -> vector<2x192xf32>
    %628 = vector.broadcast %142 : vector<1x192xf32> to vector<2x192xf32>
    %629 = arith.addf %627, %628 : vector<2x192xf32>
    %630 = arith.addf %626, %629 : vector<2x192xf32>
    %631 = arith.negf %630 : vector<2x192xf32>
    %632 = math.exp %631 : vector<2x192xf32>
    %cst_165 = arith.constant 1.000000e+00 : f32
    %633 = vector.broadcast %cst_165 : f32 to vector<2x192xf32>
    %634 = arith.addf %633, %632 : vector<2x192xf32>
    %635 = arith.divf %633, %634 : vector<2x192xf32>
    %636 = vector.extract_strided_slice %635 {offsets = [0, 0], sizes = [2, 32], strides = [1, 1]} : vector<2x192xf32> to vector<2x32xf32>
    %637 = vector.extract_strided_slice %635 {offsets = [0, 96], sizes = [2, 32], strides = [1, 1]} : vector<2x192xf32> to vector<2x32xf32>
    %638 = tpu.concatenate %636, %637 in 1 : vector<2x32xf32>, vector<2x32xf32> -> vector<2x64xf32>
    %639 = vector.extract_strided_slice %635 {offsets = [0, 32], sizes = [2, 32], strides = [1, 1]} : vector<2x192xf32> to vector<2x32xf32>
    %640 = vector.extract_strided_slice %635 {offsets = [0, 128], sizes = [2, 32], strides = [1, 1]} : vector<2x192xf32> to vector<2x32xf32>
    %641 = tpu.concatenate %639, %640 in 1 : vector<2x32xf32>, vector<2x32xf32> -> vector<2x64xf32>
    %642 = vector.extract_strided_slice %626 {offsets = [0, 64], sizes = [2, 32], strides = [1, 1]} : vector<2x192xf32> to vector<2x32xf32>
    %643 = vector.extract_strided_slice %626 {offsets = [0, 160], sizes = [2, 32], strides = [1, 1]} : vector<2x192xf32> to vector<2x32xf32>
    %644 = tpu.concatenate %642, %643 in 1 : vector<2x32xf32>, vector<2x32xf32> -> vector<2x64xf32>
    %645 = vector.extract_strided_slice %629 {offsets = [0, 64], sizes = [2, 32], strides = [1, 1]} : vector<2x192xf32> to vector<2x32xf32>
    %646 = vector.extract_strided_slice %629 {offsets = [0, 160], sizes = [2, 32], strides = [1, 1]} : vector<2x192xf32> to vector<2x32xf32>
    %647 = tpu.concatenate %645, %646 in 1 : vector<2x32xf32>, vector<2x32xf32> -> vector<2x64xf32>
    %648 = arith.mulf %638, %647 : vector<2x64xf32>
    %649 = arith.addf %644, %648 : vector<2x64xf32>
    %650 = math.tanh %649 : vector<2x64xf32>
    %cst_166 = arith.constant 1.000000e+00 : f32
    %651 = vector.broadcast %cst_166 : f32 to vector<2x64xf32>
    %652 = arith.subf %651, %641 : vector<2x64xf32>
    %653 = arith.mulf %652, %650 : vector<2x64xf32>
    %654 = arith.mulf %641, %615 : vector<2x64xf32>
    %655 = arith.addf %653, %654 : vector<2x64xf32>
    %656 = vector.extract_strided_slice %655 {offsets = [0, 0], sizes = [2, 32], strides = [1, 1]} : vector<2x64xf32> to vector<2x32xf32>
    %c0_167 = arith.constant 0 : index
    %c12_168 = arith.constant 12 : index
    %c0_169 = arith.constant 0 : index
    %657 = vector.load %arg17[%c0_167, %c12_168, %c0_169] : memref<2x20x64xf32, #tpu.memory_space<vmem>>, vector<2x1x32xf32>
    %658 = vector.shape_cast %657 : vector<2x1x32xf32> to vector<2x32xf32>
    %659 = vector.shape_cast %656 : vector<2x32xf32> to vector<2x1x32xf32>
    tpu.vector_store %arg17[%c0_167, %c12_168, %c0_169], %659 {strides = array<i32>} : memref<2x20x64xf32, #tpu.memory_space<vmem>>, vector<2x1x32xf32>,
    %660 = vector.extract_strided_slice %655 {offsets = [0, 32], sizes = [2, 32], strides = [1, 1]} : vector<2x64xf32> to vector<2x32xf32>
    %c0_170 = arith.constant 0 : index
    %c7_171 = arith.constant 7 : index
    %c32_172 = arith.constant 32 : index
    %661 = vector.load %arg17[%c0_170, %c7_171, %c32_172] : memref<2x20x64xf32, #tpu.memory_space<vmem>>, vector<2x1x32xf32>
    %662 = vector.shape_cast %661 : vector<2x1x32xf32> to vector<2x32xf32>
    %663 = vector.shape_cast %660 : vector<2x32xf32> to vector<2x1x32xf32>
    tpu.vector_store %arg17[%c0_170, %c7_171, %c32_172], %663 {strides = array<i32>} : memref<2x20x64xf32, #tpu.memory_space<vmem>>, vector<2x1x32xf32>,
    %664 = vector.extract_strided_slice %139 {offsets = [26, 0], sizes = [2, 96], strides = [1, 1]} : vector<40x96xf32> to vector<2x96xf32>
    %665 = vector.extract_strided_slice %140 {offsets = [12, 0], sizes = [2, 96], strides = [1, 1]} : vector<40x96xf32> to vector<2x96xf32>
    %666 = tpu.concatenate %664, %665 in 1 : vector<2x96xf32>, vector<2x96xf32> -> vector<2x192xf32>
    %cst_173 = arith.constant dense<0.000000e+00> : vector<2x192xf32>
    %667 = tpu.matmul %655, %141, %cst_173 {dimension_numbers = #tpu.dot_dimension_numbers<[1], [0], [0], [1], [0, 0, 1, 1], [], []>} : vector<2x64xf32>, vector<64x192xf32>, vector<2x192xf32> -> vector<2x192xf32>
    %668 = vector.broadcast %142 : vector<1x192xf32> to vector<2x192xf32>
    %669 = arith.addf %667, %668 : vector<2x192xf32>
    %670 = arith.addf %666, %669 : vector<2x192xf32>
    %671 = arith.negf %670 : vector<2x192xf32>
    %672 = math.exp %671 : vector<2x192xf32>
    %cst_174 = arith.constant 1.000000e+00 : f32
    %673 = vector.broadcast %cst_174 : f32 to vector<2x192xf32>
    %674 = arith.addf %673, %672 : vector<2x192xf32>
    %675 = arith.divf %673, %674 : vector<2x192xf32>
    %676 = vector.extract_strided_slice %675 {offsets = [0, 0], sizes = [2, 32], strides = [1, 1]} : vector<2x192xf32> to vector<2x32xf32>
    %677 = vector.extract_strided_slice %675 {offsets = [0, 96], sizes = [2, 32], strides = [1, 1]} : vector<2x192xf32> to vector<2x32xf32>
    %678 = tpu.concatenate %676, %677 in 1 : vector<2x32xf32>, vector<2x32xf32> -> vector<2x64xf32>
    %679 = vector.extract_strided_slice %675 {offsets = [0, 32], sizes = [2, 32], strides = [1, 1]} : vector<2x192xf32> to vector<2x32xf32>
    %680 = vector.extract_strided_slice %675 {offsets = [0, 128], sizes = [2, 32], strides = [1, 1]} : vector<2x192xf32> to vector<2x32xf32>
    %681 = tpu.concatenate %679, %680 in 1 : vector<2x32xf32>, vector<2x32xf32> -> vector<2x64xf32>
    %682 = vector.extract_strided_slice %666 {offsets = [0, 64], sizes = [2, 32], strides = [1, 1]} : vector<2x192xf32> to vector<2x32xf32>
    %683 = vector.extract_strided_slice %666 {offsets = [0, 160], sizes = [2, 32], strides = [1, 1]} : vector<2x192xf32> to vector<2x32xf32>
    %684 = tpu.concatenate %682, %683 in 1 : vector<2x32xf32>, vector<2x32xf32> -> vector<2x64xf32>
    %685 = vector.extract_strided_slice %669 {offsets = [0, 64], sizes = [2, 32], strides = [1, 1]} : vector<2x192xf32> to vector<2x32xf32>
    %686 = vector.extract_strided_slice %669 {offsets = [0, 160], sizes = [2, 32], strides = [1, 1]} : vector<2x192xf32> to vector<2x32xf32>
    %687 = tpu.concatenate %685, %686 in 1 : vector<2x32xf32>, vector<2x32xf32> -> vector<2x64xf32>
    %688 = arith.mulf %678, %687 : vector<2x64xf32>
    %689 = arith.addf %684, %688 : vector<2x64xf32>
    %690 = math.tanh %689 : vector<2x64xf32>
    %cst_175 = arith.constant 1.000000e+00 : f32
    %691 = vector.broadcast %cst_175 : f32 to vector<2x64xf32>
    %692 = arith.subf %691, %681 : vector<2x64xf32>
    %693 = arith.mulf %692, %690 : vector<2x64xf32>
    %694 = arith.mulf %681, %655 : vector<2x64xf32>
    %695 = arith.addf %693, %694 : vector<2x64xf32>
    %696 = vector.extract_strided_slice %695 {offsets = [0, 0], sizes = [2, 32], strides = [1, 1]} : vector<2x64xf32> to vector<2x32xf32>
    %c0_176 = arith.constant 0 : index
    %c13_177 = arith.constant 13 : index
    %c0_178 = arith.constant 0 : index
    %697 = vector.load %arg17[%c0_176, %c13_177, %c0_178] : memref<2x20x64xf32, #tpu.memory_space<vmem>>, vector<2x1x32xf32>
    %698 = vector.shape_cast %697 : vector<2x1x32xf32> to vector<2x32xf32>
    %699 = vector.shape_cast %696 : vector<2x32xf32> to vector<2x1x32xf32>
    tpu.vector_store %arg17[%c0_176, %c13_177, %c0_178], %699 {strides = array<i32>} : memref<2x20x64xf32, #tpu.memory_space<vmem>>, vector<2x1x32xf32>,
    %700 = vector.extract_strided_slice %695 {offsets = [0, 32], sizes = [2, 32], strides = [1, 1]} : vector<2x64xf32> to vector<2x32xf32>
    %c0_179 = arith.constant 0 : index
    %c6_180 = arith.constant 6 : index
    %c32_181 = arith.constant 32 : index
    %701 = vector.load %arg17[%c0_179, %c6_180, %c32_181] : memref<2x20x64xf32, #tpu.memory_space<vmem>>, vector<2x1x32xf32>
    %702 = vector.shape_cast %701 : vector<2x1x32xf32> to vector<2x32xf32>
    %703 = vector.shape_cast %700 : vector<2x32xf32> to vector<2x1x32xf32>
    tpu.vector_store %arg17[%c0_179, %c6_180, %c32_181], %703 {strides = array<i32>} : memref<2x20x64xf32, #tpu.memory_space<vmem>>, vector<2x1x32xf32>,
    %704 = vector.extract_strided_slice %139 {offsets = [28, 0], sizes = [2, 96], strides = [1, 1]} : vector<40x96xf32> to vector<2x96xf32>
    %705 = vector.extract_strided_slice %140 {offsets = [10, 0], sizes = [2, 96], strides = [1, 1]} : vector<40x96xf32> to vector<2x96xf32>
    %706 = tpu.concatenate %704, %705 in 1 : vector<2x96xf32>, vector<2x96xf32> -> vector<2x192xf32>
    %cst_182 = arith.constant dense<0.000000e+00> : vector<2x192xf32>
    %707 = tpu.matmul %695, %141, %cst_182 {dimension_numbers = #tpu.dot_dimension_numbers<[1], [0], [0], [1], [0, 0, 1, 1], [], []>} : vector<2x64xf32>, vector<64x192xf32>, vector<2x192xf32> -> vector<2x192xf32>
    %708 = vector.broadcast %142 : vector<1x192xf32> to vector<2x192xf32>
    %709 = arith.addf %707, %708 : vector<2x192xf32>
    %710 = arith.addf %706, %709 : vector<2x192xf32>
    %711 = arith.negf %710 : vector<2x192xf32>
    %712 = math.exp %711 : vector<2x192xf32>
    %cst_183 = arith.constant 1.000000e+00 : f32
    %713 = vector.broadcast %cst_183 : f32 to vector<2x192xf32>
    %714 = arith.addf %713, %712 : vector<2x192xf32>
    %715 = arith.divf %713, %714 : vector<2x192xf32>
    %716 = vector.extract_strided_slice %715 {offsets = [0, 0], sizes = [2, 32], strides = [1, 1]} : vector<2x192xf32> to vector<2x32xf32>
    %717 = vector.extract_strided_slice %715 {offsets = [0, 96], sizes = [2, 32], strides = [1, 1]} : vector<2x192xf32> to vector<2x32xf32>
    %718 = tpu.concatenate %716, %717 in 1 : vector<2x32xf32>, vector<2x32xf32> -> vector<2x64xf32>
    %719 = vector.extract_strided_slice %715 {offsets = [0, 32], sizes = [2, 32], strides = [1, 1]} : vector<2x192xf32> to vector<2x32xf32>
    %720 = vector.extract_strided_slice %715 {offsets = [0, 128], sizes = [2, 32], strides = [1, 1]} : vector<2x192xf32> to vector<2x32xf32>
    %721 = tpu.concatenate %719, %720 in 1 : vector<2x32xf32>, vector<2x32xf32> -> vector<2x64xf32>
    %722 = vector.extract_strided_slice %706 {offsets = [0, 64], sizes = [2, 32], strides = [1, 1]} : vector<2x192xf32> to vector<2x32xf32>
    %723 = vector.extract_strided_slice %706 {offsets = [0, 160], sizes = [2, 32], strides = [1, 1]} : vector<2x192xf32> to vector<2x32xf32>
    %724 = tpu.concatenate %722, %723 in 1 : vector<2x32xf32>, vector<2x32xf32> -> vector<2x64xf32>
    %725 = vector.extract_strided_slice %709 {offsets = [0, 64], sizes = [2, 32], strides = [1, 1]} : vector<2x192xf32> to vector<2x32xf32>
    %726 = vector.extract_strided_slice %709 {offsets = [0, 160], sizes = [2, 32], strides = [1, 1]} : vector<2x192xf32> to vector<2x32xf32>
    %727 = tpu.concatenate %725, %726 in 1 : vector<2x32xf32>, vector<2x32xf32> -> vector<2x64xf32>
    %728 = arith.mulf %718, %727 : vector<2x64xf32>
    %729 = arith.addf %724, %728 : vector<2x64xf32>
    %730 = math.tanh %729 : vector<2x64xf32>
    %cst_184 = arith.constant 1.000000e+00 : f32
    %731 = vector.broadcast %cst_184 : f32 to vector<2x64xf32>
    %732 = arith.subf %731, %721 : vector<2x64xf32>
    %733 = arith.mulf %732, %730 : vector<2x64xf32>
    %734 = arith.mulf %721, %695 : vector<2x64xf32>
    %735 = arith.addf %733, %734 : vector<2x64xf32>
    %736 = vector.extract_strided_slice %735 {offsets = [0, 0], sizes = [2, 32], strides = [1, 1]} : vector<2x64xf32> to vector<2x32xf32>
    %c0_185 = arith.constant 0 : index
    %c14_186 = arith.constant 14 : index
    %c0_187 = arith.constant 0 : index
    %737 = vector.load %arg17[%c0_185, %c14_186, %c0_187] : memref<2x20x64xf32, #tpu.memory_space<vmem>>, vector<2x1x32xf32>
    %738 = vector.shape_cast %737 : vector<2x1x32xf32> to vector<2x32xf32>
    %739 = vector.shape_cast %736 : vector<2x32xf32> to vector<2x1x32xf32>
    tpu.vector_store %arg17[%c0_185, %c14_186, %c0_187], %739 {strides = array<i32>} : memref<2x20x64xf32, #tpu.memory_space<vmem>>, vector<2x1x32xf32>,
    %740 = vector.extract_strided_slice %735 {offsets = [0, 32], sizes = [2, 32], strides = [1, 1]} : vector<2x64xf32> to vector<2x32xf32>
    %c0_188 = arith.constant 0 : index
    %c5_189 = arith.constant 5 : index
    %c32_190 = arith.constant 32 : index
    %741 = vector.load %arg17[%c0_188, %c5_189, %c32_190] : memref<2x20x64xf32, #tpu.memory_space<vmem>>, vector<2x1x32xf32>
    %742 = vector.shape_cast %741 : vector<2x1x32xf32> to vector<2x32xf32>
    %743 = vector.shape_cast %740 : vector<2x32xf32> to vector<2x1x32xf32>
    tpu.vector_store %arg17[%c0_188, %c5_189, %c32_190], %743 {strides = array<i32>} : memref<2x20x64xf32, #tpu.memory_space<vmem>>, vector<2x1x32xf32>,
    %744 = vector.extract_strided_slice %139 {offsets = [30, 0], sizes = [2, 96], strides = [1, 1]} : vector<40x96xf32> to vector<2x96xf32>
    %745 = vector.extract_strided_slice %140 {offsets = [8, 0], sizes = [2, 96], strides = [1, 1]} : vector<40x96xf32> to vector<2x96xf32>
    %746 = tpu.concatenate %744, %745 in 1 : vector<2x96xf32>, vector<2x96xf32> -> vector<2x192xf32>
    %cst_191 = arith.constant dense<0.000000e+00> : vector<2x192xf32>
    %747 = tpu.matmul %735, %141, %cst_191 {dimension_numbers = #tpu.dot_dimension_numbers<[1], [0], [0], [1], [0, 0, 1, 1], [], []>} : vector<2x64xf32>, vector<64x192xf32>, vector<2x192xf32> -> vector<2x192xf32>
    %748 = vector.broadcast %142 : vector<1x192xf32> to vector<2x192xf32>
    %749 = arith.addf %747, %748 : vector<2x192xf32>
    %750 = arith.addf %746, %749 : vector<2x192xf32>
    %751 = arith.negf %750 : vector<2x192xf32>
    %752 = math.exp %751 : vector<2x192xf32>
    %cst_192 = arith.constant 1.000000e+00 : f32
    %753 = vector.broadcast %cst_192 : f32 to vector<2x192xf32>
    %754 = arith.addf %753, %752 : vector<2x192xf32>
    %755 = arith.divf %753, %754 : vector<2x192xf32>
    %756 = vector.extract_strided_slice %755 {offsets = [0, 0], sizes = [2, 32], strides = [1, 1]} : vector<2x192xf32> to vector<2x32xf32>
    %757 = vector.extract_strided_slice %755 {offsets = [0, 96], sizes = [2, 32], strides = [1, 1]} : vector<2x192xf32> to vector<2x32xf32>
    %758 = tpu.concatenate %756, %757 in 1 : vector<2x32xf32>, vector<2x32xf32> -> vector<2x64xf32>
    %759 = vector.extract_strided_slice %755 {offsets = [0, 32], sizes = [2, 32], strides = [1, 1]} : vector<2x192xf32> to vector<2x32xf32>
    %760 = vector.extract_strided_slice %755 {offsets = [0, 128], sizes = [2, 32], strides = [1, 1]} : vector<2x192xf32> to vector<2x32xf32>
    %761 = tpu.concatenate %759, %760 in 1 : vector<2x32xf32>, vector<2x32xf32> -> vector<2x64xf32>
    %762 = vector.extract_strided_slice %746 {offsets = [0, 64], sizes = [2, 32], strides = [1, 1]} : vector<2x192xf32> to vector<2x32xf32>
    %763 = vector.extract_strided_slice %746 {offsets = [0, 160], sizes = [2, 32], strides = [1, 1]} : vector<2x192xf32> to vector<2x32xf32>
    %764 = tpu.concatenate %762, %763 in 1 : vector<2x32xf32>, vector<2x32xf32> -> vector<2x64xf32>
    %765 = vector.extract_strided_slice %749 {offsets = [0, 64], sizes = [2, 32], strides = [1, 1]} : vector<2x192xf32> to vector<2x32xf32>
    %766 = vector.extract_strided_slice %749 {offsets = [0, 160], sizes = [2, 32], strides = [1, 1]} : vector<2x192xf32> to vector<2x32xf32>
    %767 = tpu.concatenate %765, %766 in 1 : vector<2x32xf32>, vector<2x32xf32> -> vector<2x64xf32>
    %768 = arith.mulf %758, %767 : vector<2x64xf32>
    %769 = arith.addf %764, %768 : vector<2x64xf32>
    %770 = math.tanh %769 : vector<2x64xf32>
    %cst_193 = arith.constant 1.000000e+00 : f32
    %771 = vector.broadcast %cst_193 : f32 to vector<2x64xf32>
    %772 = arith.subf %771, %761 : vector<2x64xf32>
    %773 = arith.mulf %772, %770 : vector<2x64xf32>
    %774 = arith.mulf %761, %735 : vector<2x64xf32>
    %775 = arith.addf %773, %774 : vector<2x64xf32>
    %776 = vector.extract_strided_slice %775 {offsets = [0, 0], sizes = [2, 32], strides = [1, 1]} : vector<2x64xf32> to vector<2x32xf32>
    %c0_194 = arith.constant 0 : index
    %c15_195 = arith.constant 15 : index
    %c0_196 = arith.constant 0 : index
    %777 = vector.load %arg17[%c0_194, %c15_195, %c0_196] : memref<2x20x64xf32, #tpu.memory_space<vmem>>, vector<2x1x32xf32>
    %778 = vector.shape_cast %777 : vector<2x1x32xf32> to vector<2x32xf32>
    %779 = vector.shape_cast %776 : vector<2x32xf32> to vector<2x1x32xf32>
    tpu.vector_store %arg17[%c0_194, %c15_195, %c0_196], %779 {strides = array<i32>} : memref<2x20x64xf32, #tpu.memory_space<vmem>>, vector<2x1x32xf32>,
    %780 = vector.extract_strided_slice %775 {offsets = [0, 32], sizes = [2, 32], strides = [1, 1]} : vector<2x64xf32> to vector<2x32xf32>
    %c0_197 = arith.constant 0 : index
    %c4_198 = arith.constant 4 : index
    %c32_199 = arith.constant 32 : index
    %781 = vector.load %arg17[%c0_197, %c4_198, %c32_199] : memref<2x20x64xf32, #tpu.memory_space<vmem>>, vector<2x1x32xf32>
    %782 = vector.shape_cast %781 : vector<2x1x32xf32> to vector<2x32xf32>
    %783 = vector.shape_cast %780 : vector<2x32xf32> to vector<2x1x32xf32>
    tpu.vector_store %arg17[%c0_197, %c4_198, %c32_199], %783 {strides = array<i32>} : memref<2x20x64xf32, #tpu.memory_space<vmem>>, vector<2x1x32xf32>,
    %784 = vector.extract_strided_slice %139 {offsets = [32, 0], sizes = [2, 96], strides = [1, 1]} : vector<40x96xf32> to vector<2x96xf32>
    %785 = vector.extract_strided_slice %140 {offsets = [6, 0], sizes = [2, 96], strides = [1, 1]} : vector<40x96xf32> to vector<2x96xf32>
    %786 = tpu.concatenate %784, %785 in 1 : vector<2x96xf32>, vector<2x96xf32> -> vector<2x192xf32>
    %cst_200 = arith.constant dense<0.000000e+00> : vector<2x192xf32>
    %787 = tpu.matmul %775, %141, %cst_200 {dimension_numbers = #tpu.dot_dimension_numbers<[1], [0], [0], [1], [0, 0, 1, 1], [], []>} : vector<2x64xf32>, vector<64x192xf32>, vector<2x192xf32> -> vector<2x192xf32>
    %788 = vector.broadcast %142 : vector<1x192xf32> to vector<2x192xf32>
    %789 = arith.addf %787, %788 : vector<2x192xf32>
    %790 = arith.addf %786, %789 : vector<2x192xf32>
    %791 = arith.negf %790 : vector<2x192xf32>
    %792 = math.exp %791 : vector<2x192xf32>
    %cst_201 = arith.constant 1.000000e+00 : f32
    %793 = vector.broadcast %cst_201 : f32 to vector<2x192xf32>
    %794 = arith.addf %793, %792 : vector<2x192xf32>
    %795 = arith.divf %793, %794 : vector<2x192xf32>
    %796 = vector.extract_strided_slice %795 {offsets = [0, 0], sizes = [2, 32], strides = [1, 1]} : vector<2x192xf32> to vector<2x32xf32>
    %797 = vector.extract_strided_slice %795 {offsets = [0, 96], sizes = [2, 32], strides = [1, 1]} : vector<2x192xf32> to vector<2x32xf32>
    %798 = tpu.concatenate %796, %797 in 1 : vector<2x32xf32>, vector<2x32xf32> -> vector<2x64xf32>
    %799 = vector.extract_strided_slice %795 {offsets = [0, 32], sizes = [2, 32], strides = [1, 1]} : vector<2x192xf32> to vector<2x32xf32>
    %800 = vector.extract_strided_slice %795 {offsets = [0, 128], sizes = [2, 32], strides = [1, 1]} : vector<2x192xf32> to vector<2x32xf32>
    %801 = tpu.concatenate %799, %800 in 1 : vector<2x32xf32>, vector<2x32xf32> -> vector<2x64xf32>
    %802 = vector.extract_strided_slice %786 {offsets = [0, 64], sizes = [2, 32], strides = [1, 1]} : vector<2x192xf32> to vector<2x32xf32>
    %803 = vector.extract_strided_slice %786 {offsets = [0, 160], sizes = [2, 32], strides = [1, 1]} : vector<2x192xf32> to vector<2x32xf32>
    %804 = tpu.concatenate %802, %803 in 1 : vector<2x32xf32>, vector<2x32xf32> -> vector<2x64xf32>
    %805 = vector.extract_strided_slice %789 {offsets = [0, 64], sizes = [2, 32], strides = [1, 1]} : vector<2x192xf32> to vector<2x32xf32>
    %806 = vector.extract_strided_slice %789 {offsets = [0, 160], sizes = [2, 32], strides = [1, 1]} : vector<2x192xf32> to vector<2x32xf32>
    %807 = tpu.concatenate %805, %806 in 1 : vector<2x32xf32>, vector<2x32xf32> -> vector<2x64xf32>
    %808 = arith.mulf %798, %807 : vector<2x64xf32>
    %809 = arith.addf %804, %808 : vector<2x64xf32>
    %810 = math.tanh %809 : vector<2x64xf32>
    %cst_202 = arith.constant 1.000000e+00 : f32
    %811 = vector.broadcast %cst_202 : f32 to vector<2x64xf32>
    %812 = arith.subf %811, %801 : vector<2x64xf32>
    %813 = arith.mulf %812, %810 : vector<2x64xf32>
    %814 = arith.mulf %801, %775 : vector<2x64xf32>
    %815 = arith.addf %813, %814 : vector<2x64xf32>
    %816 = vector.extract_strided_slice %815 {offsets = [0, 0], sizes = [2, 32], strides = [1, 1]} : vector<2x64xf32> to vector<2x32xf32>
    %c0_203 = arith.constant 0 : index
    %c16_204 = arith.constant 16 : index
    %c0_205 = arith.constant 0 : index
    %817 = vector.load %arg17[%c0_203, %c16_204, %c0_205] : memref<2x20x64xf32, #tpu.memory_space<vmem>>, vector<2x1x32xf32>
    %818 = vector.shape_cast %817 : vector<2x1x32xf32> to vector<2x32xf32>
    %819 = vector.shape_cast %816 : vector<2x32xf32> to vector<2x1x32xf32>
    tpu.vector_store %arg17[%c0_203, %c16_204, %c0_205], %819 {strides = array<i32>} : memref<2x20x64xf32, #tpu.memory_space<vmem>>, vector<2x1x32xf32>,
    %820 = vector.extract_strided_slice %815 {offsets = [0, 32], sizes = [2, 32], strides = [1, 1]} : vector<2x64xf32> to vector<2x32xf32>
    %c0_206 = arith.constant 0 : index
    %c3_207 = arith.constant 3 : index
    %c32_208 = arith.constant 32 : index
    %821 = vector.load %arg17[%c0_206, %c3_207, %c32_208] : memref<2x20x64xf32, #tpu.memory_space<vmem>>, vector<2x1x32xf32>
    %822 = vector.shape_cast %821 : vector<2x1x32xf32> to vector<2x32xf32>
    %823 = vector.shape_cast %820 : vector<2x32xf32> to vector<2x1x32xf32>
    tpu.vector_store %arg17[%c0_206, %c3_207, %c32_208], %823 {strides = array<i32>} : memref<2x20x64xf32, #tpu.memory_space<vmem>>, vector<2x1x32xf32>,
    %824 = vector.extract_strided_slice %139 {offsets = [34, 0], sizes = [2, 96], strides = [1, 1]} : vector<40x96xf32> to vector<2x96xf32>
    %825 = vector.extract_strided_slice %140 {offsets = [4, 0], sizes = [2, 96], strides = [1, 1]} : vector<40x96xf32> to vector<2x96xf32>
    %826 = tpu.concatenate %824, %825 in 1 : vector<2x96xf32>, vector<2x96xf32> -> vector<2x192xf32>
    %cst_209 = arith.constant dense<0.000000e+00> : vector<2x192xf32>
    %827 = tpu.matmul %815, %141, %cst_209 {dimension_numbers = #tpu.dot_dimension_numbers<[1], [0], [0], [1], [0, 0, 1, 1], [], []>} : vector<2x64xf32>, vector<64x192xf32>, vector<2x192xf32> -> vector<2x192xf32>
    %828 = vector.broadcast %142 : vector<1x192xf32> to vector<2x192xf32>
    %829 = arith.addf %827, %828 : vector<2x192xf32>
    %830 = arith.addf %826, %829 : vector<2x192xf32>
    %831 = arith.negf %830 : vector<2x192xf32>
    %832 = math.exp %831 : vector<2x192xf32>
    %cst_210 = arith.constant 1.000000e+00 : f32
    %833 = vector.broadcast %cst_210 : f32 to vector<2x192xf32>
    %834 = arith.addf %833, %832 : vector<2x192xf32>
    %835 = arith.divf %833, %834 : vector<2x192xf32>
    %836 = vector.extract_strided_slice %835 {offsets = [0, 0], sizes = [2, 32], strides = [1, 1]} : vector<2x192xf32> to vector<2x32xf32>
    %837 = vector.extract_strided_slice %835 {offsets = [0, 96], sizes = [2, 32], strides = [1, 1]} : vector<2x192xf32> to vector<2x32xf32>
    %838 = tpu.concatenate %836, %837 in 1 : vector<2x32xf32>, vector<2x32xf32> -> vector<2x64xf32>
    %839 = vector.extract_strided_slice %835 {offsets = [0, 32], sizes = [2, 32], strides = [1, 1]} : vector<2x192xf32> to vector<2x32xf32>
    %840 = vector.extract_strided_slice %835 {offsets = [0, 128], sizes = [2, 32], strides = [1, 1]} : vector<2x192xf32> to vector<2x32xf32>
    %841 = tpu.concatenate %839, %840 in 1 : vector<2x32xf32>, vector<2x32xf32> -> vector<2x64xf32>
    %842 = vector.extract_strided_slice %826 {offsets = [0, 64], sizes = [2, 32], strides = [1, 1]} : vector<2x192xf32> to vector<2x32xf32>
    %843 = vector.extract_strided_slice %826 {offsets = [0, 160], sizes = [2, 32], strides = [1, 1]} : vector<2x192xf32> to vector<2x32xf32>
    %844 = tpu.concatenate %842, %843 in 1 : vector<2x32xf32>, vector<2x32xf32> -> vector<2x64xf32>
    %845 = vector.extract_strided_slice %829 {offsets = [0, 64], sizes = [2, 32], strides = [1, 1]} : vector<2x192xf32> to vector<2x32xf32>
    %846 = vector.extract_strided_slice %829 {offsets = [0, 160], sizes = [2, 32], strides = [1, 1]} : vector<2x192xf32> to vector<2x32xf32>
    %847 = tpu.concatenate %845, %846 in 1 : vector<2x32xf32>, vector<2x32xf32> -> vector<2x64xf32>
    %848 = arith.mulf %838, %847 : vector<2x64xf32>
    %849 = arith.addf %844, %848 : vector<2x64xf32>
    %850 = math.tanh %849 : vector<2x64xf32>
    %cst_211 = arith.constant 1.000000e+00 : f32
    %851 = vector.broadcast %cst_211 : f32 to vector<2x64xf32>
    %852 = arith.subf %851, %841 : vector<2x64xf32>
    %853 = arith.mulf %852, %850 : vector<2x64xf32>
    %854 = arith.mulf %841, %815 : vector<2x64xf32>
    %855 = arith.addf %853, %854 : vector<2x64xf32>
    %856 = vector.extract_strided_slice %855 {offsets = [0, 0], sizes = [2, 32], strides = [1, 1]} : vector<2x64xf32> to vector<2x32xf32>
    %c0_212 = arith.constant 0 : index
    %c17_213 = arith.constant 17 : index
    %c0_214 = arith.constant 0 : index
    %857 = vector.load %arg17[%c0_212, %c17_213, %c0_214] : memref<2x20x64xf32, #tpu.memory_space<vmem>>, vector<2x1x32xf32>
    %858 = vector.shape_cast %857 : vector<2x1x32xf32> to vector<2x32xf32>
    %859 = vector.shape_cast %856 : vector<2x32xf32> to vector<2x1x32xf32>
    tpu.vector_store %arg17[%c0_212, %c17_213, %c0_214], %859 {strides = array<i32>} : memref<2x20x64xf32, #tpu.memory_space<vmem>>, vector<2x1x32xf32>,
    %860 = vector.extract_strided_slice %855 {offsets = [0, 32], sizes = [2, 32], strides = [1, 1]} : vector<2x64xf32> to vector<2x32xf32>
    %c0_215 = arith.constant 0 : index
    %c2_216 = arith.constant 2 : index
    %c32_217 = arith.constant 32 : index
    %861 = vector.load %arg17[%c0_215, %c2_216, %c32_217] : memref<2x20x64xf32, #tpu.memory_space<vmem>>, vector<2x1x32xf32>
    %862 = vector.shape_cast %861 : vector<2x1x32xf32> to vector<2x32xf32>
    %863 = vector.shape_cast %860 : vector<2x32xf32> to vector<2x1x32xf32>
    tpu.vector_store %arg17[%c0_215, %c2_216, %c32_217], %863 {strides = array<i32>} : memref<2x20x64xf32, #tpu.memory_space<vmem>>, vector<2x1x32xf32>,
    %864 = vector.extract_strided_slice %139 {offsets = [36, 0], sizes = [2, 96], strides = [1, 1]} : vector<40x96xf32> to vector<2x96xf32>
    %865 = vector.extract_strided_slice %140 {offsets = [2, 0], sizes = [2, 96], strides = [1, 1]} : vector<40x96xf32> to vector<2x96xf32>
    %866 = tpu.concatenate %864, %865 in 1 : vector<2x96xf32>, vector<2x96xf32> -> vector<2x192xf32>
    %cst_218 = arith.constant dense<0.000000e+00> : vector<2x192xf32>
    %867 = tpu.matmul %855, %141, %cst_218 {dimension_numbers = #tpu.dot_dimension_numbers<[1], [0], [0], [1], [0, 0, 1, 1], [], []>} : vector<2x64xf32>, vector<64x192xf32>, vector<2x192xf32> -> vector<2x192xf32>
    %868 = vector.broadcast %142 : vector<1x192xf32> to vector<2x192xf32>
    %869 = arith.addf %867, %868 : vector<2x192xf32>
    %870 = arith.addf %866, %869 : vector<2x192xf32>
    %871 = arith.negf %870 : vector<2x192xf32>
    %872 = math.exp %871 : vector<2x192xf32>
    %cst_219 = arith.constant 1.000000e+00 : f32
    %873 = vector.broadcast %cst_219 : f32 to vector<2x192xf32>
    %874 = arith.addf %873, %872 : vector<2x192xf32>
    %875 = arith.divf %873, %874 : vector<2x192xf32>
    %876 = vector.extract_strided_slice %875 {offsets = [0, 0], sizes = [2, 32], strides = [1, 1]} : vector<2x192xf32> to vector<2x32xf32>
    %877 = vector.extract_strided_slice %875 {offsets = [0, 96], sizes = [2, 32], strides = [1, 1]} : vector<2x192xf32> to vector<2x32xf32>
    %878 = tpu.concatenate %876, %877 in 1 : vector<2x32xf32>, vector<2x32xf32> -> vector<2x64xf32>
    %879 = vector.extract_strided_slice %875 {offsets = [0, 32], sizes = [2, 32], strides = [1, 1]} : vector<2x192xf32> to vector<2x32xf32>
    %880 = vector.extract_strided_slice %875 {offsets = [0, 128], sizes = [2, 32], strides = [1, 1]} : vector<2x192xf32> to vector<2x32xf32>
    %881 = tpu.concatenate %879, %880 in 1 : vector<2x32xf32>, vector<2x32xf32> -> vector<2x64xf32>
    %882 = vector.extract_strided_slice %866 {offsets = [0, 64], sizes = [2, 32], strides = [1, 1]} : vector<2x192xf32> to vector<2x32xf32>
    %883 = vector.extract_strided_slice %866 {offsets = [0, 160], sizes = [2, 32], strides = [1, 1]} : vector<2x192xf32> to vector<2x32xf32>
    %884 = tpu.concatenate %882, %883 in 1 : vector<2x32xf32>, vector<2x32xf32> -> vector<2x64xf32>
    %885 = vector.extract_strided_slice %869 {offsets = [0, 64], sizes = [2, 32], strides = [1, 1]} : vector<2x192xf32> to vector<2x32xf32>
    %886 = vector.extract_strided_slice %869 {offsets = [0, 160], sizes = [2, 32], strides = [1, 1]} : vector<2x192xf32> to vector<2x32xf32>
    %887 = tpu.concatenate %885, %886 in 1 : vector<2x32xf32>, vector<2x32xf32> -> vector<2x64xf32>
    %888 = arith.mulf %878, %887 : vector<2x64xf32>
    %889 = arith.addf %884, %888 : vector<2x64xf32>
    %890 = math.tanh %889 : vector<2x64xf32>
    %cst_220 = arith.constant 1.000000e+00 : f32
    %891 = vector.broadcast %cst_220 : f32 to vector<2x64xf32>
    %892 = arith.subf %891, %881 : vector<2x64xf32>
    %893 = arith.mulf %892, %890 : vector<2x64xf32>
    %894 = arith.mulf %881, %855 : vector<2x64xf32>
    %895 = arith.addf %893, %894 : vector<2x64xf32>
    %896 = vector.extract_strided_slice %895 {offsets = [0, 0], sizes = [2, 32], strides = [1, 1]} : vector<2x64xf32> to vector<2x32xf32>
    %c0_221 = arith.constant 0 : index
    %c18_222 = arith.constant 18 : index
    %c0_223 = arith.constant 0 : index
    %897 = vector.load %arg17[%c0_221, %c18_222, %c0_223] : memref<2x20x64xf32, #tpu.memory_space<vmem>>, vector<2x1x32xf32>
    %898 = vector.shape_cast %897 : vector<2x1x32xf32> to vector<2x32xf32>
    %899 = vector.shape_cast %896 : vector<2x32xf32> to vector<2x1x32xf32>
    tpu.vector_store %arg17[%c0_221, %c18_222, %c0_223], %899 {strides = array<i32>} : memref<2x20x64xf32, #tpu.memory_space<vmem>>, vector<2x1x32xf32>,
    %900 = vector.extract_strided_slice %895 {offsets = [0, 32], sizes = [2, 32], strides = [1, 1]} : vector<2x64xf32> to vector<2x32xf32>
    %c0_224 = arith.constant 0 : index
    %c1_225 = arith.constant 1 : index
    %c32_226 = arith.constant 32 : index
    %901 = vector.load %arg17[%c0_224, %c1_225, %c32_226] : memref<2x20x64xf32, #tpu.memory_space<vmem>>, vector<2x1x32xf32>
    %902 = vector.shape_cast %901 : vector<2x1x32xf32> to vector<2x32xf32>
    %903 = vector.shape_cast %900 : vector<2x32xf32> to vector<2x1x32xf32>
    tpu.vector_store %arg17[%c0_224, %c1_225, %c32_226], %903 {strides = array<i32>} : memref<2x20x64xf32, #tpu.memory_space<vmem>>, vector<2x1x32xf32>,
    %904 = vector.extract_strided_slice %139 {offsets = [38, 0], sizes = [2, 96], strides = [1, 1]} : vector<40x96xf32> to vector<2x96xf32>
    %905 = vector.extract_strided_slice %140 {offsets = [0, 0], sizes = [2, 96], strides = [1, 1]} : vector<40x96xf32> to vector<2x96xf32>
    %906 = tpu.concatenate %904, %905 in 1 : vector<2x96xf32>, vector<2x96xf32> -> vector<2x192xf32>
    %cst_227 = arith.constant dense<0.000000e+00> : vector<2x192xf32>
    %907 = tpu.matmul %895, %141, %cst_227 {dimension_numbers = #tpu.dot_dimension_numbers<[1], [0], [0], [1], [0, 0, 1, 1], [], []>} : vector<2x64xf32>, vector<64x192xf32>, vector<2x192xf32> -> vector<2x192xf32>
    %908 = vector.broadcast %142 : vector<1x192xf32> to vector<2x192xf32>
    %909 = arith.addf %907, %908 : vector<2x192xf32>
    %910 = arith.addf %906, %909 : vector<2x192xf32>
    %911 = arith.negf %910 : vector<2x192xf32>
    %912 = math.exp %911 : vector<2x192xf32>
    %cst_228 = arith.constant 1.000000e+00 : f32
    %913 = vector.broadcast %cst_228 : f32 to vector<2x192xf32>
    %914 = arith.addf %913, %912 : vector<2x192xf32>
    %915 = arith.divf %913, %914 : vector<2x192xf32>
    %916 = vector.extract_strided_slice %915 {offsets = [0, 0], sizes = [2, 32], strides = [1, 1]} : vector<2x192xf32> to vector<2x32xf32>
    %917 = vector.extract_strided_slice %915 {offsets = [0, 96], sizes = [2, 32], strides = [1, 1]} : vector<2x192xf32> to vector<2x32xf32>
    %918 = tpu.concatenate %916, %917 in 1 : vector<2x32xf32>, vector<2x32xf32> -> vector<2x64xf32>
    %919 = vector.extract_strided_slice %915 {offsets = [0, 32], sizes = [2, 32], strides = [1, 1]} : vector<2x192xf32> to vector<2x32xf32>
    %920 = vector.extract_strided_slice %915 {offsets = [0, 128], sizes = [2, 32], strides = [1, 1]} : vector<2x192xf32> to vector<2x32xf32>
    %921 = tpu.concatenate %919, %920 in 1 : vector<2x32xf32>, vector<2x32xf32> -> vector<2x64xf32>
    %922 = vector.extract_strided_slice %906 {offsets = [0, 64], sizes = [2, 32], strides = [1, 1]} : vector<2x192xf32> to vector<2x32xf32>
    %923 = vector.extract_strided_slice %906 {offsets = [0, 160], sizes = [2, 32], strides = [1, 1]} : vector<2x192xf32> to vector<2x32xf32>
    %924 = tpu.concatenate %922, %923 in 1 : vector<2x32xf32>, vector<2x32xf32> -> vector<2x64xf32>
    %925 = vector.extract_strided_slice %909 {offsets = [0, 64], sizes = [2, 32], strides = [1, 1]} : vector<2x192xf32> to vector<2x32xf32>
    %926 = vector.extract_strided_slice %909 {offsets = [0, 160], sizes = [2, 32], strides = [1, 1]} : vector<2x192xf32> to vector<2x32xf32>
    %927 = tpu.concatenate %925, %926 in 1 : vector<2x32xf32>, vector<2x32xf32> -> vector<2x64xf32>
    %928 = arith.mulf %918, %927 : vector<2x64xf32>
    %929 = arith.addf %924, %928 : vector<2x64xf32>
    %930 = math.tanh %929 : vector<2x64xf32>
    %cst_229 = arith.constant 1.000000e+00 : f32
    %931 = vector.broadcast %cst_229 : f32 to vector<2x64xf32>
    %932 = arith.subf %931, %921 : vector<2x64xf32>
    %933 = arith.mulf %932, %930 : vector<2x64xf32>
    %934 = arith.mulf %921, %895 : vector<2x64xf32>
    %935 = arith.addf %933, %934 : vector<2x64xf32>
    %936 = vector.extract_strided_slice %935 {offsets = [0, 0], sizes = [2, 32], strides = [1, 1]} : vector<2x64xf32> to vector<2x32xf32>
    %c0_230 = arith.constant 0 : index
    %c19_231 = arith.constant 19 : index
    %c0_232 = arith.constant 0 : index
    %937 = vector.load %arg17[%c0_230, %c19_231, %c0_232] : memref<2x20x64xf32, #tpu.memory_space<vmem>>, vector<2x1x32xf32>
    %938 = vector.shape_cast %937 : vector<2x1x32xf32> to vector<2x32xf32>
    %939 = vector.shape_cast %936 : vector<2x32xf32> to vector<2x1x32xf32>
    tpu.vector_store %arg17[%c0_230, %c19_231, %c0_232], %939 {strides = array<i32>} : memref<2x20x64xf32, #tpu.memory_space<vmem>>, vector<2x1x32xf32>,
    %940 = vector.extract_strided_slice %935 {offsets = [0, 32], sizes = [2, 32], strides = [1, 1]} : vector<2x64xf32> to vector<2x32xf32>
    %c0_233 = arith.constant 0 : index
    %c0_234 = arith.constant 0 : index
    %c32_235 = arith.constant 32 : index
    %941 = vector.load %arg17[%c0_233, %c0_234, %c32_235] : memref<2x20x64xf32, #tpu.memory_space<vmem>>, vector<2x1x32xf32>
    %942 = vector.shape_cast %941 : vector<2x1x32xf32> to vector<2x32xf32>
    %943 = vector.shape_cast %940 : vector<2x32xf32> to vector<2x1x32xf32>
    tpu.vector_store %arg17[%c0_233, %c0_234, %c32_235], %943 {strides = array<i32>} : memref<2x20x64xf32, #tpu.memory_space<vmem>>, vector<2x1x32xf32>,
    return
  }
}

</mosaic_0001>

<llo_original>
// kernel: cbhg_forward.1
$region0: #{cbhg_forward.1}
  #allocation0 [shape = 'u32[]', space=smem, size = 0x4, offset = 0x4, fixed_abs, tag = 'smem constant byte address 0x4 - core index']
  #allocation1 [shape = 'u32[144,128]{1,0:T(1,128)}', space=vmem, size = 0x12000, scoped, tag = 'internal scratch']
  %s0 = inlined_call_operand.vmem [shape: f32[40,16], index: 0, kind: input, shape index: {}]
  %s1 = inlined_call_operand.vmem [shape: f32[64,128], index: 1, kind: input, shape index: {}]
  %s2 = inlined_call_operand.vmem [shape: f32[1,128], index: 2, kind: input, shape index: {}]
  %s3 = inlined_call_operand.vmem [shape: f32[1,128], index: 3, kind: input, shape index: {}]
  %s4 = inlined_call_operand.vmem [shape: f32[384,64], index: 4, kind: input, shape index: {}]
  %s5 = inlined_call_operand.vmem [shape: f32[1,64], index: 5, kind: input, shape index: {}]
  %s6 = inlined_call_operand.vmem [shape: f32[1,64], index: 6, kind: input, shape index: {}]
  %s7 = inlined_call_operand.vmem [shape: f32[192,16], index: 7, kind: input, shape index: {}]
  %s8 = inlined_call_operand.vmem [shape: f32[1,16], index: 8, kind: input, shape index: {}]
  %s9 = inlined_call_operand.vmem [shape: f32[1,16], index: 9, kind: input, shape index: {}]
  %s10 = inlined_call_operand.vmem [shape: f32[16,32], index: 10, kind: input, shape index: {}]
  %s11 = inlined_call_operand.vmem [shape: f32[2,32,64], index: 11, kind: input, shape index: {}]
  %s12 = inlined_call_operand.vmem [shape: f32[2,1,64], index: 12, kind: input, shape index: {}]
  %s13 = inlined_call_operand.vmem [shape: f32[32,192], index: 13, kind: input, shape index: {}]
  %s14 = inlined_call_operand.vmem [shape: f32[1,192], index: 14, kind: input, shape index: {}]
  %s15 = inlined_call_operand.vmem [shape: f32[64,192], index: 15, kind: input, shape index: {}]
  %s16 = inlined_call_operand.vmem [shape: f32[1,192], index: 16, kind: input, shape index: {}]
  %s17 = inlined_call_operand.vmem [shape: f32[2,20,64], index: 17, kind: output, shape index: {}]
  %s18 = sld [smem:[#allocation0]]
  $region78: #{cbhg_forward.1} parent=0
    _
  %s20 = ssub.s32 1, %s18
  %s21 = scalar_select 0, %s20, %s18
  // Predicated region
  $region2: #{cbhg_forward.1} parent=0 // pred_check
    _
  $region3: #{cbhg_forward.1} parent=0 // pred_check_branch
    %23 = sbr.rel (0) target = $region5
  $region4: #{cbhg_forward.1} parent=0 // pred_region
    _
  $region5: #{cbhg_forward.1} parent=0 // pred_fallthru
    _
  // Predicated region
  $region6: #{cbhg_forward.1} parent=0 // pred_check
    _
  $region7: #{cbhg_forward.1} parent=0 // pred_check_branch
    %25 = sbr.rel (0) target = $region9
  $region8: #{cbhg_forward.1} parent=0 // pred_region
    _
  $region9: #{cbhg_forward.1} parent=0 // pred_fallthru
    _
  // Predicated region
  $region10: #{cbhg_forward.1} parent=0 // pred_check
    _
  $region11: #{cbhg_forward.1} parent=0 // pred_check_branch
    %27 = sbr.rel (0) target = $region13
  $region12: #{cbhg_forward.1} parent=0 // pred_region
    _
  $region13: #{cbhg_forward.1} parent=0 // pred_fallthru
    _
  // Predicated region
  $region14: #{cbhg_forward.1} parent=0 // pred_check
    _
  $region15: #{cbhg_forward.1} parent=0 // pred_check_branch
    %29 = sbr.rel (0) target = $region17
  $region16: #{cbhg_forward.1} parent=0 // pred_region
    _
  $region17: #{cbhg_forward.1} parent=0 // pred_fallthru
    _
  // Predicated region
  $region18: #{cbhg_forward.1} parent=0 // pred_check
    _
  $region19: #{cbhg_forward.1} parent=0 // pred_check_branch
    %31 = sbr.rel (0) target = $region21
  $region20: #{cbhg_forward.1} parent=0 // pred_region
    _
  $region21: #{cbhg_forward.1} parent=0 // pred_fallthru
    _
  // Predicated region
  $region22: #{cbhg_forward.1} parent=0 // pred_check
    _
  $region23: #{cbhg_forward.1} parent=0 // pred_check_branch
    %33 = sbr.rel (0) target = $region25
  $region24: #{cbhg_forward.1} parent=0 // pred_region
    _
  $region25: #{cbhg_forward.1} parent=0 // pred_fallthru
    _
  // Predicated region
  $region26: #{cbhg_forward.1} parent=0 // pred_check
    _
  $region27: #{cbhg_forward.1} parent=0 // pred_check_branch
    %35 = sbr.rel (0) target = $region29
  $region28: #{cbhg_forward.1} parent=0 // pred_region
    _
  $region29: #{cbhg_forward.1} parent=0 // pred_fallthru
    _
  // Predicated region
  $region30: #{cbhg_forward.1} parent=0 // pred_check
    _
  $region31: #{cbhg_forward.1} parent=0 // pred_check_branch
    %37 = sbr.rel (0) target = $region33
  $region32: #{cbhg_forward.1} parent=0 // pred_region
    _
  $region33: #{cbhg_forward.1} parent=0 // pred_fallthru
    _
  // Predicated region
  $region34: #{cbhg_forward.1} parent=0 // pred_check
    _
  $region35: #{cbhg_forward.1} parent=0 // pred_check_branch
    %39 = sbr.rel (0) target = $region37
  $region36: #{cbhg_forward.1} parent=0 // pred_region
    _
  $region37: #{cbhg_forward.1} parent=0 // pred_fallthru
    _
  // Predicated region
  $region38: #{cbhg_forward.1} parent=0 // pred_check
    _
  $region39: #{cbhg_forward.1} parent=0 // pred_check_branch
    %41 = sbr.rel (0) target = $region41
  $region40: #{cbhg_forward.1} parent=0 // pred_region
    _
  $region41: #{cbhg_forward.1} parent=0 // pred_fallthru
    _
  // Predicated region
  $region42: #{cbhg_forward.1} parent=0 // pred_check
    _
  $region43: #{cbhg_forward.1} parent=0 // pred_check_branch
    %43 = sbr.rel (0) target = $region45
  $region44: #{cbhg_forward.1} parent=0 // pred_region
    _
  $region45: #{cbhg_forward.1} parent=0 // pred_fallthru
    _
  // Predicated region
  $region46: #{cbhg_forward.1} parent=0 // pred_check
    _
  $region47: #{cbhg_forward.1} parent=0 // pred_check_branch
    %45 = sbr.rel (0) target = $region49
  $region48: #{cbhg_forward.1} parent=0 // pred_region
    _
  $region49: #{cbhg_forward.1} parent=0 // pred_fallthru
    _
  // Predicated region
  $region50: #{cbhg_forward.1} parent=0 // pred_check
    _
  $region51: #{cbhg_forward.1} parent=0 // pred_check_branch
    %47 = sbr.rel (0) target = $region53
  $region52: #{cbhg_forward.1} parent=0 // pred_region
    _
  $region53: #{cbhg_forward.1} parent=0 // pred_fallthru
    _
  // Predicated region
  $region54: #{cbhg_forward.1} parent=0 // pred_check
    _
  $region55: #{cbhg_forward.1} parent=0 // pred_check_branch
    %49 = sbr.rel (0) target = $region57
  $region56: #{cbhg_forward.1} parent=0 // pred_region
    _
  $region57: #{cbhg_forward.1} parent=0 // pred_fallthru
    _
  // Predicated region
  $region58: #{cbhg_forward.1} parent=0 // pred_check
    _
  $region59: #{cbhg_forward.1} parent=0 // pred_check_branch
    %51 = sbr.rel (0) target = $region61
  $region60: #{cbhg_forward.1} parent=0 // pred_region
    _
  $region61: #{cbhg_forward.1} parent=0 // pred_fallthru
    _
  // Predicated region
  $region62: #{cbhg_forward.1} parent=0 // pred_check
    _
  $region63: #{cbhg_forward.1} parent=0 // pred_check_branch
    %53 = sbr.rel (0) target = $region65
  $region64: #{cbhg_forward.1} parent=0 // pred_region
    _
  $region65: #{cbhg_forward.1} parent=0 // pred_fallthru
    _
  // Predicated region
  $region66: #{cbhg_forward.1} parent=0 // pred_check
    _
  $region67: #{cbhg_forward.1} parent=0 // pred_check_branch
    %55 = sbr.rel (0) target = $region69
  $region68: #{cbhg_forward.1} parent=0 // pred_region
    _
  $region69: #{cbhg_forward.1} parent=0 // pred_fallthru
    _
  %v56 = vlaneseq
  %v57 = vshrl.u32 %v56, 7
  %v58 = vadd.s32 %v57, 8
  %v59 = vadd.s32 %v57, 16
  %v60 = vadd.s32 %v57, 24
  %v61 = vadd.s32 %v57, 32
  %v62 = vld [vmem:[%s0] sm:$0xff]
  %v63 = vld [vmem:[%s0 + $0x8] sm:$0xff]
  %v64 = vld [vmem:[%s0 + $0x10] sm:$0xff]
  %v65 = vld [vmem:[%s0 + $0x18] sm:$0xff]
  %v66 = vld [vmem:[%s0 + $0x20] sm:$0xff]
  %v67 = vrot.slane %v62, 4
  %v68 = vrot.slane %v63, 4
  %v69 = vrot.slane %v64, 4
  %v70 = vrot.slane %v65, 4
  %v71 = vrot.slane %v66, 4
  %vm72 = vcmp.lt.s32.totalorder %v57, 4
  %v73 = vsel %vm72, %v70, %v71
  %v74 = vsel %vm72, %v69, %v70
  %v75 = vsel %vm72, %v68, %v69
  %v76 = vsel %vm72, %v67, %v68
  %v77 = vsel %vm72, %v71, %v67
  %vm78 = vcmp.ge.s32.totalorder %v57, 4
  %vm79 = vcmp.ge.s32.totalorder %v58, 4
  %vm80 = vcmp.ge.s32.totalorder %v59, 4
  %vm81 = vcmp.ge.s32.totalorder %v60, 4
  %vm82 = vcmp.ge.s32.totalorder %v61, 4
  %v83 = vsel %vm78, 1, 0
  %v84 = vsel %vm79, 1, 0
  %v85 = vsel %vm80, 1, 0
  %v86 = vsel %vm81, 1, 0
  %v87 = vsel %vm82, 1, 0
  %vm88 = vcmp.eq.s32.totalorder %v83, 1
  %vm89 = vcmp.eq.s32.totalorder %v84, 1
  %vm90 = vcmp.eq.s32.totalorder %v85, 1
  %vm91 = vcmp.eq.s32.totalorder %v86, 1
  %vm92 = vcmp.eq.s32.totalorder %v87, 1
  %v93 = vsel %vm88, %v77, 0.0
  %v94 = vsel %vm89, %v76, 0.0
  %v95 = vsel %vm90, %v75, 0.0
  %v96 = vsel %vm91, %v74, 0.0
  %v97 = vsel %vm92, %v73, 0.0
  %v98 = vrot.slane %v62, 6
  %v99 = vrot.slane %v63, 6
  %v100 = vrot.slane %v64, 6
  %v101 = vrot.slane %v65, 6
  %v102 = vrot.slane %v66, 6
  %vm103 = vcmp.lt.s32.totalorder %v57, 2
  %v104 = vsel %vm103, %v101, %v102
  %v105 = vsel %vm103, %v100, %v101
  %v106 = vsel %vm103, %v99, %v100
  %v107 = vsel %vm103, %v98, %v99
  %v108 = vsel %vm103, %v102, %v98
  %vm109 = vcmp.ge.s32.totalorder %v57, 2
  %vm110 = vcmp.ge.s32.totalorder %v58, 2
  %vm111 = vcmp.ge.s32.totalorder %v59, 2
  %vm112 = vcmp.ge.s32.totalorder %v60, 2
  %vm113 = vcmp.ge.s32.totalorder %v61, 2
  %v114 = vsel %vm109, 1, 0
  %v115 = vsel %vm110, 1, 0
  %v116 = vsel %vm111, 1, 0
  %v117 = vsel %vm112, 1, 0
  %v118 = vsel %vm113, 1, 0
  %vm119 = vcmp.eq.s32.totalorder %v114, 1
  %vm120 = vcmp.eq.s32.totalorder %v115, 1
  %vm121 = vcmp.eq.s32.totalorder %v116, 1
  %vm122 = vcmp.eq.s32.totalorder %v117, 1
  %vm123 = vcmp.eq.s32.totalorder %v118, 1
  %v124 = vsel %vm119, %v108, 0.0
  %v125 = vsel %vm120, %v107, 0.0
  %v126 = vsel %vm121, %v106, 0.0
  %v127 = vsel %vm122, %v105, 0.0
  %v128 = vsel %vm123, %v104, 0.0
  %v129 = vrot.slane %v62, 2
  %v130 = vrot.slane %v63, 2
  %v131 = vrot.slane %v64, 2
  %v132 = vrot.slane %v65, 2
  %v133 = vrot.slane %v66, 2
  %vm134 = vcmp.lt.s32.totalorder %v57, 6
  %v135 = vsel %vm134, %v132, %v133
  %v136 = vsel %vm134, %v131, %v132
  %v137 = vsel %vm134, %v130, %v131
  %v138 = vsel %vm134, %v129, %v130
  %v139 = vsel %vm134, %v133, %v129
  %vm140 = vcmp.lt.s32.totalorder %v57, 38
  %vm141 = vcmp.lt.s32.totalorder %v58, 38
  %vm142 = vcmp.lt.s32.totalorder %v59, 38
  %vm143 = vcmp.lt.s32.totalorder %v60, 38
  %vm144 = vcmp.lt.s32.totalorder %v61, 38
  %v145 = vsel %vm140, 1, 0
  %v146 = vsel %vm141, 1, 0
  %v147 = vsel %vm142, 1, 0
  %v148 = vsel %vm143, 1, 0
  %v149 = vsel %vm144, 1, 0
  %vm150 = vcmp.eq.s32.totalorder %v145, 1
  %vm151 = vcmp.eq.s32.totalorder %v146, 1
  %vm152 = vcmp.eq.s32.totalorder %v147, 1
  %vm153 = vcmp.eq.s32.totalorder %v148, 1
  %vm154 = vcmp.eq.s32.totalorder %v149, 1
  %v155 = vsel %vm150, %v138, 0.0
  %v156 = vsel %vm151, %v137, 0.0
  %v157 = vsel %vm152, %v136, 0.0
  %v158 = vsel %vm153, %v135, 0.0
  %v159 = vsel %vm154, %v139, 0.0
  %165 = vrot.lane.b32.xlu0 %v124, 16
  %v166 = vpop.permute.xlu0 %165
  %167 = vrot.lane.b32.xlu0 %v125, 16
  %v168 = vpop.permute.xlu0 %167
  %169 = vrot.lane.b32.xlu0 %v126, 16
  %v170 = vpop.permute.xlu0 %169
  %171 = vrot.lane.b32.xlu0 %v127, 16
  %v172 = vpop.permute.xlu0 %171
  %173 = vrot.lane.b32.xlu0 %v128, 16
  %v174 = vpop.permute.xlu0 %173
  %185 = vrot.lane.b32.xlu0 %v62, 32
  %v186 = vpop.permute.xlu0 %185
  %187 = vrot.lane.b32.xlu0 %v63, 32
  %v188 = vpop.permute.xlu0 %187
  %189 = vrot.lane.b32.xlu0 %v64, 32
  %v190 = vpop.permute.xlu0 %189
  %191 = vrot.lane.b32.xlu0 %v65, 32
  %v192 = vpop.permute.xlu0 %191
  %193 = vrot.lane.b32.xlu0 %v66, 32
  %v194 = vpop.permute.xlu0 %193
  %205 = vrot.lane.b32.xlu0 %v155, 48
  %v206 = vpop.permute.xlu0 %205
  %207 = vrot.lane.b32.xlu0 %v156, 48
  %v208 = vpop.permute.xlu0 %207
  %209 = vrot.lane.b32.xlu0 %v157, 48
  %v210 = vpop.permute.xlu0 %209
  %211 = vrot.lane.b32.xlu0 %v158, 48
  %v212 = vpop.permute.xlu0 %211
  %213 = vrot.lane.b32.xlu0 %v159, 48
  %v214 = vpop.permute.xlu0 %213
  %vm220 = vcmask 130048
  %v221 = vsel %vm220, %v93, %v166
  %v222 = vsel %vm220, %v94, %v168
  %v223 = vsel %vm220, %v95, %v170
  %v224 = vsel %vm220, %v96, %v172
  %v225 = vsel %vm220, %v97, %v174
  %vm226 = vcmask 261120
  %v227 = vsel %vm226, %v221, %v186
  %v228 = vsel %vm226, %v222, %v188
  %v229 = vsel %vm226, %v223, %v190
  %v230 = vsel %vm226, %v224, %v192
  %v231 = vsel %vm226, %v225, %v194
  %vm232 = vcmask 392192
  %v233 = vsel %vm232, %v227, %v206
  %v234 = vsel %vm232, %v228, %v208
  %v235 = vsel %vm232, %v229, %v210
  %v236 = vsel %vm232, %v230, %v212
  %v237 = vsel %vm232, %v231, %v214
  %v238 = vld [vmem:[%s1] sm:$0xff]
  %v239 = vld [vmem:[%s1 + $0x8] sm:$0xff]
  %v240 = vld [vmem:[%s1 + $0x10] sm:$0xff]
  %v241 = vld [vmem:[%s1 + $0x18] sm:$0xff]
  %v242 = vld [vmem:[%s1 + $0x20] sm:$0xff]
  %v243 = vld [vmem:[%s1 + $0x28] sm:$0xff]
  %v244 = vld [vmem:[%s1 + $0x30] sm:$0xff]
  %v245 = vld [vmem:[%s1 + $0x38] sm:$0xff]
  %vm246 = vcmask 523264
  %v248 = vsel %vm246, %v233, 0
  %v251 = vsel %vm246, %v234, 0
  %v254 = vsel %vm246, %v235, 0
  %v257 = vsel %vm246, %v236, 0
  %v260 = vsel %vm246, %v237, 0
  %262 = vmatprep.subr.mxu0 0.0
  %263 = vmatpush1.msra.mxu0 %v238
  %264 = vmatprep.subr.mxu0 0.0
  %265 = vmatpush1.msra.mxu0 %v239
  %266 = vmatprep.subr.mxu0 0.0
  %267 = vmatpush1.msra.mxu0 %v240
  %268 = vmatprep.subr.mxu0 0.0
  %269 = vmatpush1.msra.mxu0 %v241
  %270 = vmatprep.subr.mxu0 0.0
  %271 = vmatpush1.msra.mxu0 %v242
  %272 = vmatprep.subr.mxu0 0.0
  %273 = vmatpush1.msra.mxu0 %v243
  %274 = vmatprep.subr.mxu0 0.0
  %275 = vmatpush1.msra.mxu0 %v244
  %276 = vmatprep.subr.mxu0 0.0
  %277 = vmatpush1.msra.mxu0 %v245
  %278 = vmatprep.subr.mxu0 0.0
  %279 = vmatpush1.msra.mxu0 0.0
  %280 = vmatprep.subr.mxu0 0.0
  %281 = vmatpush1.msra.mxu0 0.0
  %282 = vmatprep.subr.mxu0 0.0
  %283 = vmatpush1.msra.mxu0 0.0
  %284 = vmatprep.subr.mxu0 0.0
  %285 = vmatpush1.msra.mxu0 0.0
  %286 = vmatprep.subr.mxu0 0.0
  %287 = vmatpush1.msra.mxu0 0.0
  %288 = vmatprep.subr.mxu0 0.0
  %289 = vmatpush1.msra.mxu0 0.0
  %290 = vmatprep.subr.mxu0 0.0
  %291 = vmatpush1.msra.mxu0 0.0
  %292 = vmatprep.subr.mxu0 0.0
  %293 = vmatpush1.msra.mxu0 0.0
  %294 = vmatprep.subr.mxu0 0.0
  %295 = vmatpush1.msra.mxu0 0.0
  %296 = vmatprep.subr.mxu0 0.0
  %297 = vmatpush1.msra.mxu0 0.0
  %298 = vmatprep.subr.mxu0 0.0
  %299 = vmatpush1.msra.mxu0 0.0
  %300 = vmatprep.subr.mxu0 0.0
  %301 = vmatpush1.msra.mxu0 0.0
  %302 = vmatprep.subr.mxu0 0.0
  %303 = vmatpush1.msra.mxu0 0.0
  %304 = vmatprep.subr.mxu0 0.0
  %305 = vmatpush1.msra.mxu0 0.0
  %306 = vmatprep.subr.mxu0 0.0
  %307 = vmatpush1.msra.mxu0 0.0
  %308 = vmatprep.subr.mxu0 0.0
  %309 = vmatpush1.msra.mxu0 0.0
  %310 = vmatprep.subr.mxu0 0.0
  %311 = vmatpush1.msra.mxu0 0.0
  %312 = vmatprep.subr.mxu0 0.0
  %313 = vmatpush1.msra.mxu0 0.0
  %314 = vmatprep.subr.mxu0 0.0
  %315 = vmatpush1.msra.mxu0 0.0
  %316 = vmatprep.subr.mxu0 0.0
  %317 = vmatpush1.msra.mxu0 0.0
  %318 = vmatprep.subr.mxu0 0.0
  %319 = vmatpush1.msra.mxu0 0.0
  %320 = vmatprep.subr.mxu0 0.0
  %321 = vmatpush1.msra.mxu0 0.0
  %322 = vmatprep.subr.mxu0 0.0
  %323 = vmatpush1.msra.mxu0 0.0
  %324 = vmatprep.subr.mxu0 0.0
  %325 = vmatpush1.msra.mxu0 0.0
  %326 = vmatprep.mubr.f32.mxu0 0.0
  %327 = vmatmul.mubr.f32.gmra.mrb[0].mxu0 %v248
  %v328 = vpop.f32.mrb[0].mxu0
  %v329 = vadd.f32 0.0, %v328
  %v330 = vpop.f32.mrb[0].mxu0
  %331 = vmatprep.mubr.f32.mxu0 0.0
  %332 = vmatmul.mubr.f32.gmra.mrb[0].mxu0 %v251
  %v333 = vpop.f32.mrb[0].mxu0
  %v334 = vadd.f32 0.0, %v333
  %v335 = vpop.f32.mrb[0].mxu0
  %336 = vmatprep.mubr.f32.mxu0 0.0
  %337 = vmatmul.mubr.f32.gmra.mrb[0].mxu0 %v254
  %v338 = vpop.f32.mrb[0].mxu0
  %v339 = vadd.f32 0.0, %v338
  %v340 = vpop.f32.mrb[0].mxu0
  %341 = vmatprep.mubr.f32.mxu0 0.0
  %342 = vmatmul.mubr.f32.gmra.mrb[0].mxu0 %v257
  %v343 = vpop.f32.mrb[0].mxu0
  %v344 = vadd.f32 0.0, %v343
  %v345 = vpop.f32.mrb[0].mxu0
  %346 = vmatprep.mubr.f32.mxu0 0.0
  %347 = vmatmul.mubr.f32.gmra.mrb[0].mxu0 %v260
  %v348 = vpop.f32.mrb[0].mxu0
  %v349 = vadd.f32 0.0, %v348
  %v350 = vpop.f32.mrb[0].mxu0
  %351 = vdwg.mxu0
  %v352 = vmax.f32 %v329, 0.0
  %v353 = vmax.f32 %v334, 0.0
  %v354 = vmax.f32 %v339, 0.0
  %v355 = vmax.f32 %v344, 0.0
  %v356 = vmax.f32 %v349, 0.0
  %v357 = vld [vmem:[%s2] sm:$0x1]
  %v359 = vlaneseq
  %v360 = vshrl.u32 %v359, 7
  %v361 = vsub.s32 0, %v360
  %v362 = vrot.slane %v357, %v361
  %v364 = vmul.f32 %v352, %v362
  %v365 = vmul.f32 %v353, %v362
  %v366 = vmul.f32 %v354, %v362
  %v367 = vmul.f32 %v355, %v362
  %v368 = vmul.f32 %v356, %v362
  %v369 = vld [vmem:[%s3] sm:$0x1]
  %v371 = vlaneseq
  %v372 = vshrl.u32 %v371, 7
  %v373 = vsub.s32 0, %v372
  %v374 = vrot.slane %v369, %v373
  %v376 = vadd.f32 %v364, %v374
  %v377 = vadd.f32 %v365, %v374
  %v378 = vadd.f32 %v366, %v374
  %v379 = vadd.f32 %v367, %v374
  %v380 = vadd.f32 %v368, %v374
  %v381 = vrot.slane %v376, 6
  %v382 = vrot.slane %v377, 6
  %v383 = vrot.slane %v378, 6
  %v384 = vrot.slane %v379, 6
  %v385 = vrot.slane %v380, 6
  %v386 = vsel %vm103, %v384, %v385
  %v387 = vsel %vm103, %v383, %v384
  %v388 = vsel %vm103, %v382, %v383
  %v389 = vsel %vm103, %v381, %v382
  %v390 = vsel %vm103, %v385, %v381
  %v391 = vsel %vm119, %v390, %v376
  %v392 = vsel %vm120, %v389, %v377
  %v393 = vsel %vm121, %v388, %v378
  %v394 = vsel %vm122, %v387, %v379
  %v395 = vsel %vm123, %v386, %v380
  %v396 = vmax.f32 %v376, %v391
  %v397 = vmax.f32 %v377, %v392
  %v398 = vmax.f32 %v378, %v393
  %v399 = vmax.f32 %v379, %v394
  %v400 = vmax.f32 %v380, %v395
  %v401 = vrot.slane %v396, 6
  %v402 = vrot.slane %v397, 6
  %v403 = vrot.slane %v398, 6
  %v404 = vrot.slane %v399, 6
  %v405 = vrot.slane %v400, 6
  %v406 = vsel %vm103, %v404, %v405
  %v407 = vsel %vm103, %v403, %v404
  %v408 = vsel %vm103, %v402, %v403
  %v409 = vsel %vm103, %v401, %v402
  %v410 = vsel %vm103, %v405, %v401
  %v411 = vsel %vm119, %v410, 0.0
  %v412 = vsel %vm120, %v409, 0.0
  %v413 = vsel %vm121, %v408, 0.0
  %v414 = vsel %vm122, %v407, 0.0
  %v415 = vsel %vm123, %v406, 0.0
  %v416 = vrot.slane %v396, 2
  %v417 = vrot.slane %v397, 2
  %v418 = vrot.slane %v398, 2
  %v419 = vrot.slane %v399, 2
  %v420 = vrot.slane %v400, 2
  %v421 = vsel %vm134, %v419, %v420
  %v422 = vsel %vm134, %v418, %v419
  %v423 = vsel %vm134, %v417, %v418
  %v424 = vsel %vm134, %v416, %v417
  %v425 = vsel %vm134, %v420, %v416
  %v426 = vsel %vm150, %v424, 0.0
  %v427 = vsel %vm151, %v423, 0.0
  %v428 = vsel %vm152, %v422, 0.0
  %v429 = vsel %vm153, %v421, 0.0
  %v430 = vsel %vm154, %v425, 0.0
  %v431 = vld [vmem:[%s4] sm:$0xff]
  %v432 = vld [vmem:[%s4 + $0x8] sm:$0xff]
  %v433 = vld [vmem:[%s4 + $0x10] sm:$0xff]
  %v434 = vld [vmem:[%s4 + $0x18] sm:$0xff]
  %v435 = vld [vmem:[%s4 + $0x20] sm:$0xff]
  %v436 = vld [vmem:[%s4 + $0x28] sm:$0xff]
  %v437 = vld [vmem:[%s4 + $0x30] sm:$0xff]
  %v438 = vld [vmem:[%s4 + $0x38] sm:$0xff]
  %v439 = vld [vmem:[%s4 + $0x40] sm:$0xff]
  %v440 = vld [vmem:[%s4 + $0x48] sm:$0xff]
  %v441 = vld [vmem:[%s4 + $0x50] sm:$0xff]
  %v442 = vld [vmem:[%s4 + $0x58] sm:$0xff]
  %v443 = vld [vmem:[%s4 + $0x60] sm:$0xff]
  %v444 = vld [vmem:[%s4 + $0x68] sm:$0xff]
  %v445 = vld [vmem:[%s4 + $0x70] sm:$0xff]
  %v446 = vld [vmem:[%s4 + $0x78] sm:$0xff]
  %v447 = vld [vmem:[%s4 + $0x80] sm:$0xff]
  %v448 = vld [vmem:[%s4 + $0x88] sm:$0xff]
  %v449 = vld [vmem:[%s4 + $0x90] sm:$0xff]
  %v450 = vld [vmem:[%s4 + $0x98] sm:$0xff]
  %v451 = vld [vmem:[%s4 + $0xa0] sm:$0xff]
  %v452 = vld [vmem:[%s4 + $0xa8] sm:$0xff]
  %v453 = vld [vmem:[%s4 + $0xb0] sm:$0xff]
  %v454 = vld [vmem:[%s4 + $0xb8] sm:$0xff]
  %v455 = vld [vmem:[%s4 + $0xc0] sm:$0xff]
  %v456 = vld [vmem:[%s4 + $0xc8] sm:$0xff]
  %v457 = vld [vmem:[%s4 + $0xd0] sm:$0xff]
  %v458 = vld [vmem:[%s4 + $0xd8] sm:$0xff]
  %v459 = vld [vmem:[%s4 + $0xe0] sm:$0xff]
  %v460 = vld [vmem:[%s4 + $0xe8] sm:$0xff]
  %v461 = vld [vmem:[%s4 + $0xf0] sm:$0xff]
  %v462 = vld [vmem:[%s4 + $0xf8] sm:$0xff]
  %v463 = vld [vmem:[%s4 + $0x100] sm:$0xff]
  %v464 = vld [vmem:[%s4 + $0x108] sm:$0xff]
  %v465 = vld [vmem:[%s4 + $0x110] sm:$0xff]
  %v466 = vld [vmem:[%s4 + $0x118] sm:$0xff]
  %v467 = vld [vmem:[%s4 + $0x120] sm:$0xff]
  %v468 = vld [vmem:[%s4 + $0x128] sm:$0xff]
  %v469 = vld [vmem:[%s4 + $0x130] sm:$0xff]
  %v470 = vld [vmem:[%s4 + $0x138] sm:$0xff]
  %v471 = vld [vmem:[%s4 + $0x140] sm:$0xff]
  %v472 = vld [vmem:[%s4 + $0x148] sm:$0xff]
  %v473 = vld [vmem:[%s4 + $0x150] sm:$0xff]
  %v474 = vld [vmem:[%s4 + $0x158] sm:$0xff]
  %v475 = vld [vmem:[%s4 + $0x160] sm:$0xff]
  %v476 = vld [vmem:[%s4 + $0x168] sm:$0xff]
  %v477 = vld [vmem:[%s4 + $0x170] sm:$0xff]
  %v478 = vld [vmem:[%s4 + $0x178] sm:$0xff]
  %479 = vmatprep.subr.mxu0 0.0
  %480 = vmatpush1.msra.mxu0 %v431
  %481 = vmatprep.subr.mxu0 0.0
  %482 = vmatpush1.msra.mxu0 %v432
  %483 = vmatprep.subr.mxu0 0.0
  %484 = vmatpush1.msra.mxu0 %v433
  %485 = vmatprep.subr.mxu0 0.0
  %486 = vmatpush1.msra.mxu0 %v434
  %487 = vmatprep.subr.mxu0 0.0
  %488 = vmatpush1.msra.mxu0 %v435
  %489 = vmatprep.subr.mxu0 0.0
  %490 = vmatpush1.msra.mxu0 %v436
  %491 = vmatprep.subr.mxu0 0.0
  %492 = vmatpush1.msra.mxu0 %v437
  %493 = vmatprep.subr.mxu0 0.0
  %494 = vmatpush1.msra.mxu0 %v438
  %495 = vmatprep.subr.mxu0 0.0
  %496 = vmatpush1.msra.mxu0 %v439
  %497 = vmatprep.subr.mxu0 0.0
  %498 = vmatpush1.msra.mxu0 %v440
  %499 = vmatprep.subr.mxu0 0.0
  %500 = vmatpush1.msra.mxu0 %v441
  %501 = vmatprep.subr.mxu0 0.0
  %502 = vmatpush1.msra.mxu0 %v442
  %503 = vmatprep.subr.mxu0 0.0
  %504 = vmatpush1.msra.mxu0 %v443
  %505 = vmatprep.subr.mxu0 0.0
  %506 = vmatpush1.msra.mxu0 %v444
  %507 = vmatprep.subr.mxu0 0.0
  %508 = vmatpush1.msra.mxu0 %v445
  %509 = vmatprep.subr.mxu0 0.0
  %510 = vmatpush1.msra.mxu0 %v446
  %511 = vmatprep.subr.mxu0 0.0
  %512 = vmatpush1.msra.mxu0 %v447
  %513 = vmatprep.subr.mxu0 0.0
  %514 = vmatpush1.msra.mxu0 %v448
  %515 = vmatprep.subr.mxu0 0.0
  %516 = vmatpush1.msra.mxu0 %v449
  %517 = vmatprep.subr.mxu0 0.0
  %518 = vmatpush1.msra.mxu0 %v450
  %519 = vmatprep.subr.mxu0 0.0
  %520 = vmatpush1.msra.mxu0 %v451
  %521 = vmatprep.subr.mxu0 0.0
  %522 = vmatpush1.msra.mxu0 %v452
  %523 = vmatprep.subr.mxu0 0.0
  %524 = vmatpush1.msra.mxu0 %v453
  %525 = vmatprep.subr.mxu0 0.0
  %526 = vmatpush1.msra.mxu0 %v454
  %527 = vmatprep.subr.mxu0 0.0
  %528 = vmatpush1.msra.mxu0 %v455
  %529 = vmatprep.subr.mxu0 0.0
  %530 = vmatpush1.msra.mxu0 %v456
  %531 = vmatprep.subr.mxu0 0.0
  %532 = vmatpush1.msra.mxu0 %v457
  %533 = vmatprep.subr.mxu0 0.0
  %534 = vmatpush1.msra.mxu0 %v458
  %535 = vmatprep.subr.mxu0 0.0
  %536 = vmatpush1.msra.mxu0 %v459
  %537 = vmatprep.subr.mxu0 0.0
  %538 = vmatpush1.msra.mxu0 %v460
  %539 = vmatprep.subr.mxu0 0.0
  %540 = vmatpush1.msra.mxu0 %v461
  %541 = vmatprep.subr.mxu0 0.0
  %542 = vmatpush1.msra.mxu0 %v462
  %543 = vmatprep.mubr.f32.mxu0 %v396
  %544 = vmatmul.mubr.f32.gmra.mrb[0].mxu0 %v411
  %v545 = vpop.f32.mrb[0].mxu0
  %v546 = vadd.f32 0.0, %v545
  %v547 = vpop.f32.mrb[0].mxu0
  %548 = vmatprep.mubr.f32.mxu0 %v397
  %549 = vmatmul.mubr.f32.gmra.mrb[0].mxu0 %v412
  %v550 = vpop.f32.mrb[0].mxu0
  %v551 = vadd.f32 0.0, %v550
  %v552 = vpop.f32.mrb[0].mxu0
  %553 = vmatprep.mubr.f32.mxu0 %v398
  %554 = vmatmul.mubr.f32.gmra.mrb[0].mxu0 %v413
  %v555 = vpop.f32.mrb[0].mxu0
  %v556 = vadd.f32 0.0, %v555
  %v557 = vpop.f32.mrb[0].mxu0
  %558 = vmatprep.mubr.f32.mxu0 %v399
  %559 = vmatmul.mubr.f32.gmra.mrb[0].mxu0 %v414
  %v560 = vpop.f32.mrb[0].mxu0
  %v561 = vadd.f32 0.0, %v560
  %v562 = vpop.f32.mrb[0].mxu0
  %563 = vmatprep.mubr.f32.mxu0 %v400
  %564 = vmatmul.mubr.f32.gmra.mrb[0].mxu0 %v415
  %v565 = vpop.f32.mrb[0].mxu0
  %v566 = vadd.f32 0.0, %v565
  %v567 = vpop.f32.mrb[0].mxu0
  %568 = vdwg.mxu0
  %569 = vmatprep.subr.mxu0 0.0
  %570 = vmatpush1.msra.mxu0 %v463
  %571 = vmatprep.subr.mxu0 0.0
  %572 = vmatpush1.msra.mxu0 %v464
  %573 = vmatprep.subr.mxu0 0.0
  %574 = vmatpush1.msra.mxu0 %v465
  %575 = vmatprep.subr.mxu0 0.0
  %576 = vmatpush1.msra.mxu0 %v466
  %577 = vmatprep.subr.mxu0 0.0
  %578 = vmatpush1.msra.mxu0 %v467
  %579 = vmatprep.subr.mxu0 0.0
  %580 = vmatpush1.msra.mxu0 %v468
  %581 = vmatprep.subr.mxu0 0.0
  %582 = vmatpush1.msra.mxu0 %v469
  %583 = vmatprep.subr.mxu0 0.0
  %584 = vmatpush1.msra.mxu0 %v470
  %585 = vmatprep.subr.mxu0 0.0
  %586 = vmatpush1.msra.mxu0 %v471
  %587 = vmatprep.subr.mxu0 0.0
  %588 = vmatpush1.msra.mxu0 %v472
  %589 = vmatprep.subr.mxu0 0.0
  %590 = vmatpush1.msra.mxu0 %v473
  %591 = vmatprep.subr.mxu0 0.0
  %592 = vmatpush1.msra.mxu0 %v474
  %593 = vmatprep.subr.mxu0 0.0
  %594 = vmatpush1.msra.mxu0 %v475
  %595 = vmatprep.subr.mxu0 0.0
  %596 = vmatpush1.msra.mxu0 %v476
  %597 = vmatprep.subr.mxu0 0.0
  %598 = vmatpush1.msra.mxu0 %v477
  %599 = vmatprep.subr.mxu0 0.0
  %600 = vmatpush1.msra.mxu0 %v478
  %601 = vmatprep.subr.mxu0 0.0
  %602 = vmatpush1.msra.mxu0 0.0
  %603 = vmatprep.subr.mxu0 0.0
  %604 = vmatpush1.msra.mxu0 0.0
  %605 = vmatprep.subr.mxu0 0.0
  %606 = vmatpush1.msra.mxu0 0.0
  %607 = vmatprep.subr.mxu0 0.0
  %608 = vmatpush1.msra.mxu0 0.0
  %609 = vmatprep.subr.mxu0 0.0
  %610 = vmatpush1.msra.mxu0 0.0
  %611 = vmatprep.subr.mxu0 0.0
  %612 = vmatpush1.msra.mxu0 0.0
  %613 = vmatprep.subr.mxu0 0.0
  %614 = vmatpush1.msra.mxu0 0.0
  %615 = vmatprep.subr.mxu0 0.0
  %616 = vmatpush1.msra.mxu0 0.0
  %617 = vmatprep.subr.mxu0 0.0
  %618 = vmatpush1.msra.mxu0 0.0
  %619 = vmatprep.subr.mxu0 0.0
  %620 = vmatpush1.msra.mxu0 0.0
  %621 = vmatprep.subr.mxu0 0.0
  %622 = vmatpush1.msra.mxu0 0.0
  %623 = vmatprep.subr.mxu0 0.0
  %624 = vmatpush1.msra.mxu0 0.0
  %625 = vmatprep.subr.mxu0 0.0
  %626 = vmatpush1.msra.mxu0 0.0
  %627 = vmatprep.subr.mxu0 0.0
  %628 = vmatpush1.msra.mxu0 0.0
  %629 = vmatprep.subr.mxu0 0.0
  %630 = vmatpush1.msra.mxu0 0.0
  %631 = vmatprep.subr.mxu0 0.0
  %632 = vmatpush1.msra.mxu0 0.0
  %633 = vmatprep.mubr.f32.mxu0 0.0
  %634 = vmatmul.mubr.f32.gmra.mrb[0].mxu0 %v426
  %v635 = vpop.f32.mrb[0].mxu0
  %v636 = vadd.f32 %v546, %v635
  %v637 = vpop.f32.mrb[0].mxu0
  %638 = vmatprep.mubr.f32.mxu0 0.0
  %639 = vmatmul.mubr.f32.gmra.mrb[0].mxu0 %v427
  %v640 = vpop.f32.mrb[0].mxu0
  %v641 = vadd.f32 %v551, %v640
  %v642 = vpop.f32.mrb[0].mxu0
  %643 = vmatprep.mubr.f32.mxu0 0.0
  %644 = vmatmul.mubr.f32.gmra.mrb[0].mxu0 %v428
  %v645 = vpop.f32.mrb[0].mxu0
  %v646 = vadd.f32 %v556, %v645
  %v647 = vpop.f32.mrb[0].mxu0
  %648 = vmatprep.mubr.f32.mxu0 0.0
  %649 = vmatmul.mubr.f32.gmra.mrb[0].mxu0 %v429
  %v650 = vpop.f32.mrb[0].mxu0
  %v651 = vadd.f32 %v561, %v650
  %v652 = vpop.f32.mrb[0].mxu0
  %653 = vmatprep.mubr.f32.mxu0 0.0
  %654 = vmatmul.mubr.f32.gmra.mrb[0].mxu0 %v430
  %v655 = vpop.f32.mrb[0].mxu0
  %v656 = vadd.f32 %v566, %v655
  %v657 = vpop.f32.mrb[0].mxu0
  %658 = vdwg.mxu0
  %v659 = vmax.f32 %v636, 0.0
  %v660 = vmax.f32 %v641, 0.0
  %v661 = vmax.f32 %v646, 0.0
  %v662 = vmax.f32 %v651, 0.0
  %v663 = vmax.f32 %v656, 0.0
  %v664 = vld [vmem:[%s5] sm:$0x1]
  %v666 = vlaneseq
  %v667 = vshrl.u32 %v666, 7
  %v668 = vsub.s32 0, %v667
  %v669 = vrot.slane %v664, %v668
  %v671 = vmul.f32 %v659, %v669
  %v672 = vmul.f32 %v660, %v669
  %v673 = vmul.f32 %v661, %v669
  %v674 = vmul.f32 %v662, %v669
  %v675 = vmul.f32 %v663, %v669
  %v676 = vld [vmem:[%s6] sm:$0x1]
  %v678 = vlaneseq
  %v679 = vshrl.u32 %v678, 7
  %v680 = vsub.s32 0, %v679
  %v681 = vrot.slane %v676, %v680
  %v683 = vadd.f32 %v671, %v681
  %v684 = vadd.f32 %v672, %v681
  %v685 = vadd.f32 %v673, %v681
  %v686 = vadd.f32 %v674, %v681
  %v687 = vadd.f32 %v675, %v681
  %v688 = vrot.slane %v683, 6
  %v689 = vrot.slane %v684, 6
  %v690 = vrot.slane %v685, 6
  %v691 = vrot.slane %v686, 6
  %v692 = vrot.slane %v687, 6
  %v693 = vsel %vm103, %v691, %v692
  %v694 = vsel %vm103, %v690, %v691
  %v695 = vsel %vm103, %v689, %v690
  %v696 = vsel %vm103, %v688, %v689
  %v697 = vsel %vm103, %v692, %v688
  %v698 = vsel %vm119, %v697, 0.0
  %v699 = vsel %vm120, %v696, 0.0
  %v700 = vsel %vm121, %v695, 0.0
  %v701 = vsel %vm122, %v694, 0.0
  %v702 = vsel %vm123, %v693, 0.0
  %v703 = vrot.slane %v683, 2
  %v704 = vrot.slane %v684, 2
  %v705 = vrot.slane %v685, 2
  %v706 = vrot.slane %v686, 2
  %v707 = vrot.slane %v687, 2
  %v708 = vsel %vm134, %v706, %v707
  %v709 = vsel %vm134, %v705, %v706
  %v710 = vsel %vm134, %v704, %v705
  %v711 = vsel %vm134, %v703, %v704
  %v712 = vsel %vm134, %v707, %v703
  %v713 = vsel %vm150, %v711, 0.0
  %v714 = vsel %vm151, %v710, 0.0
  %v715 = vsel %vm152, %v709, 0.0
  %v716 = vsel %vm153, %v708, 0.0
  %v717 = vsel %vm154, %v712, 0.0
  %723 = vrot.lane.b32.xlu0 %v683, 64
  %v724 = vpop.permute.xlu0 %723
  %725 = vrot.lane.b32.xlu0 %v684, 64
  %v726 = vpop.permute.xlu0 %725
  %727 = vrot.lane.b32.xlu0 %v685, 64
  %v728 = vpop.permute.xlu0 %727
  %729 = vrot.lane.b32.xlu0 %v686, 64
  %v730 = vpop.permute.xlu0 %729
  %731 = vrot.lane.b32.xlu0 %v687, 64
  %v732 = vpop.permute.xlu0 %731
  %v738 = vsel %vm246, %v698, %v724
  %v739 = vsel %vm246, %v699, %v726
  %v740 = vsel %vm246, %v700, %v728
  %v741 = vsel %vm246, %v701, %v730
  %v742 = vsel %vm246, %v702, %v732
  %v743 = vld [vmem:[%s7] sm:$0xff]
  %v744 = vld [vmem:[%s7 + $0x8] sm:$0xff]
  %v745 = vld [vmem:[%s7 + $0x10] sm:$0xff]
  %v746 = vld [vmem:[%s7 + $0x18] sm:$0xff]
  %v747 = vld [vmem:[%s7 + $0x20] sm:$0xff]
  %v748 = vld [vmem:[%s7 + $0x28] sm:$0xff]
  %v749 = vld [vmem:[%s7 + $0x30] sm:$0xff]
  %v750 = vld [vmem:[%s7 + $0x38] sm:$0xff]
  %v751 = vld [vmem:[%s7 + $0x40] sm:$0xff]
  %v752 = vld [vmem:[%s7 + $0x48] sm:$0xff]
  %v753 = vld [vmem:[%s7 + $0x50] sm:$0xff]
  %v754 = vld [vmem:[%s7 + $0x58] sm:$0xff]
  %v755 = vld [vmem:[%s7 + $0x60] sm:$0xff]
  %v756 = vld [vmem:[%s7 + $0x68] sm:$0xff]
  %v757 = vld [vmem:[%s7 + $0x70] sm:$0xff]
  %v758 = vld [vmem:[%s7 + $0x78] sm:$0xff]
  %v759 = vld [vmem:[%s7 + $0x80] sm:$0xff]
  %v760 = vld [vmem:[%s7 + $0x88] sm:$0xff]
  %v761 = vld [vmem:[%s7 + $0x90] sm:$0xff]
  %v762 = vld [vmem:[%s7 + $0x98] sm:$0xff]
  %v763 = vld [vmem:[%s7 + $0xa0] sm:$0xff]
  %v764 = vld [vmem:[%s7 + $0xa8] sm:$0xff]
  %v765 = vld [vmem:[%s7 + $0xb0] sm:$0xff]
  %v766 = vld [vmem:[%s7 + $0xb8] sm:$0xff]
  %v768 = vsel %vm246, %v713, 0
  %v771 = vsel %vm246, %v714, 0
  %v774 = vsel %vm246, %v715, 0
  %v777 = vsel %vm246, %v716, 0
  %v780 = vsel %vm246, %v717, 0
  %782 = vmatprep.subr.mxu0 0.0
  %783 = vmatpush1.msra.mxu0 %v743
  %784 = vmatprep.subr.mxu0 0.0
  %785 = vmatpush1.msra.mxu0 %v744
  %786 = vmatprep.subr.mxu0 0.0
  %787 = vmatpush1.msra.mxu0 %v745
  %788 = vmatprep.subr.mxu0 0.0
  %789 = vmatpush1.msra.mxu0 %v746
  %790 = vmatprep.subr.mxu0 0.0
  %791 = vmatpush1.msra.mxu0 %v747
  %792 = vmatprep.subr.mxu0 0.0
  %793 = vmatpush1.msra.mxu0 %v748
  %794 = vmatprep.subr.mxu0 0.0
  %795 = vmatpush1.msra.mxu0 %v749
  %796 = vmatprep.subr.mxu0 0.0
  %797 = vmatpush1.msra.mxu0 %v750
  %798 = vmatprep.subr.mxu0 0.0
  %799 = vmatpush1.msra.mxu0 %v751
  %800 = vmatprep.subr.mxu0 0.0
  %801 = vmatpush1.msra.mxu0 %v752
  %802 = vmatprep.subr.mxu0 0.0
  %803 = vmatpush1.msra.mxu0 %v753
  %804 = vmatprep.subr.mxu0 0.0
  %805 = vmatpush1.msra.mxu0 %v754
  %806 = vmatprep.subr.mxu0 0.0
  %807 = vmatpush1.msra.mxu0 %v755
  %808 = vmatprep.subr.mxu0 0.0
  %809 = vmatpush1.msra.mxu0 %v756
  %810 = vmatprep.subr.mxu0 0.0
  %811 = vmatpush1.msra.mxu0 %v757
  %812 = vmatprep.subr.mxu0 0.0
  %813 = vmatpush1.msra.mxu0 %v758
  %814 = vmatprep.subr.mxu0 0.0
  %815 = vmatpush1.msra.mxu0 %v759
  %816 = vmatprep.subr.mxu0 0.0
  %817 = vmatpush1.msra.mxu0 %v760
  %818 = vmatprep.subr.mxu0 0.0
  %819 = vmatpush1.msra.mxu0 %v761
  %820 = vmatprep.subr.mxu0 0.0
  %821 = vmatpush1.msra.mxu0 %v762
  %822 = vmatprep.subr.mxu0 0.0
  %823 = vmatpush1.msra.mxu0 %v763
  %824 = vmatprep.subr.mxu0 0.0
  %825 = vmatpush1.msra.mxu0 %v764
  %826 = vmatprep.subr.mxu0 0.0
  %827 = vmatpush1.msra.mxu0 %v765
  %828 = vmatprep.subr.mxu0 0.0
  %829 = vmatpush1.msra.mxu0 %v766
  %830 = vmatprep.subr.mxu0 0.0
  %831 = vmatpush1.msra.mxu0 0.0
  %832 = vmatprep.subr.mxu0 0.0
  %833 = vmatpush1.msra.mxu0 0.0
  %834 = vmatprep.subr.mxu0 0.0
  %835 = vmatpush1.msra.mxu0 0.0
  %836 = vmatprep.subr.mxu0 0.0
  %837 = vmatpush1.msra.mxu0 0.0
  %838 = vmatprep.subr.mxu0 0.0
  %839 = vmatpush1.msra.mxu0 0.0
  %840 = vmatprep.subr.mxu0 0.0
  %841 = vmatpush1.msra.mxu0 0.0
  %842 = vmatprep.subr.mxu0 0.0
  %843 = vmatpush1.msra.mxu0 0.0
  %844 = vmatprep.subr.mxu0 0.0
  %845 = vmatpush1.msra.mxu0 0.0
  %846 = vmatprep.mubr.f32.mxu0 %v768
  %847 = vmatmul.mubr.f32.gmra.mrb[0].mxu0 %v738
  %v848 = vpop.f32.mrb[0].mxu0
  %v849 = vadd.f32 0.0, %v848
  %v850 = vpop.f32.mrb[0].mxu0
  %851 = vmatprep.mubr.f32.mxu0 %v771
  %852 = vmatmul.mubr.f32.gmra.mrb[0].mxu0 %v739
  %v853 = vpop.f32.mrb[0].mxu0
  %v854 = vadd.f32 0.0, %v853
  %v855 = vpop.f32.mrb[0].mxu0
  %856 = vmatprep.mubr.f32.mxu0 %v774
  %857 = vmatmul.mubr.f32.gmra.mrb[0].mxu0 %v740
  %v858 = vpop.f32.mrb[0].mxu0
  %v859 = vadd.f32 0.0, %v858
  %v860 = vpop.f32.mrb[0].mxu0
  %861 = vmatprep.mubr.f32.mxu0 %v777
  %862 = vmatmul.mubr.f32.gmra.mrb[0].mxu0 %v741
  %v863 = vpop.f32.mrb[0].mxu0
  %v864 = vadd.f32 0.0, %v863
  %v865 = vpop.f32.mrb[0].mxu0
  %866 = vmatprep.mubr.f32.mxu0 %v780
  %867 = vmatmul.mubr.f32.gmra.mrb[0].mxu0 %v742
  %v868 = vpop.f32.mrb[0].mxu0
  %v869 = vadd.f32 0.0, %v868
  %v870 = vpop.f32.mrb[0].mxu0
  %871 = vdwg.mxu0
  %v872 = vld [vmem:[%s8] sm:$0x1]
  %v874 = vlaneseq
  %v875 = vshrl.u32 %v874, 7
  %v876 = vsub.s32 0, %v875
  %v877 = vrot.slane %v872, %v876
  %v879 = vmul.f32 %v849, %v877
  %v880 = vmul.f32 %v854, %v877
  %v881 = vmul.f32 %v859, %v877
  %v882 = vmul.f32 %v864, %v877
  %v883 = vmul.f32 %v869, %v877
  %v884 = vld [vmem:[%s9] sm:$0x1]
  %v886 = vlaneseq
  %v887 = vshrl.u32 %v886, 7
  %v888 = vsub.s32 0, %v887
  %v889 = vrot.slane %v884, %v888
  %v891 = vadd.f32 %v879, %v889
  %v892 = vadd.f32 %v880, %v889
  %v893 = vadd.f32 %v881, %v889
  %v894 = vadd.f32 %v882, %v889
  %v895 = vadd.f32 %v883, %v889
  %v896 = vadd.f32 %v891, %v62
  %v897 = vadd.f32 %v892, %v63
  %v898 = vadd.f32 %v893, %v64
  %v899 = vadd.f32 %v894, %v65
  %v900 = vadd.f32 %v895, %v66
  %v901 = vld [vmem:[%s10] sm:$0xff]
  %v902 = vld [vmem:[%s10 + $0x8] sm:$0xff]
  %v904 = vsel %vm220, %v896, 0
  %v907 = vsel %vm220, %v897, 0
  %v910 = vsel %vm220, %v898, 0
  %v913 = vsel %vm220, %v899, 0
  %v916 = vsel %vm220, %v900, 0
  %918 = vmatprep.subr.mxu0 0.0
  %919 = vmatpush1.msra.mxu0 %v901
  %920 = vmatprep.subr.mxu0 0.0
  %921 = vmatpush1.msra.mxu0 %v902
  %922 = vmatprep.subr.mxu0 0.0
  %923 = vmatpush1.msra.mxu0 0.0
  %924 = vmatprep.subr.mxu0 0.0
  %925 = vmatpush1.msra.mxu0 0.0
  %926 = vmatprep.subr.mxu0 0.0
  %927 = vmatpush1.msra.mxu0 0.0
  %928 = vmatprep.subr.mxu0 0.0
  %929 = vmatpush1.msra.mxu0 0.0
  %930 = vmatprep.subr.mxu0 0.0
  %931 = vmatpush1.msra.mxu0 0.0
  %932 = vmatprep.subr.mxu0 0.0
  %933 = vmatpush1.msra.mxu0 0.0
  %934 = vmatprep.subr.mxu0 0.0
  %935 = vmatpush1.msra.mxu0 0.0
  %936 = vmatprep.subr.mxu0 0.0
  %937 = vmatpush1.msra.mxu0 0.0
  %938 = vmatprep.subr.mxu0 0.0
  %939 = vmatpush1.msra.mxu0 0.0
  %940 = vmatprep.subr.mxu0 0.0
  %941 = vmatpush1.msra.mxu0 0.0
  %942 = vmatprep.subr.mxu0 0.0
  %943 = vmatpush1.msra.mxu0 0.0
  %944 = vmatprep.subr.mxu0 0.0
  %945 = vmatpush1.msra.mxu0 0.0
  %946 = vmatprep.subr.mxu0 0.0
  %947 = vmatpush1.msra.mxu0 0.0
  %948 = vmatprep.subr.mxu0 0.0
  %949 = vmatpush1.msra.mxu0 0.0
  %950 = vmatprep.subr.mxu0 0.0
  %951 = vmatpush1.msra.mxu0 0.0
  %952 = vmatprep.subr.mxu0 0.0
  %953 = vmatpush1.msra.mxu0 0.0
  %954 = vmatprep.subr.mxu0 0.0
  %955 = vmatpush1.msra.mxu0 0.0
  %956 = vmatprep.subr.mxu0 0.0
  %957 = vmatpush1.msra.mxu0 0.0
  %958 = vmatprep.subr.mxu0 0.0
  %959 = vmatpush1.msra.mxu0 0.0
  %960 = vmatprep.subr.mxu0 0.0
  %961 = vmatpush1.msra.mxu0 0.0
  %962 = vmatprep.subr.mxu0 0.0
  %963 = vmatpush1.msra.mxu0 0.0
  %964 = vmatprep.subr.mxu0 0.0
  %965 = vmatpush1.msra.mxu0 0.0
  %966 = vmatprep.subr.mxu0 0.0
  %967 = vmatpush1.msra.mxu0 0.0
  %968 = vmatprep.subr.mxu0 0.0
  %969 = vmatpush1.msra.mxu0 0.0
  %970 = vmatprep.subr.mxu0 0.0
  %971 = vmatpush1.msra.mxu0 0.0
  %972 = vmatprep.subr.mxu0 0.0
  %973 = vmatpush1.msra.mxu0 0.0
  %974 = vmatprep.subr.mxu0 0.0
  %975 = vmatpush1.msra.mxu0 0.0
  %976 = vmatprep.subr.mxu0 0.0
  %977 = vmatpush1.msra.mxu0 0.0
  %978 = vmatprep.subr.mxu0 0.0
  %979 = vmatpush1.msra.mxu0 0.0
  %980 = vmatprep.subr.mxu0 0.0
  %981 = vmatpush1.msra.mxu0 0.0
  %982 = vmatprep.mubr.f32.mxu0 0.0
  %983 = vmatmul.mubr.f32.gmra.mrb[0].mxu0 %v904
  %v984 = vpop.f32.mrb[0].mxu0
  %v985 = vadd.f32 0.0, %v984
  %v986 = vpop.f32.mrb[0].mxu0
  %987 = vmatprep.mubr.f32.mxu0 0.0
  %988 = vmatmul.mubr.f32.gmra.mrb[0].mxu0 %v907
  %v989 = vpop.f32.mrb[0].mxu0
  %v990 = vadd.f32 0.0, %v989
  %v991 = vpop.f32.mrb[0].mxu0
  %992 = vmatprep.mubr.f32.mxu0 0.0
  %993 = vmatmul.mubr.f32.gmra.mrb[0].mxu0 %v910
  %v994 = vpop.f32.mrb[0].mxu0
  %v995 = vadd.f32 0.0, %v994
  %v996 = vpop.f32.mrb[0].mxu0
  %997 = vmatprep.mubr.f32.mxu0 0.0
  %998 = vmatmul.mubr.f32.gmra.mrb[0].mxu0 %v913
  %v999 = vpop.f32.mrb[0].mxu0
  %v1000 = vadd.f32 0.0, %v999
  %v1001 = vpop.f32.mrb[0].mxu0
  %1002 = vmatprep.mubr.f32.mxu0 0.0
  %1003 = vmatmul.mubr.f32.gmra.mrb[0].mxu0 %v916
  %v1004 = vpop.f32.mrb[0].mxu0
  %v1005 = vadd.f32 0.0, %v1004
  %v1006 = vpop.f32.mrb[0].mxu0
  %1007 = vdwg.mxu0
  %v1008 = vld [vmem:[%s11] sm:$0xff]
  %v1009 = vld [vmem:[%s11 + $0x8] sm:$0xff]
  %v1010 = vld [vmem:[%s11 + $0x10] sm:$0xff]
  %v1011 = vld [vmem:[%s11 + $0x18] sm:$0xff]
  %v1012 = vld [vmem:[%s12] sm:$0x1]
  %v1014 = vlaneseq
  %v1015 = vshrl.u32 %v1014, 7
  %v1016 = vsub.s32 0, %v1015
  %v1017 = vrot.slane %v1012, %v1016
  %v1020 = vsel %vm226, %v985, 0
  %v1023 = vsel %vm226, %v990, 0
  %v1026 = vsel %vm226, %v995, 0
  %v1029 = vsel %vm226, %v1000, 0
  %v1032 = vsel %vm226, %v1005, 0
  %1034 = vmatprep.subr.mxu0 0.0
  %1035 = vmatpush1.msra.mxu0 %v1008
  %1036 = vmatprep.subr.mxu0 0.0
  %1037 = vmatpush1.msra.mxu0 %v1009
  %1038 = vmatprep.subr.mxu0 0.0
  %1039 = vmatpush1.msra.mxu0 %v1010
  %1040 = vmatprep.subr.mxu0 0.0
  %1041 = vmatpush1.msra.mxu0 %v1011
  %1042 = vmatprep.subr.mxu0 0.0
  %1043 = vmatpush1.msra.mxu0 0.0
  %1044 = vmatprep.subr.mxu0 0.0
  %1045 = vmatpush1.msra.mxu0 0.0
  %1046 = vmatprep.subr.mxu0 0.0
  %1047 = vmatpush1.msra.mxu0 0.0
  %1048 = vmatprep.subr.mxu0 0.0
  %1049 = vmatpush1.msra.mxu0 0.0
  %1050 = vmatprep.subr.mxu0 0.0
  %1051 = vmatpush1.msra.mxu0 0.0
  %1052 = vmatprep.subr.mxu0 0.0
  %1053 = vmatpush1.msra.mxu0 0.0
  %1054 = vmatprep.subr.mxu0 0.0
  %1055 = vmatpush1.msra.mxu0 0.0
  %1056 = vmatprep.subr.mxu0 0.0
  %1057 = vmatpush1.msra.mxu0 0.0
  %1058 = vmatprep.subr.mxu0 0.0
  %1059 = vmatpush1.msra.mxu0 0.0
  %1060 = vmatprep.subr.mxu0 0.0
  %1061 = vmatpush1.msra.mxu0 0.0
  %1062 = vmatprep.subr.mxu0 0.0
  %1063 = vmatpush1.msra.mxu0 0.0
  %1064 = vmatprep.subr.mxu0 0.0
  %1065 = vmatpush1.msra.mxu0 0.0
  %1066 = vmatprep.subr.mxu0 0.0
  %1067 = vmatpush1.msra.mxu0 0.0
  %1068 = vmatprep.subr.mxu0 0.0
  %1069 = vmatpush1.msra.mxu0 0.0
  %1070 = vmatprep.subr.mxu0 0.0
  %1071 = vmatpush1.msra.mxu0 0.0
  %1072 = vmatprep.subr.mxu0 0.0
  %1073 = vmatpush1.msra.mxu0 0.0
  %1074 = vmatprep.subr.mxu0 0.0
  %1075 = vmatpush1.msra.mxu0 0.0
  %1076 = vmatprep.subr.mxu0 0.0
  %1077 = vmatpush1.msra.mxu0 0.0
  %1078 = vmatprep.subr.mxu0 0.0
  %1079 = vmatpush1.msra.mxu0 0.0
  %1080 = vmatprep.subr.mxu0 0.0
  %1081 = vmatpush1.msra.mxu0 0.0
  %1082 = vmatprep.subr.mxu0 0.0
  %1083 = vmatpush1.msra.mxu0 0.0
  %1084 = vmatprep.subr.mxu0 0.0
  %1085 = vmatpush1.msra.mxu0 0.0
  %1086 = vmatprep.subr.mxu0 0.0
  %1087 = vmatpush1.msra.mxu0 0.0
  %1088 = vmatprep.subr.mxu0 0.0
  %1089 = vmatpush1.msra.mxu0 0.0
  %1090 = vmatprep.subr.mxu0 0.0
  %1091 = vmatpush1.msra.mxu0 0.0
  %1092 = vmatprep.subr.mxu0 0.0
  %1093 = vmatpush1.msra.mxu0 0.0
  %1094 = vmatprep.subr.mxu0 0.0
  %1095 = vmatpush1.msra.mxu0 0.0
  %1096 = vmatprep.subr.mxu0 0.0
  %1097 = vmatpush1.msra.mxu0 0.0
  %1098 = vmatprep.mubr.f32.mxu0 0.0
  %1099 = vmatmul.mubr.f32.gmra.mrb[0].mxu0 %v1020
  %v1100 = vpop.f32.mrb[0].mxu0
  %v1101 = vadd.f32 %v1017, %v1100
  %v1102 = vpop.f32.mrb[0].mxu0
  %1103 = vmatprep.mubr.f32.mxu0 0.0
  %1104 = vmatmul.mubr.f32.gmra.mrb[0].mxu0 %v1023
  %v1105 = vpop.f32.mrb[0].mxu0
  %v1106 = vadd.f32 %v1017, %v1105
  %v1107 = vpop.f32.mrb[0].mxu0
  %1108 = vmatprep.mubr.f32.mxu0 0.0
  %1109 = vmatmul.mubr.f32.gmra.mrb[0].mxu0 %v1026
  %v1110 = vpop.f32.mrb[0].mxu0
  %v1111 = vadd.f32 %v1017, %v1110
  %v1112 = vpop.f32.mrb[0].mxu0
  %1113 = vmatprep.mubr.f32.mxu0 0.0
  %1114 = vmatmul.mubr.f32.gmra.mrb[0].mxu0 %v1029
  %v1115 = vpop.f32.mrb[0].mxu0
  %v1116 = vadd.f32 %v1017, %v1115
  %v1117 = vpop.f32.mrb[0].mxu0
  %1118 = vmatprep.mubr.f32.mxu0 0.0
  %1119 = vmatmul.mubr.f32.gmra.mrb[0].mxu0 %v1032
  %v1120 = vpop.f32.mrb[0].mxu0
  %v1121 = vadd.f32 %v1017, %v1120
  %v1122 = vpop.f32.mrb[0].mxu0
  %1123 = vdwg.mxu0
  %v1124 = vxor.u32 %v1101, 2147483648
  %v1125 = vxor.u32 %v1106, 2147483648
  %v1126 = vxor.u32 %v1111, 2147483648
  %v1127 = vxor.u32 %v1116, 2147483648
  %v1128 = vxor.u32 %v1121, 2147483648
  %v1129 = vmul.f32 %v1124, 1.442695
  %v1130 = vpow.pop %v1129
  %v1131 = vmul.f32 %v1125, 1.442695
  %v1132 = vpow.pop %v1131
  %v1133 = vmul.f32 %v1126, 1.442695
  %v1134 = vpow.pop %v1133
  %v1135 = vmul.f32 %v1127, 1.442695
  %v1136 = vpow.pop %v1135
  %v1137 = vmul.f32 %v1128, 1.442695
  %v1138 = vpow.pop %v1137
  %v1139 = vadd.f32 %v1130, 1.0
  %v1140 = vadd.f32 %v1132, 1.0
  %v1141 = vadd.f32 %v1134, 1.0
  %v1142 = vadd.f32 %v1136, 1.0
  %v1143 = vadd.f32 %v1138, 1.0
  %v1144 = vrcp.pop %v1139
  %v1145 = vmul.f32 1.0, %v1144
  %v1146 = vrcp.pop %v1140
  %v1147 = vmul.f32 1.0, %v1146
  %v1148 = vrcp.pop %v1141
  %v1149 = vmul.f32 1.0, %v1148
  %v1150 = vrcp.pop %v1142
  %v1151 = vmul.f32 1.0, %v1150
  %v1152 = vrcp.pop %v1143
  %v1153 = vmul.f32 1.0, %v1152
  %v1154 = vmax.f32 %v1101, 0.0
  %v1155 = vmax.f32 %v1106, 0.0
  %v1156 = vmax.f32 %v1111, 0.0
  %v1157 = vmax.f32 %v1116, 0.0
  %v1158 = vmax.f32 %v1121, 0.0
  %1164 = vrot.lane.b32.xlu0 %v1154, 32
  %v1165 = vpop.permute.xlu0 %1164
  %1166 = vrot.lane.b32.xlu0 %v1155, 32
  %v1167 = vpop.permute.xlu0 %1166
  %1168 = vrot.lane.b32.xlu0 %v1156, 32
  %v1169 = vpop.permute.xlu0 %1168
  %1170 = vrot.lane.b32.xlu0 %v1157, 32
  %v1171 = vpop.permute.xlu0 %1170
  %1172 = vrot.lane.b32.xlu0 %v1158, 32
  %v1173 = vpop.permute.xlu0 %1172
  %v1179 = vmul.f32 %v1145, %v1165
  %v1180 = vmul.f32 %v1147, %v1167
  %v1181 = vmul.f32 %v1149, %v1169
  %v1182 = vmul.f32 %v1151, %v1171
  %v1183 = vmul.f32 %v1153, %v1173
  %v1184 = vsub.f32 1.0, %v1145
  %v1185 = vsub.f32 1.0, %v1147
  %v1186 = vsub.f32 1.0, %v1149
  %v1187 = vsub.f32 1.0, %v1151
  %v1188 = vsub.f32 1.0, %v1153
  %1189 = vrot.lane.b32.xlu0 %v985, 32
  %v1190 = vpop.permute.xlu0 %1189
  %1191 = vrot.lane.b32.xlu0 %v990, 32
  %v1192 = vpop.permute.xlu0 %1191
  %1193 = vrot.lane.b32.xlu0 %v995, 32
  %v1194 = vpop.permute.xlu0 %1193
  %1195 = vrot.lane.b32.xlu0 %v1000, 32
  %v1196 = vpop.permute.xlu0 %1195
  %1197 = vrot.lane.b32.xlu0 %v1005, 32
  %v1198 = vpop.permute.xlu0 %1197
  %v1204 = vmul.f32 %v1184, %v1190
  %v1205 = vmul.f32 %v1185, %v1192
  %v1206 = vmul.f32 %v1186, %v1194
  %v1207 = vmul.f32 %v1187, %v1196
  %v1208 = vmul.f32 %v1188, %v1198
  %v1209 = vadd.f32 %v1179, %v1204
  %v1210 = vadd.f32 %v1180, %v1205
  %v1211 = vadd.f32 %v1181, %v1206
  %v1212 = vadd.f32 %v1182, %v1207
  %v1213 = vadd.f32 %v1183, %v1208
  %s1214 = scalar_lea.vmem %s11, 32
  %v1215 = vld [vmem:[%s1214] sm:$0xff]
  %v1216 = vld [vmem:[%s1214 + $0x8] sm:$0xff]
  %v1217 = vld [vmem:[%s1214 + $0x10] sm:$0xff]
  %v1218 = vld [vmem:[%s1214 + $0x18] sm:$0xff]
  %s1219 = scalar_lea.vmem %s12, 1
  %v1220 = vld [vmem:[%s1219] sm:$0x1]
  %v1222 = vlaneseq
  %v1223 = vshrl.u32 %v1222, 7
  %v1224 = vsub.s32 0, %v1223
  %v1225 = vrot.slane %v1220, %v1224
  %1232 = vrot.lane.b32.xlu0 %v1209, 96
  %v1233 = vpop.permute.xlu0 %1232
  %1234 = vrot.lane.b32.xlu0 %v1210, 96
  %v1235 = vpop.permute.xlu0 %1234
  %1236 = vrot.lane.b32.xlu0 %v1211, 96
  %v1237 = vpop.permute.xlu0 %1236
  %1238 = vrot.lane.b32.xlu0 %v1212, 96
  %v1239 = vpop.permute.xlu0 %1238
  %1240 = vrot.lane.b32.xlu0 %v1213, 96
  %v1241 = vpop.permute.xlu0 %1240
  %v1242 = vsel %vm226, %v1233, 0
  %v1244 = vsel %vm226, %v1235, 0
  %v1246 = vsel %vm226, %v1237, 0
  %v1248 = vsel %vm226, %v1239, 0
  %v1250 = vsel %vm226, %v1241, 0
  %1252 = vmatprep.subr.mxu0 0.0
  %1253 = vmatpush1.msra.mxu0 %v1215
  %1254 = vmatprep.subr.mxu0 0.0
  %1255 = vmatpush1.msra.mxu0 %v1216
  %1256 = vmatprep.subr.mxu0 0.0
  %1257 = vmatpush1.msra.mxu0 %v1217
  %1258 = vmatprep.subr.mxu0 0.0
  %1259 = vmatpush1.msra.mxu0 %v1218
  %1260 = vmatprep.subr.mxu0 0.0
  %1261 = vmatpush1.msra.mxu0 0.0
  %1262 = vmatprep.subr.mxu0 0.0
  %1263 = vmatpush1.msra.mxu0 0.0
  %1264 = vmatprep.subr.mxu0 0.0
  %1265 = vmatpush1.msra.mxu0 0.0
  %1266 = vmatprep.subr.mxu0 0.0
  %1267 = vmatpush1.msra.mxu0 0.0
  %1268 = vmatprep.subr.mxu0 0.0
  %1269 = vmatpush1.msra.mxu0 0.0
  %1270 = vmatprep.subr.mxu0 0.0
  %1271 = vmatpush1.msra.mxu0 0.0
  %1272 = vmatprep.subr.mxu0 0.0
  %1273 = vmatpush1.msra.mxu0 0.0
  %1274 = vmatprep.subr.mxu0 0.0
  %1275 = vmatpush1.msra.mxu0 0.0
  %1276 = vmatprep.subr.mxu0 0.0
  %1277 = vmatpush1.msra.mxu0 0.0
  %1278 = vmatprep.subr.mxu0 0.0
  %1279 = vmatpush1.msra.mxu0 0.0
  %1280 = vmatprep.subr.mxu0 0.0
  %1281 = vmatpush1.msra.mxu0 0.0
  %1282 = vmatprep.subr.mxu0 0.0
  %1283 = vmatpush1.msra.mxu0 0.0
  %1284 = vmatprep.subr.mxu0 0.0
  %1285 = vmatpush1.msra.mxu0 0.0
  %1286 = vmatprep.subr.mxu0 0.0
  %1287 = vmatpush1.msra.mxu0 0.0
  %1288 = vmatprep.subr.mxu0 0.0
  %1289 = vmatpush1.msra.mxu0 0.0
  %1290 = vmatprep.subr.mxu0 0.0
  %1291 = vmatpush1.msra.mxu0 0.0
  %1292 = vmatprep.subr.mxu0 0.0
  %1293 = vmatpush1.msra.mxu0 0.0
  %1294 = vmatprep.subr.mxu0 0.0
  %1295 = vmatpush1.msra.mxu0 0.0
  %1296 = vmatprep.subr.mxu0 0.0
  %1297 = vmatpush1.msra.mxu0 0.0
  %1298 = vmatprep.subr.mxu0 0.0
  %1299 = vmatpush1.msra.mxu0 0.0
  %1300 = vmatprep.subr.mxu0 0.0
  %1301 = vmatpush1.msra.mxu0 0.0
  %1302 = vmatprep.subr.mxu0 0.0
  %1303 = vmatpush1.msra.mxu0 0.0
  %1304 = vmatprep.subr.mxu0 0.0
  %1305 = vmatpush1.msra.mxu0 0.0
  %1306 = vmatprep.subr.mxu0 0.0
  %1307 = vmatpush1.msra.mxu0 0.0
  %1308 = vmatprep.subr.mxu0 0.0
  %1309 = vmatpush1.msra.mxu0 0.0
  %1310 = vmatprep.subr.mxu0 0.0
  %1311 = vmatpush1.msra.mxu0 0.0
  %1312 = vmatprep.subr.mxu0 0.0
  %1313 = vmatpush1.msra.mxu0 0.0
  %1314 = vmatprep.subr.mxu0 0.0
  %1315 = vmatpush1.msra.mxu0 0.0
  %1316 = vmatprep.mubr.f32.mxu0 0.0
  %1317 = vmatmul.mubr.f32.gmra.mrb[0].mxu0 %v1242
  %v1318 = vpop.f32.mrb[0].mxu0
  %v1319 = vadd.f32 %v1225, %v1318
  %v1320 = vpop.f32.mrb[0].mxu0
  %1321 = vmatprep.mubr.f32.mxu0 0.0
  %1322 = vmatmul.mubr.f32.gmra.mrb[0].mxu0 %v1244
  %v1323 = vpop.f32.mrb[0].mxu0
  %v1324 = vadd.f32 %v1225, %v1323
  %v1325 = vpop.f32.mrb[0].mxu0
  %1326 = vmatprep.mubr.f32.mxu0 0.0
  %1327 = vmatmul.mubr.f32.gmra.mrb[0].mxu0 %v1246
  %v1328 = vpop.f32.mrb[0].mxu0
  %v1329 = vadd.f32 %v1225, %v1328
  %v1330 = vpop.f32.mrb[0].mxu0
  %1331 = vmatprep.mubr.f32.mxu0 0.0
  %1332 = vmatmul.mubr.f32.gmra.mrb[0].mxu0 %v1248
  %v1333 = vpop.f32.mrb[0].mxu0
  %v1334 = vadd.f32 %v1225, %v1333
  %v1335 = vpop.f32.mrb[0].mxu0
  %1336 = vmatprep.mubr.f32.mxu0 0.0
  %1337 = vmatmul.mubr.f32.gmra.mrb[0].mxu0 %v1250
  %v1338 = vpop.f32.mrb[0].mxu0
  %v1339 = vadd.f32 %v1225, %v1338
  %v1340 = vpop.f32.mrb[0].mxu0
  %1341 = vdwg.mxu0
  %v1342 = vxor.u32 %v1319, 2147483648
  %v1343 = vxor.u32 %v1324, 2147483648
  %v1344 = vxor.u32 %v1329, 2147483648
  %v1345 = vxor.u32 %v1334, 2147483648
  %v1346 = vxor.u32 %v1339, 2147483648
  %v1347 = vmul.f32 %v1342, 1.442695
  %v1348 = vpow.pop %v1347
  %v1349 = vmul.f32 %v1343, 1.442695
  %v1350 = vpow.pop %v1349
  %v1351 = vmul.f32 %v1344, 1.442695
  %v1352 = vpow.pop %v1351
  %v1353 = vmul.f32 %v1345, 1.442695
  %v1354 = vpow.pop %v1353
  %v1355 = vmul.f32 %v1346, 1.442695
  %v1356 = vpow.pop %v1355
  %v1357 = vadd.f32 %v1348, 1.0
  %v1358 = vadd.f32 %v1350, 1.0
  %v1359 = vadd.f32 %v1352, 1.0
  %v1360 = vadd.f32 %v1354, 1.0
  %v1361 = vadd.f32 %v1356, 1.0
  %v1362 = vrcp.pop %v1357
  %v1363 = vmul.f32 1.0, %v1362
  %v1364 = vrcp.pop %v1358
  %v1365 = vmul.f32 1.0, %v1364
  %v1366 = vrcp.pop %v1359
  %v1367 = vmul.f32 1.0, %v1366
  %v1368 = vrcp.pop %v1360
  %v1369 = vmul.f32 1.0, %v1368
  %v1370 = vrcp.pop %v1361
  %v1371 = vmul.f32 1.0, %v1370
  %v1372 = vmax.f32 %v1319, 0.0
  %v1373 = vmax.f32 %v1324, 0.0
  %v1374 = vmax.f32 %v1329, 0.0
  %v1375 = vmax.f32 %v1334, 0.0
  %v1376 = vmax.f32 %v1339, 0.0
  %1382 = vrot.lane.b32.xlu0 %v1372, 32
  %v1383 = vpop.permute.xlu0 %1382
  %1384 = vrot.lane.b32.xlu0 %v1373, 32
  %v1385 = vpop.permute.xlu0 %1384
  %1386 = vrot.lane.b32.xlu0 %v1374, 32
  %v1387 = vpop.permute.xlu0 %1386
  %1388 = vrot.lane.b32.xlu0 %v1375, 32
  %v1389 = vpop.permute.xlu0 %1388
  %1390 = vrot.lane.b32.xlu0 %v1376, 32
  %v1391 = vpop.permute.xlu0 %1390
  %v1397 = vmul.f32 %v1363, %v1383
  %v1398 = vmul.f32 %v1365, %v1385
  %v1399 = vmul.f32 %v1367, %v1387
  %v1400 = vmul.f32 %v1369, %v1389
  %v1401 = vmul.f32 %v1371, %v1391
  %v1402 = vsub.f32 1.0, %v1363
  %v1403 = vsub.f32 1.0, %v1365
  %v1404 = vsub.f32 1.0, %v1367
  %v1405 = vsub.f32 1.0, %v1369
  %v1406 = vsub.f32 1.0, %v1371
  %v1407 = vmul.f32 %v1402, %v1209
  %v1408 = vmul.f32 %v1403, %v1210
  %v1409 = vmul.f32 %v1404, %v1211
  %v1410 = vmul.f32 %v1405, %v1212
  %v1411 = vmul.f32 %v1406, %v1213
  %v1412 = vadd.f32 %v1397, %v1407
  %v1413 = vadd.f32 %v1398, %v1408
  %v1414 = vadd.f32 %v1399, %v1409
  %v1415 = vadd.f32 %v1400, %v1410
  %v1416 = vadd.f32 %v1401, %v1411
  %v1417 = vld [vmem:[%s13] sm:$0xff]
  %v1418 = vld [vmem:[%s13 + $0x8] sm:$0xff]
  %v1419 = vld [vmem:[%s13 + $0x10] sm:$0xff]
  %v1420 = vld [vmem:[%s13 + $0x18] sm:$0xff]
  %v1421 = vld [vmem:[%s13 + $0x20] sm:$0xff]
  %v1422 = vld [vmem:[%s13 + $0x28] sm:$0xff]
  %v1423 = vld [vmem:[%s13 + $0x30] sm:$0xff]
  %v1424 = vld [vmem:[%s13 + $0x38] sm:$0xff]
  %v1425 = vld [vmem:[%s14] sm:$0x3]
  %v1427 = vlaneseq
  %v1428 = vshrl.u32 %v1427, 7
  %v1429 = vsub.s32 0, %v1428
  %v1430 = vrot.slane %v1425, %v1429
  %v1431 = vlaneseq
  %v1432 = vshrl.u32 %v1431, 7
  %v1433 = vsub.s32 1, %v1432
  %v1434 = vrot.slane %v1425, %v1433
  %1442 = vrot.lane.b32.xlu0 %v1412, 96
  %v1443 = vpop.permute.xlu0 %1442
  %1444 = vrot.lane.b32.xlu0 %v1413, 96
  %v1445 = vpop.permute.xlu0 %1444
  %1446 = vrot.lane.b32.xlu0 %v1414, 96
  %v1447 = vpop.permute.xlu0 %1446
  %1448 = vrot.lane.b32.xlu0 %v1415, 96
  %v1449 = vpop.permute.xlu0 %1448
  %1450 = vrot.lane.b32.xlu0 %v1416, 96
  %v1451 = vpop.permute.xlu0 %1450
  %v1452 = vsel %vm226, %v1443, 0
  %v1454 = vsel %vm226, %v1445, 0
  %v1456 = vsel %vm226, %v1447, 0
  %v1458 = vsel %vm226, %v1449, 0
  %v1460 = vsel %vm226, %v1451, 0
  %1462 = vmatprep.subr.mxu0 %v1418
  %1463 = vmatpush1.msra.mxu0 %v1417
  %1464 = vmatprep.subr.mxu0 %v1420
  %1465 = vmatpush1.msra.mxu0 %v1419
  %1466 = vmatprep.subr.mxu0 %v1422
  %1467 = vmatpush1.msra.mxu0 %v1421
  %1468 = vmatprep.subr.mxu0 %v1424
  %1469 = vmatpush1.msra.mxu0 %v1423
  %1470 = vmatprep.subr.mxu0 0.0
  %1471 = vmatpush1.msra.mxu0 0.0
  %1472 = vmatprep.subr.mxu0 0.0
  %1473 = vmatpush1.msra.mxu0 0.0
  %1474 = vmatprep.subr.mxu0 0.0
  %1475 = vmatpush1.msra.mxu0 0.0
  %1476 = vmatprep.subr.mxu0 0.0
  %1477 = vmatpush1.msra.mxu0 0.0
  %1478 = vmatprep.subr.mxu0 0.0
  %1479 = vmatpush1.msra.mxu0 0.0
  %1480 = vmatprep.subr.mxu0 0.0
  %1481 = vmatpush1.msra.mxu0 0.0
  %1482 = vmatprep.subr.mxu0 0.0
  %1483 = vmatpush1.msra.mxu0 0.0
  %1484 = vmatprep.subr.mxu0 0.0
  %1485 = vmatpush1.msra.mxu0 0.0
  %1486 = vmatprep.subr.mxu0 0.0
  %1487 = vmatpush1.msra.mxu0 0.0
  %1488 = vmatprep.subr.mxu0 0.0
  %1489 = vmatpush1.msra.mxu0 0.0
  %1490 = vmatprep.subr.mxu0 0.0
  %1491 = vmatpush1.msra.mxu0 0.0
  %1492 = vmatprep.subr.mxu0 0.0
  %1493 = vmatpush1.msra.mxu0 0.0
  %1494 = vmatprep.subr.mxu0 0.0
  %1495 = vmatpush1.msra.mxu0 0.0
  %1496 = vmatprep.subr.mxu0 0.0
  %1497 = vmatpush1.msra.mxu0 0.0
  %1498 = vmatprep.subr.mxu0 0.0
  %1499 = vmatpush1.msra.mxu0 0.0
  %1500 = vmatprep.subr.mxu0 0.0
  %1501 = vmatpush1.msra.mxu0 0.0
  %1502 = vmatprep.subr.mxu0 0.0
  %1503 = vmatpush1.msra.mxu0 0.0
  %1504 = vmatprep.subr.mxu0 0.0
  %1505 = vmatpush1.msra.mxu0 0.0
  %1506 = vmatprep.subr.mxu0 0.0
  %1507 = vmatpush1.msra.mxu0 0.0
  %1508 = vmatprep.subr.mxu0 0.0
  %1509 = vmatpush1.msra.mxu0 0.0
  %1510 = vmatprep.subr.mxu0 0.0
  %1511 = vmatpush1.msra.mxu0 0.0
  %1512 = vmatprep.subr.mxu0 0.0
  %1513 = vmatpush1.msra.mxu0 0.0
  %1514 = vmatprep.subr.mxu0 0.0
  %1515 = vmatpush1.msra.mxu0 0.0
  %1516 = vmatprep.subr.mxu0 0.0
  %1517 = vmatpush1.msra.mxu0 0.0
  %1518 = vmatprep.subr.mxu0 0.0
  %1519 = vmatpush1.msra.mxu0 0.0
  %1520 = vmatprep.subr.mxu0 0.0
  %1521 = vmatpush1.msra.mxu0 0.0
  %1522 = vmatprep.subr.mxu0 0.0
  %1523 = vmatpush1.msra.mxu0 0.0
  %1524 = vmatprep.subr.mxu0 0.0
  %1525 = vmatpush1.msra.mxu0 0.0
  %1526 = vmatprep.mubr.f32.mxu0 0.0
  %1527 = vmatmul.mubr.f32.gmra.mrb[0].mxu0 %v1452
  %v1528 = vpop.f32.mrb[0].mxu0
  %v1529 = vadd.f32 %v1430, %v1528
  %v1530 = vpop.f32.mrb[0].mxu0
  %v1531 = vadd.f32 %v1434, %v1530
  %1532 = vmatprep.mubr.f32.mxu0 0.0
  %1533 = vmatmul.mubr.f32.gmra.mrb[0].mxu0 %v1454
  %v1534 = vpop.f32.mrb[0].mxu0
  %v1535 = vadd.f32 %v1430, %v1534
  %v1536 = vpop.f32.mrb[0].mxu0
  %v1537 = vadd.f32 %v1434, %v1536
  %1538 = vmatprep.mubr.f32.mxu0 0.0
  %1539 = vmatmul.mubr.f32.gmra.mrb[0].mxu0 %v1456
  %v1540 = vpop.f32.mrb[0].mxu0
  %v1541 = vadd.f32 %v1430, %v1540
  %v1542 = vpop.f32.mrb[0].mxu0
  %v1543 = vadd.f32 %v1434, %v1542
  %1544 = vmatprep.mubr.f32.mxu0 0.0
  %1545 = vmatmul.mubr.f32.gmra.mrb[0].mxu0 %v1458
  %v1546 = vpop.f32.mrb[0].mxu0
  %v1547 = vadd.f32 %v1430, %v1546
  %v1548 = vpop.f32.mrb[0].mxu0
  %v1549 = vadd.f32 %v1434, %v1548
  %1550 = vmatprep.mubr.f32.mxu0 0.0
  %1551 = vmatmul.mubr.f32.gmra.mrb[0].mxu0 %v1460
  %v1552 = vpop.f32.mrb[0].mxu0
  %v1553 = vadd.f32 %v1430, %v1552
  %v1554 = vpop.f32.mrb[0].mxu0
  %v1555 = vadd.f32 %v1434, %v1554
  %1556 = vdwg.mxu0
  %v1557 = vld [vmem:[%s15] sm:$0xff]
  %v1558 = vld [vmem:[%s15 + $0x8] sm:$0xff]
  %v1559 = vld [vmem:[%s15 + $0x10] sm:$0xff]
  %v1560 = vld [vmem:[%s15 + $0x18] sm:$0xff]
  %v1561 = vld [vmem:[%s15 + $0x20] sm:$0xff]
  %v1562 = vld [vmem:[%s15 + $0x28] sm:$0xff]
  %v1563 = vld [vmem:[%s15 + $0x30] sm:$0xff]
  %v1564 = vld [vmem:[%s15 + $0x38] sm:$0xff]
  %v1565 = vld [vmem:[%s15 + $0x40] sm:$0xff]
  %v1566 = vld [vmem:[%s15 + $0x48] sm:$0xff]
  %v1567 = vld [vmem:[%s15 + $0x50] sm:$0xff]
  %v1568 = vld [vmem:[%s15 + $0x58] sm:$0xff]
  %v1569 = vld [vmem:[%s15 + $0x60] sm:$0xff]
  %v1570 = vld [vmem:[%s15 + $0x68] sm:$0xff]
  %v1571 = vld [vmem:[%s15 + $0x70] sm:$0xff]
  %v1572 = vld [vmem:[%s15 + $0x78] sm:$0xff]
  %v1573 = vld [vmem:[%s16] sm:$0x3]
  %v1576 = vrot.slane %v1553, 6
  %v1577 = vrot.slane %v1555, 6
  %vm1580 = vcmask 785408
  %v1581 = vsel %vm1580, %v1529, %v1576
  %v1583 = vlaneseq
  %v1584 = vshrl.u32 %v1583, 7
  %v1585 = vsub.s32 0, %v1584
  %v1586 = vrot.slane %v1573, %v1585
  %v1587 = vlaneseq
  %v1588 = vshrl.u32 %v1587, 7
  %v1589 = vsub.s32 1, %v1588
  %v1590 = vrot.slane %v1573, %v1589
  %v1594 = vsel %vm246, 0.0, 0
  %1596 = vmatprep.subr.mxu0 %v1558
  %1597 = vmatpush1.msra.mxu0 %v1557
  %1598 = vmatprep.subr.mxu0 %v1560
  %1599 = vmatpush1.msra.mxu0 %v1559
  %1600 = vmatprep.subr.mxu0 %v1562
  %1601 = vmatpush1.msra.mxu0 %v1561
  %1602 = vmatprep.subr.mxu0 %v1564
  %1603 = vmatpush1.msra.mxu0 %v1563
  %1604 = vmatprep.subr.mxu0 %v1566
  %1605 = vmatpush1.msra.mxu0 %v1565
  %1606 = vmatprep.subr.mxu0 %v1568
  %1607 = vmatpush1.msra.mxu0 %v1567
  %1608 = vmatprep.subr.mxu0 %v1570
  %1609 = vmatpush1.msra.mxu0 %v1569
  %1610 = vmatprep.subr.mxu0 %v1572
  %1611 = vmatpush1.msra.mxu0 %v1571
  %1612 = vmatprep.subr.mxu0 0.0
  %1613 = vmatpush1.msra.mxu0 0.0
  %1614 = vmatprep.subr.mxu0 0.0
  %1615 = vmatpush1.msra.mxu0 0.0
  %1616 = vmatprep.subr.mxu0 0.0
  %1617 = vmatpush1.msra.mxu0 0.0
  %1618 = vmatprep.subr.mxu0 0.0
  %1619 = vmatpush1.msra.mxu0 0.0
  %1620 = vmatprep.subr.mxu0 0.0
  %1621 = vmatpush1.msra.mxu0 0.0
  %1622 = vmatprep.subr.mxu0 0.0
  %1623 = vmatpush1.msra.mxu0 0.0
  %1624 = vmatprep.subr.mxu0 0.0
  %1625 = vmatpush1.msra.mxu0 0.0
  %1626 = vmatprep.subr.mxu0 0.0
  %1627 = vmatpush1.msra.mxu0 0.0
  %1628 = vmatprep.subr.mxu0 0.0
  %1629 = vmatpush1.msra.mxu0 0.0
  %1630 = vmatprep.subr.mxu0 0.0
  %1631 = vmatpush1.msra.mxu0 0.0
  %1632 = vmatprep.subr.mxu0 0.0
  %1633 = vmatpush1.msra.mxu0 0.0
  %1634 = vmatprep.subr.mxu0 0.0
  %1635 = vmatpush1.msra.mxu0 0.0
  %1636 = vmatprep.subr.mxu0 0.0
  %1637 = vmatpush1.msra.mxu0 0.0
  %1638 = vmatprep.subr.mxu0 0.0
  %1639 = vmatpush1.msra.mxu0 0.0
  %1640 = vmatprep.subr.mxu0 0.0
  %1641 = vmatpush1.msra.mxu0 0.0
  %1642 = vmatprep.subr.mxu0 0.0
  %1643 = vmatpush1.msra.mxu0 0.0
  %1644 = vmatprep.subr.mxu0 0.0
  %1645 = vmatpush1.msra.mxu0 0.0
  %1646 = vmatprep.subr.mxu0 0.0
  %1647 = vmatpush1.msra.mxu0 0.0
  %1648 = vmatprep.subr.mxu0 0.0
  %1649 = vmatpush1.msra.mxu0 0.0
  %1650 = vmatprep.subr.mxu0 0.0
  %1651 = vmatpush1.msra.mxu0 0.0
  %1652 = vmatprep.subr.mxu0 0.0
  %1653 = vmatpush1.msra.mxu0 0.0
  %1654 = vmatprep.subr.mxu0 0.0
  %1655 = vmatpush1.msra.mxu0 0.0
  %1656 = vmatprep.subr.mxu0 0.0
  %1657 = vmatpush1.msra.mxu0 0.0
  %1658 = vmatprep.subr.mxu0 0.0
  %1659 = vmatpush1.msra.mxu0 0.0
  %1660 = vmatprep.mubr.f32.mxu0 0.0
  %1661 = vmatmul.mubr.f32.gmra.mrb[0].mxu0 %v1594
  %v1662 = vpop.f32.mrb[0].mxu0
  %v1663 = vadd.f32 %v1586, %v1662
  %v1664 = vpop.f32.mrb[0].mxu0
  %v1665 = vadd.f32 %v1590, %v1664
  %1666 = vdwg.mxu0
  %v1667 = vadd.f32 %v1581, %v1663
  %v1668 = vadd.f32 %v1577, %v1665
  %v1669 = vxor.u32 %v1667, 2147483648
  %v1670 = vxor.u32 %v1668, 2147483648
  %v1671 = vmul.f32 %v1669, 1.442695
  %v1672 = vpow.pop %v1671
  %v1673 = vmul.f32 %v1670, 1.442695
  %v1674 = vpow.pop %v1673
  %v1675 = vadd.f32 %v1672, 1.0
  %v1676 = vadd.f32 %v1674, 1.0
  %v1677 = vrcp.pop %v1675
  %v1678 = vmul.f32 1.0, %v1677
  %v1679 = vrcp.pop %v1676
  %v1680 = vmul.f32 1.0, %v1679
  %1682 = vrot.lane.b32.xlu0 %v1678, 64
  %v1683 = vpop.permute.xlu0 %1682
  %v1685 = vsel %vm226, %v1678, %v1683
  %1686 = vrot.lane.b32.xlu0 %v1678, 96
  %v1687 = vpop.permute.xlu0 %1686
  %1690 = vrot.lane.b32.xlu0 %v1680, 32
  %v1691 = vpop.permute.xlu0 %1690
  %v1693 = vsel %vm226, %v1687, %v1691
  %1695 = vrot.lane.b32.xlu0 %v1581, 64
  %v1696 = vpop.permute.xlu0 %1695
  %v1698 = vsel %vm226, %v1696, %v1577
  %1700 = vrot.lane.b32.xlu0 %v1663, 64
  %v1701 = vpop.permute.xlu0 %1700
  %v1703 = vsel %vm226, %v1701, %v1665
  %v1704 = vmul.f32 %v1685, %v1703
  %v1705 = vadd.f32 %v1698, %v1704
  %v1706 = vtanh.pop %v1705
  %v1707 = vsub.f32 1.0, %v1693
  %v1708 = vmul.f32 %v1707, %v1706
  %v1709 = vmul.f32 %v1693, 0.0
  %v1710 = vadd.f32 %v1708, %v1709
  %v1713 = vunpack.c.l.s4 1966171168
  %v1714 = vunpack.c.0.s8 %v1713
  %v1715 = vlaneseq
  %v1716 = vshrl.u32 %v1715, 7
  %v1717 = vsub.s32 %v1714, %v1716
  %v1718 = vrot.slane %v1710, %v1717
  %v1719 = vcombine.high %v1718, %v1718
  %v1721 = vunpack.c.l.s4 1966171168
  %v1722 = vunpack.c.0.s8 %v1721
  %v1723 = vlaneseq
  %v1724 = vshrl.u32 %v1723, 7
  %v1725 = vsub.s32 %v1722, %v1724
  %v1726 = vrot.slane %v1718, %v1725
  %v1728 = vunpack.c.l.s4 1966171168
  %v1729 = vunpack.c.0.s8 %v1728
  %v1730 = vlaneseq
  %v1731 = vshrl.u32 %v1730, 7
  %v1732 = vsub.s32 %v1729, %v1731
  %v1733 = vrot.slane %v1719, %v1732
  %vm1736 = vcmask 253952
  %1737 = vst.msk [vmem:[%s17] sm:$0x1] %vm1736, %v1726
  %1738 = vst.msk [vmem:[%s17 + $0x18] sm:$0x1] %vm1736, %v1733
  %vm1739 = vcmask 516352
  %1740 = vst.msk [vmem:[%s17 + $0x13] sm:$0x1] %vm1739, %v1726
  %1741 = vst.msk [vmem:[%s17 + $0x2b] sm:$0x1] %vm1739, %v1733
  %v1742 = vrot.slane %v1553, 2
  %v1743 = vrot.slane %v1555, 2
  %v1746 = vsel %vm1580, %v1529, %v1742
  %v1747 = vsel %vm246, %v1710, 0
  %1749 = vmatprep.subr.mxu0 %v1558
  %1750 = vmatpush1.msra.mxu0 %v1557
  %1751 = vmatprep.subr.mxu0 %v1560
  %1752 = vmatpush1.msra.mxu0 %v1559
  %1753 = vmatprep.subr.mxu0 %v1562
  %1754 = vmatpush1.msra.mxu0 %v1561
  %1755 = vmatprep.subr.mxu0 %v1564
  %1756 = vmatpush1.msra.mxu0 %v1563
  %1757 = vmatprep.subr.mxu0 %v1566
  %1758 = vmatpush1.msra.mxu0 %v1565
  %1759 = vmatprep.subr.mxu0 %v1568
  %1760 = vmatpush1.msra.mxu0 %v1567
  %1761 = vmatprep.subr.mxu0 %v1570
  %1762 = vmatpush1.msra.mxu0 %v1569
  %1763 = vmatprep.subr.mxu0 %v1572
  %1764 = vmatpush1.msra.mxu0 %v1571
  %1765 = vmatprep.subr.mxu0 0.0
  %1766 = vmatpush1.msra.mxu0 0.0
  %1767 = vmatprep.subr.mxu0 0.0
  %1768 = vmatpush1.msra.mxu0 0.0
  %1769 = vmatprep.subr.mxu0 0.0
  %1770 = vmatpush1.msra.mxu0 0.0
  %1771 = vmatprep.subr.mxu0 0.0
  %1772 = vmatpush1.msra.mxu0 0.0
  %1773 = vmatprep.subr.mxu0 0.0
  %1774 = vmatpush1.msra.mxu0 0.0
  %1775 = vmatprep.subr.mxu0 0.0
  %1776 = vmatpush1.msra.mxu0 0.0
  %1777 = vmatprep.subr.mxu0 0.0
  %1778 = vmatpush1.msra.mxu0 0.0
  %1779 = vmatprep.subr.mxu0 0.0
  %1780 = vmatpush1.msra.mxu0 0.0
  %1781 = vmatprep.subr.mxu0 0.0
  %1782 = vmatpush1.msra.mxu0 0.0
  %1783 = vmatprep.subr.mxu0 0.0
  %1784 = vmatpush1.msra.mxu0 0.0
  %1785 = vmatprep.subr.mxu0 0.0
  %1786 = vmatpush1.msra.mxu0 0.0
  %1787 = vmatprep.subr.mxu0 0.0
  %1788 = vmatpush1.msra.mxu0 0.0
  %1789 = vmatprep.subr.mxu0 0.0
  %1790 = vmatpush1.msra.mxu0 0.0
  %1791 = vmatprep.subr.mxu0 0.0
  %1792 = vmatpush1.msra.mxu0 0.0
  %1793 = vmatprep.subr.mxu0 0.0
  %1794 = vmatpush1.msra.mxu0 0.0
  %1795 = vmatprep.subr.mxu0 0.0
  %1796 = vmatpush1.msra.mxu0 0.0
  %1797 = vmatprep.subr.mxu0 0.0
  %1798 = vmatpush1.msra.mxu0 0.0
  %1799 = vmatprep.subr.mxu0 0.0
  %1800 = vmatpush1.msra.mxu0 0.0
  %1801 = vmatprep.subr.mxu0 0.0
  %1802 = vmatpush1.msra.mxu0 0.0
  %1803 = vmatprep.subr.mxu0 0.0
  %1804 = vmatpush1.msra.mxu0 0.0
  %1805 = vmatprep.subr.mxu0 0.0
  %1806 = vmatpush1.msra.mxu0 0.0
  %1807 = vmatprep.subr.mxu0 0.0
  %1808 = vmatpush1.msra.mxu0 0.0
  %1809 = vmatprep.subr.mxu0 0.0
  %1810 = vmatpush1.msra.mxu0 0.0
  %1811 = vmatprep.subr.mxu0 0.0
  %1812 = vmatpush1.msra.mxu0 0.0
  %1813 = vmatprep.mubr.f32.mxu0 0.0
  %1814 = vmatmul.mubr.f32.gmra.mrb[0].mxu0 %v1747
  %v1815 = vpop.f32.mrb[0].mxu0
  %v1816 = vadd.f32 %v1586, %v1815
  %v1817 = vpop.f32.mrb[0].mxu0
  %v1818 = vadd.f32 %v1590, %v1817
  %1819 = vdwg.mxu0
  %v1822 = vrot.slane %v1816, 6
  %v1823 = vrot.slane %v1818, 6
  %v1826 = vadd.f32 %v1746, %v1822
  %v1827 = vadd.f32 %v1743, %v1823
  %v1828 = vxor.u32 %v1826, 2147483648
  %v1829 = vxor.u32 %v1827, 2147483648
  %v1830 = vmul.f32 %v1828, 1.442695
  %v1831 = vpow.pop %v1830
  %v1832 = vmul.f32 %v1829, 1.442695
  %v1833 = vpow.pop %v1832
  %v1834 = vadd.f32 %v1831, 1.0
  %v1835 = vadd.f32 %v1833, 1.0
  %v1836 = vrcp.pop %v1834
  %v1837 = vmul.f32 1.0, %v1836
  %v1838 = vrcp.pop %v1835
  %v1839 = vmul.f32 1.0, %v1838
  %1841 = vrot.lane.b32.xlu0 %v1837, 64
  %v1842 = vpop.permute.xlu0 %1841
  %v1844 = vsel %vm226, %v1837, %v1842
  %1845 = vrot.lane.b32.xlu0 %v1837, 96
  %v1846 = vpop.permute.xlu0 %1845
  %1849 = vrot.lane.b32.xlu0 %v1839, 32
  %v1850 = vpop.permute.xlu0 %1849
  %v1852 = vsel %vm226, %v1846, %v1850
  %1854 = vrot.lane.b32.xlu0 %v1746, 64
  %v1855 = vpop.permute.xlu0 %1854
  %v1857 = vsel %vm226, %v1855, %v1743
  %1858 = vrot.lane.b32.xlu0 %v1816, 64
  %v1859 = vpop.permute.xlu0 %1858
  %v1861 = vsel %vm226, %v1859, %v1818
  %v1863 = vrot.slane %v1861, 6
  %v1865 = vmul.f32 %v1844, %v1863
  %v1866 = vadd.f32 %v1857, %v1865
  %v1867 = vtanh.pop %v1866
  %v1868 = vsub.f32 1.0, %v1852
  %v1869 = vmul.f32 %v1868, %v1867
  %v1870 = vrot.slane %v1710, 6
  %v1872 = vmul.f32 %v1852, %v1870
  %v1873 = vadd.f32 %v1869, %v1872
  %v1876 = vunpack.c.l.s4 1966171168
  %v1877 = vunpack.c.0.s8 %v1876
  %v1878 = vlaneseq
  %v1879 = vshrl.u32 %v1878, 7
  %v1880 = vsub.s32 %v1877, %v1879
  %v1881 = vrot.slane %v1873, %v1880
  %v1882 = vcombine.high %v1881, %v1881
  %v1884 = vunpack.c.l.s4 1966171168
  %v1885 = vunpack.c.0.s8 %v1884
  %v1886 = vlaneseq
  %v1887 = vshrl.u32 %v1886, 7
  %v1888 = vsub.s32 %v1885, %v1887
  %v1889 = vrot.slane %v1881, %v1888
  %v1891 = vunpack.c.l.s4 1966171168
  %v1892 = vunpack.c.0.s8 %v1891
  %v1893 = vlaneseq
  %v1894 = vshrl.u32 %v1893, 7
  %v1895 = vsub.s32 %v1892, %v1894
  %v1896 = vrot.slane %v1882, %v1895
  %v1897 = vcombine.high %v1889, %v1889
  %v1898 = vcombine.high %v1896, %v1896
  %1901 = vst.msk [vmem:[%s17 + $0x1] sm:$0x1] %vm1736, %v1897
  %1902 = vst.msk [vmem:[%s17 + $0x19] sm:$0x1] %vm1736, %v1898
  %1903 = vst.msk [vmem:[%s17 + $0x12] sm:$0x1] %vm1739, %v1897
  %1904 = vst.msk [vmem:[%s17 + $0x2a] sm:$0x1] %vm1739, %v1898
  %v1905 = vrot.slane %v1873, 2
  %v1906 = vsel %vm246, %v1905, 0
  %1908 = vmatprep.subr.mxu0 %v1558
  %1909 = vmatpush1.msra.mxu0 %v1557
  %1910 = vmatprep.subr.mxu0 %v1560
  %1911 = vmatpush1.msra.mxu0 %v1559
  %1912 = vmatprep.subr.mxu0 %v1562
  %1913 = vmatpush1.msra.mxu0 %v1561
  %1914 = vmatprep.subr.mxu0 %v1564
  %1915 = vmatpush1.msra.mxu0 %v1563
  %1916 = vmatprep.subr.mxu0 %v1566
  %1917 = vmatpush1.msra.mxu0 %v1565
  %1918 = vmatprep.subr.mxu0 %v1568
  %1919 = vmatpush1.msra.mxu0 %v1567
  %1920 = vmatprep.subr.mxu0 %v1570
  %1921 = vmatpush1.msra.mxu0 %v1569
  %1922 = vmatprep.subr.mxu0 %v1572
  %1923 = vmatpush1.msra.mxu0 %v1571
  %1924 = vmatprep.subr.mxu0 0.0
  %1925 = vmatpush1.msra.mxu0 0.0
  %1926 = vmatprep.subr.mxu0 0.0
  %1927 = vmatpush1.msra.mxu0 0.0
  %1928 = vmatprep.subr.mxu0 0.0
  %1929 = vmatpush1.msra.mxu0 0.0
  %1930 = vmatprep.subr.mxu0 0.0
  %1931 = vmatpush1.msra.mxu0 0.0
  %1932 = vmatprep.subr.mxu0 0.0
  %1933 = vmatpush1.msra.mxu0 0.0
  %1934 = vmatprep.subr.mxu0 0.0
  %1935 = vmatpush1.msra.mxu0 0.0
  %1936 = vmatprep.subr.mxu0 0.0
  %1937 = vmatpush1.msra.mxu0 0.0
  %1938 = vmatprep.subr.mxu0 0.0
  %1939 = vmatpush1.msra.mxu0 0.0
  %1940 = vmatprep.subr.mxu0 0.0
  %1941 = vmatpush1.msra.mxu0 0.0
  %1942 = vmatprep.subr.mxu0 0.0
  %1943 = vmatpush1.msra.mxu0 0.0
  %1944 = vmatprep.subr.mxu0 0.0
  %1945 = vmatpush1.msra.mxu0 0.0
  %1946 = vmatprep.subr.mxu0 0.0
  %1947 = vmatpush1.msra.mxu0 0.0
  %1948 = vmatprep.subr.mxu0 0.0
  %1949 = vmatpush1.msra.mxu0 0.0
  %1950 = vmatprep.subr.mxu0 0.0
  %1951 = vmatpush1.msra.mxu0 0.0
  %1952 = vmatprep.subr.mxu0 0.0
  %1953 = vmatpush1.msra.mxu0 0.0
  %1954 = vmatprep.subr.mxu0 0.0
  %1955 = vmatpush1.msra.mxu0 0.0
  %1956 = vmatprep.subr.mxu0 0.0
  %1957 = vmatpush1.msra.mxu0 0.0
  %1958 = vmatprep.subr.mxu0 0.0
  %1959 = vmatpush1.msra.mxu0 0.0
  %1960 = vmatprep.subr.mxu0 0.0
  %1961 = vmatpush1.msra.mxu0 0.0
  %1962 = vmatprep.subr.mxu0 0.0
  %1963 = vmatpush1.msra.mxu0 0.0
  %1964 = vmatprep.subr.mxu0 0.0
  %1965 = vmatpush1.msra.mxu0 0.0
  %1966 = vmatprep.subr.mxu0 0.0
  %1967 = vmatpush1.msra.mxu0 0.0
  %1968 = vmatprep.subr.mxu0 0.0
  %1969 = vmatpush1.msra.mxu0 0.0
  %1970 = vmatprep.subr.mxu0 0.0
  %1971 = vmatpush1.msra.mxu0 0.0
  %1972 = vmatprep.mubr.f32.mxu0 0.0
  %1973 = vmatmul.mubr.f32.gmra.mrb[0].mxu0 %v1906
  %v1974 = vpop.f32.mrb[0].mxu0
  %v1975 = vadd.f32 %v1586, %v1974
  %v1976 = vpop.f32.mrb[0].mxu0
  %v1977 = vadd.f32 %v1590, %v1976
  %1978 = vdwg.mxu0
  %v1981 = vrot.slane %v1975, 4
  %v1982 = vrot.slane %v1977, 4
  %v1985 = vadd.f32 %v1581, %v1981
  %v1986 = vadd.f32 %v1577, %v1982
  %v1987 = vxor.u32 %v1985, 2147483648
  %v1988 = vxor.u32 %v1986, 2147483648
  %v1989 = vmul.f32 %v1987, 1.442695
  %v1990 = vpow.pop %v1989
  %v1991 = vmul.f32 %v1988, 1.442695
  %v1992 = vpow.pop %v1991
  %v1993 = vadd.f32 %v1990, 1.0
  %v1994 = vadd.f32 %v1992, 1.0
  %v1995 = vrcp.pop %v1993
  %v1996 = vmul.f32 1.0, %v1995
  %v1997 = vrcp.pop %v1994
  %v1998 = vmul.f32 1.0, %v1997
  %2000 = vrot.lane.b32.xlu0 %v1996, 64
  %v2001 = vpop.permute.xlu0 %2000
  %v2003 = vsel %vm226, %v1996, %v2001
  %2004 = vrot.lane.b32.xlu0 %v1996, 96
  %v2005 = vpop.permute.xlu0 %2004
  %2008 = vrot.lane.b32.xlu0 %v1998, 32
  %v2009 = vpop.permute.xlu0 %2008
  %v2011 = vsel %vm226, %v2005, %v2009
  %2012 = vrot.lane.b32.xlu0 %v1975, 64
  %v2013 = vpop.permute.xlu0 %2012
  %v2015 = vsel %vm226, %v2013, %v1977
  %v2017 = vrot.slane %v2015, 4
  %v2019 = vmul.f32 %v2003, %v2017
  %v2020 = vadd.f32 %v1698, %v2019
  %v2021 = vtanh.pop %v2020
  %v2022 = vsub.f32 1.0, %v2011
  %v2023 = vmul.f32 %v2022, %v2021
  %v2024 = vrot.slane %v1873, 6
  %v2026 = vmul.f32 %v2011, %v2024
  %v2027 = vadd.f32 %v2023, %v2026
  %v2029 = vcombine.high %v2027, %v2027
  %v2031 = vunpack.c.l.s4 1966171168
  %v2032 = vunpack.c.0.s8 %v2031
  %v2033 = vlaneseq
  %v2034 = vshrl.u32 %v2033, 7
  %v2035 = vsub.s32 %v2032, %v2034
  %v2036 = vrot.slane %v2029, %v2035
  %v2037 = vcombine.high %v2036, %v2036
  %v2039 = vunpack.c.l.s4 1966171168
  %v2040 = vunpack.c.0.s8 %v2039
  %v2041 = vlaneseq
  %v2042 = vshrl.u32 %v2041, 7
  %v2043 = vsub.s32 %v2040, %v2042
  %v2044 = vrot.slane %v2036, %v2043
  %v2046 = vunpack.c.l.s4 1966171168
  %v2047 = vunpack.c.0.s8 %v2046
  %v2048 = vlaneseq
  %v2049 = vshrl.u32 %v2048, 7
  %v2050 = vsub.s32 %v2047, %v2049
  %v2051 = vrot.slane %v2037, %v2050
  %2054 = vst.msk [vmem:[%s17 + $0x2] sm:$0x1] %vm1736, %v2044
  %2055 = vst.msk [vmem:[%s17 + $0x1a] sm:$0x1] %vm1736, %v2051
  %2056 = vst.msk [vmem:[%s17 + $0x11] sm:$0x1] %vm1739, %v2044
  %2057 = vst.msk [vmem:[%s17 + $0x29] sm:$0x1] %vm1739, %v2051
  %v2058 = vrot.slane %v2027, 4
  %v2059 = vsel %vm246, %v2058, 0
  %2061 = vmatprep.subr.mxu0 %v1558
  %2062 = vmatpush1.msra.mxu0 %v1557
  %2063 = vmatprep.subr.mxu0 %v1560
  %2064 = vmatpush1.msra.mxu0 %v1559
  %2065 = vmatprep.subr.mxu0 %v1562
  %2066 = vmatpush1.msra.mxu0 %v1561
  %2067 = vmatprep.subr.mxu0 %v1564
  %2068 = vmatpush1.msra.mxu0 %v1563
  %2069 = vmatprep.subr.mxu0 %v1566
  %2070 = vmatpush1.msra.mxu0 %v1565
  %2071 = vmatprep.subr.mxu0 %v1568
  %2072 = vmatpush1.msra.mxu0 %v1567
  %2073 = vmatprep.subr.mxu0 %v1570
  %2074 = vmatpush1.msra.mxu0 %v1569
  %2075 = vmatprep.subr.mxu0 %v1572
  %2076 = vmatpush1.msra.mxu0 %v1571
  %2077 = vmatprep.subr.mxu0 0.0
  %2078 = vmatpush1.msra.mxu0 0.0
  %2079 = vmatprep.subr.mxu0 0.0
  %2080 = vmatpush1.msra.mxu0 0.0
  %2081 = vmatprep.subr.mxu0 0.0
  %2082 = vmatpush1.msra.mxu0 0.0
  %2083 = vmatprep.subr.mxu0 0.0
  %2084 = vmatpush1.msra.mxu0 0.0
  %2085 = vmatprep.subr.mxu0 0.0
  %2086 = vmatpush1.msra.mxu0 0.0
  %2087 = vmatprep.subr.mxu0 0.0
  %2088 = vmatpush1.msra.mxu0 0.0
  %2089 = vmatprep.subr.mxu0 0.0
  %2090 = vmatpush1.msra.mxu0 0.0
  %2091 = vmatprep.subr.mxu0 0.0
  %2092 = vmatpush1.msra.mxu0 0.0
  %2093 = vmatprep.subr.mxu0 0.0
  %2094 = vmatpush1.msra.mxu0 0.0
  %2095 = vmatprep.subr.mxu0 0.0
  %2096 = vmatpush1.msra.mxu0 0.0
  %2097 = vmatprep.subr.mxu0 0.0
  %2098 = vmatpush1.msra.mxu0 0.0
  %2099 = vmatprep.subr.mxu0 0.0
  %2100 = vmatpush1.msra.mxu0 0.0
  %2101 = vmatprep.subr.mxu0 0.0
  %2102 = vmatpush1.msra.mxu0 0.0
  %2103 = vmatprep.subr.mxu0 0.0
  %2104 = vmatpush1.msra.mxu0 0.0
  %2105 = vmatprep.subr.mxu0 0.0
  %2106 = vmatpush1.msra.mxu0 0.0
  %2107 = vmatprep.subr.mxu0 0.0
  %2108 = vmatpush1.msra.mxu0 0.0
  %2109 = vmatprep.subr.mxu0 0.0
  %2110 = vmatpush1.msra.mxu0 0.0
  %2111 = vmatprep.subr.mxu0 0.0
  %2112 = vmatpush1.msra.mxu0 0.0
  %2113 = vmatprep.subr.mxu0 0.0
  %2114 = vmatpush1.msra.mxu0 0.0
  %2115 = vmatprep.subr.mxu0 0.0
  %2116 = vmatpush1.msra.mxu0 0.0
  %2117 = vmatprep.subr.mxu0 0.0
  %2118 = vmatpush1.msra.mxu0 0.0
  %2119 = vmatprep.subr.mxu0 0.0
  %2120 = vmatpush1.msra.mxu0 0.0
  %2121 = vmatprep.subr.mxu0 0.0
  %2122 = vmatpush1.msra.mxu0 0.0
  %2123 = vmatprep.subr.mxu0 0.0
  %2124 = vmatpush1.msra.mxu0 0.0
  %2125 = vmatprep.mubr.f32.mxu0 0.0
  %2126 = vmatmul.mubr.f32.gmra.mrb[0].mxu0 %v2059
  %v2127 = vpop.f32.mrb[0].mxu0
  %v2128 = vadd.f32 %v1586, %v2127
  %v2129 = vpop.f32.mrb[0].mxu0
  %v2130 = vadd.f32 %v1590, %v2129
  %2131 = vdwg.mxu0
  %v2134 = vrot.slane %v2128, 2
  %v2135 = vrot.slane %v2130, 2
  %v2138 = vadd.f32 %v1746, %v2134
  %v2139 = vadd.f32 %v1743, %v2135
  %v2140 = vxor.u32 %v2138, 2147483648
  %v2141 = vxor.u32 %v2139, 2147483648
  %v2142 = vmul.f32 %v2140, 1.442695
  %v2143 = vpow.pop %v2142
  %v2144 = vmul.f32 %v2141, 1.442695
  %v2145 = vpow.pop %v2144
  %v2146 = vadd.f32 %v2143, 1.0
  %v2147 = vadd.f32 %v2145, 1.0
  %v2148 = vrcp.pop %v2146
  %v2149 = vmul.f32 1.0, %v2148
  %v2150 = vrcp.pop %v2147
  %v2151 = vmul.f32 1.0, %v2150
  %2153 = vrot.lane.b32.xlu0 %v2149, 64
  %v2154 = vpop.permute.xlu0 %2153
  %v2156 = vsel %vm226, %v2149, %v2154
  %2157 = vrot.lane.b32.xlu0 %v2149, 96
  %v2158 = vpop.permute.xlu0 %2157
  %2161 = vrot.lane.b32.xlu0 %v2151, 32
  %v2162 = vpop.permute.xlu0 %2161
  %v2164 = vsel %vm226, %v2158, %v2162
  %2165 = vrot.lane.b32.xlu0 %v2128, 64
  %v2166 = vpop.permute.xlu0 %2165
  %v2168 = vsel %vm226, %v2166, %v2130
  %v2170 = vrot.slane %v2168, 2
  %v2172 = vmul.f32 %v2156, %v2170
  %v2173 = vadd.f32 %v1857, %v2172
  %v2174 = vtanh.pop %v2173
  %v2175 = vsub.f32 1.0, %v2164
  %v2176 = vmul.f32 %v2175, %v2174
  %v2177 = vrot.slane %v2027, 6
  %v2179 = vmul.f32 %v2164, %v2177
  %v2180 = vadd.f32 %v2176, %v2179
  %v2182 = vcombine.high %v2180, %v2180
  %v2184 = vunpack.c.l.s4 1966171168
  %v2185 = vunpack.c.0.s8 %v2184
  %v2186 = vlaneseq
  %v2187 = vshrl.u32 %v2186, 7
  %v2188 = vsub.s32 %v2185, %v2187
  %v2189 = vrot.slane %v2182, %v2188
  %v2190 = vcombine.high %v2189, %v2189
  %v2192 = vunpack.c.l.s4 1966171168
  %v2193 = vunpack.c.0.s8 %v2192
  %v2194 = vlaneseq
  %v2195 = vshrl.u32 %v2194, 7
  %v2196 = vsub.s32 %v2193, %v2195
  %v2197 = vrot.slane %v2189, %v2196
  %v2199 = vunpack.c.l.s4 1966171168
  %v2200 = vunpack.c.0.s8 %v2199
  %v2201 = vlaneseq
  %v2202 = vshrl.u32 %v2201, 7
  %v2203 = vsub.s32 %v2200, %v2202
  %v2204 = vrot.slane %v2190, %v2203
  %v2205 = vcombine.high %v2197, %v2197
  %v2206 = vcombine.high %v2204, %v2204
  %2209 = vst.msk [vmem:[%s17 + $0x3] sm:$0x1] %vm1736, %v2205
  %2210 = vst.msk [vmem:[%s17 + $0x1b] sm:$0x1] %vm1736, %v2206
  %2211 = vst.msk [vmem:[%s17 + $0x10] sm:$0x1] %vm1739, %v2205
  %2212 = vst.msk [vmem:[%s17 + $0x28] sm:$0x1] %vm1739, %v2206
  %v2215 = vrot.slane %v1547, 6
  %v2216 = vrot.slane %v1549, 6
  %v2219 = vsel %vm1580, %v1535, %v2215
  %v2220 = vrot.slane %v2180, 6
  %v2221 = vsel %vm246, %v2220, 0
  %2223 = vmatprep.subr.mxu0 %v1558
  %2224 = vmatpush1.msra.mxu0 %v1557
  %2225 = vmatprep.subr.mxu0 %v1560
  %2226 = vmatpush1.msra.mxu0 %v1559
  %2227 = vmatprep.subr.mxu0 %v1562
  %2228 = vmatpush1.msra.mxu0 %v1561
  %2229 = vmatprep.subr.mxu0 %v1564
  %2230 = vmatpush1.msra.mxu0 %v1563
  %2231 = vmatprep.subr.mxu0 %v1566
  %2232 = vmatpush1.msra.mxu0 %v1565
  %2233 = vmatprep.subr.mxu0 %v1568
  %2234 = vmatpush1.msra.mxu0 %v1567
  %2235 = vmatprep.subr.mxu0 %v1570
  %2236 = vmatpush1.msra.mxu0 %v1569
  %2237 = vmatprep.subr.mxu0 %v1572
  %2238 = vmatpush1.msra.mxu0 %v1571
  %2239 = vmatprep.subr.mxu0 0.0
  %2240 = vmatpush1.msra.mxu0 0.0
  %2241 = vmatprep.subr.mxu0 0.0
  %2242 = vmatpush1.msra.mxu0 0.0
  %2243 = vmatprep.subr.mxu0 0.0
  %2244 = vmatpush1.msra.mxu0 0.0
  %2245 = vmatprep.subr.mxu0 0.0
  %2246 = vmatpush1.msra.mxu0 0.0
  %2247 = vmatprep.subr.mxu0 0.0
  %2248 = vmatpush1.msra.mxu0 0.0
  %2249 = vmatprep.subr.mxu0 0.0
  %2250 = vmatpush1.msra.mxu0 0.0
  %2251 = vmatprep.subr.mxu0 0.0
  %2252 = vmatpush1.msra.mxu0 0.0
  %2253 = vmatprep.subr.mxu0 0.0
  %2254 = vmatpush1.msra.mxu0 0.0
  %2255 = vmatprep.subr.mxu0 0.0
  %2256 = vmatpush1.msra.mxu0 0.0
  %2257 = vmatprep.subr.mxu0 0.0
  %2258 = vmatpush1.msra.mxu0 0.0
  %2259 = vmatprep.subr.mxu0 0.0
  %2260 = vmatpush1.msra.mxu0 0.0
  %2261 = vmatprep.subr.mxu0 0.0
  %2262 = vmatpush1.msra.mxu0 0.0
  %2263 = vmatprep.subr.mxu0 0.0
  %2264 = vmatpush1.msra.mxu0 0.0
  %2265 = vmatprep.subr.mxu0 0.0
  %2266 = vmatpush1.msra.mxu0 0.0
  %2267 = vmatprep.subr.mxu0 0.0
  %2268 = vmatpush1.msra.mxu0 0.0
  %2269 = vmatprep.subr.mxu0 0.0
  %2270 = vmatpush1.msra.mxu0 0.0
  %2271 = vmatprep.subr.mxu0 0.0
  %2272 = vmatpush1.msra.mxu0 0.0
  %2273 = vmatprep.subr.mxu0 0.0
  %2274 = vmatpush1.msra.mxu0 0.0
  %2275 = vmatprep.subr.mxu0 0.0
  %2276 = vmatpush1.msra.mxu0 0.0
  %2277 = vmatprep.subr.mxu0 0.0
  %2278 = vmatpush1.msra.mxu0 0.0
  %2279 = vmatprep.subr.mxu0 0.0
  %2280 = vmatpush1.msra.mxu0 0.0
  %2281 = vmatprep.subr.mxu0 0.0
  %2282 = vmatpush1.msra.mxu0 0.0
  %2283 = vmatprep.subr.mxu0 0.0
  %2284 = vmatpush1.msra.mxu0 0.0
  %2285 = vmatprep.subr.mxu0 0.0
  %2286 = vmatpush1.msra.mxu0 0.0
  %2287 = vmatprep.mubr.f32.mxu0 0.0
  %2288 = vmatmul.mubr.f32.gmra.mrb[0].mxu0 %v2221
  %v2289 = vpop.f32.mrb[0].mxu0
  %v2290 = vadd.f32 %v1586, %v2289
  %v2291 = vpop.f32.mrb[0].mxu0
  %v2292 = vadd.f32 %v1590, %v2291
  %2293 = vdwg.mxu0
  %v2294 = vadd.f32 %v2219, %v2290
  %v2295 = vadd.f32 %v2216, %v2292
  %v2296 = vxor.u32 %v2294, 2147483648
  %v2297 = vxor.u32 %v2295, 2147483648
  %v2298 = vmul.f32 %v2296, 1.442695
  %v2299 = vpow.pop %v2298
  %v2300 = vmul.f32 %v2297, 1.442695
  %v2301 = vpow.pop %v2300
  %v2302 = vadd.f32 %v2299, 1.0
  %v2303 = vadd.f32 %v2301, 1.0
  %v2304 = vrcp.pop %v2302
  %v2305 = vmul.f32 1.0, %v2304
  %v2306 = vrcp.pop %v2303
  %v2307 = vmul.f32 1.0, %v2306
  %2309 = vrot.lane.b32.xlu0 %v2305, 64
  %v2310 = vpop.permute.xlu0 %2309
  %v2312 = vsel %vm226, %v2305, %v2310
  %2313 = vrot.lane.b32.xlu0 %v2305, 96
  %v2314 = vpop.permute.xlu0 %2313
  %2317 = vrot.lane.b32.xlu0 %v2307, 32
  %v2318 = vpop.permute.xlu0 %2317
  %v2320 = vsel %vm226, %v2314, %v2318
  %2322 = vrot.lane.b32.xlu0 %v2219, 64
  %v2323 = vpop.permute.xlu0 %2322
  %v2325 = vsel %vm226, %v2323, %v2216
  %2327 = vrot.lane.b32.xlu0 %v2290, 64
  %v2328 = vpop.permute.xlu0 %2327
  %v2330 = vsel %vm226, %v2328, %v2292
  %v2331 = vmul.f32 %v2312, %v2330
  %v2332 = vadd.f32 %v2325, %v2331
  %v2333 = vtanh.pop %v2332
  %v2334 = vsub.f32 1.0, %v2320
  %v2335 = vmul.f32 %v2334, %v2333
  %v2337 = vmul.f32 %v2320, %v2220
  %v2338 = vadd.f32 %v2335, %v2337
  %v2341 = vunpack.c.l.s4 1966171168
  %v2342 = vunpack.c.0.s8 %v2341
  %v2343 = vlaneseq
  %v2344 = vshrl.u32 %v2343, 7
  %v2345 = vsub.s32 %v2342, %v2344
  %v2346 = vrot.slane %v2338, %v2345
  %v2347 = vcombine.high %v2346, %v2346
  %v2349 = vunpack.c.l.s4 1966171168
  %v2350 = vunpack.c.0.s8 %v2349
  %v2351 = vlaneseq
  %v2352 = vshrl.u32 %v2351, 7
  %v2353 = vsub.s32 %v2350, %v2352
  %v2354 = vrot.slane %v2346, %v2353
  %v2356 = vunpack.c.l.s4 1966171168
  %v2357 = vunpack.c.0.s8 %v2356
  %v2358 = vlaneseq
  %v2359 = vshrl.u32 %v2358, 7
  %v2360 = vsub.s32 %v2357, %v2359
  %v2361 = vrot.slane %v2347, %v2360
  %2364 = vst.msk [vmem:[%s17 + $0x4] sm:$0x1] %vm1736, %v2354
  %2365 = vst.msk [vmem:[%s17 + $0x1c] sm:$0x1] %vm1736, %v2361
  %2366 = vst.msk [vmem:[%s17 + $0xf] sm:$0x1] %vm1739, %v2354
  %2367 = vst.msk [vmem:[%s17 + $0x27] sm:$0x1] %vm1739, %v2361
  %v2368 = vrot.slane %v1547, 2
  %v2369 = vrot.slane %v1549, 2
  %v2372 = vsel %vm1580, %v1535, %v2368
  %v2373 = vsel %vm246, %v2338, 0
  %2375 = vmatprep.subr.mxu0 %v1558
  %2376 = vmatpush1.msra.mxu0 %v1557
  %2377 = vmatprep.subr.mxu0 %v1560
  %2378 = vmatpush1.msra.mxu0 %v1559
  %2379 = vmatprep.subr.mxu0 %v1562
  %2380 = vmatpush1.msra.mxu0 %v1561
  %2381 = vmatprep.subr.mxu0 %v1564
  %2382 = vmatpush1.msra.mxu0 %v1563
  %2383 = vmatprep.subr.mxu0 %v1566
  %2384 = vmatpush1.msra.mxu0 %v1565
  %2385 = vmatprep.subr.mxu0 %v1568
  %2386 = vmatpush1.msra.mxu0 %v1567
  %2387 = vmatprep.subr.mxu0 %v1570
  %2388 = vmatpush1.msra.mxu0 %v1569
  %2389 = vmatprep.subr.mxu0 %v1572
  %2390 = vmatpush1.msra.mxu0 %v1571
  %2391 = vmatprep.subr.mxu0 0.0
  %2392 = vmatpush1.msra.mxu0 0.0
  %2393 = vmatprep.subr.mxu0 0.0
  %2394 = vmatpush1.msra.mxu0 0.0
  %2395 = vmatprep.subr.mxu0 0.0
  %2396 = vmatpush1.msra.mxu0 0.0
  %2397 = vmatprep.subr.mxu0 0.0
  %2398 = vmatpush1.msra.mxu0 0.0
  %2399 = vmatprep.subr.mxu0 0.0
  %2400 = vmatpush1.msra.mxu0 0.0
  %2401 = vmatprep.subr.mxu0 0.0
  %2402 = vmatpush1.msra.mxu0 0.0
  %2403 = vmatprep.subr.mxu0 0.0
  %2404 = vmatpush1.msra.mxu0 0.0
  %2405 = vmatprep.subr.mxu0 0.0
  %2406 = vmatpush1.msra.mxu0 0.0
  %2407 = vmatprep.subr.mxu0 0.0
  %2408 = vmatpush1.msra.mxu0 0.0
  %2409 = vmatprep.subr.mxu0 0.0
  %2410 = vmatpush1.msra.mxu0 0.0
  %2411 = vmatprep.subr.mxu0 0.0
  %2412 = vmatpush1.msra.mxu0 0.0
  %2413 = vmatprep.subr.mxu0 0.0
  %2414 = vmatpush1.msra.mxu0 0.0
  %2415 = vmatprep.subr.mxu0 0.0
  %2416 = vmatpush1.msra.mxu0 0.0
  %2417 = vmatprep.subr.mxu0 0.0
  %2418 = vmatpush1.msra.mxu0 0.0
  %2419 = vmatprep.subr.mxu0 0.0
  %2420 = vmatpush1.msra.mxu0 0.0
  %2421 = vmatprep.subr.mxu0 0.0
  %2422 = vmatpush1.msra.mxu0 0.0
  %2423 = vmatprep.subr.mxu0 0.0
  %2424 = vmatpush1.msra.mxu0 0.0
  %2425 = vmatprep.subr.mxu0 0.0
  %2426 = vmatpush1.msra.mxu0 0.0
  %2427 = vmatprep.subr.mxu0 0.0
  %2428 = vmatpush1.msra.mxu0 0.0
  %2429 = vmatprep.subr.mxu0 0.0
  %2430 = vmatpush1.msra.mxu0 0.0
  %2431 = vmatprep.subr.mxu0 0.0
  %2432 = vmatpush1.msra.mxu0 0.0
  %2433 = vmatprep.subr.mxu0 0.0
  %2434 = vmatpush1.msra.mxu0 0.0
  %2435 = vmatprep.subr.mxu0 0.0
  %2436 = vmatpush1.msra.mxu0 0.0
  %2437 = vmatprep.subr.mxu0 0.0
  %2438 = vmatpush1.msra.mxu0 0.0
  %2439 = vmatprep.mubr.f32.mxu0 0.0
  %2440 = vmatmul.mubr.f32.gmra.mrb[0].mxu0 %v2373
  %v2441 = vpop.f32.mrb[0].mxu0
  %v2442 = vadd.f32 %v1586, %v2441
  %v2443 = vpop.f32.mrb[0].mxu0
  %v2444 = vadd.f32 %v1590, %v2443
  %2445 = vdwg.mxu0
  %v2448 = vrot.slane %v2442, 6
  %v2449 = vrot.slane %v2444, 6
  %v2452 = vadd.f32 %v2372, %v2448
  %v2453 = vadd.f32 %v2369, %v2449
  %v2454 = vxor.u32 %v2452, 2147483648
  %v2455 = vxor.u32 %v2453, 2147483648
  %v2456 = vmul.f32 %v2454, 1.442695
  %v2457 = vpow.pop %v2456
  %v2458 = vmul.f32 %v2455, 1.442695
  %v2459 = vpow.pop %v2458
  %v2460 = vadd.f32 %v2457, 1.0
  %v2461 = vadd.f32 %v2459, 1.0
  %v2462 = vrcp.pop %v2460
  %v2463 = vmul.f32 1.0, %v2462
  %v2464 = vrcp.pop %v2461
  %v2465 = vmul.f32 1.0, %v2464
  %2467 = vrot.lane.b32.xlu0 %v2463, 64
  %v2468 = vpop.permute.xlu0 %2467
  %v2470 = vsel %vm226, %v2463, %v2468
  %2471 = vrot.lane.b32.xlu0 %v2463, 96
  %v2472 = vpop.permute.xlu0 %2471
  %2475 = vrot.lane.b32.xlu0 %v2465, 32
  %v2476 = vpop.permute.xlu0 %2475
  %v2478 = vsel %vm226, %v2472, %v2476
  %2480 = vrot.lane.b32.xlu0 %v2372, 64
  %v2481 = vpop.permute.xlu0 %2480
  %v2483 = vsel %vm226, %v2481, %v2369
  %2484 = vrot.lane.b32.xlu0 %v2442, 64
  %v2485 = vpop.permute.xlu0 %2484
  %v2487 = vsel %vm226, %v2485, %v2444
  %v2489 = vrot.slane %v2487, 6
  %v2491 = vmul.f32 %v2470, %v2489
  %v2492 = vadd.f32 %v2483, %v2491
  %v2493 = vtanh.pop %v2492
  %v2494 = vsub.f32 1.0, %v2478
  %v2495 = vmul.f32 %v2494, %v2493
  %v2496 = vrot.slane %v2338, 6
  %v2498 = vmul.f32 %v2478, %v2496
  %v2499 = vadd.f32 %v2495, %v2498
  %v2502 = vunpack.c.l.s4 1966171168
  %v2503 = vunpack.c.0.s8 %v2502
  %v2504 = vlaneseq
  %v2505 = vshrl.u32 %v2504, 7
  %v2506 = vsub.s32 %v2503, %v2505
  %v2507 = vrot.slane %v2499, %v2506
  %v2508 = vcombine.high %v2507, %v2507
  %v2510 = vunpack.c.l.s4 1966171168
  %v2511 = vunpack.c.0.s8 %v2510
  %v2512 = vlaneseq
  %v2513 = vshrl.u32 %v2512, 7
  %v2514 = vsub.s32 %v2511, %v2513
  %v2515 = vrot.slane %v2507, %v2514
  %v2517 = vunpack.c.l.s4 1966171168
  %v2518 = vunpack.c.0.s8 %v2517
  %v2519 = vlaneseq
  %v2520 = vshrl.u32 %v2519, 7
  %v2521 = vsub.s32 %v2518, %v2520
  %v2522 = vrot.slane %v2508, %v2521
  %v2523 = vcombine.high %v2515, %v2515
  %v2524 = vcombine.high %v2522, %v2522
  %2527 = vst.msk [vmem:[%s17 + $0x5] sm:$0x1] %vm1736, %v2523
  %2528 = vst.msk [vmem:[%s17 + $0x1d] sm:$0x1] %vm1736, %v2524
  %2529 = vst.msk [vmem:[%s17 + $0xe] sm:$0x1] %vm1739, %v2523
  %2530 = vst.msk [vmem:[%s17 + $0x26] sm:$0x1] %vm1739, %v2524
  %v2531 = vrot.slane %v2499, 2
  %v2532 = vsel %vm246, %v2531, 0
  %2534 = vmatprep.subr.mxu0 %v1558
  %2535 = vmatpush1.msra.mxu0 %v1557
  %2536 = vmatprep.subr.mxu0 %v1560
  %2537 = vmatpush1.msra.mxu0 %v1559
  %2538 = vmatprep.subr.mxu0 %v1562
  %2539 = vmatpush1.msra.mxu0 %v1561
  %2540 = vmatprep.subr.mxu0 %v1564
  %2541 = vmatpush1.msra.mxu0 %v1563
  %2542 = vmatprep.subr.mxu0 %v1566
  %2543 = vmatpush1.msra.mxu0 %v1565
  %2544 = vmatprep.subr.mxu0 %v1568
  %2545 = vmatpush1.msra.mxu0 %v1567
  %2546 = vmatprep.subr.mxu0 %v1570
  %2547 = vmatpush1.msra.mxu0 %v1569
  %2548 = vmatprep.subr.mxu0 %v1572
  %2549 = vmatpush1.msra.mxu0 %v1571
  %2550 = vmatprep.subr.mxu0 0.0
  %2551 = vmatpush1.msra.mxu0 0.0
  %2552 = vmatprep.subr.mxu0 0.0
  %2553 = vmatpush1.msra.mxu0 0.0
  %2554 = vmatprep.subr.mxu0 0.0
  %2555 = vmatpush1.msra.mxu0 0.0
  %2556 = vmatprep.subr.mxu0 0.0
  %2557 = vmatpush1.msra.mxu0 0.0
  %2558 = vmatprep.subr.mxu0 0.0
  %2559 = vmatpush1.msra.mxu0 0.0
  %2560 = vmatprep.subr.mxu0 0.0
  %2561 = vmatpush1.msra.mxu0 0.0
  %2562 = vmatprep.subr.mxu0 0.0
  %2563 = vmatpush1.msra.mxu0 0.0
  %2564 = vmatprep.subr.mxu0 0.0
  %2565 = vmatpush1.msra.mxu0 0.0
  %2566 = vmatprep.subr.mxu0 0.0
  %2567 = vmatpush1.msra.mxu0 0.0
  %2568 = vmatprep.subr.mxu0 0.0
  %2569 = vmatpush1.msra.mxu0 0.0
  %2570 = vmatprep.subr.mxu0 0.0
  %2571 = vmatpush1.msra.mxu0 0.0
  %2572 = vmatprep.subr.mxu0 0.0
  %2573 = vmatpush1.msra.mxu0 0.0
  %2574 = vmatprep.subr.mxu0 0.0
  %2575 = vmatpush1.msra.mxu0 0.0
  %2576 = vmatprep.subr.mxu0 0.0
  %2577 = vmatpush1.msra.mxu0 0.0
  %2578 = vmatprep.subr.mxu0 0.0
  %2579 = vmatpush1.msra.mxu0 0.0
  %2580 = vmatprep.subr.mxu0 0.0
  %2581 = vmatpush1.msra.mxu0 0.0
  %2582 = vmatprep.subr.mxu0 0.0
  %2583 = vmatpush1.msra.mxu0 0.0
  %2584 = vmatprep.subr.mxu0 0.0
  %2585 = vmatpush1.msra.mxu0 0.0
  %2586 = vmatprep.subr.mxu0 0.0
  %2587 = vmatpush1.msra.mxu0 0.0
  %2588 = vmatprep.subr.mxu0 0.0
  %2589 = vmatpush1.msra.mxu0 0.0
  %2590 = vmatprep.subr.mxu0 0.0
  %2591 = vmatpush1.msra.mxu0 0.0
  %2592 = vmatprep.subr.mxu0 0.0
  %2593 = vmatpush1.msra.mxu0 0.0
  %2594 = vmatprep.subr.mxu0 0.0
  %2595 = vmatpush1.msra.mxu0 0.0
  %2596 = vmatprep.subr.mxu0 0.0
  %2597 = vmatpush1.msra.mxu0 0.0
  %2598 = vmatprep.mubr.f32.mxu0 0.0
  %2599 = vmatmul.mubr.f32.gmra.mrb[0].mxu0 %v2532
  %v2600 = vpop.f32.mrb[0].mxu0
  %v2601 = vadd.f32 %v1586, %v2600
  %v2602 = vpop.f32.mrb[0].mxu0
  %v2603 = vadd.f32 %v1590, %v2602
  %2604 = vdwg.mxu0
  %v2607 = vrot.slane %v2601, 4
  %v2608 = vrot.slane %v2603, 4
  %v2611 = vadd.f32 %v2219, %v2607
  %v2612 = vadd.f32 %v2216, %v2608
  %v2613 = vxor.u32 %v2611, 2147483648
  %v2614 = vxor.u32 %v2612, 2147483648
  %v2615 = vmul.f32 %v2613, 1.442695
  %v2616 = vpow.pop %v2615
  %v2617 = vmul.f32 %v2614, 1.442695
  %v2618 = vpow.pop %v2617
  %v2619 = vadd.f32 %v2616, 1.0
  %v2620 = vadd.f32 %v2618, 1.0
  %v2621 = vrcp.pop %v2619
  %v2622 = vmul.f32 1.0, %v2621
  %v2623 = vrcp.pop %v2620
  %v2624 = vmul.f32 1.0, %v2623
  %2626 = vrot.lane.b32.xlu0 %v2622, 64
  %v2627 = vpop.permute.xlu0 %2626
  %v2629 = vsel %vm226, %v2622, %v2627
  %2630 = vrot.lane.b32.xlu0 %v2622, 96
  %v2631 = vpop.permute.xlu0 %2630
  %2634 = vrot.lane.b32.xlu0 %v2624, 32
  %v2635 = vpop.permute.xlu0 %2634
  %v2637 = vsel %vm226, %v2631, %v2635
  %2638 = vrot.lane.b32.xlu0 %v2601, 64
  %v2639 = vpop.permute.xlu0 %2638
  %v2641 = vsel %vm226, %v2639, %v2603
  %v2643 = vrot.slane %v2641, 4
  %v2645 = vmul.f32 %v2629, %v2643
  %v2646 = vadd.f32 %v2325, %v2645
  %v2647 = vtanh.pop %v2646
  %v2648 = vsub.f32 1.0, %v2637
  %v2649 = vmul.f32 %v2648, %v2647
  %v2650 = vrot.slane %v2499, 6
  %v2652 = vmul.f32 %v2637, %v2650
  %v2653 = vadd.f32 %v2649, %v2652
  %v2655 = vcombine.high %v2653, %v2653
  %v2657 = vunpack.c.l.s4 1966171168
  %v2658 = vunpack.c.0.s8 %v2657
  %v2659 = vlaneseq
  %v2660 = vshrl.u32 %v2659, 7
  %v2661 = vsub.s32 %v2658, %v2660
  %v2662 = vrot.slane %v2655, %v2661
  %v2663 = vcombine.high %v2662, %v2662
  %v2665 = vunpack.c.l.s4 1966171168
  %v2666 = vunpack.c.0.s8 %v2665
  %v2667 = vlaneseq
  %v2668 = vshrl.u32 %v2667, 7
  %v2669 = vsub.s32 %v2666, %v2668
  %v2670 = vrot.slane %v2662, %v2669
  %v2672 = vunpack.c.l.s4 1966171168
  %v2673 = vunpack.c.0.s8 %v2672
  %v2674 = vlaneseq
  %v2675 = vshrl.u32 %v2674, 7
  %v2676 = vsub.s32 %v2673, %v2675
  %v2677 = vrot.slane %v2663, %v2676
  %2680 = vst.msk [vmem:[%s17 + $0x6] sm:$0x1] %vm1736, %v2670
  %2681 = vst.msk [vmem:[%s17 + $0x1e] sm:$0x1] %vm1736, %v2677
  %2682 = vst.msk [vmem:[%s17 + $0xd] sm:$0x1] %vm1739, %v2670
  %2683 = vst.msk [vmem:[%s17 + $0x25] sm:$0x1] %vm1739, %v2677
  %v2684 = vrot.slane %v2653, 4
  %v2685 = vsel %vm246, %v2684, 0
  %2687 = vmatprep.subr.mxu0 %v1558
  %2688 = vmatpush1.msra.mxu0 %v1557
  %2689 = vmatprep.subr.mxu0 %v1560
  %2690 = vmatpush1.msra.mxu0 %v1559
  %2691 = vmatprep.subr.mxu0 %v1562
  %2692 = vmatpush1.msra.mxu0 %v1561
  %2693 = vmatprep.subr.mxu0 %v1564
  %2694 = vmatpush1.msra.mxu0 %v1563
  %2695 = vmatprep.subr.mxu0 %v1566
  %2696 = vmatpush1.msra.mxu0 %v1565
  %2697 = vmatprep.subr.mxu0 %v1568
  %2698 = vmatpush1.msra.mxu0 %v1567
  %2699 = vmatprep.subr.mxu0 %v1570
  %2700 = vmatpush1.msra.mxu0 %v1569
  %2701 = vmatprep.subr.mxu0 %v1572
  %2702 = vmatpush1.msra.mxu0 %v1571
  %2703 = vmatprep.subr.mxu0 0.0
  %2704 = vmatpush1.msra.mxu0 0.0
  %2705 = vmatprep.subr.mxu0 0.0
  %2706 = vmatpush1.msra.mxu0 0.0
  %2707 = vmatprep.subr.mxu0 0.0
  %2708 = vmatpush1.msra.mxu0 0.0
  %2709 = vmatprep.subr.mxu0 0.0
  %2710 = vmatpush1.msra.mxu0 0.0
  %2711 = vmatprep.subr.mxu0 0.0
  %2712 = vmatpush1.msra.mxu0 0.0
  %2713 = vmatprep.subr.mxu0 0.0
  %2714 = vmatpush1.msra.mxu0 0.0
  %2715 = vmatprep.subr.mxu0 0.0
  %2716 = vmatpush1.msra.mxu0 0.0
  %2717 = vmatprep.subr.mxu0 0.0
  %2718 = vmatpush1.msra.mxu0 0.0
  %2719 = vmatprep.subr.mxu0 0.0
  %2720 = vmatpush1.msra.mxu0 0.0
  %2721 = vmatprep.subr.mxu0 0.0
  %2722 = vmatpush1.msra.mxu0 0.0
  %2723 = vmatprep.subr.mxu0 0.0
  %2724 = vmatpush1.msra.mxu0 0.0
  %2725 = vmatprep.subr.mxu0 0.0
  %2726 = vmatpush1.msra.mxu0 0.0
  %2727 = vmatprep.subr.mxu0 0.0
  %2728 = vmatpush1.msra.mxu0 0.0
  %2729 = vmatprep.subr.mxu0 0.0
  %2730 = vmatpush1.msra.mxu0 0.0
  %2731 = vmatprep.subr.mxu0 0.0
  %2732 = vmatpush1.msra.mxu0 0.0
  %2733 = vmatprep.subr.mxu0 0.0
  %2734 = vmatpush1.msra.mxu0 0.0
  %2735 = vmatprep.subr.mxu0 0.0
  %2736 = vmatpush1.msra.mxu0 0.0
  %2737 = vmatprep.subr.mxu0 0.0
  %2738 = vmatpush1.msra.mxu0 0.0
  %2739 = vmatprep.subr.mxu0 0.0
  %2740 = vmatpush1.msra.mxu0 0.0
  %2741 = vmatprep.subr.mxu0 0.0
  %2742 = vmatpush1.msra.mxu0 0.0
  %2743 = vmatprep.subr.mxu0 0.0
  %2744 = vmatpush1.msra.mxu0 0.0
  %2745 = vmatprep.subr.mxu0 0.0
  %2746 = vmatpush1.msra.mxu0 0.0
  %2747 = vmatprep.subr.mxu0 0.0
  %2748 = vmatpush1.msra.mxu0 0.0
  %2749 = vmatprep.subr.mxu0 0.0
  %2750 = vmatpush1.msra.mxu0 0.0
  %2751 = vmatprep.mubr.f32.mxu0 0.0
  %2752 = vmatmul.mubr.f32.gmra.mrb[0].mxu0 %v2685
  %v2753 = vpop.f32.mrb[0].mxu0
  %v2754 = vadd.f32 %v1586, %v2753
  %v2755 = vpop.f32.mrb[0].mxu0
  %v2756 = vadd.f32 %v1590, %v2755
  %2757 = vdwg.mxu0
  %v2760 = vrot.slane %v2754, 2
  %v2761 = vrot.slane %v2756, 2
  %v2764 = vadd.f32 %v2372, %v2760
  %v2765 = vadd.f32 %v2369, %v2761
  %v2766 = vxor.u32 %v2764, 2147483648
  %v2767 = vxor.u32 %v2765, 2147483648
  %v2768 = vmul.f32 %v2766, 1.442695
  %v2769 = vpow.pop %v2768
  %v2770 = vmul.f32 %v2767, 1.442695
  %v2771 = vpow.pop %v2770
  %v2772 = vadd.f32 %v2769, 1.0
  %v2773 = vadd.f32 %v2771, 1.0
  %v2774 = vrcp.pop %v2772
  %v2775 = vmul.f32 1.0, %v2774
  %v2776 = vrcp.pop %v2773
  %v2777 = vmul.f32 1.0, %v2776
  %2779 = vrot.lane.b32.xlu0 %v2775, 64
  %v2780 = vpop.permute.xlu0 %2779
  %v2782 = vsel %vm226, %v2775, %v2780
  %2783 = vrot.lane.b32.xlu0 %v2775, 96
  %v2784 = vpop.permute.xlu0 %2783
  %2787 = vrot.lane.b32.xlu0 %v2777, 32
  %v2788 = vpop.permute.xlu0 %2787
  %v2790 = vsel %vm226, %v2784, %v2788
  %2791 = vrot.lane.b32.xlu0 %v2754, 64
  %v2792 = vpop.permute.xlu0 %2791
  %v2794 = vsel %vm226, %v2792, %v2756
  %v2796 = vrot.slane %v2794, 2
  %v2798 = vmul.f32 %v2782, %v2796
  %v2799 = vadd.f32 %v2483, %v2798
  %v2800 = vtanh.pop %v2799
  %v2801 = vsub.f32 1.0, %v2790
  %v2802 = vmul.f32 %v2801, %v2800
  %v2803 = vrot.slane %v2653, 6
  %v2805 = vmul.f32 %v2790, %v2803
  %v2806 = vadd.f32 %v2802, %v2805
  %v2808 = vcombine.high %v2806, %v2806
  %v2810 = vunpack.c.l.s4 1966171168
  %v2811 = vunpack.c.0.s8 %v2810
  %v2812 = vlaneseq
  %v2813 = vshrl.u32 %v2812, 7
  %v2814 = vsub.s32 %v2811, %v2813
  %v2815 = vrot.slane %v2808, %v2814
  %v2816 = vcombine.high %v2815, %v2815
  %v2818 = vunpack.c.l.s4 1966171168
  %v2819 = vunpack.c.0.s8 %v2818
  %v2820 = vlaneseq
  %v2821 = vshrl.u32 %v2820, 7
  %v2822 = vsub.s32 %v2819, %v2821
  %v2823 = vrot.slane %v2815, %v2822
  %v2825 = vunpack.c.l.s4 1966171168
  %v2826 = vunpack.c.0.s8 %v2825
  %v2827 = vlaneseq
  %v2828 = vshrl.u32 %v2827, 7
  %v2829 = vsub.s32 %v2826, %v2828
  %v2830 = vrot.slane %v2816, %v2829
  %v2831 = vcombine.high %v2823, %v2823
  %v2832 = vcombine.high %v2830, %v2830
  %2835 = vst.msk [vmem:[%s17 + $0x7] sm:$0x1] %vm1736, %v2831
  %2836 = vst.msk [vmem:[%s17 + $0x1f] sm:$0x1] %vm1736, %v2832
  %2837 = vst.msk [vmem:[%s17 + $0xc] sm:$0x1] %vm1739, %v2831
  %2838 = vst.msk [vmem:[%s17 + $0x24] sm:$0x1] %vm1739, %v2832
  %v2841 = vrot.slane %v1541, 6
  %v2842 = vrot.slane %v1543, 6
  %v2845 = vsel %vm1580, %v1541, %v2841
  %v2846 = vrot.slane %v2806, 6
  %v2847 = vsel %vm246, %v2846, 0
  %2849 = vmatprep.subr.mxu0 %v1558
  %2850 = vmatpush1.msra.mxu0 %v1557
  %2851 = vmatprep.subr.mxu0 %v1560
  %2852 = vmatpush1.msra.mxu0 %v1559
  %2853 = vmatprep.subr.mxu0 %v1562
  %2854 = vmatpush1.msra.mxu0 %v1561
  %2855 = vmatprep.subr.mxu0 %v1564
  %2856 = vmatpush1.msra.mxu0 %v1563
  %2857 = vmatprep.subr.mxu0 %v1566
  %2858 = vmatpush1.msra.mxu0 %v1565
  %2859 = vmatprep.subr.mxu0 %v1568
  %2860 = vmatpush1.msra.mxu0 %v1567
  %2861 = vmatprep.subr.mxu0 %v1570
  %2862 = vmatpush1.msra.mxu0 %v1569
  %2863 = vmatprep.subr.mxu0 %v1572
  %2864 = vmatpush1.msra.mxu0 %v1571
  %2865 = vmatprep.subr.mxu0 0.0
  %2866 = vmatpush1.msra.mxu0 0.0
  %2867 = vmatprep.subr.mxu0 0.0
  %2868 = vmatpush1.msra.mxu0 0.0
  %2869 = vmatprep.subr.mxu0 0.0
  %2870 = vmatpush1.msra.mxu0 0.0
  %2871 = vmatprep.subr.mxu0 0.0
  %2872 = vmatpush1.msra.mxu0 0.0
  %2873 = vmatprep.subr.mxu0 0.0
  %2874 = vmatpush1.msra.mxu0 0.0
  %2875 = vmatprep.subr.mxu0 0.0
  %2876 = vmatpush1.msra.mxu0 0.0
  %2877 = vmatprep.subr.mxu0 0.0
  %2878 = vmatpush1.msra.mxu0 0.0
  %2879 = vmatprep.subr.mxu0 0.0
  %2880 = vmatpush1.msra.mxu0 0.0
  %2881 = vmatprep.subr.mxu0 0.0
  %2882 = vmatpush1.msra.mxu0 0.0
  %2883 = vmatprep.subr.mxu0 0.0
  %2884 = vmatpush1.msra.mxu0 0.0
  %2885 = vmatprep.subr.mxu0 0.0
  %2886 = vmatpush1.msra.mxu0 0.0
  %2887 = vmatprep.subr.mxu0 0.0
  %2888 = vmatpush1.msra.mxu0 0.0
  %2889 = vmatprep.subr.mxu0 0.0
  %2890 = vmatpush1.msra.mxu0 0.0
  %2891 = vmatprep.subr.mxu0 0.0
  %2892 = vmatpush1.msra.mxu0 0.0
  %2893 = vmatprep.subr.mxu0 0.0
  %2894 = vmatpush1.msra.mxu0 0.0
  %2895 = vmatprep.subr.mxu0 0.0
  %2896 = vmatpush1.msra.mxu0 0.0
  %2897 = vmatprep.subr.mxu0 0.0
  %2898 = vmatpush1.msra.mxu0 0.0
  %2899 = vmatprep.subr.mxu0 0.0
  %2900 = vmatpush1.msra.mxu0 0.0
  %2901 = vmatprep.subr.mxu0 0.0
  %2902 = vmatpush1.msra.mxu0 0.0
  %2903 = vmatprep.subr.mxu0 0.0
  %2904 = vmatpush1.msra.mxu0 0.0
  %2905 = vmatprep.subr.mxu0 0.0
  %2906 = vmatpush1.msra.mxu0 0.0
  %2907 = vmatprep.subr.mxu0 0.0
  %2908 = vmatpush1.msra.mxu0 0.0
  %2909 = vmatprep.subr.mxu0 0.0
  %2910 = vmatpush1.msra.mxu0 0.0
  %2911 = vmatprep.subr.mxu0 0.0
  %2912 = vmatpush1.msra.mxu0 0.0
  %2913 = vmatprep.mubr.f32.mxu0 0.0
  %2914 = vmatmul.mubr.f32.gmra.mrb[0].mxu0 %v2847
  %v2915 = vpop.f32.mrb[0].mxu0
  %v2916 = vadd.f32 %v1586, %v2915
  %v2917 = vpop.f32.mrb[0].mxu0
  %v2918 = vadd.f32 %v1590, %v2917
  %2919 = vdwg.mxu0
  %v2920 = vadd.f32 %v2845, %v2916
  %v2921 = vadd.f32 %v2842, %v2918
  %v2922 = vxor.u32 %v2920, 2147483648
  %v2923 = vxor.u32 %v2921, 2147483648
  %v2924 = vmul.f32 %v2922, 1.442695
  %v2925 = vpow.pop %v2924
  %v2926 = vmul.f32 %v2923, 1.442695
  %v2927 = vpow.pop %v2926
  %v2928 = vadd.f32 %v2925, 1.0
  %v2929 = vadd.f32 %v2927, 1.0
  %v2930 = vrcp.pop %v2928
  %v2931 = vmul.f32 1.0, %v2930
  %v2932 = vrcp.pop %v2929
  %v2933 = vmul.f32 1.0, %v2932
  %2935 = vrot.lane.b32.xlu0 %v2931, 64
  %v2936 = vpop.permute.xlu0 %2935
  %v2938 = vsel %vm226, %v2931, %v2936
  %2939 = vrot.lane.b32.xlu0 %v2931, 96
  %v2940 = vpop.permute.xlu0 %2939
  %2943 = vrot.lane.b32.xlu0 %v2933, 32
  %v2944 = vpop.permute.xlu0 %2943
  %v2946 = vsel %vm226, %v2940, %v2944
  %2948 = vrot.lane.b32.xlu0 %v2845, 64
  %v2949 = vpop.permute.xlu0 %2948
  %v2951 = vsel %vm226, %v2949, %v2842
  %2953 = vrot.lane.b32.xlu0 %v2916, 64
  %v2954 = vpop.permute.xlu0 %2953
  %v2956 = vsel %vm226, %v2954, %v2918
  %v2957 = vmul.f32 %v2938, %v2956
  %v2958 = vadd.f32 %v2951, %v2957
  %v2959 = vtanh.pop %v2958
  %v2960 = vsub.f32 1.0, %v2946
  %v2961 = vmul.f32 %v2960, %v2959
  %v2963 = vmul.f32 %v2946, %v2846
  %v2964 = vadd.f32 %v2961, %v2963
  %v2967 = vunpack.c.l.s4 1966171168
  %v2968 = vunpack.c.0.s8 %v2967
  %v2969 = vlaneseq
  %v2970 = vshrl.u32 %v2969, 7
  %v2971 = vsub.s32 %v2968, %v2970
  %v2972 = vrot.slane %v2964, %v2971
  %v2973 = vcombine.high %v2972, %v2972
  %v2975 = vunpack.c.l.s4 1966171168
  %v2976 = vunpack.c.0.s8 %v2975
  %v2977 = vlaneseq
  %v2978 = vshrl.u32 %v2977, 7
  %v2979 = vsub.s32 %v2976, %v2978
  %v2980 = vrot.slane %v2972, %v2979
  %v2982 = vunpack.c.l.s4 1966171168
  %v2983 = vunpack.c.0.s8 %v2982
  %v2984 = vlaneseq
  %v2985 = vshrl.u32 %v2984, 7
  %v2986 = vsub.s32 %v2983, %v2985
  %v2987 = vrot.slane %v2973, %v2986
  %2990 = vst.msk [vmem:[%s17 + $0x8] sm:$0x1] %vm1736, %v2980
  %2991 = vst.msk [vmem:[%s17 + $0x20] sm:$0x1] %vm1736, %v2987
  %2992 = vst.msk [vmem:[%s17 + $0xb] sm:$0x1] %vm1739, %v2980
  %2993 = vst.msk [vmem:[%s17 + $0x23] sm:$0x1] %vm1739, %v2987
  %v2994 = vrot.slane %v1541, 2
  %v2995 = vrot.slane %v1543, 2
  %v2998 = vsel %vm1580, %v1541, %v2994
  %v2999 = vsel %vm246, %v2964, 0
  %3001 = vmatprep.subr.mxu0 %v1558
  %3002 = vmatpush1.msra.mxu0 %v1557
  %3003 = vmatprep.subr.mxu0 %v1560
  %3004 = vmatpush1.msra.mxu0 %v1559
  %3005 = vmatprep.subr.mxu0 %v1562
  %3006 = vmatpush1.msra.mxu0 %v1561
  %3007 = vmatprep.subr.mxu0 %v1564
  %3008 = vmatpush1.msra.mxu0 %v1563
  %3009 = vmatprep.subr.mxu0 %v1566
  %3010 = vmatpush1.msra.mxu0 %v1565
  %3011 = vmatprep.subr.mxu0 %v1568
  %3012 = vmatpush1.msra.mxu0 %v1567
  %3013 = vmatprep.subr.mxu0 %v1570
  %3014 = vmatpush1.msra.mxu0 %v1569
  %3015 = vmatprep.subr.mxu0 %v1572
  %3016 = vmatpush1.msra.mxu0 %v1571
  %3017 = vmatprep.subr.mxu0 0.0
  %3018 = vmatpush1.msra.mxu0 0.0
  %3019 = vmatprep.subr.mxu0 0.0
  %3020 = vmatpush1.msra.mxu0 0.0
  %3021 = vmatprep.subr.mxu0 0.0
  %3022 = vmatpush1.msra.mxu0 0.0
  %3023 = vmatprep.subr.mxu0 0.0
  %3024 = vmatpush1.msra.mxu0 0.0
  %3025 = vmatprep.subr.mxu0 0.0
  %3026 = vmatpush1.msra.mxu0 0.0
  %3027 = vmatprep.subr.mxu0 0.0
  %3028 = vmatpush1.msra.mxu0 0.0
  %3029 = vmatprep.subr.mxu0 0.0
  %3030 = vmatpush1.msra.mxu0 0.0
  %3031 = vmatprep.subr.mxu0 0.0
  %3032 = vmatpush1.msra.mxu0 0.0
  %3033 = vmatprep.subr.mxu0 0.0
  %3034 = vmatpush1.msra.mxu0 0.0
  %3035 = vmatprep.subr.mxu0 0.0
  %3036 = vmatpush1.msra.mxu0 0.0
  %3037 = vmatprep.subr.mxu0 0.0
  %3038 = vmatpush1.msra.mxu0 0.0
  %3039 = vmatprep.subr.mxu0 0.0
  %3040 = vmatpush1.msra.mxu0 0.0
  %3041 = vmatprep.subr.mxu0 0.0
  %3042 = vmatpush1.msra.mxu0 0.0
  %3043 = vmatprep.subr.mxu0 0.0
  %3044 = vmatpush1.msra.mxu0 0.0
  %3045 = vmatprep.subr.mxu0 0.0
  %3046 = vmatpush1.msra.mxu0 0.0
  %3047 = vmatprep.subr.mxu0 0.0
  %3048 = vmatpush1.msra.mxu0 0.0
  %3049 = vmatprep.subr.mxu0 0.0
  %3050 = vmatpush1.msra.mxu0 0.0
  %3051 = vmatprep.subr.mxu0 0.0
  %3052 = vmatpush1.msra.mxu0 0.0
  %3053 = vmatprep.subr.mxu0 0.0
  %3054 = vmatpush1.msra.mxu0 0.0
  %3055 = vmatprep.subr.mxu0 0.0
  %3056 = vmatpush1.msra.mxu0 0.0
  %3057 = vmatprep.subr.mxu0 0.0
  %3058 = vmatpush1.msra.mxu0 0.0
  %3059 = vmatprep.subr.mxu0 0.0
  %3060 = vmatpush1.msra.mxu0 0.0
  %3061 = vmatprep.subr.mxu0 0.0
  %3062 = vmatpush1.msra.mxu0 0.0
  %3063 = vmatprep.subr.mxu0 0.0
  %3064 = vmatpush1.msra.mxu0 0.0
  %3065 = vmatprep.mubr.f32.mxu0 0.0
  %3066 = vmatmul.mubr.f32.gmra.mrb[0].mxu0 %v2999
  %v3067 = vpop.f32.mrb[0].mxu0
  %v3068 = vadd.f32 %v1586, %v3067
  %v3069 = vpop.f32.mrb[0].mxu0
  %v3070 = vadd.f32 %v1590, %v3069
  %3071 = vdwg.mxu0
  %v3074 = vrot.slane %v3068, 6
  %v3075 = vrot.slane %v3070, 6
  %v3078 = vadd.f32 %v2998, %v3074
  %v3079 = vadd.f32 %v2995, %v3075
  %v3080 = vxor.u32 %v3078, 2147483648
  %v3081 = vxor.u32 %v3079, 2147483648
  %v3082 = vmul.f32 %v3080, 1.442695
  %v3083 = vpow.pop %v3082
  %v3084 = vmul.f32 %v3081, 1.442695
  %v3085 = vpow.pop %v3084
  %v3086 = vadd.f32 %v3083, 1.0
  %v3087 = vadd.f32 %v3085, 1.0
  %v3088 = vrcp.pop %v3086
  %v3089 = vmul.f32 1.0, %v3088
  %v3090 = vrcp.pop %v3087
  %v3091 = vmul.f32 1.0, %v3090
  %3093 = vrot.lane.b32.xlu0 %v3089, 64
  %v3094 = vpop.permute.xlu0 %3093
  %v3096 = vsel %vm226, %v3089, %v3094
  %3097 = vrot.lane.b32.xlu0 %v3089, 96
  %v3098 = vpop.permute.xlu0 %3097
  %3101 = vrot.lane.b32.xlu0 %v3091, 32
  %v3102 = vpop.permute.xlu0 %3101
  %v3104 = vsel %vm226, %v3098, %v3102
  %3106 = vrot.lane.b32.xlu0 %v2998, 64
  %v3107 = vpop.permute.xlu0 %3106
  %v3109 = vsel %vm226, %v3107, %v2995
  %3110 = vrot.lane.b32.xlu0 %v3068, 64
  %v3111 = vpop.permute.xlu0 %3110
  %v3113 = vsel %vm226, %v3111, %v3070
  %v3115 = vrot.slane %v3113, 6
  %v3117 = vmul.f32 %v3096, %v3115
  %v3118 = vadd.f32 %v3109, %v3117
  %v3119 = vtanh.pop %v3118
  %v3120 = vsub.f32 1.0, %v3104
  %v3121 = vmul.f32 %v3120, %v3119
  %v3122 = vrot.slane %v2964, 6
  %v3124 = vmul.f32 %v3104, %v3122
  %v3125 = vadd.f32 %v3121, %v3124
  %v3128 = vunpack.c.l.s4 1966171168
  %v3129 = vunpack.c.0.s8 %v3128
  %v3130 = vlaneseq
  %v3131 = vshrl.u32 %v3130, 7
  %v3132 = vsub.s32 %v3129, %v3131
  %v3133 = vrot.slane %v3125, %v3132
  %v3134 = vcombine.high %v3133, %v3133
  %v3136 = vunpack.c.l.s4 1966171168
  %v3137 = vunpack.c.0.s8 %v3136
  %v3138 = vlaneseq
  %v3139 = vshrl.u32 %v3138, 7
  %v3140 = vsub.s32 %v3137, %v3139
  %v3141 = vrot.slane %v3133, %v3140
  %v3143 = vunpack.c.l.s4 1966171168
  %v3144 = vunpack.c.0.s8 %v3143
  %v3145 = vlaneseq
  %v3146 = vshrl.u32 %v3145, 7
  %v3147 = vsub.s32 %v3144, %v3146
  %v3148 = vrot.slane %v3134, %v3147
  %v3149 = vcombine.high %v3141, %v3141
  %v3150 = vcombine.high %v3148, %v3148
  %3153 = vst.msk [vmem:[%s17 + $0x9] sm:$0x1] %vm1736, %v3149
  %3154 = vst.msk [vmem:[%s17 + $0x21] sm:$0x1] %vm1736, %v3150
  %3155 = vst.msk [vmem:[%s17 + $0xa] sm:$0x1] %vm1739, %v3149
  %3156 = vst.msk [vmem:[%s17 + $0x22] sm:$0x1] %vm1739, %v3150
  %v3157 = vrot.slane %v3125, 2
  %v3158 = vsel %vm246, %v3157, 0
  %3160 = vmatprep.subr.mxu0 %v1558
  %3161 = vmatpush1.msra.mxu0 %v1557
  %3162 = vmatprep.subr.mxu0 %v1560
  %3163 = vmatpush1.msra.mxu0 %v1559
  %3164 = vmatprep.subr.mxu0 %v1562
  %3165 = vmatpush1.msra.mxu0 %v1561
  %3166 = vmatprep.subr.mxu0 %v1564
  %3167 = vmatpush1.msra.mxu0 %v1563
  %3168 = vmatprep.subr.mxu0 %v1566
  %3169 = vmatpush1.msra.mxu0 %v1565
  %3170 = vmatprep.subr.mxu0 %v1568
  %3171 = vmatpush1.msra.mxu0 %v1567
  %3172 = vmatprep.subr.mxu0 %v1570
  %3173 = vmatpush1.msra.mxu0 %v1569
  %3174 = vmatprep.subr.mxu0 %v1572
  %3175 = vmatpush1.msra.mxu0 %v1571
  %3176 = vmatprep.subr.mxu0 0.0
  %3177 = vmatpush1.msra.mxu0 0.0
  %3178 = vmatprep.subr.mxu0 0.0
  %3179 = vmatpush1.msra.mxu0 0.0
  %3180 = vmatprep.subr.mxu0 0.0
  %3181 = vmatpush1.msra.mxu0 0.0
  %3182 = vmatprep.subr.mxu0 0.0
  %3183 = vmatpush1.msra.mxu0 0.0
  %3184 = vmatprep.subr.mxu0 0.0
  %3185 = vmatpush1.msra.mxu0 0.0
  %3186 = vmatprep.subr.mxu0 0.0
  %3187 = vmatpush1.msra.mxu0 0.0
  %3188 = vmatprep.subr.mxu0 0.0
  %3189 = vmatpush1.msra.mxu0 0.0
  %3190 = vmatprep.subr.mxu0 0.0
  %3191 = vmatpush1.msra.mxu0 0.0
  %3192 = vmatprep.subr.mxu0 0.0
  %3193 = vmatpush1.msra.mxu0 0.0
  %3194 = vmatprep.subr.mxu0 0.0
  %3195 = vmatpush1.msra.mxu0 0.0
  %3196 = vmatprep.subr.mxu0 0.0
  %3197 = vmatpush1.msra.mxu0 0.0
  %3198 = vmatprep.subr.mxu0 0.0
  %3199 = vmatpush1.msra.mxu0 0.0
  %3200 = vmatprep.subr.mxu0 0.0
  %3201 = vmatpush1.msra.mxu0 0.0
  %3202 = vmatprep.subr.mxu0 0.0
  %3203 = vmatpush1.msra.mxu0 0.0
  %3204 = vmatprep.subr.mxu0 0.0
  %3205 = vmatpush1.msra.mxu0 0.0
  %3206 = vmatprep.subr.mxu0 0.0
  %3207 = vmatpush1.msra.mxu0 0.0
  %3208 = vmatprep.subr.mxu0 0.0
  %3209 = vmatpush1.msra.mxu0 0.0
  %3210 = vmatprep.subr.mxu0 0.0
  %3211 = vmatpush1.msra.mxu0 0.0
  %3212 = vmatprep.subr.mxu0 0.0
  %3213 = vmatpush1.msra.mxu0 0.0
  %3214 = vmatprep.subr.mxu0 0.0
  %3215 = vmatpush1.msra.mxu0 0.0
  %3216 = vmatprep.subr.mxu0 0.0
  %3217 = vmatpush1.msra.mxu0 0.0
  %3218 = vmatprep.subr.mxu0 0.0
  %3219 = vmatpush1.msra.mxu0 0.0
  %3220 = vmatprep.subr.mxu0 0.0
  %3221 = vmatpush1.msra.mxu0 0.0
  %3222 = vmatprep.subr.mxu0 0.0
  %3223 = vmatpush1.msra.mxu0 0.0
  %3224 = vmatprep.mubr.f32.mxu0 0.0
  %3225 = vmatmul.mubr.f32.gmra.mrb[0].mxu0 %v3158
  %v3226 = vpop.f32.mrb[0].mxu0
  %v3227 = vadd.f32 %v1586, %v3226
  %v3228 = vpop.f32.mrb[0].mxu0
  %v3229 = vadd.f32 %v1590, %v3228
  %3230 = vdwg.mxu0
  %v3233 = vrot.slane %v3227, 4
  %v3234 = vrot.slane %v3229, 4
  %v3237 = vadd.f32 %v2845, %v3233
  %v3238 = vadd.f32 %v2842, %v3234
  %v3239 = vxor.u32 %v3237, 2147483648
  %v3240 = vxor.u32 %v3238, 2147483648
  %v3241 = vmul.f32 %v3239, 1.442695
  %v3242 = vpow.pop %v3241
  %v3243 = vmul.f32 %v3240, 1.442695
  %v3244 = vpow.pop %v3243
  %v3245 = vadd.f32 %v3242, 1.0
  %v3246 = vadd.f32 %v3244, 1.0
  %v3247 = vrcp.pop %v3245
  %v3248 = vmul.f32 1.0, %v3247
  %v3249 = vrcp.pop %v3246
  %v3250 = vmul.f32 1.0, %v3249
  %3252 = vrot.lane.b32.xlu0 %v3248, 64
  %v3253 = vpop.permute.xlu0 %3252
  %v3255 = vsel %vm226, %v3248, %v3253
  %3256 = vrot.lane.b32.xlu0 %v3248, 96
  %v3257 = vpop.permute.xlu0 %3256
  %3260 = vrot.lane.b32.xlu0 %v3250, 32
  %v3261 = vpop.permute.xlu0 %3260
  %v3263 = vsel %vm226, %v3257, %v3261
  %3264 = vrot.lane.b32.xlu0 %v3227, 64
  %v3265 = vpop.permute.xlu0 %3264
  %v3267 = vsel %vm226, %v3265, %v3229
  %v3269 = vrot.slane %v3267, 4
  %v3271 = vmul.f32 %v3255, %v3269
  %v3272 = vadd.f32 %v2951, %v3271
  %v3273 = vtanh.pop %v3272
  %v3274 = vsub.f32 1.0, %v3263
  %v3275 = vmul.f32 %v3274, %v3273
  %v3276 = vrot.slane %v3125, 6
  %v3278 = vmul.f32 %v3263, %v3276
  %v3279 = vadd.f32 %v3275, %v3278
  %v3281 = vcombine.high %v3279, %v3279
  %v3283 = vunpack.c.l.s4 1966171168
  %v3284 = vunpack.c.0.s8 %v3283
  %v3285 = vlaneseq
  %v3286 = vshrl.u32 %v3285, 7
  %v3287 = vsub.s32 %v3284, %v3286
  %v3288 = vrot.slane %v3281, %v3287
  %v3289 = vcombine.high %v3288, %v3288
  %v3291 = vunpack.c.l.s4 1966171168
  %v3292 = vunpack.c.0.s8 %v3291
  %v3293 = vlaneseq
  %v3294 = vshrl.u32 %v3293, 7
  %v3295 = vsub.s32 %v3292, %v3294
  %v3296 = vrot.slane %v3288, %v3295
  %v3298 = vunpack.c.l.s4 1966171168
  %v3299 = vunpack.c.0.s8 %v3298
  %v3300 = vlaneseq
  %v3301 = vshrl.u32 %v3300, 7
  %v3302 = vsub.s32 %v3299, %v3301
  %v3303 = vrot.slane %v3289, %v3302
  %3306 = vst.msk [vmem:[%s17 + $0xa] sm:$0x1] %vm1736, %v3296
  %3307 = vst.msk [vmem:[%s17 + $0x22] sm:$0x1] %vm1736, %v3303
  %3308 = vst.msk [vmem:[%s17 + $0x9] sm:$0x1] %vm1739, %v3296
  %3309 = vst.msk [vmem:[%s17 + $0x21] sm:$0x1] %vm1739, %v3303
  %v3310 = vrot.slane %v3279, 4
  %v3311 = vsel %vm246, %v3310, 0
  %3313 = vmatprep.subr.mxu0 %v1558
  %3314 = vmatpush1.msra.mxu0 %v1557
  %3315 = vmatprep.subr.mxu0 %v1560
  %3316 = vmatpush1.msra.mxu0 %v1559
  %3317 = vmatprep.subr.mxu0 %v1562
  %3318 = vmatpush1.msra.mxu0 %v1561
  %3319 = vmatprep.subr.mxu0 %v1564
  %3320 = vmatpush1.msra.mxu0 %v1563
  %3321 = vmatprep.subr.mxu0 %v1566
  %3322 = vmatpush1.msra.mxu0 %v1565
  %3323 = vmatprep.subr.mxu0 %v1568
  %3324 = vmatpush1.msra.mxu0 %v1567
  %3325 = vmatprep.subr.mxu0 %v1570
  %3326 = vmatpush1.msra.mxu0 %v1569
  %3327 = vmatprep.subr.mxu0 %v1572
  %3328 = vmatpush1.msra.mxu0 %v1571
  %3329 = vmatprep.subr.mxu0 0.0
  %3330 = vmatpush1.msra.mxu0 0.0
  %3331 = vmatprep.subr.mxu0 0.0
  %3332 = vmatpush1.msra.mxu0 0.0
  %3333 = vmatprep.subr.mxu0 0.0
  %3334 = vmatpush1.msra.mxu0 0.0
  %3335 = vmatprep.subr.mxu0 0.0
  %3336 = vmatpush1.msra.mxu0 0.0
  %3337 = vmatprep.subr.mxu0 0.0
  %3338 = vmatpush1.msra.mxu0 0.0
  %3339 = vmatprep.subr.mxu0 0.0
  %3340 = vmatpush1.msra.mxu0 0.0
  %3341 = vmatprep.subr.mxu0 0.0
  %3342 = vmatpush1.msra.mxu0 0.0
  %3343 = vmatprep.subr.mxu0 0.0
  %3344 = vmatpush1.msra.mxu0 0.0
  %3345 = vmatprep.subr.mxu0 0.0
  %3346 = vmatpush1.msra.mxu0 0.0
  %3347 = vmatprep.subr.mxu0 0.0
  %3348 = vmatpush1.msra.mxu0 0.0
  %3349 = vmatprep.subr.mxu0 0.0
  %3350 = vmatpush1.msra.mxu0 0.0
  %3351 = vmatprep.subr.mxu0 0.0
  %3352 = vmatpush1.msra.mxu0 0.0
  %3353 = vmatprep.subr.mxu0 0.0
  %3354 = vmatpush1.msra.mxu0 0.0
  %3355 = vmatprep.subr.mxu0 0.0
  %3356 = vmatpush1.msra.mxu0 0.0
  %3357 = vmatprep.subr.mxu0 0.0
  %3358 = vmatpush1.msra.mxu0 0.0
  %3359 = vmatprep.subr.mxu0 0.0
  %3360 = vmatpush1.msra.mxu0 0.0
  %3361 = vmatprep.subr.mxu0 0.0
  %3362 = vmatpush1.msra.mxu0 0.0
  %3363 = vmatprep.subr.mxu0 0.0
  %3364 = vmatpush1.msra.mxu0 0.0
  %3365 = vmatprep.subr.mxu0 0.0
  %3366 = vmatpush1.msra.mxu0 0.0
  %3367 = vmatprep.subr.mxu0 0.0
  %3368 = vmatpush1.msra.mxu0 0.0
  %3369 = vmatprep.subr.mxu0 0.0
  %3370 = vmatpush1.msra.mxu0 0.0
  %3371 = vmatprep.subr.mxu0 0.0
  %3372 = vmatpush1.msra.mxu0 0.0
  %3373 = vmatprep.subr.mxu0 0.0
  %3374 = vmatpush1.msra.mxu0 0.0
  %3375 = vmatprep.subr.mxu0 0.0
  %3376 = vmatpush1.msra.mxu0 0.0
  %3377 = vmatprep.mubr.f32.mxu0 0.0
  %3378 = vmatmul.mubr.f32.gmra.mrb[0].mxu0 %v3311
  %v3379 = vpop.f32.mrb[0].mxu0
  %v3380 = vadd.f32 %v1586, %v3379
  %v3381 = vpop.f32.mrb[0].mxu0
  %v3382 = vadd.f32 %v1590, %v3381
  %3383 = vdwg.mxu0
  %v3386 = vrot.slane %v3380, 2
  %v3387 = vrot.slane %v3382, 2
  %v3390 = vadd.f32 %v2998, %v3386
  %v3391 = vadd.f32 %v2995, %v3387
  %v3392 = vxor.u32 %v3390, 2147483648
  %v3393 = vxor.u32 %v3391, 2147483648
  %v3394 = vmul.f32 %v3392, 1.442695
  %v3395 = vpow.pop %v3394
  %v3396 = vmul.f32 %v3393, 1.442695
  %v3397 = vpow.pop %v3396
  %v3398 = vadd.f32 %v3395, 1.0
  %v3399 = vadd.f32 %v3397, 1.0
  %v3400 = vrcp.pop %v3398
  %v3401 = vmul.f32 1.0, %v3400
  %v3402 = vrcp.pop %v3399
  %v3403 = vmul.f32 1.0, %v3402
  %3405 = vrot.lane.b32.xlu0 %v3401, 64
  %v3406 = vpop.permute.xlu0 %3405
  %v3408 = vsel %vm226, %v3401, %v3406
  %3409 = vrot.lane.b32.xlu0 %v3401, 96
  %v3410 = vpop.permute.xlu0 %3409
  %3413 = vrot.lane.b32.xlu0 %v3403, 32
  %v3414 = vpop.permute.xlu0 %3413
  %v3416 = vsel %vm226, %v3410, %v3414
  %3417 = vrot.lane.b32.xlu0 %v3380, 64
  %v3418 = vpop.permute.xlu0 %3417
  %v3420 = vsel %vm226, %v3418, %v3382
  %v3422 = vrot.slane %v3420, 2
  %v3424 = vmul.f32 %v3408, %v3422
  %v3425 = vadd.f32 %v3109, %v3424
  %v3426 = vtanh.pop %v3425
  %v3427 = vsub.f32 1.0, %v3416
  %v3428 = vmul.f32 %v3427, %v3426
  %v3429 = vrot.slane %v3279, 6
  %v3431 = vmul.f32 %v3416, %v3429
  %v3432 = vadd.f32 %v3428, %v3431
  %v3434 = vcombine.high %v3432, %v3432
  %v3436 = vunpack.c.l.s4 1966171168
  %v3437 = vunpack.c.0.s8 %v3436
  %v3438 = vlaneseq
  %v3439 = vshrl.u32 %v3438, 7
  %v3440 = vsub.s32 %v3437, %v3439
  %v3441 = vrot.slane %v3434, %v3440
  %v3442 = vcombine.high %v3441, %v3441
  %v3444 = vunpack.c.l.s4 1966171168
  %v3445 = vunpack.c.0.s8 %v3444
  %v3446 = vlaneseq
  %v3447 = vshrl.u32 %v3446, 7
  %v3448 = vsub.s32 %v3445, %v3447
  %v3449 = vrot.slane %v3441, %v3448
  %v3451 = vunpack.c.l.s4 1966171168
  %v3452 = vunpack.c.0.s8 %v3451
  %v3453 = vlaneseq
  %v3454 = vshrl.u32 %v3453, 7
  %v3455 = vsub.s32 %v3452, %v3454
  %v3456 = vrot.slane %v3442, %v3455
  %v3457 = vcombine.high %v3449, %v3449
  %v3458 = vcombine.high %v3456, %v3456
  %3461 = vst.msk [vmem:[%s17 + $0xb] sm:$0x1] %vm1736, %v3457
  %3462 = vst.msk [vmem:[%s17 + $0x23] sm:$0x1] %vm1736, %v3458
  %3463 = vst.msk [vmem:[%s17 + $0x8] sm:$0x1] %vm1739, %v3457
  %3464 = vst.msk [vmem:[%s17 + $0x20] sm:$0x1] %vm1739, %v3458
  %v3467 = vrot.slane %v1535, 6
  %v3468 = vrot.slane %v1537, 6
  %v3471 = vsel %vm1580, %v1547, %v3467
  %v3472 = vrot.slane %v3432, 6
  %v3473 = vsel %vm246, %v3472, 0
  %3475 = vmatprep.subr.mxu0 %v1558
  %3476 = vmatpush1.msra.mxu0 %v1557
  %3477 = vmatprep.subr.mxu0 %v1560
  %3478 = vmatpush1.msra.mxu0 %v1559
  %3479 = vmatprep.subr.mxu0 %v1562
  %3480 = vmatpush1.msra.mxu0 %v1561
  %3481 = vmatprep.subr.mxu0 %v1564
  %3482 = vmatpush1.msra.mxu0 %v1563
  %3483 = vmatprep.subr.mxu0 %v1566
  %3484 = vmatpush1.msra.mxu0 %v1565
  %3485 = vmatprep.subr.mxu0 %v1568
  %3486 = vmatpush1.msra.mxu0 %v1567
  %3487 = vmatprep.subr.mxu0 %v1570
  %3488 = vmatpush1.msra.mxu0 %v1569
  %3489 = vmatprep.subr.mxu0 %v1572
  %3490 = vmatpush1.msra.mxu0 %v1571
  %3491 = vmatprep.subr.mxu0 0.0
  %3492 = vmatpush1.msra.mxu0 0.0
  %3493 = vmatprep.subr.mxu0 0.0
  %3494 = vmatpush1.msra.mxu0 0.0
  %3495 = vmatprep.subr.mxu0 0.0
  %3496 = vmatpush1.msra.mxu0 0.0
  %3497 = vmatprep.subr.mxu0 0.0
  %3498 = vmatpush1.msra.mxu0 0.0
  %3499 = vmatprep.subr.mxu0 0.0
  %3500 = vmatpush1.msra.mxu0 0.0
  %3501 = vmatprep.subr.mxu0 0.0
  %3502 = vmatpush1.msra.mxu0 0.0
  %3503 = vmatprep.subr.mxu0 0.0
  %3504 = vmatpush1.msra.mxu0 0.0
  %3505 = vmatprep.subr.mxu0 0.0
  %3506 = vmatpush1.msra.mxu0 0.0
  %3507 = vmatprep.subr.mxu0 0.0
  %3508 = vmatpush1.msra.mxu0 0.0
  %3509 = vmatprep.subr.mxu0 0.0
  %3510 = vmatpush1.msra.mxu0 0.0
  %3511 = vmatprep.subr.mxu0 0.0
  %3512 = vmatpush1.msra.mxu0 0.0
  %3513 = vmatprep.subr.mxu0 0.0
  %3514 = vmatpush1.msra.mxu0 0.0
  %3515 = vmatprep.subr.mxu0 0.0
  %3516 = vmatpush1.msra.mxu0 0.0
  %3517 = vmatprep.subr.mxu0 0.0
  %3518 = vmatpush1.msra.mxu0 0.0
  %3519 = vmatprep.subr.mxu0 0.0
  %3520 = vmatpush1.msra.mxu0 0.0
  %3521 = vmatprep.subr.mxu0 0.0
  %3522 = vmatpush1.msra.mxu0 0.0
  %3523 = vmatprep.subr.mxu0 0.0
  %3524 = vmatpush1.msra.mxu0 0.0
  %3525 = vmatprep.subr.mxu0 0.0
  %3526 = vmatpush1.msra.mxu0 0.0
  %3527 = vmatprep.subr.mxu0 0.0
  %3528 = vmatpush1.msra.mxu0 0.0
  %3529 = vmatprep.subr.mxu0 0.0
  %3530 = vmatpush1.msra.mxu0 0.0
  %3531 = vmatprep.subr.mxu0 0.0
  %3532 = vmatpush1.msra.mxu0 0.0
  %3533 = vmatprep.subr.mxu0 0.0
  %3534 = vmatpush1.msra.mxu0 0.0
  %3535 = vmatprep.subr.mxu0 0.0
  %3536 = vmatpush1.msra.mxu0 0.0
  %3537 = vmatprep.subr.mxu0 0.0
  %3538 = vmatpush1.msra.mxu0 0.0
  %3539 = vmatprep.mubr.f32.mxu0 0.0
  %3540 = vmatmul.mubr.f32.gmra.mrb[0].mxu0 %v3473
  %v3541 = vpop.f32.mrb[0].mxu0
  %v3542 = vadd.f32 %v1586, %v3541
  %v3543 = vpop.f32.mrb[0].mxu0
  %v3544 = vadd.f32 %v1590, %v3543
  %3545 = vdwg.mxu0
  %v3546 = vadd.f32 %v3471, %v3542
  %v3547 = vadd.f32 %v3468, %v3544
  %v3548 = vxor.u32 %v3546, 2147483648
  %v3549 = vxor.u32 %v3547, 2147483648
  %v3550 = vmul.f32 %v3548, 1.442695
  %v3551 = vpow.pop %v3550
  %v3552 = vmul.f32 %v3549, 1.442695
  %v3553 = vpow.pop %v3552
  %v3554 = vadd.f32 %v3551, 1.0
  %v3555 = vadd.f32 %v3553, 1.0
  %v3556 = vrcp.pop %v3554
  %v3557 = vmul.f32 1.0, %v3556
  %v3558 = vrcp.pop %v3555
  %v3559 = vmul.f32 1.0, %v3558
  %3561 = vrot.lane.b32.xlu0 %v3557, 64
  %v3562 = vpop.permute.xlu0 %3561
  %v3564 = vsel %vm226, %v3557, %v3562
  %3565 = vrot.lane.b32.xlu0 %v3557, 96
  %v3566 = vpop.permute.xlu0 %3565
  %3569 = vrot.lane.b32.xlu0 %v3559, 32
  %v3570 = vpop.permute.xlu0 %3569
  %v3572 = vsel %vm226, %v3566, %v3570
  %3574 = vrot.lane.b32.xlu0 %v3471, 64
  %v3575 = vpop.permute.xlu0 %3574
  %v3577 = vsel %vm226, %v3575, %v3468
  %3579 = vrot.lane.b32.xlu0 %v3542, 64
  %v3580 = vpop.permute.xlu0 %3579
  %v3582 = vsel %vm226, %v3580, %v3544
  %v3583 = vmul.f32 %v3564, %v3582
  %v3584 = vadd.f32 %v3577, %v3583
  %v3585 = vtanh.pop %v3584
  %v3586 = vsub.f32 1.0, %v3572
  %v3587 = vmul.f32 %v3586, %v3585
  %v3589 = vmul.f32 %v3572, %v3472
  %v3590 = vadd.f32 %v3587, %v3589
  %v3593 = vunpack.c.l.s4 1966171168
  %v3594 = vunpack.c.0.s8 %v3593
  %v3595 = vlaneseq
  %v3596 = vshrl.u32 %v3595, 7
  %v3597 = vsub.s32 %v3594, %v3596
  %v3598 = vrot.slane %v3590, %v3597
  %v3599 = vcombine.high %v3598, %v3598
  %v3601 = vunpack.c.l.s4 1966171168
  %v3602 = vunpack.c.0.s8 %v3601
  %v3603 = vlaneseq
  %v3604 = vshrl.u32 %v3603, 7
  %v3605 = vsub.s32 %v3602, %v3604
  %v3606 = vrot.slane %v3598, %v3605
  %v3608 = vunpack.c.l.s4 1966171168
  %v3609 = vunpack.c.0.s8 %v3608
  %v3610 = vlaneseq
  %v3611 = vshrl.u32 %v3610, 7
  %v3612 = vsub.s32 %v3609, %v3611
  %v3613 = vrot.slane %v3599, %v3612
  %3616 = vst.msk [vmem:[%s17 + $0xc] sm:$0x1] %vm1736, %v3606
  %3617 = vst.msk [vmem:[%s17 + $0x24] sm:$0x1] %vm1736, %v3613
  %3618 = vst.msk [vmem:[%s17 + $0x7] sm:$0x1] %vm1739, %v3606
  %3619 = vst.msk [vmem:[%s17 + $0x1f] sm:$0x1] %vm1739, %v3613
  %v3620 = vrot.slane %v1535, 2
  %v3621 = vrot.slane %v1537, 2
  %v3624 = vsel %vm1580, %v1547, %v3620
  %v3625 = vsel %vm246, %v3590, 0
  %3627 = vmatprep.subr.mxu0 %v1558
  %3628 = vmatpush1.msra.mxu0 %v1557
  %3629 = vmatprep.subr.mxu0 %v1560
  %3630 = vmatpush1.msra.mxu0 %v1559
  %3631 = vmatprep.subr.mxu0 %v1562
  %3632 = vmatpush1.msra.mxu0 %v1561
  %3633 = vmatprep.subr.mxu0 %v1564
  %3634 = vmatpush1.msra.mxu0 %v1563
  %3635 = vmatprep.subr.mxu0 %v1566
  %3636 = vmatpush1.msra.mxu0 %v1565
  %3637 = vmatprep.subr.mxu0 %v1568
  %3638 = vmatpush1.msra.mxu0 %v1567
  %3639 = vmatprep.subr.mxu0 %v1570
  %3640 = vmatpush1.msra.mxu0 %v1569
  %3641 = vmatprep.subr.mxu0 %v1572
  %3642 = vmatpush1.msra.mxu0 %v1571
  %3643 = vmatprep.subr.mxu0 0.0
  %3644 = vmatpush1.msra.mxu0 0.0
  %3645 = vmatprep.subr.mxu0 0.0
  %3646 = vmatpush1.msra.mxu0 0.0
  %3647 = vmatprep.subr.mxu0 0.0
  %3648 = vmatpush1.msra.mxu0 0.0
  %3649 = vmatprep.subr.mxu0 0.0
  %3650 = vmatpush1.msra.mxu0 0.0
  %3651 = vmatprep.subr.mxu0 0.0
  %3652 = vmatpush1.msra.mxu0 0.0
  %3653 = vmatprep.subr.mxu0 0.0
  %3654 = vmatpush1.msra.mxu0 0.0
  %3655 = vmatprep.subr.mxu0 0.0
  %3656 = vmatpush1.msra.mxu0 0.0
  %3657 = vmatprep.subr.mxu0 0.0
  %3658 = vmatpush1.msra.mxu0 0.0
  %3659 = vmatprep.subr.mxu0 0.0
  %3660 = vmatpush1.msra.mxu0 0.0
  %3661 = vmatprep.subr.mxu0 0.0
  %3662 = vmatpush1.msra.mxu0 0.0
  %3663 = vmatprep.subr.mxu0 0.0
  %3664 = vmatpush1.msra.mxu0 0.0
  %3665 = vmatprep.subr.mxu0 0.0
  %3666 = vmatpush1.msra.mxu0 0.0
  %3667 = vmatprep.subr.mxu0 0.0
  %3668 = vmatpush1.msra.mxu0 0.0
  %3669 = vmatprep.subr.mxu0 0.0
  %3670 = vmatpush1.msra.mxu0 0.0
  %3671 = vmatprep.subr.mxu0 0.0
  %3672 = vmatpush1.msra.mxu0 0.0
  %3673 = vmatprep.subr.mxu0 0.0
  %3674 = vmatpush1.msra.mxu0 0.0
  %3675 = vmatprep.subr.mxu0 0.0
  %3676 = vmatpush1.msra.mxu0 0.0
  %3677 = vmatprep.subr.mxu0 0.0
  %3678 = vmatpush1.msra.mxu0 0.0
  %3679 = vmatprep.subr.mxu0 0.0
  %3680 = vmatpush1.msra.mxu0 0.0
  %3681 = vmatprep.subr.mxu0 0.0
  %3682 = vmatpush1.msra.mxu0 0.0
  %3683 = vmatprep.subr.mxu0 0.0
  %3684 = vmatpush1.msra.mxu0 0.0
  %3685 = vmatprep.subr.mxu0 0.0
  %3686 = vmatpush1.msra.mxu0 0.0
  %3687 = vmatprep.subr.mxu0 0.0
  %3688 = vmatpush1.msra.mxu0 0.0
  %3689 = vmatprep.subr.mxu0 0.0
  %3690 = vmatpush1.msra.mxu0 0.0
  %3691 = vmatprep.mubr.f32.mxu0 0.0
  %3692 = vmatmul.mubr.f32.gmra.mrb[0].mxu0 %v3625
  %v3693 = vpop.f32.mrb[0].mxu0
  %v3694 = vadd.f32 %v1586, %v3693
  %v3695 = vpop.f32.mrb[0].mxu0
  %v3696 = vadd.f32 %v1590, %v3695
  %3697 = vdwg.mxu0
  %v3700 = vrot.slane %v3694, 6
  %v3701 = vrot.slane %v3696, 6
  %v3704 = vadd.f32 %v3624, %v3700
  %v3705 = vadd.f32 %v3621, %v3701
  %v3706 = vxor.u32 %v3704, 2147483648
  %v3707 = vxor.u32 %v3705, 2147483648
  %v3708 = vmul.f32 %v3706, 1.442695
  %v3709 = vpow.pop %v3708
  %v3710 = vmul.f32 %v3707, 1.442695
  %v3711 = vpow.pop %v3710
  %v3712 = vadd.f32 %v3709, 1.0
  %v3713 = vadd.f32 %v3711, 1.0
  %v3714 = vrcp.pop %v3712
  %v3715 = vmul.f32 1.0, %v3714
  %v3716 = vrcp.pop %v3713
  %v3717 = vmul.f32 1.0, %v3716
  %3719 = vrot.lane.b32.xlu0 %v3715, 64
  %v3720 = vpop.permute.xlu0 %3719
  %v3722 = vsel %vm226, %v3715, %v3720
  %3723 = vrot.lane.b32.xlu0 %v3715, 96
  %v3724 = vpop.permute.xlu0 %3723
  %3727 = vrot.lane.b32.xlu0 %v3717, 32
  %v3728 = vpop.permute.xlu0 %3727
  %v3730 = vsel %vm226, %v3724, %v3728
  %3732 = vrot.lane.b32.xlu0 %v3624, 64
  %v3733 = vpop.permute.xlu0 %3732
  %v3735 = vsel %vm226, %v3733, %v3621
  %3736 = vrot.lane.b32.xlu0 %v3694, 64
  %v3737 = vpop.permute.xlu0 %3736
  %v3739 = vsel %vm226, %v3737, %v3696
  %v3741 = vrot.slane %v3739, 6
  %v3743 = vmul.f32 %v3722, %v3741
  %v3744 = vadd.f32 %v3735, %v3743
  %v3745 = vtanh.pop %v3744
  %v3746 = vsub.f32 1.0, %v3730
  %v3747 = vmul.f32 %v3746, %v3745
  %v3748 = vrot.slane %v3590, 6
  %v3750 = vmul.f32 %v3730, %v3748
  %v3751 = vadd.f32 %v3747, %v3750
  %v3754 = vunpack.c.l.s4 1966171168
  %v3755 = vunpack.c.0.s8 %v3754
  %v3756 = vlaneseq
  %v3757 = vshrl.u32 %v3756, 7
  %v3758 = vsub.s32 %v3755, %v3757
  %v3759 = vrot.slane %v3751, %v3758
  %v3760 = vcombine.high %v3759, %v3759
  %v3762 = vunpack.c.l.s4 1966171168
  %v3763 = vunpack.c.0.s8 %v3762
  %v3764 = vlaneseq
  %v3765 = vshrl.u32 %v3764, 7
  %v3766 = vsub.s32 %v3763, %v3765
  %v3767 = vrot.slane %v3759, %v3766
  %v3769 = vunpack.c.l.s4 1966171168
  %v3770 = vunpack.c.0.s8 %v3769
  %v3771 = vlaneseq
  %v3772 = vshrl.u32 %v3771, 7
  %v3773 = vsub.s32 %v3770, %v3772
  %v3774 = vrot.slane %v3760, %v3773
  %v3775 = vcombine.high %v3767, %v3767
  %v3776 = vcombine.high %v3774, %v3774
  %3779 = vst.msk [vmem:[%s17 + $0xd] sm:$0x1] %vm1736, %v3775
  %3780 = vst.msk [vmem:[%s17 + $0x25] sm:$0x1] %vm1736, %v3776
  %3781 = vst.msk [vmem:[%s17 + $0x6] sm:$0x1] %vm1739, %v3775
  %3782 = vst.msk [vmem:[%s17 + $0x1e] sm:$0x1] %vm1739, %v3776
  %v3783 = vrot.slane %v3751, 2
  %v3784 = vsel %vm246, %v3783, 0
  %3786 = vmatprep.subr.mxu0 %v1558
  %3787 = vmatpush1.msra.mxu0 %v1557
  %3788 = vmatprep.subr.mxu0 %v1560
  %3789 = vmatpush1.msra.mxu0 %v1559
  %3790 = vmatprep.subr.mxu0 %v1562
  %3791 = vmatpush1.msra.mxu0 %v1561
  %3792 = vmatprep.subr.mxu0 %v1564
  %3793 = vmatpush1.msra.mxu0 %v1563
  %3794 = vmatprep.subr.mxu0 %v1566
  %3795 = vmatpush1.msra.mxu0 %v1565
  %3796 = vmatprep.subr.mxu0 %v1568
  %3797 = vmatpush1.msra.mxu0 %v1567
  %3798 = vmatprep.subr.mxu0 %v1570
  %3799 = vmatpush1.msra.mxu0 %v1569
  %3800 = vmatprep.subr.mxu0 %v1572
  %3801 = vmatpush1.msra.mxu0 %v1571
  %3802 = vmatprep.subr.mxu0 0.0
  %3803 = vmatpush1.msra.mxu0 0.0
  %3804 = vmatprep.subr.mxu0 0.0
  %3805 = vmatpush1.msra.mxu0 0.0
  %3806 = vmatprep.subr.mxu0 0.0
  %3807 = vmatpush1.msra.mxu0 0.0
  %3808 = vmatprep.subr.mxu0 0.0
  %3809 = vmatpush1.msra.mxu0 0.0
  %3810 = vmatprep.subr.mxu0 0.0
  %3811 = vmatpush1.msra.mxu0 0.0
  %3812 = vmatprep.subr.mxu0 0.0
  %3813 = vmatpush1.msra.mxu0 0.0
  %3814 = vmatprep.subr.mxu0 0.0
  %3815 = vmatpush1.msra.mxu0 0.0
  %3816 = vmatprep.subr.mxu0 0.0
  %3817 = vmatpush1.msra.mxu0 0.0
  %3818 = vmatprep.subr.mxu0 0.0
  %3819 = vmatpush1.msra.mxu0 0.0
  %3820 = vmatprep.subr.mxu0 0.0
  %3821 = vmatpush1.msra.mxu0 0.0
  %3822 = vmatprep.subr.mxu0 0.0
  %3823 = vmatpush1.msra.mxu0 0.0
  %3824 = vmatprep.subr.mxu0 0.0
  %3825 = vmatpush1.msra.mxu0 0.0
  %3826 = vmatprep.subr.mxu0 0.0
  %3827 = vmatpush1.msra.mxu0 0.0
  %3828 = vmatprep.subr.mxu0 0.0
  %3829 = vmatpush1.msra.mxu0 0.0
  %3830 = vmatprep.subr.mxu0 0.0
  %3831 = vmatpush1.msra.mxu0 0.0
  %3832 = vmatprep.subr.mxu0 0.0
  %3833 = vmatpush1.msra.mxu0 0.0
  %3834 = vmatprep.subr.mxu0 0.0
  %3835 = vmatpush1.msra.mxu0 0.0
  %3836 = vmatprep.subr.mxu0 0.0
  %3837 = vmatpush1.msra.mxu0 0.0
  %3838 = vmatprep.subr.mxu0 0.0
  %3839 = vmatpush1.msra.mxu0 0.0
  %3840 = vmatprep.subr.mxu0 0.0
  %3841 = vmatpush1.msra.mxu0 0.0
  %3842 = vmatprep.subr.mxu0 0.0
  %3843 = vmatpush1.msra.mxu0 0.0
  %3844 = vmatprep.subr.mxu0 0.0
  %3845 = vmatpush1.msra.mxu0 0.0
  %3846 = vmatprep.subr.mxu0 0.0
  %3847 = vmatpush1.msra.mxu0 0.0
  %3848 = vmatprep.subr.mxu0 0.0
  %3849 = vmatpush1.msra.mxu0 0.0
  %3850 = vmatprep.mubr.f32.mxu0 0.0
  %3851 = vmatmul.mubr.f32.gmra.mrb[0].mxu0 %v3784
  %v3852 = vpop.f32.mrb[0].mxu0
  %v3853 = vadd.f32 %v1586, %v3852
  %v3854 = vpop.f32.mrb[0].mxu0
  %v3855 = vadd.f32 %v1590, %v3854
  %3856 = vdwg.mxu0
  %v3859 = vrot.slane %v3853, 4
  %v3860 = vrot.slane %v3855, 4
  %v3863 = vadd.f32 %v3471, %v3859
  %v3864 = vadd.f32 %v3468, %v3860
  %v3865 = vxor.u32 %v3863, 2147483648
  %v3866 = vxor.u32 %v3864, 2147483648
  %v3867 = vmul.f32 %v3865, 1.442695
  %v3868 = vpow.pop %v3867
  %v3869 = vmul.f32 %v3866, 1.442695
  %v3870 = vpow.pop %v3869
  %v3871 = vadd.f32 %v3868, 1.0
  %v3872 = vadd.f32 %v3870, 1.0
  %v3873 = vrcp.pop %v3871
  %v3874 = vmul.f32 1.0, %v3873
  %v3875 = vrcp.pop %v3872
  %v3876 = vmul.f32 1.0, %v3875
  %3878 = vrot.lane.b32.xlu0 %v3874, 64
  %v3879 = vpop.permute.xlu0 %3878
  %v3881 = vsel %vm226, %v3874, %v3879
  %3882 = vrot.lane.b32.xlu0 %v3874, 96
  %v3883 = vpop.permute.xlu0 %3882
  %3886 = vrot.lane.b32.xlu0 %v3876, 32
  %v3887 = vpop.permute.xlu0 %3886
  %v3889 = vsel %vm226, %v3883, %v3887
  %3890 = vrot.lane.b32.xlu0 %v3853, 64
  %v3891 = vpop.permute.xlu0 %3890
  %v3893 = vsel %vm226, %v3891, %v3855
  %v3895 = vrot.slane %v3893, 4
  %v3897 = vmul.f32 %v3881, %v3895
  %v3898 = vadd.f32 %v3577, %v3897
  %v3899 = vtanh.pop %v3898
  %v3900 = vsub.f32 1.0, %v3889
  %v3901 = vmul.f32 %v3900, %v3899
  %v3902 = vrot.slane %v3751, 6
  %v3904 = vmul.f32 %v3889, %v3902
  %v3905 = vadd.f32 %v3901, %v3904
  %v3907 = vcombine.high %v3905, %v3905
  %v3909 = vunpack.c.l.s4 1966171168
  %v3910 = vunpack.c.0.s8 %v3909
  %v3911 = vlaneseq
  %v3912 = vshrl.u32 %v3911, 7
  %v3913 = vsub.s32 %v3910, %v3912
  %v3914 = vrot.slane %v3907, %v3913
  %v3915 = vcombine.high %v3914, %v3914
  %v3917 = vunpack.c.l.s4 1966171168
  %v3918 = vunpack.c.0.s8 %v3917
  %v3919 = vlaneseq
  %v3920 = vshrl.u32 %v3919, 7
  %v3921 = vsub.s32 %v3918, %v3920
  %v3922 = vrot.slane %v3914, %v3921
  %v3924 = vunpack.c.l.s4 1966171168
  %v3925 = vunpack.c.0.s8 %v3924
  %v3926 = vlaneseq
  %v3927 = vshrl.u32 %v3926, 7
  %v3928 = vsub.s32 %v3925, %v3927
  %v3929 = vrot.slane %v3915, %v3928
  %3932 = vst.msk [vmem:[%s17 + $0xe] sm:$0x1] %vm1736, %v3922
  %3933 = vst.msk [vmem:[%s17 + $0x26] sm:$0x1] %vm1736, %v3929
  %3934 = vst.msk [vmem:[%s17 + $0x5] sm:$0x1] %vm1739, %v3922
  %3935 = vst.msk [vmem:[%s17 + $0x1d] sm:$0x1] %vm1739, %v3929
  %v3936 = vrot.slane %v3905, 4
  %v3937 = vsel %vm246, %v3936, 0
  %3939 = vmatprep.subr.mxu0 %v1558
  %3940 = vmatpush1.msra.mxu0 %v1557
  %3941 = vmatprep.subr.mxu0 %v1560
  %3942 = vmatpush1.msra.mxu0 %v1559
  %3943 = vmatprep.subr.mxu0 %v1562
  %3944 = vmatpush1.msra.mxu0 %v1561
  %3945 = vmatprep.subr.mxu0 %v1564
  %3946 = vmatpush1.msra.mxu0 %v1563
  %3947 = vmatprep.subr.mxu0 %v1566
  %3948 = vmatpush1.msra.mxu0 %v1565
  %3949 = vmatprep.subr.mxu0 %v1568
  %3950 = vmatpush1.msra.mxu0 %v1567
  %3951 = vmatprep.subr.mxu0 %v1570
  %3952 = vmatpush1.msra.mxu0 %v1569
  %3953 = vmatprep.subr.mxu0 %v1572
  %3954 = vmatpush1.msra.mxu0 %v1571
  %3955 = vmatprep.subr.mxu0 0.0
  %3956 = vmatpush1.msra.mxu0 0.0
  %3957 = vmatprep.subr.mxu0 0.0
  %3958 = vmatpush1.msra.mxu0 0.0
  %3959 = vmatprep.subr.mxu0 0.0
  %3960 = vmatpush1.msra.mxu0 0.0
  %3961 = vmatprep.subr.mxu0 0.0
  %3962 = vmatpush1.msra.mxu0 0.0
  %3963 = vmatprep.subr.mxu0 0.0
  %3964 = vmatpush1.msra.mxu0 0.0
  %3965 = vmatprep.subr.mxu0 0.0
  %3966 = vmatpush1.msra.mxu0 0.0
  %3967 = vmatprep.subr.mxu0 0.0
  %3968 = vmatpush1.msra.mxu0 0.0
  %3969 = vmatprep.subr.mxu0 0.0
  %3970 = vmatpush1.msra.mxu0 0.0
  %3971 = vmatprep.subr.mxu0 0.0
  %3972 = vmatpush1.msra.mxu0 0.0
  %3973 = vmatprep.subr.mxu0 0.0
  %3974 = vmatpush1.msra.mxu0 0.0
  %3975 = vmatprep.subr.mxu0 0.0
  %3976 = vmatpush1.msra.mxu0 0.0
  %3977 = vmatprep.subr.mxu0 0.0
  %3978 = vmatpush1.msra.mxu0 0.0
  %3979 = vmatprep.subr.mxu0 0.0
  %3980 = vmatpush1.msra.mxu0 0.0
  %3981 = vmatprep.subr.mxu0 0.0
  %3982 = vmatpush1.msra.mxu0 0.0
  %3983 = vmatprep.subr.mxu0 0.0
  %3984 = vmatpush1.msra.mxu0 0.0
  %3985 = vmatprep.subr.mxu0 0.0
  %3986 = vmatpush1.msra.mxu0 0.0
  %3987 = vmatprep.subr.mxu0 0.0
  %3988 = vmatpush1.msra.mxu0 0.0
  %3989 = vmatprep.subr.mxu0 0.0
  %3990 = vmatpush1.msra.mxu0 0.0
  %3991 = vmatprep.subr.mxu0 0.0
  %3992 = vmatpush1.msra.mxu0 0.0
  %3993 = vmatprep.subr.mxu0 0.0
  %3994 = vmatpush1.msra.mxu0 0.0
  %3995 = vmatprep.subr.mxu0 0.0
  %3996 = vmatpush1.msra.mxu0 0.0
  %3997 = vmatprep.subr.mxu0 0.0
  %3998 = vmatpush1.msra.mxu0 0.0
  %3999 = vmatprep.subr.mxu0 0.0
  %4000 = vmatpush1.msra.mxu0 0.0
  %4001 = vmatprep.subr.mxu0 0.0
  %4002 = vmatpush1.msra.mxu0 0.0
  %4003 = vmatprep.mubr.f32.mxu0 0.0
  %4004 = vmatmul.mubr.f32.gmra.mrb[0].mxu0 %v3937
  %v4005 = vpop.f32.mrb[0].mxu0
  %v4006 = vadd.f32 %v1586, %v4005
  %v4007 = vpop.f32.mrb[0].mxu0
  %v4008 = vadd.f32 %v1590, %v4007
  %4009 = vdwg.mxu0
  %v4012 = vrot.slane %v4006, 2
  %v4013 = vrot.slane %v4008, 2
  %v4016 = vadd.f32 %v3624, %v4012
  %v4017 = vadd.f32 %v3621, %v4013
  %v4018 = vxor.u32 %v4016, 2147483648
  %v4019 = vxor.u32 %v4017, 2147483648
  %v4020 = vmul.f32 %v4018, 1.442695
  %v4021 = vpow.pop %v4020
  %v4022 = vmul.f32 %v4019, 1.442695
  %v4023 = vpow.pop %v4022
  %v4024 = vadd.f32 %v4021, 1.0
  %v4025 = vadd.f32 %v4023, 1.0
  %v4026 = vrcp.pop %v4024
  %v4027 = vmul.f32 1.0, %v4026
  %v4028 = vrcp.pop %v4025
  %v4029 = vmul.f32 1.0, %v4028
  %4031 = vrot.lane.b32.xlu0 %v4027, 64
  %v4032 = vpop.permute.xlu0 %4031
  %v4034 = vsel %vm226, %v4027, %v4032
  %4035 = vrot.lane.b32.xlu0 %v4027, 96
  %v4036 = vpop.permute.xlu0 %4035
  %4039 = vrot.lane.b32.xlu0 %v4029, 32
  %v4040 = vpop.permute.xlu0 %4039
  %v4042 = vsel %vm226, %v4036, %v4040
  %4043 = vrot.lane.b32.xlu0 %v4006, 64
  %v4044 = vpop.permute.xlu0 %4043
  %v4046 = vsel %vm226, %v4044, %v4008
  %v4048 = vrot.slane %v4046, 2
  %v4050 = vmul.f32 %v4034, %v4048
  %v4051 = vadd.f32 %v3735, %v4050
  %v4052 = vtanh.pop %v4051
  %v4053 = vsub.f32 1.0, %v4042
  %v4054 = vmul.f32 %v4053, %v4052
  %v4055 = vrot.slane %v3905, 6
  %v4057 = vmul.f32 %v4042, %v4055
  %v4058 = vadd.f32 %v4054, %v4057
  %v4060 = vcombine.high %v4058, %v4058
  %v4062 = vunpack.c.l.s4 1966171168
  %v4063 = vunpack.c.0.s8 %v4062
  %v4064 = vlaneseq
  %v4065 = vshrl.u32 %v4064, 7
  %v4066 = vsub.s32 %v4063, %v4065
  %v4067 = vrot.slane %v4060, %v4066
  %v4068 = vcombine.high %v4067, %v4067
  %v4070 = vunpack.c.l.s4 1966171168
  %v4071 = vunpack.c.0.s8 %v4070
  %v4072 = vlaneseq
  %v4073 = vshrl.u32 %v4072, 7
  %v4074 = vsub.s32 %v4071, %v4073
  %v4075 = vrot.slane %v4067, %v4074
  %v4077 = vunpack.c.l.s4 1966171168
  %v4078 = vunpack.c.0.s8 %v4077
  %v4079 = vlaneseq
  %v4080 = vshrl.u32 %v4079, 7
  %v4081 = vsub.s32 %v4078, %v4080
  %v4082 = vrot.slane %v4068, %v4081
  %v4083 = vcombine.high %v4075, %v4075
  %v4084 = vcombine.high %v4082, %v4082
  %4087 = vst.msk [vmem:[%s17 + $0xf] sm:$0x1] %vm1736, %v4083
  %4088 = vst.msk [vmem:[%s17 + $0x27] sm:$0x1] %vm1736, %v4084
  %4089 = vst.msk [vmem:[%s17 + $0x4] sm:$0x1] %vm1739, %v4083
  %4090 = vst.msk [vmem:[%s17 + $0x1c] sm:$0x1] %vm1739, %v4084
  %v4093 = vrot.slane %v1529, 6
  %v4094 = vrot.slane %v1531, 6
  %v4097 = vsel %vm1580, %v1553, %v4093
  %v4098 = vrot.slane %v4058, 6
  %v4099 = vsel %vm246, %v4098, 0
  %4101 = vmatprep.subr.mxu0 %v1558
  %4102 = vmatpush1.msra.mxu0 %v1557
  %4103 = vmatprep.subr.mxu0 %v1560
  %4104 = vmatpush1.msra.mxu0 %v1559
  %4105 = vmatprep.subr.mxu0 %v1562
  %4106 = vmatpush1.msra.mxu0 %v1561
  %4107 = vmatprep.subr.mxu0 %v1564
  %4108 = vmatpush1.msra.mxu0 %v1563
  %4109 = vmatprep.subr.mxu0 %v1566
  %4110 = vmatpush1.msra.mxu0 %v1565
  %4111 = vmatprep.subr.mxu0 %v1568
  %4112 = vmatpush1.msra.mxu0 %v1567
  %4113 = vmatprep.subr.mxu0 %v1570
  %4114 = vmatpush1.msra.mxu0 %v1569
  %4115 = vmatprep.subr.mxu0 %v1572
  %4116 = vmatpush1.msra.mxu0 %v1571
  %4117 = vmatprep.subr.mxu0 0.0
  %4118 = vmatpush1.msra.mxu0 0.0
  %4119 = vmatprep.subr.mxu0 0.0
  %4120 = vmatpush1.msra.mxu0 0.0
  %4121 = vmatprep.subr.mxu0 0.0
  %4122 = vmatpush1.msra.mxu0 0.0
  %4123 = vmatprep.subr.mxu0 0.0
  %4124 = vmatpush1.msra.mxu0 0.0
  %4125 = vmatprep.subr.mxu0 0.0
  %4126 = vmatpush1.msra.mxu0 0.0
  %4127 = vmatprep.subr.mxu0 0.0
  %4128 = vmatpush1.msra.mxu0 0.0
  %4129 = vmatprep.subr.mxu0 0.0
  %4130 = vmatpush1.msra.mxu0 0.0
  %4131 = vmatprep.subr.mxu0 0.0
  %4132 = vmatpush1.msra.mxu0 0.0
  %4133 = vmatprep.subr.mxu0 0.0
  %4134 = vmatpush1.msra.mxu0 0.0
  %4135 = vmatprep.subr.mxu0 0.0
  %4136 = vmatpush1.msra.mxu0 0.0
  %4137 = vmatprep.subr.mxu0 0.0
  %4138 = vmatpush1.msra.mxu0 0.0
  %4139 = vmatprep.subr.mxu0 0.0
  %4140 = vmatpush1.msra.mxu0 0.0
  %4141 = vmatprep.subr.mxu0 0.0
  %4142 = vmatpush1.msra.mxu0 0.0
  %4143 = vmatprep.subr.mxu0 0.0
  %4144 = vmatpush1.msra.mxu0 0.0
  %4145 = vmatprep.subr.mxu0 0.0
  %4146 = vmatpush1.msra.mxu0 0.0
  %4147 = vmatprep.subr.mxu0 0.0
  %4148 = vmatpush1.msra.mxu0 0.0
  %4149 = vmatprep.subr.mxu0 0.0
  %4150 = vmatpush1.msra.mxu0 0.0
  %4151 = vmatprep.subr.mxu0 0.0
  %4152 = vmatpush1.msra.mxu0 0.0
  %4153 = vmatprep.subr.mxu0 0.0
  %4154 = vmatpush1.msra.mxu0 0.0
  %4155 = vmatprep.subr.mxu0 0.0
  %4156 = vmatpush1.msra.mxu0 0.0
  %4157 = vmatprep.subr.mxu0 0.0
  %4158 = vmatpush1.msra.mxu0 0.0
  %4159 = vmatprep.subr.mxu0 0.0
  %4160 = vmatpush1.msra.mxu0 0.0
  %4161 = vmatprep.subr.mxu0 0.0
  %4162 = vmatpush1.msra.mxu0 0.0
  %4163 = vmatprep.subr.mxu0 0.0
  %4164 = vmatpush1.msra.mxu0 0.0
  %4165 = vmatprep.mubr.f32.mxu0 0.0
  %4166 = vmatmul.mubr.f32.gmra.mrb[0].mxu0 %v4099
  %v4167 = vpop.f32.mrb[0].mxu0
  %v4168 = vadd.f32 %v1586, %v4167
  %v4169 = vpop.f32.mrb[0].mxu0
  %v4170 = vadd.f32 %v1590, %v4169
  %4171 = vdwg.mxu0
  %v4172 = vadd.f32 %v4097, %v4168
  %v4173 = vadd.f32 %v4094, %v4170
  %v4174 = vxor.u32 %v4172, 2147483648
  %v4175 = vxor.u32 %v4173, 2147483648
  %v4176 = vmul.f32 %v4174, 1.442695
  %v4177 = vpow.pop %v4176
  %v4178 = vmul.f32 %v4175, 1.442695
  %v4179 = vpow.pop %v4178
  %v4180 = vadd.f32 %v4177, 1.0
  %v4181 = vadd.f32 %v4179, 1.0
  %v4182 = vrcp.pop %v4180
  %v4183 = vmul.f32 1.0, %v4182
  %v4184 = vrcp.pop %v4181
  %v4185 = vmul.f32 1.0, %v4184
  %4187 = vrot.lane.b32.xlu0 %v4183, 64
  %v4188 = vpop.permute.xlu0 %4187
  %v4190 = vsel %vm226, %v4183, %v4188
  %4191 = vrot.lane.b32.xlu0 %v4183, 96
  %v4192 = vpop.permute.xlu0 %4191
  %4195 = vrot.lane.b32.xlu0 %v4185, 32
  %v4196 = vpop.permute.xlu0 %4195
  %v4198 = vsel %vm226, %v4192, %v4196
  %4200 = vrot.lane.b32.xlu0 %v4097, 64
  %v4201 = vpop.permute.xlu0 %4200
  %v4203 = vsel %vm226, %v4201, %v4094
  %4205 = vrot.lane.b32.xlu0 %v4168, 64
  %v4206 = vpop.permute.xlu0 %4205
  %v4208 = vsel %vm226, %v4206, %v4170
  %v4209 = vmul.f32 %v4190, %v4208
  %v4210 = vadd.f32 %v4203, %v4209
  %v4211 = vtanh.pop %v4210
  %v4212 = vsub.f32 1.0, %v4198
  %v4213 = vmul.f32 %v4212, %v4211
  %v4215 = vmul.f32 %v4198, %v4098
  %v4216 = vadd.f32 %v4213, %v4215
  %v4219 = vunpack.c.l.s4 1966171168
  %v4220 = vunpack.c.0.s8 %v4219
  %v4221 = vlaneseq
  %v4222 = vshrl.u32 %v4221, 7
  %v4223 = vsub.s32 %v4220, %v4222
  %v4224 = vrot.slane %v4216, %v4223
  %v4225 = vcombine.high %v4224, %v4224
  %v4227 = vunpack.c.l.s4 1966171168
  %v4228 = vunpack.c.0.s8 %v4227
  %v4229 = vlaneseq
  %v4230 = vshrl.u32 %v4229, 7
  %v4231 = vsub.s32 %v4228, %v4230
  %v4232 = vrot.slane %v4224, %v4231
  %v4234 = vunpack.c.l.s4 1966171168
  %v4235 = vunpack.c.0.s8 %v4234
  %v4236 = vlaneseq
  %v4237 = vshrl.u32 %v4236, 7
  %v4238 = vsub.s32 %v4235, %v4237
  %v4239 = vrot.slane %v4225, %v4238
  %4242 = vst.msk [vmem:[%s17 + $0x10] sm:$0x1] %vm1736, %v4232
  %4243 = vst.msk [vmem:[%s17 + $0x28] sm:$0x1] %vm1736, %v4239
  %4244 = vst.msk [vmem:[%s17 + $0x3] sm:$0x1] %vm1739, %v4232
  %4245 = vst.msk [vmem:[%s17 + $0x1b] sm:$0x1] %vm1739, %v4239
  %v4246 = vrot.slane %v1529, 2
  %v4247 = vrot.slane %v1531, 2
  %v4250 = vsel %vm1580, %v1553, %v4246
  %v4251 = vsel %vm246, %v4216, 0
  %4253 = vmatprep.subr.mxu0 %v1558
  %4254 = vmatpush1.msra.mxu0 %v1557
  %4255 = vmatprep.subr.mxu0 %v1560
  %4256 = vmatpush1.msra.mxu0 %v1559
  %4257 = vmatprep.subr.mxu0 %v1562
  %4258 = vmatpush1.msra.mxu0 %v1561
  %4259 = vmatprep.subr.mxu0 %v1564
  %4260 = vmatpush1.msra.mxu0 %v1563
  %4261 = vmatprep.subr.mxu0 %v1566
  %4262 = vmatpush1.msra.mxu0 %v1565
  %4263 = vmatprep.subr.mxu0 %v1568
  %4264 = vmatpush1.msra.mxu0 %v1567
  %4265 = vmatprep.subr.mxu0 %v1570
  %4266 = vmatpush1.msra.mxu0 %v1569
  %4267 = vmatprep.subr.mxu0 %v1572
  %4268 = vmatpush1.msra.mxu0 %v1571
  %4269 = vmatprep.subr.mxu0 0.0
  %4270 = vmatpush1.msra.mxu0 0.0
  %4271 = vmatprep.subr.mxu0 0.0
  %4272 = vmatpush1.msra.mxu0 0.0
  %4273 = vmatprep.subr.mxu0 0.0
  %4274 = vmatpush1.msra.mxu0 0.0
  %4275 = vmatprep.subr.mxu0 0.0
  %4276 = vmatpush1.msra.mxu0 0.0
  %4277 = vmatprep.subr.mxu0 0.0
  %4278 = vmatpush1.msra.mxu0 0.0
  %4279 = vmatprep.subr.mxu0 0.0
  %4280 = vmatpush1.msra.mxu0 0.0
  %4281 = vmatprep.subr.mxu0 0.0
  %4282 = vmatpush1.msra.mxu0 0.0
  %4283 = vmatprep.subr.mxu0 0.0
  %4284 = vmatpush1.msra.mxu0 0.0
  %4285 = vmatprep.subr.mxu0 0.0
  %4286 = vmatpush1.msra.mxu0 0.0
  %4287 = vmatprep.subr.mxu0 0.0
  %4288 = vmatpush1.msra.mxu0 0.0
  %4289 = vmatprep.subr.mxu0 0.0
  %4290 = vmatpush1.msra.mxu0 0.0
  %4291 = vmatprep.subr.mxu0 0.0
  %4292 = vmatpush1.msra.mxu0 0.0
  %4293 = vmatprep.subr.mxu0 0.0
  %4294 = vmatpush1.msra.mxu0 0.0
  %4295 = vmatprep.subr.mxu0 0.0
  %4296 = vmatpush1.msra.mxu0 0.0
  %4297 = vmatprep.subr.mxu0 0.0
  %4298 = vmatpush1.msra.mxu0 0.0
  %4299 = vmatprep.subr.mxu0 0.0
  %4300 = vmatpush1.msra.mxu0 0.0
  %4301 = vmatprep.subr.mxu0 0.0
  %4302 = vmatpush1.msra.mxu0 0.0
  %4303 = vmatprep.subr.mxu0 0.0
  %4304 = vmatpush1.msra.mxu0 0.0
  %4305 = vmatprep.subr.mxu0 0.0
  %4306 = vmatpush1.msra.mxu0 0.0
  %4307 = vmatprep.subr.mxu0 0.0
  %4308 = vmatpush1.msra.mxu0 0.0
  %4309 = vmatprep.subr.mxu0 0.0
  %4310 = vmatpush1.msra.mxu0 0.0
  %4311 = vmatprep.subr.mxu0 0.0
  %4312 = vmatpush1.msra.mxu0 0.0
  %4313 = vmatprep.subr.mxu0 0.0
  %4314 = vmatpush1.msra.mxu0 0.0
  %4315 = vmatprep.subr.mxu0 0.0
  %4316 = vmatpush1.msra.mxu0 0.0
  %4317 = vmatprep.mubr.f32.mxu0 0.0
  %4318 = vmatmul.mubr.f32.gmra.mrb[0].mxu0 %v4251
  %v4319 = vpop.f32.mrb[0].mxu0
  %v4320 = vadd.f32 %v1586, %v4319
  %v4321 = vpop.f32.mrb[0].mxu0
  %v4322 = vadd.f32 %v1590, %v4321
  %4323 = vdwg.mxu0
  %v4326 = vrot.slane %v4320, 6
  %v4327 = vrot.slane %v4322, 6
  %v4330 = vadd.f32 %v4250, %v4326
  %v4331 = vadd.f32 %v4247, %v4327
  %v4332 = vxor.u32 %v4330, 2147483648
  %v4333 = vxor.u32 %v4331, 2147483648
  %v4334 = vmul.f32 %v4332, 1.442695
  %v4335 = vpow.pop %v4334
  %v4336 = vmul.f32 %v4333, 1.442695
  %v4337 = vpow.pop %v4336
  %v4338 = vadd.f32 %v4335, 1.0
  %v4339 = vadd.f32 %v4337, 1.0
  %v4340 = vrcp.pop %v4338
  %v4341 = vmul.f32 1.0, %v4340
  %v4342 = vrcp.pop %v4339
  %v4343 = vmul.f32 1.0, %v4342
  %4345 = vrot.lane.b32.xlu0 %v4341, 64
  %v4346 = vpop.permute.xlu0 %4345
  %v4348 = vsel %vm226, %v4341, %v4346
  %4349 = vrot.lane.b32.xlu0 %v4341, 96
  %v4350 = vpop.permute.xlu0 %4349
  %4353 = vrot.lane.b32.xlu0 %v4343, 32
  %v4354 = vpop.permute.xlu0 %4353
  %v4356 = vsel %vm226, %v4350, %v4354
  %4358 = vrot.lane.b32.xlu0 %v4250, 64
  %v4359 = vpop.permute.xlu0 %4358
  %v4361 = vsel %vm226, %v4359, %v4247
  %4362 = vrot.lane.b32.xlu0 %v4320, 64
  %v4363 = vpop.permute.xlu0 %4362
  %v4365 = vsel %vm226, %v4363, %v4322
  %v4367 = vrot.slane %v4365, 6
  %v4369 = vmul.f32 %v4348, %v4367
  %v4370 = vadd.f32 %v4361, %v4369
  %v4371 = vtanh.pop %v4370
  %v4372 = vsub.f32 1.0, %v4356
  %v4373 = vmul.f32 %v4372, %v4371
  %v4374 = vrot.slane %v4216, 6
  %v4376 = vmul.f32 %v4356, %v4374
  %v4377 = vadd.f32 %v4373, %v4376
  %v4380 = vunpack.c.l.s4 1966171168
  %v4381 = vunpack.c.0.s8 %v4380
  %v4382 = vlaneseq
  %v4383 = vshrl.u32 %v4382, 7
  %v4384 = vsub.s32 %v4381, %v4383
  %v4385 = vrot.slane %v4377, %v4384
  %v4386 = vcombine.high %v4385, %v4385
  %v4388 = vunpack.c.l.s4 1966171168
  %v4389 = vunpack.c.0.s8 %v4388
  %v4390 = vlaneseq
  %v4391 = vshrl.u32 %v4390, 7
  %v4392 = vsub.s32 %v4389, %v4391
  %v4393 = vrot.slane %v4385, %v4392
  %v4395 = vunpack.c.l.s4 1966171168
  %v4396 = vunpack.c.0.s8 %v4395
  %v4397 = vlaneseq
  %v4398 = vshrl.u32 %v4397, 7
  %v4399 = vsub.s32 %v4396, %v4398
  %v4400 = vrot.slane %v4386, %v4399
  %v4401 = vcombine.high %v4393, %v4393
  %v4402 = vcombine.high %v4400, %v4400
  %4405 = vst.msk [vmem:[%s17 + $0x11] sm:$0x1] %vm1736, %v4401
  %4406 = vst.msk [vmem:[%s17 + $0x29] sm:$0x1] %vm1736, %v4402
  %4407 = vst.msk [vmem:[%s17 + $0x2] sm:$0x1] %vm1739, %v4401
  %4408 = vst.msk [vmem:[%s17 + $0x1a] sm:$0x1] %vm1739, %v4402
  %v4409 = vrot.slane %v4377, 2
  %v4410 = vsel %vm246, %v4409, 0
  %4412 = vmatprep.subr.mxu0 %v1558
  %4413 = vmatpush1.msra.mxu0 %v1557
  %4414 = vmatprep.subr.mxu0 %v1560
  %4415 = vmatpush1.msra.mxu0 %v1559
  %4416 = vmatprep.subr.mxu0 %v1562
  %4417 = vmatpush1.msra.mxu0 %v1561
  %4418 = vmatprep.subr.mxu0 %v1564
  %4419 = vmatpush1.msra.mxu0 %v1563
  %4420 = vmatprep.subr.mxu0 %v1566
  %4421 = vmatpush1.msra.mxu0 %v1565
  %4422 = vmatprep.subr.mxu0 %v1568
  %4423 = vmatpush1.msra.mxu0 %v1567
  %4424 = vmatprep.subr.mxu0 %v1570
  %4425 = vmatpush1.msra.mxu0 %v1569
  %4426 = vmatprep.subr.mxu0 %v1572
  %4427 = vmatpush1.msra.mxu0 %v1571
  %4428 = vmatprep.subr.mxu0 0.0
  %4429 = vmatpush1.msra.mxu0 0.0
  %4430 = vmatprep.subr.mxu0 0.0
  %4431 = vmatpush1.msra.mxu0 0.0
  %4432 = vmatprep.subr.mxu0 0.0
  %4433 = vmatpush1.msra.mxu0 0.0
  %4434 = vmatprep.subr.mxu0 0.0
  %4435 = vmatpush1.msra.mxu0 0.0
  %4436 = vmatprep.subr.mxu0 0.0
  %4437 = vmatpush1.msra.mxu0 0.0
  %4438 = vmatprep.subr.mxu0 0.0
  %4439 = vmatpush1.msra.mxu0 0.0
  %4440 = vmatprep.subr.mxu0 0.0
  %4441 = vmatpush1.msra.mxu0 0.0
  %4442 = vmatprep.subr.mxu0 0.0
  %4443 = vmatpush1.msra.mxu0 0.0
  %4444 = vmatprep.subr.mxu0 0.0
  %4445 = vmatpush1.msra.mxu0 0.0
  %4446 = vmatprep.subr.mxu0 0.0
  %4447 = vmatpush1.msra.mxu0 0.0
  %4448 = vmatprep.subr.mxu0 0.0
  %4449 = vmatpush1.msra.mxu0 0.0
  %4450 = vmatprep.subr.mxu0 0.0
  %4451 = vmatpush1.msra.mxu0 0.0
  %4452 = vmatprep.subr.mxu0 0.0
  %4453 = vmatpush1.msra.mxu0 0.0
  %4454 = vmatprep.subr.mxu0 0.0
  %4455 = vmatpush1.msra.mxu0 0.0
  %4456 = vmatprep.subr.mxu0 0.0
  %4457 = vmatpush1.msra.mxu0 0.0
  %4458 = vmatprep.subr.mxu0 0.0
  %4459 = vmatpush1.msra.mxu0 0.0
  %4460 = vmatprep.subr.mxu0 0.0
  %4461 = vmatpush1.msra.mxu0 0.0
  %4462 = vmatprep.subr.mxu0 0.0
  %4463 = vmatpush1.msra.mxu0 0.0
  %4464 = vmatprep.subr.mxu0 0.0
  %4465 = vmatpush1.msra.mxu0 0.0
  %4466 = vmatprep.subr.mxu0 0.0
  %4467 = vmatpush1.msra.mxu0 0.0
  %4468 = vmatprep.subr.mxu0 0.0
  %4469 = vmatpush1.msra.mxu0 0.0
  %4470 = vmatprep.subr.mxu0 0.0
  %4471 = vmatpush1.msra.mxu0 0.0
  %4472 = vmatprep.subr.mxu0 0.0
  %4473 = vmatpush1.msra.mxu0 0.0
  %4474 = vmatprep.subr.mxu0 0.0
  %4475 = vmatpush1.msra.mxu0 0.0
  %4476 = vmatprep.mubr.f32.mxu0 0.0
  %4477 = vmatmul.mubr.f32.gmra.mrb[0].mxu0 %v4410
  %v4478 = vpop.f32.mrb[0].mxu0
  %v4479 = vadd.f32 %v1586, %v4478
  %v4480 = vpop.f32.mrb[0].mxu0
  %v4481 = vadd.f32 %v1590, %v4480
  %4482 = vdwg.mxu0
  %v4485 = vrot.slane %v4479, 4
  %v4486 = vrot.slane %v4481, 4
  %v4489 = vadd.f32 %v4097, %v4485
  %v4490 = vadd.f32 %v4094, %v4486
  %v4491 = vxor.u32 %v4489, 2147483648
  %v4492 = vxor.u32 %v4490, 2147483648
  %v4493 = vmul.f32 %v4491, 1.442695
  %v4494 = vpow.pop %v4493
  %v4495 = vmul.f32 %v4492, 1.442695
  %v4496 = vpow.pop %v4495
  %v4497 = vadd.f32 %v4494, 1.0
  %v4498 = vadd.f32 %v4496, 1.0
  %v4499 = vrcp.pop %v4497
  %v4500 = vmul.f32 1.0, %v4499
  %v4501 = vrcp.pop %v4498
  %v4502 = vmul.f32 1.0, %v4501
  %4504 = vrot.lane.b32.xlu0 %v4500, 64
  %v4505 = vpop.permute.xlu0 %4504
  %v4507 = vsel %vm226, %v4500, %v4505
  %4508 = vrot.lane.b32.xlu0 %v4500, 96
  %v4509 = vpop.permute.xlu0 %4508
  %4512 = vrot.lane.b32.xlu0 %v4502, 32
  %v4513 = vpop.permute.xlu0 %4512
  %v4515 = vsel %vm226, %v4509, %v4513
  %4516 = vrot.lane.b32.xlu0 %v4479, 64
  %v4517 = vpop.permute.xlu0 %4516
  %v4519 = vsel %vm226, %v4517, %v4481
  %v4521 = vrot.slane %v4519, 4
  %v4523 = vmul.f32 %v4507, %v4521
  %v4524 = vadd.f32 %v4203, %v4523
  %v4525 = vtanh.pop %v4524
  %v4526 = vsub.f32 1.0, %v4515
  %v4527 = vmul.f32 %v4526, %v4525
  %v4528 = vrot.slane %v4377, 6
  %v4530 = vmul.f32 %v4515, %v4528
  %v4531 = vadd.f32 %v4527, %v4530
  %v4533 = vcombine.high %v4531, %v4531
  %v4535 = vunpack.c.l.s4 1966171168
  %v4536 = vunpack.c.0.s8 %v4535
  %v4537 = vlaneseq
  %v4538 = vshrl.u32 %v4537, 7
  %v4539 = vsub.s32 %v4536, %v4538
  %v4540 = vrot.slane %v4533, %v4539
  %v4541 = vcombine.high %v4540, %v4540
  %v4543 = vunpack.c.l.s4 1966171168
  %v4544 = vunpack.c.0.s8 %v4543
  %v4545 = vlaneseq
  %v4546 = vshrl.u32 %v4545, 7
  %v4547 = vsub.s32 %v4544, %v4546
  %v4548 = vrot.slane %v4540, %v4547
  %v4550 = vunpack.c.l.s4 1966171168
  %v4551 = vunpack.c.0.s8 %v4550
  %v4552 = vlaneseq
  %v4553 = vshrl.u32 %v4552, 7
  %v4554 = vsub.s32 %v4551, %v4553
  %v4555 = vrot.slane %v4541, %v4554
  %4558 = vst.msk [vmem:[%s17 + $0x12] sm:$0x1] %vm1736, %v4548
  %4559 = vst.msk [vmem:[%s17 + $0x2a] sm:$0x1] %vm1736, %v4555
  %4560 = vst.msk [vmem:[%s17 + $0x1] sm:$0x1] %vm1739, %v4548
  %4561 = vst.msk [vmem:[%s17 + $0x19] sm:$0x1] %vm1739, %v4555
  %v4562 = vrot.slane %v4531, 4
  %v4563 = vsel %vm246, %v4562, 0
  %4565 = vmatprep.subr.mxu0 %v1558
  %4566 = vmatpush1.msra.mxu0 %v1557
  %4567 = vmatprep.subr.mxu0 %v1560
  %4568 = vmatpush1.msra.mxu0 %v1559
  %4569 = vmatprep.subr.mxu0 %v1562
  %4570 = vmatpush1.msra.mxu0 %v1561
  %4571 = vmatprep.subr.mxu0 %v1564
  %4572 = vmatpush1.msra.mxu0 %v1563
  %4573 = vmatprep.subr.mxu0 %v1566
  %4574 = vmatpush1.msra.mxu0 %v1565
  %4575 = vmatprep.subr.mxu0 %v1568
  %4576 = vmatpush1.msra.mxu0 %v1567
  %4577 = vmatprep.subr.mxu0 %v1570
  %4578 = vmatpush1.msra.mxu0 %v1569
  %4579 = vmatprep.subr.mxu0 %v1572
  %4580 = vmatpush1.msra.mxu0 %v1571
  %4581 = vmatprep.subr.mxu0 0.0
  %4582 = vmatpush1.msra.mxu0 0.0
  %4583 = vmatprep.subr.mxu0 0.0
  %4584 = vmatpush1.msra.mxu0 0.0
  %4585 = vmatprep.subr.mxu0 0.0
  %4586 = vmatpush1.msra.mxu0 0.0
  %4587 = vmatprep.subr.mxu0 0.0
  %4588 = vmatpush1.msra.mxu0 0.0
  %4589 = vmatprep.subr.mxu0 0.0
  %4590 = vmatpush1.msra.mxu0 0.0
  %4591 = vmatprep.subr.mxu0 0.0
  %4592 = vmatpush1.msra.mxu0 0.0
  %4593 = vmatprep.subr.mxu0 0.0
  %4594 = vmatpush1.msra.mxu0 0.0
  %4595 = vmatprep.subr.mxu0 0.0
  %4596 = vmatpush1.msra.mxu0 0.0
  %4597 = vmatprep.subr.mxu0 0.0
  %4598 = vmatpush1.msra.mxu0 0.0
  %4599 = vmatprep.subr.mxu0 0.0
  %4600 = vmatpush1.msra.mxu0 0.0
  %4601 = vmatprep.subr.mxu0 0.0
  %4602 = vmatpush1.msra.mxu0 0.0
  %4603 = vmatprep.subr.mxu0 0.0
  %4604 = vmatpush1.msra.mxu0 0.0
  %4605 = vmatprep.subr.mxu0 0.0
  %4606 = vmatpush1.msra.mxu0 0.0
  %4607 = vmatprep.subr.mxu0 0.0
  %4608 = vmatpush1.msra.mxu0 0.0
  %4609 = vmatprep.subr.mxu0 0.0
  %4610 = vmatpush1.msra.mxu0 0.0
  %4611 = vmatprep.subr.mxu0 0.0
  %4612 = vmatpush1.msra.mxu0 0.0
  %4613 = vmatprep.subr.mxu0 0.0
  %4614 = vmatpush1.msra.mxu0 0.0
  %4615 = vmatprep.subr.mxu0 0.0
  %4616 = vmatpush1.msra.mxu0 0.0
  %4617 = vmatprep.subr.mxu0 0.0
  %4618 = vmatpush1.msra.mxu0 0.0
  %4619 = vmatprep.subr.mxu0 0.0
  %4620 = vmatpush1.msra.mxu0 0.0
  %4621 = vmatprep.subr.mxu0 0.0
  %4622 = vmatpush1.msra.mxu0 0.0
  %4623 = vmatprep.subr.mxu0 0.0
  %4624 = vmatpush1.msra.mxu0 0.0
  %4625 = vmatprep.subr.mxu0 0.0
  %4626 = vmatpush1.msra.mxu0 0.0
  %4627 = vmatprep.subr.mxu0 0.0
  %4628 = vmatpush1.msra.mxu0 0.0
  %4629 = vmatprep.mubr.f32.mxu0 0.0
  %4630 = vmatmul.mubr.f32.gmra.mrb[0].mxu0 %v4563
  %v4631 = vpop.f32.mrb[0].mxu0
  %v4632 = vadd.f32 %v1586, %v4631
  %v4633 = vpop.f32.mrb[0].mxu0
  %v4634 = vadd.f32 %v1590, %v4633
  %4635 = vdwg.mxu0
  %v4638 = vrot.slane %v4632, 2
  %v4639 = vrot.slane %v4634, 2
  %v4642 = vadd.f32 %v4250, %v4638
  %v4643 = vadd.f32 %v4247, %v4639
  %v4644 = vxor.u32 %v4642, 2147483648
  %v4645 = vxor.u32 %v4643, 2147483648
  %v4646 = vmul.f32 %v4644, 1.442695
  %v4647 = vpow.pop %v4646
  %v4648 = vmul.f32 %v4645, 1.442695
  %v4649 = vpow.pop %v4648
  %v4650 = vadd.f32 %v4647, 1.0
  %v4651 = vadd.f32 %v4649, 1.0
  %v4652 = vrcp.pop %v4650
  %v4653 = vmul.f32 1.0, %v4652
  %v4654 = vrcp.pop %v4651
  %v4655 = vmul.f32 1.0, %v4654
  %4657 = vrot.lane.b32.xlu0 %v4653, 64
  %v4658 = vpop.permute.xlu0 %4657
  %v4660 = vsel %vm226, %v4653, %v4658
  %4661 = vrot.lane.b32.xlu0 %v4653, 96
  %v4662 = vpop.permute.xlu0 %4661
  %4665 = vrot.lane.b32.xlu0 %v4655, 32
  %v4666 = vpop.permute.xlu0 %4665
  %v4668 = vsel %vm226, %v4662, %v4666
  %4669 = vrot.lane.b32.xlu0 %v4632, 64
  %v4670 = vpop.permute.xlu0 %4669
  %v4672 = vsel %vm226, %v4670, %v4634
  %v4674 = vrot.slane %v4672, 2
  %v4676 = vmul.f32 %v4660, %v4674
  %v4677 = vadd.f32 %v4361, %v4676
  %v4678 = vtanh.pop %v4677
  %v4679 = vsub.f32 1.0, %v4668
  %v4680 = vmul.f32 %v4679, %v4678
  %v4681 = vrot.slane %v4531, 6
  %v4683 = vmul.f32 %v4668, %v4681
  %v4684 = vadd.f32 %v4680, %v4683
  %v4686 = vcombine.high %v4684, %v4684
  %v4688 = vunpack.c.l.s4 1966171168
  %v4689 = vunpack.c.0.s8 %v4688
  %v4690 = vlaneseq
  %v4691 = vshrl.u32 %v4690, 7
  %v4692 = vsub.s32 %v4689, %v4691
  %v4693 = vrot.slane %v4686, %v4692
  %v4694 = vcombine.high %v4693, %v4693
  %v4696 = vunpack.c.l.s4 1966171168
  %v4697 = vunpack.c.0.s8 %v4696
  %v4698 = vlaneseq
  %v4699 = vshrl.u32 %v4698, 7
  %v4700 = vsub.s32 %v4697, %v4699
  %v4701 = vrot.slane %v4693, %v4700
  %v4703 = vunpack.c.l.s4 1966171168
  %v4704 = vunpack.c.0.s8 %v4703
  %v4705 = vlaneseq
  %v4706 = vshrl.u32 %v4705, 7
  %v4707 = vsub.s32 %v4704, %v4706
  %v4708 = vrot.slane %v4694, %v4707
  %v4709 = vcombine.high %v4701, %v4701
  %v4710 = vcombine.high %v4708, %v4708
  %4713 = vst.msk [vmem:[%s17 + $0x13] sm:$0x1] %vm1736, %v4709
  %4714 = vst.msk [vmem:[%s17 + $0x2b] sm:$0x1] %vm1736, %v4710
  %4715 = vst.msk [vmem:[%s17] sm:$0x1] %vm1739, %v4709
  %4716 = vst.msk [vmem:[%s17 + $0x18] sm:$0x1] %vm1739, %v4710
  // Predicated region
  $region70: #{cbhg_forward.1} parent=0 // pred_check
    _
  $region71: #{cbhg_forward.1} parent=0 // pred_check_branch
    %4718 = sbr.rel (0) target = $region73
  $region72: #{cbhg_forward.1} parent=0 // pred_region
    _
  $region73: #{cbhg_forward.1} parent=0 // pred_fallthru
    _
  // Predicated region
  $region74: #{cbhg_forward.1} parent=0 // pred_check
    _
  $region75: #{cbhg_forward.1} parent=0 // pred_check_branch
    %4720 = sbr.rel (0) target = $region77
  $region76: #{cbhg_forward.1} parent=0 // pred_region
    _
  $region77: #{cbhg_forward.1} parent=0 // pred_fallthru
    _

</llo_original>
